<compile_context>
chip_gen: v7x
topology: tpu7x:2x2x1
jax: 0.10.0
libtpu: 0.0.40
codegen_flags: <defaults>
</compile_context>

<pallas_src>
import jax
import jax.numpy as jnp
from jax.experimental import pallas as pl
from jax.experimental.pallas import tpu as pltpu


def _band_weights(w, W):
    """Fold the kw tap (and its zero padding) into the contraction dimension.

    w: (3, 3, 3, Cin, Cout)  ->  (9, W*Cin, W*Cout) with
       B[kd*3+kh, w_in*Cin + ci, w_out*Cout + co] = w[kd, kh, w_in - w_out + 1, ci, co]
    when 0 <= w_in - w_out + 1 <= 2, else 0 (this implements padding=1 along W).
    """
    _, _, _, Cin, Cout = w.shape
    r = jnp.arange(W * Cin)
    c = jnp.arange(W * Cout)
    w_in, ci = r // Cin, r % Cin
    w_out, co = c // Cout, c % Cout
    kw = w_in[:, None] - w_out[None, :] + 1          # (W*Cin, W*Cout)
    valid = (kw >= 0) & (kw <= 2)
    band = w[:, :, jnp.clip(kw, 0, 2), ci[:, None], co[None, :]]   # (3, 3, R, C)
    band = jnp.where(valid[None, None], band, 0.0)
    return band.reshape(9, W * Cin, W * Cout)


def _basic_block_kernel(x_ref, w1_ref, s1_ref, b1_ref, w2_ref, s2_ref, b2_ref,
                        out_ref, stage_ref):
    # x_ref:     (1, D, H, W*C)    bf16  channels-last, (W, C) flattened into lanes
    # w*_ref:    (9, W*C, W*C)     bf16  banded weights per (kd, kh)
    # s*/b*_ref: (1, W*C)          f32   folded BN scale / bias (tiled along W)
    # out_ref:   (1, D, H, W*C)    bf16
    # stage_ref: (3, D+2, H, W*C)  bf16  VMEM: per-kh H-shifted, D-padded activation slabs
    _, D, H, WC = x_ref.shape
    M = D * H

    # Zero only the D-halo border planes (the interior is fully overwritten by fill()).
    zplane = jnp.zeros((1, H, WC), jnp.bfloat16)
    for kh in range(3):
        stage_ref[kh, 0:1, :, :] = zplane
        stage_ref[kh, D + 1:D + 2, :, :] = zplane

    def fill(src_f32):
        # src_f32: (D, H, WC) f32.  Write three H-shifted copies so that every (kd, kh)
        # slab below is a tile-aligned, contiguous leading-dim slice (H == sublane tile
        # -> reshape to (D*H, WC) is a layout no-op).  Shifts are done in f32 registers;
        # all scratch stores are full-tile aligned bf16 stores.
        zrow = jnp.zeros((D, 1, WC), jnp.float32)
        stage_ref[1, 1:1 + D, :, :] = src_f32.astype(jnp.bfloat16)            # kh = 1
        stage_ref[0, 1:1 + D, :, :] = jnp.concatenate(                        # kh = 0
            [zrow, src_f32[:, :H - 1, :]], axis=1).astype(jnp.bfloat16)
        stage_ref[2, 1:1 + D, :, :] = jnp.concatenate(                        # kh = 2
            [src_f32[:, 1:, :], zrow], axis=1).astype(jnp.bfloat16)

    def conv3d(w_ref):
        # 3x3x3 conv = 9 MXU matmuls: bf16 (kd,kh)-shifted slab x banded (kw,Cin) weight,
        # f32 accumulation.  K = N = W*C (= 256 here -> full MXU depth/width on v6e/v7x).
        acc = jnp.zeros((M, w_ref.shape[-1]), jnp.float32)
        for kd in range(3):
            for kh in range(3):
                slab = stage_ref[kh, kd:kd + D, :, :].reshape(M, WC)          # bf16, aligned
                acc += jnp.dot(slab, w_ref[kd * 3 + kh],
                               preferred_element_type=jnp.float32)
        return acc

    # ---- stage 1: conv1 -> BN1 -> ReLU ----------------------------------------------
    fill(x_ref[0].astype(jnp.float32))
    y = conv3d(w1_ref)                                            # (M, WC) f32
    y = jnp.maximum(y * s1_ref[...] + b1_ref[...], 0.0)           # folded BN1 + ReLU

    # ---- stage 2: conv2 -> BN2 -> +residual -> ReLU (intermediate never leaves VMEM) ----
    fill(y.reshape(D, H, WC))
    z = conv3d(w2_ref)
    z = z * s2_ref[...] + b2_ref[...]                             # folded BN2
    z = z + x_ref[0].reshape(M, WC).astype(jnp.float32)           # residual (stride=1)
    z = jnp.maximum(z, 0.0)
    out_ref[...] = z.reshape(1, D, H, WC).astype(out_ref.dtype)


def basic_block_forward(x_ncdhw, params):
    """BasicBlock forward (stride=1, downsample=None). NCDHW in/out like PyTorch.

    Activations are bf16 end-to-end (input cast + bf16 output); all conv accumulation and
    the BN/ReLU/residual epilogue are f32.
    """
    N, C, D, H, W = x_ncdhw.shape
    assert params["w1"].shape[-2] == C and params["w1"].shape[-1] == C, \
        "stride=1 / downsample=None BasicBlock requires in_planes == planes"
    WC = W * C

    # Cast to bf16 BEFORE the layout transpose so the transpose moves half the bytes,
    # then flatten (W, C) into the lane dimension.
    x = jnp.transpose(x_ncdhw.astype(jnp.bfloat16), (0, 2, 3, 4, 1)).reshape(N, D, H, WC)

    w1b = _band_weights(params["w1"], W).astype(jnp.bfloat16)     # (9, WC, WC)
    w2b = _band_weights(params["w2"], W).astype(jnp.bfloat16)
    # Tile per-channel BN scale/bias to the (W, C)-flattened lane layout (f32 epilogue).
    s1 = jnp.tile(params["scale1"].reshape(-1), W).reshape(1, WC).astype(jnp.float32)
    b1 = jnp.tile(params["bias1"].reshape(-1), W).reshape(1, WC).astype(jnp.float32)
    s2 = jnp.tile(params["scale2"].reshape(-1), W).reshape(1, WC).astype(jnp.float32)
    b2 = jnp.tile(params["bias2"].reshape(-1), W).reshape(1, WC).astype(jnp.float32)

    flops = 2 * 9 * (2 * (D * H) * WC * WC) * N                   # MXU flops (both convs)
    bytes_accessed = (x.size * 2 + (w1b.size + w2b.size) * 2
                      + 4 * WC * 4 + N * D * H * WC * 2)

    out = pl.pallas_call(
        _basic_block_kernel,
        grid=(N,),
        in_specs=[
            pl.BlockSpec((1, D, H, WC), lambda n: (n, 0, 0, 0)),
            pl.BlockSpec((9, WC, WC), lambda n: (0, 0, 0)),
            pl.BlockSpec((1, WC), lambda n: (0, 0)),
            pl.BlockSpec((1, WC), lambda n: (0, 0)),
            pl.BlockSpec((9, WC, WC), lambda n: (0, 0, 0)),
            pl.BlockSpec((1, WC), lambda n: (0, 0)),
            pl.BlockSpec((1, WC), lambda n: (0, 0)),
        ],
        out_specs=pl.BlockSpec((1, D, H, WC), lambda n: (n, 0, 0, 0)),
        out_shape=jax.ShapeDtypeStruct((N, D, H, WC), jnp.bfloat16),
        scratch_shapes=[pltpu.VMEM((3, D + 2, H, WC), jnp.bfloat16)],
        compiler_params=pltpu.CompilerParams(
            dimension_semantics=("parallel",)),
        cost_estimate=pl.CostEstimate(flops=flops, transcendentals=0,
                                      bytes_accessed=bytes_accessed),
    )(x, w1b, s1, b1, w2b, s2, b2)

    out = out.reshape(N, D, H, W, C)
    return jnp.transpose(out, (0, 4, 1, 2, 3))                    # NDHWC -> NCDHW (bf16)


def init_basic_block_params(key, in_planes, planes, eps=1e-5):
    """Deterministic synthetic params. Conv weights stored as (kd, kh, kw, Cin, Cout)."""
    ks = jax.random.split(key, 10)
    w1 = jax.random.normal(ks[0], (3, 3, 3, in_planes, planes), jnp.float32) \
        * (1.0 / jnp.sqrt(27.0 * in_planes))
    w2 = jax.random.normal(ks[1], (3, 3, 3, planes, planes), jnp.float32) \
        * (1.0 / jnp.sqrt(27.0 * planes))

    def bn_fold(kg, kb, km, kv):
        gamma = 1.0 + 0.1 * jax.random.normal(kg, (planes,), jnp.float32)
        beta = 0.1 * jax.random.normal(kb, (planes,), jnp.float32)
        rmean = 0.1 * jax.random.normal(km, (planes,), jnp.float32)
        rvar = 1.0 + 0.1 * jnp.abs(jax.random.normal(kv, (planes,), jnp.float32))
        scale = gamma / jnp.sqrt(rvar + eps)
        bias = beta - rmean * scale
        return scale, bias

    s1, b1 = bn_fold(ks[2], ks[3], ks[4], ks[5])
    s2, b2 = bn_fold(ks[6], ks[7], ks[8], ks[9])
    return dict(w1=w1, w2=w2, scale1=s1, bias1=b1, scale2=s2, bias2=b2)


def _reference_forward(x_ncdhw, p):
    """Pure-JAX reference (lax.conv, f32) for a correctness check."""
    x = jnp.transpose(x_ncdhw, (0, 2, 3, 4, 1))

    def conv(h, w):
        return jax.lax.conv_general_dilated(
            h, w, (1, 1, 1), "SAME",
            dimension_numbers=("NDHWC", "DHWIO", "NDHWC"),
            precision=jax.lax.Precision.HIGHEST)

    out = jnp.maximum(conv(x, p["w1"]) * p["scale1"] + p["bias1"], 0.0)
    out = conv(out, p["w2"]) * p["scale2"] + p["bias2"] + x
    out = jnp.maximum(out, 0.0)
    return jnp.transpose(out, (0, 4, 1, 2, 3))


if __name__ == "__main__":
    key = jax.random.PRNGKey(0)
    kx, kp = jax.random.split(key)

    # in_planes == planes, stride=1; W*C = 256 -> lane-dense and full MXU depth/width.
    N, C, D, H, W = 2, 32, 8, 8, 8
    x = jax.random.normal(kx, (N, C, D, H, W), jnp.float32)
    params = init_basic_block_params(kp, C, C)

    fwd = jax.jit(basic_block_forward)
    out = jax.block_until_ready(fwd(x, params))
    assert out.shape == (N, C, D, H, W), out.shape

    ref = _reference_forward(x, params)
    err = float(jnp.max(jnp.abs(out.astype(jnp.float32) - ref)))
    ref_max = float(jnp.max(jnp.abs(ref)))
    # bf16 activations/weights/output on the MXU path (f32 accumulation): tolerance scaled
    # to the output magnitude.
    assert err <= 5e-2 * (1.0 + ref_max), f"mismatch vs reference: abs={err}, ref_max={ref_max}"

    print("KERNEL_OK")
</pallas_src>

<mosaic_0001>
module attributes {stable_mosaic.version = 11 : i64} {
  func.func @_basic_block_kernel(%arg0: i32, %arg1: memref<1x8x8x256xbf16, #tpu.memory_space<vmem>>, %arg2: memref<9x256x256xbf16, #tpu.memory_space<vmem>>, %arg3: memref<1x256xf32, #tpu.memory_space<vmem>>, %arg4: memref<1x256xf32, #tpu.memory_space<vmem>>, %arg5: memref<9x256x256xbf16, #tpu.memory_space<vmem>>, %arg6: memref<1x256xf32, #tpu.memory_space<vmem>>, %arg7: memref<1x256xf32, #tpu.memory_space<vmem>>, %arg8: memref<1x8x8x256xbf16, #tpu.memory_space<vmem>>, %arg9: memref<3x10x8x256xbf16, #tpu.memory_space<vmem>>) attributes {dimension_semantics = [#tpu.dimension_semantics<parallel>], iteration_bounds = array<i64: 2>, scalar_prefetch = 0 : i64, scratch_operands = 1 : i64, tpu.core_type = #tpu.core_type<tc>, window_params = [{transform_indices = @transform_0, window_bounds = array<i64: 1, 8, 8, 256>}, {pipeline_mode = #tpu.pipeline_mode<synchronous>, transform_indices = @transform_1, window_bounds = array<i64: 9, 256, 256>}, {pipeline_mode = #tpu.pipeline_mode<synchronous>, transform_indices = @transform_2, window_bounds = array<i64: 1, 256>}, {pipeline_mode = #tpu.pipeline_mode<synchronous>, transform_indices = @transform_3, window_bounds = array<i64: 1, 256>}, {pipeline_mode = #tpu.pipeline_mode<synchronous>, transform_indices = @transform_4, window_bounds = array<i64: 9, 256, 256>}, {pipeline_mode = #tpu.pipeline_mode<synchronous>, transform_indices = @transform_5, window_bounds = array<i64: 1, 256>}, {pipeline_mode = #tpu.pipeline_mode<synchronous>, transform_indices = @transform_6, window_bounds = array<i64: 1, 256>}, {transform_indices = @transform_7, window_bounds = array<i64: 1, 8, 8, 256>}]} {
    %cst = arith.constant 0.000000e+00 : bf16
    %0 = vector.broadcast %cst : bf16 to vector<1x8x256xbf16>
    %c0 = arith.constant 0 : index
    %c0_0 = arith.constant 0 : index
    %c0_1 = arith.constant 0 : index
    %c0_2 = arith.constant 0 : index
    %1 = vector.load %arg9[%c0, %c0_0, %c0_1, %c0_2] : memref<3x10x8x256xbf16, #tpu.memory_space<vmem>>, vector<1x1x8x256xbf16>
    %2 = vector.shape_cast %1 : vector<1x1x8x256xbf16> to vector<1x8x256xbf16>
    %3 = vector.shape_cast %0 : vector<1x8x256xbf16> to vector<1x1x8x256xbf16>
    tpu.vector_store %arg9[%c0, %c0_0, %c0_1, %c0_2], %3 {strides = array<i32>} : memref<3x10x8x256xbf16, #tpu.memory_space<vmem>>, vector<1x1x8x256xbf16>,
    %c0_3 = arith.constant 0 : index
    %c9 = arith.constant 9 : index
    %c0_4 = arith.constant 0 : index
    %c0_5 = arith.constant 0 : index
    %4 = vector.load %arg9[%c0_3, %c9, %c0_4, %c0_5] : memref<3x10x8x256xbf16, #tpu.memory_space<vmem>>, vector<1x1x8x256xbf16>
    %5 = vector.shape_cast %4 : vector<1x1x8x256xbf16> to vector<1x8x256xbf16>
    %6 = vector.shape_cast %0 : vector<1x8x256xbf16> to vector<1x1x8x256xbf16>
    tpu.vector_store %arg9[%c0_3, %c9, %c0_4, %c0_5], %6 {strides = array<i32>} : memref<3x10x8x256xbf16, #tpu.memory_space<vmem>>, vector<1x1x8x256xbf16>,
    %c1 = arith.constant 1 : index
    %c0_6 = arith.constant 0 : index
    %c0_7 = arith.constant 0 : index
    %c0_8 = arith.constant 0 : index
    %7 = vector.load %arg9[%c1, %c0_6, %c0_7, %c0_8] : memref<3x10x8x256xbf16, #tpu.memory_space<vmem>>, vector<1x1x8x256xbf16>
    %8 = vector.shape_cast %7 : vector<1x1x8x256xbf16> to vector<1x8x256xbf16>
    %9 = vector.shape_cast %0 : vector<1x8x256xbf16> to vector<1x1x8x256xbf16>
    tpu.vector_store %arg9[%c1, %c0_6, %c0_7, %c0_8], %9 {strides = array<i32>} : memref<3x10x8x256xbf16, #tpu.memory_space<vmem>>, vector<1x1x8x256xbf16>,
    %c1_9 = arith.constant 1 : index
    %c9_10 = arith.constant 9 : index
    %c0_11 = arith.constant 0 : index
    %c0_12 = arith.constant 0 : index
    %10 = vector.load %arg9[%c1_9, %c9_10, %c0_11, %c0_12] : memref<3x10x8x256xbf16, #tpu.memory_space<vmem>>, vector<1x1x8x256xbf16>
    %11 = vector.shape_cast %10 : vector<1x1x8x256xbf16> to vector<1x8x256xbf16>
    %12 = vector.shape_cast %0 : vector<1x8x256xbf16> to vector<1x1x8x256xbf16>
    tpu.vector_store %arg9[%c1_9, %c9_10, %c0_11, %c0_12], %12 {strides = array<i32>} : memref<3x10x8x256xbf16, #tpu.memory_space<vmem>>, vector<1x1x8x256xbf16>,
    %c2 = arith.constant 2 : index
    %c0_13 = arith.constant 0 : index
    %c0_14 = arith.constant 0 : index
    %c0_15 = arith.constant 0 : index
    %13 = vector.load %arg9[%c2, %c0_13, %c0_14, %c0_15] : memref<3x10x8x256xbf16, #tpu.memory_space<vmem>>, vector<1x1x8x256xbf16>
    %14 = vector.shape_cast %13 : vector<1x1x8x256xbf16> to vector<1x8x256xbf16>
    %15 = vector.shape_cast %0 : vector<1x8x256xbf16> to vector<1x1x8x256xbf16>
    tpu.vector_store %arg9[%c2, %c0_13, %c0_14, %c0_15], %15 {strides = array<i32>} : memref<3x10x8x256xbf16, #tpu.memory_space<vmem>>, vector<1x1x8x256xbf16>,
    %c2_16 = arith.constant 2 : index
    %c9_17 = arith.constant 9 : index
    %c0_18 = arith.constant 0 : index
    %c0_19 = arith.constant 0 : index
    %16 = vector.load %arg9[%c2_16, %c9_17, %c0_18, %c0_19] : memref<3x10x8x256xbf16, #tpu.memory_space<vmem>>, vector<1x1x8x256xbf16>
    %17 = vector.shape_cast %16 : vector<1x1x8x256xbf16> to vector<1x8x256xbf16>
    %18 = vector.shape_cast %0 : vector<1x8x256xbf16> to vector<1x1x8x256xbf16>
    tpu.vector_store %arg9[%c2_16, %c9_17, %c0_18, %c0_19], %18 {strides = array<i32>} : memref<3x10x8x256xbf16, #tpu.memory_space<vmem>>, vector<1x1x8x256xbf16>,
    %c0_20 = arith.constant 0 : index
    %c0_21 = arith.constant 0 : index
    %c0_22 = arith.constant 0 : index
    %c0_23 = arith.constant 0 : index
    %19 = vector.load %arg1[%c0_20, %c0_21, %c0_22, %c0_23] : memref<1x8x8x256xbf16, #tpu.memory_space<vmem>>, vector<1x8x8x256xbf16>
    %20 = vector.shape_cast %19 : vector<1x8x8x256xbf16> to vector<8x8x256xbf16>
    %21 = arith.extf %20 : vector<8x8x256xbf16> to vector<8x8x256xf32>
    %cst_24 = arith.constant 0.000000e+00 : f32
    %22 = vector.broadcast %cst_24 : f32 to vector<8x1x256xf32>
    %23 = arith.truncf %21 : vector<8x8x256xf32> to vector<8x8x256xbf16>
    %c1_25 = arith.constant 1 : index
    %c1_26 = arith.constant 1 : index
    %c0_27 = arith.constant 0 : index
    %c0_28 = arith.constant 0 : index
    %24 = vector.load %arg9[%c1_25, %c1_26, %c0_27, %c0_28] : memref<3x10x8x256xbf16, #tpu.memory_space<vmem>>, vector<1x8x8x256xbf16>
    %25 = vector.shape_cast %24 : vector<1x8x8x256xbf16> to vector<8x8x256xbf16>
    %26 = vector.shape_cast %23 : vector<8x8x256xbf16> to vector<1x8x8x256xbf16>
    tpu.vector_store %arg9[%c1_25, %c1_26, %c0_27, %c0_28], %26 {strides = array<i32>} : memref<3x10x8x256xbf16, #tpu.memory_space<vmem>>, vector<1x8x8x256xbf16>,
    %27 = vector.extract_strided_slice %21 {offsets = [0, 0, 0], sizes = [8, 7, 256], strides = [1, 1, 1]} : vector<8x8x256xf32> to vector<8x7x256xf32>
    %28 = tpu.concatenate %22, %27 in 1 : vector<8x1x256xf32>, vector<8x7x256xf32> -> vector<8x8x256xf32>
    %29 = arith.truncf %28 : vector<8x8x256xf32> to vector<8x8x256xbf16>
    %c0_29 = arith.constant 0 : index
    %c1_30 = arith.constant 1 : index
    %c0_31 = arith.constant 0 : index
    %c0_32 = arith.constant 0 : index
    %30 = vector.load %arg9[%c0_29, %c1_30, %c0_31, %c0_32] : memref<3x10x8x256xbf16, #tpu.memory_space<vmem>>, vector<1x8x8x256xbf16>
    %31 = vector.shape_cast %30 : vector<1x8x8x256xbf16> to vector<8x8x256xbf16>
    %32 = vector.shape_cast %29 : vector<8x8x256xbf16> to vector<1x8x8x256xbf16>
    tpu.vector_store %arg9[%c0_29, %c1_30, %c0_31, %c0_32], %32 {strides = array<i32>} : memref<3x10x8x256xbf16, #tpu.memory_space<vmem>>, vector<1x8x8x256xbf16>,
    %33 = vector.extract_strided_slice %21 {offsets = [0, 1, 0], sizes = [8, 7, 256], strides = [1, 1, 1]} : vector<8x8x256xf32> to vector<8x7x256xf32>
    %34 = tpu.concatenate %33, %22 in 1 : vector<8x7x256xf32>, vector<8x1x256xf32> -> vector<8x8x256xf32>
    %35 = arith.truncf %34 : vector<8x8x256xf32> to vector<8x8x256xbf16>
    %c2_33 = arith.constant 2 : index
    %c1_34 = arith.constant 1 : index
    %c0_35 = arith.constant 0 : index
    %c0_36 = arith.constant 0 : index
    %36 = vector.load %arg9[%c2_33, %c1_34, %c0_35, %c0_36] : memref<3x10x8x256xbf16, #tpu.memory_space<vmem>>, vector<1x8x8x256xbf16>
    %37 = vector.shape_cast %36 : vector<1x8x8x256xbf16> to vector<8x8x256xbf16>
    %38 = vector.shape_cast %35 : vector<8x8x256xbf16> to vector<1x8x8x256xbf16>
    tpu.vector_store %arg9[%c2_33, %c1_34, %c0_35, %c0_36], %38 {strides = array<i32>} : memref<3x10x8x256xbf16, #tpu.memory_space<vmem>>, vector<1x8x8x256xbf16>,
    %cst_37 = arith.constant 0.000000e+00 : f32
    %39 = vector.broadcast %cst_37 : f32 to vector<64x256xf32>
    %c0_38 = arith.constant 0 : index
    %c0_39 = arith.constant 0 : index
    %c0_40 = arith.constant 0 : index
    %c0_41 = arith.constant 0 : index
    %40 = vector.load %arg9[%c0_38, %c0_39, %c0_40, %c0_41] : memref<3x10x8x256xbf16, #tpu.memory_space<vmem>>, vector<1x8x8x256xbf16>
    %41 = vector.shape_cast %40 : vector<1x8x8x256xbf16> to vector<8x8x256xbf16>
    %42 = vector.shape_cast %41 : vector<8x8x256xbf16> to vector<64x256xbf16>
    %c0_42 = arith.constant 0 : index
    %c0_43 = arith.constant 0 : index
    %c0_44 = arith.constant 0 : index
    %43 = vector.load %arg2[%c0_42, %c0_43, %c0_44] : memref<9x256x256xbf16, #tpu.memory_space<vmem>>, vector<1x256x256xbf16>
    %44 = vector.shape_cast %43 : vector<1x256x256xbf16> to vector<256x256xbf16>
    %cst_45 = arith.constant dense<0.000000e+00> : vector<64x256xf32>
    %45 = tpu.matmul %42, %44, %cst_45 {dimension_numbers = #tpu.dot_dimension_numbers<[1], [0], [0], [1], [0, 0, 1, 1], [], []>} : vector<64x256xbf16>, vector<256x256xbf16>, vector<64x256xf32> -> vector<64x256xf32>
    %46 = arith.addf %39, %45 : vector<64x256xf32>
    %c1_46 = arith.constant 1 : index
    %c0_47 = arith.constant 0 : index
    %c0_48 = arith.constant 0 : index
    %c0_49 = arith.constant 0 : index
    %47 = vector.load %arg9[%c1_46, %c0_47, %c0_48, %c0_49] : memref<3x10x8x256xbf16, #tpu.memory_space<vmem>>, vector<1x8x8x256xbf16>
    %48 = vector.shape_cast %47 : vector<1x8x8x256xbf16> to vector<8x8x256xbf16>
    %49 = vector.shape_cast %48 : vector<8x8x256xbf16> to vector<64x256xbf16>
    %c1_50 = arith.constant 1 : index
    %c0_51 = arith.constant 0 : index
    %c0_52 = arith.constant 0 : index
    %50 = vector.load %arg2[%c1_50, %c0_51, %c0_52] : memref<9x256x256xbf16, #tpu.memory_space<vmem>>, vector<1x256x256xbf16>
    %51 = vector.shape_cast %50 : vector<1x256x256xbf16> to vector<256x256xbf16>
    %cst_53 = arith.constant dense<0.000000e+00> : vector<64x256xf32>
    %52 = tpu.matmul %49, %51, %cst_53 {dimension_numbers = #tpu.dot_dimension_numbers<[1], [0], [0], [1], [0, 0, 1, 1], [], []>} : vector<64x256xbf16>, vector<256x256xbf16>, vector<64x256xf32> -> vector<64x256xf32>
    %53 = arith.addf %46, %52 : vector<64x256xf32>
    %c2_54 = arith.constant 2 : index
    %c0_55 = arith.constant 0 : index
    %c0_56 = arith.constant 0 : index
    %c0_57 = arith.constant 0 : index
    %54 = vector.load %arg9[%c2_54, %c0_55, %c0_56, %c0_57] : memref<3x10x8x256xbf16, #tpu.memory_space<vmem>>, vector<1x8x8x256xbf16>
    %55 = vector.shape_cast %54 : vector<1x8x8x256xbf16> to vector<8x8x256xbf16>
    %56 = vector.shape_cast %55 : vector<8x8x256xbf16> to vector<64x256xbf16>
    %c2_58 = arith.constant 2 : index
    %c0_59 = arith.constant 0 : index
    %c0_60 = arith.constant 0 : index
    %57 = vector.load %arg2[%c2_58, %c0_59, %c0_60] : memref<9x256x256xbf16, #tpu.memory_space<vmem>>, vector<1x256x256xbf16>
    %58 = vector.shape_cast %57 : vector<1x256x256xbf16> to vector<256x256xbf16>
    %cst_61 = arith.constant dense<0.000000e+00> : vector<64x256xf32>
    %59 = tpu.matmul %56, %58, %cst_61 {dimension_numbers = #tpu.dot_dimension_numbers<[1], [0], [0], [1], [0, 0, 1, 1], [], []>} : vector<64x256xbf16>, vector<256x256xbf16>, vector<64x256xf32> -> vector<64x256xf32>
    %60 = arith.addf %53, %59 : vector<64x256xf32>
    %c0_62 = arith.constant 0 : index
    %c1_63 = arith.constant 1 : index
    %c0_64 = arith.constant 0 : index
    %c0_65 = arith.constant 0 : index
    %61 = vector.load %arg9[%c0_62, %c1_63, %c0_64, %c0_65] : memref<3x10x8x256xbf16, #tpu.memory_space<vmem>>, vector<1x8x8x256xbf16>
    %62 = vector.shape_cast %61 : vector<1x8x8x256xbf16> to vector<8x8x256xbf16>
    %63 = vector.shape_cast %62 : vector<8x8x256xbf16> to vector<64x256xbf16>
    %c3 = arith.constant 3 : index
    %c0_66 = arith.constant 0 : index
    %c0_67 = arith.constant 0 : index
    %64 = vector.load %arg2[%c3, %c0_66, %c0_67] : memref<9x256x256xbf16, #tpu.memory_space<vmem>>, vector<1x256x256xbf16>
    %65 = vector.shape_cast %64 : vector<1x256x256xbf16> to vector<256x256xbf16>
    %cst_68 = arith.constant dense<0.000000e+00> : vector<64x256xf32>
    %66 = tpu.matmul %63, %65, %cst_68 {dimension_numbers = #tpu.dot_dimension_numbers<[1], [0], [0], [1], [0, 0, 1, 1], [], []>} : vector<64x256xbf16>, vector<256x256xbf16>, vector<64x256xf32> -> vector<64x256xf32>
    %67 = arith.addf %60, %66 : vector<64x256xf32>
    %c1_69 = arith.constant 1 : index
    %c1_70 = arith.constant 1 : index
    %c0_71 = arith.constant 0 : index
    %c0_72 = arith.constant 0 : index
    %68 = vector.load %arg9[%c1_69, %c1_70, %c0_71, %c0_72] : memref<3x10x8x256xbf16, #tpu.memory_space<vmem>>, vector<1x8x8x256xbf16>
    %69 = vector.shape_cast %68 : vector<1x8x8x256xbf16> to vector<8x8x256xbf16>
    %70 = vector.shape_cast %69 : vector<8x8x256xbf16> to vector<64x256xbf16>
    %c4 = arith.constant 4 : index
    %c0_73 = arith.constant 0 : index
    %c0_74 = arith.constant 0 : index
    %71 = vector.load %arg2[%c4, %c0_73, %c0_74] : memref<9x256x256xbf16, #tpu.memory_space<vmem>>, vector<1x256x256xbf16>
    %72 = vector.shape_cast %71 : vector<1x256x256xbf16> to vector<256x256xbf16>
    %cst_75 = arith.constant dense<0.000000e+00> : vector<64x256xf32>
    %73 = tpu.matmul %70, %72, %cst_75 {dimension_numbers = #tpu.dot_dimension_numbers<[1], [0], [0], [1], [0, 0, 1, 1], [], []>} : vector<64x256xbf16>, vector<256x256xbf16>, vector<64x256xf32> -> vector<64x256xf32>
    %74 = arith.addf %67, %73 : vector<64x256xf32>
    %c2_76 = arith.constant 2 : index
    %c1_77 = arith.constant 1 : index
    %c0_78 = arith.constant 0 : index
    %c0_79 = arith.constant 0 : index
    %75 = vector.load %arg9[%c2_76, %c1_77, %c0_78, %c0_79] : memref<3x10x8x256xbf16, #tpu.memory_space<vmem>>, vector<1x8x8x256xbf16>
    %76 = vector.shape_cast %75 : vector<1x8x8x256xbf16> to vector<8x8x256xbf16>
    %77 = vector.shape_cast %76 : vector<8x8x256xbf16> to vector<64x256xbf16>
    %c5 = arith.constant 5 : index
    %c0_80 = arith.constant 0 : index
    %c0_81 = arith.constant 0 : index
    %78 = vector.load %arg2[%c5, %c0_80, %c0_81] : memref<9x256x256xbf16, #tpu.memory_space<vmem>>, vector<1x256x256xbf16>
    %79 = vector.shape_cast %78 : vector<1x256x256xbf16> to vector<256x256xbf16>
    %cst_82 = arith.constant dense<0.000000e+00> : vector<64x256xf32>
    %80 = tpu.matmul %77, %79, %cst_82 {dimension_numbers = #tpu.dot_dimension_numbers<[1], [0], [0], [1], [0, 0, 1, 1], [], []>} : vector<64x256xbf16>, vector<256x256xbf16>, vector<64x256xf32> -> vector<64x256xf32>
    %81 = arith.addf %74, %80 : vector<64x256xf32>
    %c0_83 = arith.constant 0 : index
    %c2_84 = arith.constant 2 : index
    %c0_85 = arith.constant 0 : index
    %c0_86 = arith.constant 0 : index
    %82 = vector.load %arg9[%c0_83, %c2_84, %c0_85, %c0_86] : memref<3x10x8x256xbf16, #tpu.memory_space<vmem>>, vector<1x8x8x256xbf16>
    %83 = vector.shape_cast %82 : vector<1x8x8x256xbf16> to vector<8x8x256xbf16>
    %84 = vector.shape_cast %83 : vector<8x8x256xbf16> to vector<64x256xbf16>
    %c6 = arith.constant 6 : index
    %c0_87 = arith.constant 0 : index
    %c0_88 = arith.constant 0 : index
    %85 = vector.load %arg2[%c6, %c0_87, %c0_88] : memref<9x256x256xbf16, #tpu.memory_space<vmem>>, vector<1x256x256xbf16>
    %86 = vector.shape_cast %85 : vector<1x256x256xbf16> to vector<256x256xbf16>
    %cst_89 = arith.constant dense<0.000000e+00> : vector<64x256xf32>
    %87 = tpu.matmul %84, %86, %cst_89 {dimension_numbers = #tpu.dot_dimension_numbers<[1], [0], [0], [1], [0, 0, 1, 1], [], []>} : vector<64x256xbf16>, vector<256x256xbf16>, vector<64x256xf32> -> vector<64x256xf32>
    %88 = arith.addf %81, %87 : vector<64x256xf32>
    %c1_90 = arith.constant 1 : index
    %c2_91 = arith.constant 2 : index
    %c0_92 = arith.constant 0 : index
    %c0_93 = arith.constant 0 : index
    %89 = vector.load %arg9[%c1_90, %c2_91, %c0_92, %c0_93] : memref<3x10x8x256xbf16, #tpu.memory_space<vmem>>, vector<1x8x8x256xbf16>
    %90 = vector.shape_cast %89 : vector<1x8x8x256xbf16> to vector<8x8x256xbf16>
    %91 = vector.shape_cast %90 : vector<8x8x256xbf16> to vector<64x256xbf16>
    %c7 = arith.constant 7 : index
    %c0_94 = arith.constant 0 : index
    %c0_95 = arith.constant 0 : index
    %92 = vector.load %arg2[%c7, %c0_94, %c0_95] : memref<9x256x256xbf16, #tpu.memory_space<vmem>>, vector<1x256x256xbf16>
    %93 = vector.shape_cast %92 : vector<1x256x256xbf16> to vector<256x256xbf16>
    %cst_96 = arith.constant dense<0.000000e+00> : vector<64x256xf32>
    %94 = tpu.matmul %91, %93, %cst_96 {dimension_numbers = #tpu.dot_dimension_numbers<[1], [0], [0], [1], [0, 0, 1, 1], [], []>} : vector<64x256xbf16>, vector<256x256xbf16>, vector<64x256xf32> -> vector<64x256xf32>
    %95 = arith.addf %88, %94 : vector<64x256xf32>
    %c2_97 = arith.constant 2 : index
    %c2_98 = arith.constant 2 : index
    %c0_99 = arith.constant 0 : index
    %c0_100 = arith.constant 0 : index
    %96 = vector.load %arg9[%c2_97, %c2_98, %c0_99, %c0_100] : memref<3x10x8x256xbf16, #tpu.memory_space<vmem>>, vector<1x8x8x256xbf16>
    %97 = vector.shape_cast %96 : vector<1x8x8x256xbf16> to vector<8x8x256xbf16>
    %98 = vector.shape_cast %97 : vector<8x8x256xbf16> to vector<64x256xbf16>
    %c8 = arith.constant 8 : index
    %c0_101 = arith.constant 0 : index
    %c0_102 = arith.constant 0 : index
    %99 = vector.load %arg2[%c8, %c0_101, %c0_102] : memref<9x256x256xbf16, #tpu.memory_space<vmem>>, vector<1x256x256xbf16>
    %100 = vector.shape_cast %99 : vector<1x256x256xbf16> to vector<256x256xbf16>
    %cst_103 = arith.constant dense<0.000000e+00> : vector<64x256xf32>
    %101 = tpu.matmul %98, %100, %cst_103 {dimension_numbers = #tpu.dot_dimension_numbers<[1], [0], [0], [1], [0, 0, 1, 1], [], []>} : vector<64x256xbf16>, vector<256x256xbf16>, vector<64x256xf32> -> vector<64x256xf32>
    %102 = arith.addf %95, %101 : vector<64x256xf32>
    %c0_104 = arith.constant 0 : index
    %c0_105 = arith.constant 0 : index
    %103 = vector.load %arg3[%c0_104, %c0_105] : memref<1x256xf32, #tpu.memory_space<vmem>>, vector<1x256xf32>
    %104 = vector.broadcast %103 : vector<1x256xf32> to vector<64x256xf32>
    %105 = arith.mulf %102, %104 : vector<64x256xf32>
    %c0_106 = arith.constant 0 : index
    %c0_107 = arith.constant 0 : index
    %106 = vector.load %arg4[%c0_106, %c0_107] : memref<1x256xf32, #tpu.memory_space<vmem>>, vector<1x256xf32>
    %107 = vector.broadcast %106 : vector<1x256xf32> to vector<64x256xf32>
    %108 = arith.addf %105, %107 : vector<64x256xf32>
    %cst_108 = arith.constant 0.000000e+00 : f32
    %109 = vector.broadcast %cst_108 : f32 to vector<64x256xf32>
    %110 = arith.maximumf %108, %109 : vector<64x256xf32>
    %111 = vector.shape_cast %110 : vector<64x256xf32> to vector<8x8x256xf32>
    %cst_109 = arith.constant 0.000000e+00 : f32
    %112 = vector.broadcast %cst_109 : f32 to vector<8x1x256xf32>
    %113 = arith.truncf %111 : vector<8x8x256xf32> to vector<8x8x256xbf16>
    %c1_110 = arith.constant 1 : index
    %c1_111 = arith.constant 1 : index
    %c0_112 = arith.constant 0 : index
    %c0_113 = arith.constant 0 : index
    %114 = vector.load %arg9[%c1_110, %c1_111, %c0_112, %c0_113] : memref<3x10x8x256xbf16, #tpu.memory_space<vmem>>, vector<1x8x8x256xbf16>
    %115 = vector.shape_cast %114 : vector<1x8x8x256xbf16> to vector<8x8x256xbf16>
    %116 = vector.shape_cast %113 : vector<8x8x256xbf16> to vector<1x8x8x256xbf16>
    tpu.vector_store %arg9[%c1_110, %c1_111, %c0_112, %c0_113], %116 {strides = array<i32>} : memref<3x10x8x256xbf16, #tpu.memory_space<vmem>>, vector<1x8x8x256xbf16>,
    %117 = vector.extract_strided_slice %111 {offsets = [0, 0, 0], sizes = [8, 7, 256], strides = [1, 1, 1]} : vector<8x8x256xf32> to vector<8x7x256xf32>
    %118 = tpu.concatenate %112, %117 in 1 : vector<8x1x256xf32>, vector<8x7x256xf32> -> vector<8x8x256xf32>
    %119 = arith.truncf %118 : vector<8x8x256xf32> to vector<8x8x256xbf16>
    %c0_114 = arith.constant 0 : index
    %c1_115 = arith.constant 1 : index
    %c0_116 = arith.constant 0 : index
    %c0_117 = arith.constant 0 : index
    %120 = vector.load %arg9[%c0_114, %c1_115, %c0_116, %c0_117] : memref<3x10x8x256xbf16, #tpu.memory_space<vmem>>, vector<1x8x8x256xbf16>
    %121 = vector.shape_cast %120 : vector<1x8x8x256xbf16> to vector<8x8x256xbf16>
    %122 = vector.shape_cast %119 : vector<8x8x256xbf16> to vector<1x8x8x256xbf16>
    tpu.vector_store %arg9[%c0_114, %c1_115, %c0_116, %c0_117], %122 {strides = array<i32>} : memref<3x10x8x256xbf16, #tpu.memory_space<vmem>>, vector<1x8x8x256xbf16>,
    %123 = vector.extract_strided_slice %111 {offsets = [0, 1, 0], sizes = [8, 7, 256], strides = [1, 1, 1]} : vector<8x8x256xf32> to vector<8x7x256xf32>
    %124 = tpu.concatenate %123, %112 in 1 : vector<8x7x256xf32>, vector<8x1x256xf32> -> vector<8x8x256xf32>
    %125 = arith.truncf %124 : vector<8x8x256xf32> to vector<8x8x256xbf16>
    %c2_118 = arith.constant 2 : index
    %c1_119 = arith.constant 1 : index
    %c0_120 = arith.constant 0 : index
    %c0_121 = arith.constant 0 : index
    %126 = vector.load %arg9[%c2_118, %c1_119, %c0_120, %c0_121] : memref<3x10x8x256xbf16, #tpu.memory_space<vmem>>, vector<1x8x8x256xbf16>
    %127 = vector.shape_cast %126 : vector<1x8x8x256xbf16> to vector<8x8x256xbf16>
    %128 = vector.shape_cast %125 : vector<8x8x256xbf16> to vector<1x8x8x256xbf16>
    tpu.vector_store %arg9[%c2_118, %c1_119, %c0_120, %c0_121], %128 {strides = array<i32>} : memref<3x10x8x256xbf16, #tpu.memory_space<vmem>>, vector<1x8x8x256xbf16>,
    %cst_122 = arith.constant 0.000000e+00 : f32
    %129 = vector.broadcast %cst_122 : f32 to vector<64x256xf32>
    %c0_123 = arith.constant 0 : index
    %c0_124 = arith.constant 0 : index
    %c0_125 = arith.constant 0 : index
    %c0_126 = arith.constant 0 : index
    %130 = vector.load %arg9[%c0_123, %c0_124, %c0_125, %c0_126] : memref<3x10x8x256xbf16, #tpu.memory_space<vmem>>, vector<1x8x8x256xbf16>
    %131 = vector.shape_cast %130 : vector<1x8x8x256xbf16> to vector<8x8x256xbf16>
    %132 = vector.shape_cast %131 : vector<8x8x256xbf16> to vector<64x256xbf16>
    %c0_127 = arith.constant 0 : index
    %c0_128 = arith.constant 0 : index
    %c0_129 = arith.constant 0 : index
    %133 = vector.load %arg5[%c0_127, %c0_128, %c0_129] : memref<9x256x256xbf16, #tpu.memory_space<vmem>>, vector<1x256x256xbf16>
    %134 = vector.shape_cast %133 : vector<1x256x256xbf16> to vector<256x256xbf16>
    %cst_130 = arith.constant dense<0.000000e+00> : vector<64x256xf32>
    %135 = tpu.matmul %132, %134, %cst_130 {dimension_numbers = #tpu.dot_dimension_numbers<[1], [0], [0], [1], [0, 0, 1, 1], [], []>} : vector<64x256xbf16>, vector<256x256xbf16>, vector<64x256xf32> -> vector<64x256xf32>
    %136 = arith.addf %129, %135 : vector<64x256xf32>
    %c1_131 = arith.constant 1 : index
    %c0_132 = arith.constant 0 : index
    %c0_133 = arith.constant 0 : index
    %c0_134 = arith.constant 0 : index
    %137 = vector.load %arg9[%c1_131, %c0_132, %c0_133, %c0_134] : memref<3x10x8x256xbf16, #tpu.memory_space<vmem>>, vector<1x8x8x256xbf16>
    %138 = vector.shape_cast %137 : vector<1x8x8x256xbf16> to vector<8x8x256xbf16>
    %139 = vector.shape_cast %138 : vector<8x8x256xbf16> to vector<64x256xbf16>
    %c1_135 = arith.constant 1 : index
    %c0_136 = arith.constant 0 : index
    %c0_137 = arith.constant 0 : index
    %140 = vector.load %arg5[%c1_135, %c0_136, %c0_137] : memref<9x256x256xbf16, #tpu.memory_space<vmem>>, vector<1x256x256xbf16>
    %141 = vector.shape_cast %140 : vector<1x256x256xbf16> to vector<256x256xbf16>
    %cst_138 = arith.constant dense<0.000000e+00> : vector<64x256xf32>
    %142 = tpu.matmul %139, %141, %cst_138 {dimension_numbers = #tpu.dot_dimension_numbers<[1], [0], [0], [1], [0, 0, 1, 1], [], []>} : vector<64x256xbf16>, vector<256x256xbf16>, vector<64x256xf32> -> vector<64x256xf32>
    %143 = arith.addf %136, %142 : vector<64x256xf32>
    %c2_139 = arith.constant 2 : index
    %c0_140 = arith.constant 0 : index
    %c0_141 = arith.constant 0 : index
    %c0_142 = arith.constant 0 : index
    %144 = vector.load %arg9[%c2_139, %c0_140, %c0_141, %c0_142] : memref<3x10x8x256xbf16, #tpu.memory_space<vmem>>, vector<1x8x8x256xbf16>
    %145 = vector.shape_cast %144 : vector<1x8x8x256xbf16> to vector<8x8x256xbf16>
    %146 = vector.shape_cast %145 : vector<8x8x256xbf16> to vector<64x256xbf16>
    %c2_143 = arith.constant 2 : index
    %c0_144 = arith.constant 0 : index
    %c0_145 = arith.constant 0 : index
    %147 = vector.load %arg5[%c2_143, %c0_144, %c0_145] : memref<9x256x256xbf16, #tpu.memory_space<vmem>>, vector<1x256x256xbf16>
    %148 = vector.shape_cast %147 : vector<1x256x256xbf16> to vector<256x256xbf16>
    %cst_146 = arith.constant dense<0.000000e+00> : vector<64x256xf32>
    %149 = tpu.matmul %146, %148, %cst_146 {dimension_numbers = #tpu.dot_dimension_numbers<[1], [0], [0], [1], [0, 0, 1, 1], [], []>} : vector<64x256xbf16>, vector<256x256xbf16>, vector<64x256xf32> -> vector<64x256xf32>
    %150 = arith.addf %143, %149 : vector<64x256xf32>
    %c0_147 = arith.constant 0 : index
    %c1_148 = arith.constant 1 : index
    %c0_149 = arith.constant 0 : index
    %c0_150 = arith.constant 0 : index
    %151 = vector.load %arg9[%c0_147, %c1_148, %c0_149, %c0_150] : memref<3x10x8x256xbf16, #tpu.memory_space<vmem>>, vector<1x8x8x256xbf16>
    %152 = vector.shape_cast %151 : vector<1x8x8x256xbf16> to vector<8x8x256xbf16>
    %153 = vector.shape_cast %152 : vector<8x8x256xbf16> to vector<64x256xbf16>
    %c3_151 = arith.constant 3 : index
    %c0_152 = arith.constant 0 : index
    %c0_153 = arith.constant 0 : index
    %154 = vector.load %arg5[%c3_151, %c0_152, %c0_153] : memref<9x256x256xbf16, #tpu.memory_space<vmem>>, vector<1x256x256xbf16>
    %155 = vector.shape_cast %154 : vector<1x256x256xbf16> to vector<256x256xbf16>
    %cst_154 = arith.constant dense<0.000000e+00> : vector<64x256xf32>
    %156 = tpu.matmul %153, %155, %cst_154 {dimension_numbers = #tpu.dot_dimension_numbers<[1], [0], [0], [1], [0, 0, 1, 1], [], []>} : vector<64x256xbf16>, vector<256x256xbf16>, vector<64x256xf32> -> vector<64x256xf32>
    %157 = arith.addf %150, %156 : vector<64x256xf32>
    %c1_155 = arith.constant 1 : index
    %c1_156 = arith.constant 1 : index
    %c0_157 = arith.constant 0 : index
    %c0_158 = arith.constant 0 : index
    %158 = vector.load %arg9[%c1_155, %c1_156, %c0_157, %c0_158] : memref<3x10x8x256xbf16, #tpu.memory_space<vmem>>, vector<1x8x8x256xbf16>
    %159 = vector.shape_cast %158 : vector<1x8x8x256xbf16> to vector<8x8x256xbf16>
    %160 = vector.shape_cast %159 : vector<8x8x256xbf16> to vector<64x256xbf16>
    %c4_159 = arith.constant 4 : index
    %c0_160 = arith.constant 0 : index
    %c0_161 = arith.constant 0 : index
    %161 = vector.load %arg5[%c4_159, %c0_160, %c0_161] : memref<9x256x256xbf16, #tpu.memory_space<vmem>>, vector<1x256x256xbf16>
    %162 = vector.shape_cast %161 : vector<1x256x256xbf16> to vector<256x256xbf16>
    %cst_162 = arith.constant dense<0.000000e+00> : vector<64x256xf32>
    %163 = tpu.matmul %160, %162, %cst_162 {dimension_numbers = #tpu.dot_dimension_numbers<[1], [0], [0], [1], [0, 0, 1, 1], [], []>} : vector<64x256xbf16>, vector<256x256xbf16>, vector<64x256xf32> -> vector<64x256xf32>
    %164 = arith.addf %157, %163 : vector<64x256xf32>
    %c2_163 = arith.constant 2 : index
    %c1_164 = arith.constant 1 : index
    %c0_165 = arith.constant 0 : index
    %c0_166 = arith.constant 0 : index
    %165 = vector.load %arg9[%c2_163, %c1_164, %c0_165, %c0_166] : memref<3x10x8x256xbf16, #tpu.memory_space<vmem>>, vector<1x8x8x256xbf16>
    %166 = vector.shape_cast %165 : vector<1x8x8x256xbf16> to vector<8x8x256xbf16>
    %167 = vector.shape_cast %166 : vector<8x8x256xbf16> to vector<64x256xbf16>
    %c5_167 = arith.constant 5 : index
    %c0_168 = arith.constant 0 : index
    %c0_169 = arith.constant 0 : index
    %168 = vector.load %arg5[%c5_167, %c0_168, %c0_169] : memref<9x256x256xbf16, #tpu.memory_space<vmem>>, vector<1x256x256xbf16>
    %169 = vector.shape_cast %168 : vector<1x256x256xbf16> to vector<256x256xbf16>
    %cst_170 = arith.constant dense<0.000000e+00> : vector<64x256xf32>
    %170 = tpu.matmul %167, %169, %cst_170 {dimension_numbers = #tpu.dot_dimension_numbers<[1], [0], [0], [1], [0, 0, 1, 1], [], []>} : vector<64x256xbf16>, vector<256x256xbf16>, vector<64x256xf32> -> vector<64x256xf32>
    %171 = arith.addf %164, %170 : vector<64x256xf32>
    %c0_171 = arith.constant 0 : index
    %c2_172 = arith.constant 2 : index
    %c0_173 = arith.constant 0 : index
    %c0_174 = arith.constant 0 : index
    %172 = vector.load %arg9[%c0_171, %c2_172, %c0_173, %c0_174] : memref<3x10x8x256xbf16, #tpu.memory_space<vmem>>, vector<1x8x8x256xbf16>
    %173 = vector.shape_cast %172 : vector<1x8x8x256xbf16> to vector<8x8x256xbf16>
    %174 = vector.shape_cast %173 : vector<8x8x256xbf16> to vector<64x256xbf16>
    %c6_175 = arith.constant 6 : index
    %c0_176 = arith.constant 0 : index
    %c0_177 = arith.constant 0 : index
    %175 = vector.load %arg5[%c6_175, %c0_176, %c0_177] : memref<9x256x256xbf16, #tpu.memory_space<vmem>>, vector<1x256x256xbf16>
    %176 = vector.shape_cast %175 : vector<1x256x256xbf16> to vector<256x256xbf16>
    %cst_178 = arith.constant dense<0.000000e+00> : vector<64x256xf32>
    %177 = tpu.matmul %174, %176, %cst_178 {dimension_numbers = #tpu.dot_dimension_numbers<[1], [0], [0], [1], [0, 0, 1, 1], [], []>} : vector<64x256xbf16>, vector<256x256xbf16>, vector<64x256xf32> -> vector<64x256xf32>
    %178 = arith.addf %171, %177 : vector<64x256xf32>
    %c1_179 = arith.constant 1 : index
    %c2_180 = arith.constant 2 : index
    %c0_181 = arith.constant 0 : index
    %c0_182 = arith.constant 0 : index
    %179 = vector.load %arg9[%c1_179, %c2_180, %c0_181, %c0_182] : memref<3x10x8x256xbf16, #tpu.memory_space<vmem>>, vector<1x8x8x256xbf16>
    %180 = vector.shape_cast %179 : vector<1x8x8x256xbf16> to vector<8x8x256xbf16>
    %181 = vector.shape_cast %180 : vector<8x8x256xbf16> to vector<64x256xbf16>
    %c7_183 = arith.constant 7 : index
    %c0_184 = arith.constant 0 : index
    %c0_185 = arith.constant 0 : index
    %182 = vector.load %arg5[%c7_183, %c0_184, %c0_185] : memref<9x256x256xbf16, #tpu.memory_space<vmem>>, vector<1x256x256xbf16>
    %183 = vector.shape_cast %182 : vector<1x256x256xbf16> to vector<256x256xbf16>
    %cst_186 = arith.constant dense<0.000000e+00> : vector<64x256xf32>
    %184 = tpu.matmul %181, %183, %cst_186 {dimension_numbers = #tpu.dot_dimension_numbers<[1], [0], [0], [1], [0, 0, 1, 1], [], []>} : vector<64x256xbf16>, vector<256x256xbf16>, vector<64x256xf32> -> vector<64x256xf32>
    %185 = arith.addf %178, %184 : vector<64x256xf32>
    %c2_187 = arith.constant 2 : index
    %c2_188 = arith.constant 2 : index
    %c0_189 = arith.constant 0 : index
    %c0_190 = arith.constant 0 : index
    %186 = vector.load %arg9[%c2_187, %c2_188, %c0_189, %c0_190] : memref<3x10x8x256xbf16, #tpu.memory_space<vmem>>, vector<1x8x8x256xbf16>
    %187 = vector.shape_cast %186 : vector<1x8x8x256xbf16> to vector<8x8x256xbf16>
    %188 = vector.shape_cast %187 : vector<8x8x256xbf16> to vector<64x256xbf16>
    %c8_191 = arith.constant 8 : index
    %c0_192 = arith.constant 0 : index
    %c0_193 = arith.constant 0 : index
    %189 = vector.load %arg5[%c8_191, %c0_192, %c0_193] : memref<9x256x256xbf16, #tpu.memory_space<vmem>>, vector<1x256x256xbf16>
    %190 = vector.shape_cast %189 : vector<1x256x256xbf16> to vector<256x256xbf16>
    %cst_194 = arith.constant dense<0.000000e+00> : vector<64x256xf32>
    %191 = tpu.matmul %188, %190, %cst_194 {dimension_numbers = #tpu.dot_dimension_numbers<[1], [0], [0], [1], [0, 0, 1, 1], [], []>} : vector<64x256xbf16>, vector<256x256xbf16>, vector<64x256xf32> -> vector<64x256xf32>
    %192 = arith.addf %185, %191 : vector<64x256xf32>
    %c0_195 = arith.constant 0 : index
    %c0_196 = arith.constant 0 : index
    %193 = vector.load %arg6[%c0_195, %c0_196] : memref<1x256xf32, #tpu.memory_space<vmem>>, vector<1x256xf32>
    %194 = vector.broadcast %193 : vector<1x256xf32> to vector<64x256xf32>
    %195 = arith.mulf %192, %194 : vector<64x256xf32>
    %c0_197 = arith.constant 0 : index
    %c0_198 = arith.constant 0 : index
    %196 = vector.load %arg7[%c0_197, %c0_198] : memref<1x256xf32, #tpu.memory_space<vmem>>, vector<1x256xf32>
    %197 = vector.broadcast %196 : vector<1x256xf32> to vector<64x256xf32>
    %198 = arith.addf %195, %197 : vector<64x256xf32>
    %c0_199 = arith.constant 0 : index
    %c0_200 = arith.constant 0 : index
    %c0_201 = arith.constant 0 : index
    %c0_202 = arith.constant 0 : index
    %199 = vector.load %arg1[%c0_199, %c0_200, %c0_201, %c0_202] : memref<1x8x8x256xbf16, #tpu.memory_space<vmem>>, vector<1x8x8x256xbf16>
    %200 = vector.shape_cast %199 : vector<1x8x8x256xbf16> to vector<8x8x256xbf16>
    %201 = vector.shape_cast %200 : vector<8x8x256xbf16> to vector<64x256xbf16>
    %202 = arith.extf %201 : vector<64x256xbf16> to vector<64x256xf32>
    %203 = arith.addf %198, %202 : vector<64x256xf32>
    %cst_203 = arith.constant 0.000000e+00 : f32
    %204 = vector.broadcast %cst_203 : f32 to vector<64x256xf32>
    %205 = arith.maximumf %203, %204 : vector<64x256xf32>
    %206 = vector.shape_cast %205 : vector<64x256xf32> to vector<1x8x8x256xf32>
    %207 = arith.truncf %206 : vector<1x8x8x256xf32> to vector<1x8x8x256xbf16>
    %c0_204 = arith.constant 0 : index
    %c0_205 = arith.constant 0 : index
    %c0_206 = arith.constant 0 : index
    %c0_207 = arith.constant 0 : index
    %208 = vector.load %arg8[%c0_204, %c0_205, %c0_206, %c0_207] : memref<1x8x8x256xbf16, #tpu.memory_space<vmem>>, vector<1x8x8x256xbf16>
    tpu.vector_store %arg8[%c0_204, %c0_205, %c0_206, %c0_207], %207 {strides = array<i32>} : memref<1x8x8x256xbf16, #tpu.memory_space<vmem>>, vector<1x8x8x256xbf16>,
    return
  }
  func.func @transform_0(%arg0: i32) -> (i32, i32, i32, i32) {
    %c0_i32 = arith.constant 0 : i32
    %c0_i32_0 = arith.constant 0 : i32
    %c0_i32_1 = arith.constant 0 : i32
    %c0_i32_2 = arith.constant 0 : i32
    return %arg0, %c0_i32, %c0_i32_0, %c0_i32_1 : i32, i32, i32, i32
  }
  func.func @transform_1(%arg0: i32) -> (i32, i32, i32) {
    %c0_i32 = arith.constant 0 : i32
    %c0_i32_0 = arith.constant 0 : i32
    %c0_i32_1 = arith.constant 0 : i32
    %c0_i32_2 = arith.constant 0 : i32
    return %c0_i32, %c0_i32_0, %c0_i32_1 : i32, i32, i32
  }
  func.func @transform_2(%arg0: i32) -> (i32, i32) {
    %c0_i32 = arith.constant 0 : i32
    %c0_i32_0 = arith.constant 0 : i32
    %c0_i32_1 = arith.constant 0 : i32
    return %c0_i32, %c0_i32_0 : i32, i32
  }
  func.func @transform_3(%arg0: i32) -> (i32, i32) {
    %c0_i32 = arith.constant 0 : i32
    %c0_i32_0 = arith.constant 0 : i32
    %c0_i32_1 = arith.constant 0 : i32
    return %c0_i32, %c0_i32_0 : i32, i32
  }
  func.func @transform_4(%arg0: i32) -> (i32, i32, i32) {
    %c0_i32 = arith.constant 0 : i32
    %c0_i32_0 = arith.constant 0 : i32
    %c0_i32_1 = arith.constant 0 : i32
    %c0_i32_2 = arith.constant 0 : i32
    return %c0_i32, %c0_i32_0, %c0_i32_1 : i32, i32, i32
  }
  func.func @transform_5(%arg0: i32) -> (i32, i32) {
    %c0_i32 = arith.constant 0 : i32
    %c0_i32_0 = arith.constant 0 : i32
    %c0_i32_1 = arith.constant 0 : i32
    return %c0_i32, %c0_i32_0 : i32, i32
  }
  func.func @transform_6(%arg0: i32) -> (i32, i32) {
    %c0_i32 = arith.constant 0 : i32
    %c0_i32_0 = arith.constant 0 : i32
    %c0_i32_1 = arith.constant 0 : i32
    return %c0_i32, %c0_i32_0 : i32, i32
  }
  func.func @transform_7(%arg0: i32) -> (i32, i32, i32, i32) {
    %c0_i32 = arith.constant 0 : i32
    %c0_i32_0 = arith.constant 0 : i32
    %c0_i32_1 = arith.constant 0 : i32
    %c0_i32_2 = arith.constant 0 : i32
    return %arg0, %c0_i32, %c0_i32_0, %c0_i32_1 : i32, i32, i32, i32
  }
}

</mosaic_0001>

<llo_original>
// kernel: tile.23
$region0: #{tile.23}
  #allocation0 [shape = 's32[1]{0}', space=sflag, size = 0x4, scoped, tag = 'scoped memory for tile.23']
  %s0 = inlined_call_operand.vmem [shape: f32[32], index: 0, kind: input, shape index: {}]
  %s1 = inlined_call_operand.vmem [shape: f32[8,32], index: 1, kind: output, shape index: {}]
  // Predicated region
  $region2: #{tile.23} parent=0 // pred_check
    _
  $region3: #{tile.23} parent=0 // pred_check_branch
    %3 = sbr.rel (0) target = $region5
  $region4: #{tile.23} parent=0 // pred_region
    _
  $region5: #{tile.23} parent=0 // pred_fallthru
    _
  %v4 = vld [vmem:[%s0] ss:$0 sm:$0xff]
  %5 = vst [vmem:[%s1] sm:$0xff] %v4

// kernel: tile.24
$region0: #{tile.24}
  %s0 = inlined_call_operand.vmem [shape: f32[8,32], index: 0, kind: input, shape index: {}]
  %s1 = inlined_call_operand.vmem [shape: f32[1,256], index: 1, kind: output, shape index: {}]
  $region1: #{tile.24} parent=0
    #allocation0 [shape = 'u8[8192]{0}', space=vmem, size = 0x2000, scoped, tag = 'scoped mem for output reshape']
    %s2 = smov 3
    %v3 = vld [vmem:[%s0] ss:$4 sm:%s2]
    %vm4 = vcmask 261120
    %5 = vst.msk [vmem:[#allocation0] ss:$8 sm:$0x3] %vm4, %v3
    %s6 = scalar_lea.vmem %s0, 3
    %s7 = smov 3
    %v8 = vld [vmem:[%s6] ss:$4 sm:%s7]
    %9 = vrot.lane.b32.xlu0 %v8, 96
    %v10 = vpop.permute.xlu0 %9
    %vm11 = vcmask 1048320
    %12 = vst.msk [vmem:[#allocation0] ss:$8 sm:$0x3] %vm11, %v10
    %s13 = scalar_lea.vmem %s0, 2
    %s14 = smov 3
    %v15 = vld [vmem:[%s13] ss:$4 sm:%s14]
    %16 = vrot.lane.b32.xlu0 %v15, 64
    %v17 = vpop.permute.xlu0 %16
    %vm18 = vcmask 785920
    %19 = vst.msk [vmem:[#allocation0] ss:$8 sm:$0x3] %vm18, %v17
    %s20 = scalar_lea.vmem %s0, 1
    %s21 = smov 3
    %v22 = vld [vmem:[%s20] ss:$4 sm:%s21]
    %23 = vrot.lane.b32.xlu0 %v22, 32
    %v24 = vpop.permute.xlu0 %23
    %vm25 = vcmask 523520
    %26 = vst.msk [vmem:[#allocation0] ss:$8 sm:$0x3] %vm25, %v24
    %s28 = sshllo.u32 0, 1
    %v30 = vld [vmem:[#allocation0] sm:%s28]
    %s31 = sshllo.u32 0, 1
    %32 = vst [vmem:[%s1] sm:%s31] %v30
    %s33 = scalar_lea.vmem [#allocation0], 8
    %v34 = vld [vmem:[%s33] sm:%s28]
    %s35 = sshllo.u32 0, 1
    %s36 = scalar_lea.vmem %s1, 1
    %37 = vst [vmem:[%s36] sm:%s35] %v34

// kernel: basic_block_forward.1
$region0: #{basic_block_forward.1}
  #allocation0 [shape = 'u32[]', space=smem, size = 0x4, offset = 0x4, fixed_abs, tag = 'smem constant byte address 0x4 - core index']
  #allocation1 [shape = 'u32[144,128]{1,0:T(1,128)}', space=vmem, size = 0x12000, scoped, tag = 'internal scratch']
  #allocation2 [shape = 'bf16[3,10,8,256]{3,2,1,0:T(8,128)(2,1)}', space=vmem, size = 0x1e000, scoped, tag = 'scratch operand']
  %s0 = inlined_call_operand.vmem [shape: bf16[2,8,8,256], index: 0, kind: input, shape index: {}]
  %s1 = inlined_call_operand.vmem [shape: bf16[9,256,256], index: 1, kind: input, shape index: {}]
  %s2 = inlined_call_operand.vmem [shape: f32[1,256], index: 2, kind: input, shape index: {}]
  %s3 = inlined_call_operand.vmem [shape: f32[1,256], index: 3, kind: input, shape index: {}]
  %s4 = inlined_call_operand.vmem [shape: bf16[9,256,256], index: 4, kind: input, shape index: {}]
  %s5 = inlined_call_operand.vmem [shape: f32[1,256], index: 5, kind: input, shape index: {}]
  %s6 = inlined_call_operand.vmem [shape: f32[1,256], index: 6, kind: input, shape index: {}]
  %s7 = inlined_call_operand.vmem [shape: bf16[2,8,8,256], index: 7, kind: output, shape index: {}]
  %s8 = sld [smem:[#allocation0]]
  $region61: #{basic_block_forward.1} parent=0
    _
  %s10 = ssub.s32 1, %s8
  %s11 = scalar_select 0, %s10, %s8
  loop: start=0, step=1, limit=4
  $region2: #{basic_block_forward.1} parent=0 // loop_pre_header
    _
  $region3: #{basic_block_forward.1} parent=0 // loop_header
    %s13 = sphi 0, %s17
    %p14 = scmp.ge.s32.totalorder %s13, 4
    %s23 = sphi 0, %s25
    %s26 = sphi 0, %s23
    %s27 = sphi 0, %s26
    %s43 = sphi 0, %s27
    %s47 = sphi 0, %s47
    %s49 = sphi 0, %s47
    %s50 = sphi 0, %s49
    %s64 = sphi 0, %s50
    %s68 = sphi 0, %s68
    %s70 = sphi 0, %s68
    %s71 = sphi 0, %s70
    %s85 = sphi 0, %s71
    %s89 = sphi 0, %s89
    %s91 = sphi 0, %s89
    %s92 = sphi 0, %s91
    %s106 = sphi 0, %s92
    %s110 = sphi 0, %s110
    %s112 = sphi 0, %s110
    %s113 = sphi 0, %s112
    %s127 = sphi 0, %s113
    %s131 = sphi 0, %s131
    %s133 = sphi 0, %s131
    %s134 = sphi 0, %s133
    %s148 = sphi 0, %s134
    %s152 = sphi 0, %s152
    %s154 = sphi 0, %s152
    %s155 = sphi 0, %s154
    %s169 = sphi 0, %s155
    %s175 = sphi 0, %s177
    %s178 = sphi 0, %s175
    %s179 = sphi 0, %s178
    %s195 = sphi 0, %s179
  $region4: #{basic_block_forward.1} parent=0 // loop_header_branch
    %16 = sbr.rel (%p14) target = $region8
  $region5: #{basic_block_forward.1} parent=0 // loop_body
    %s18 = ssub.s32 %s13, 1
    %s19 = ssub.s32 %s13, 2
    %s20 = sadd.s32 %s13, 1
    %s21 = ssub.s32 %s13, %s20
    %p22 = scmp.eq.s32.totalorder %s21, 0
    %s24 = sadd.s32 %s23, 1
    %s25 = scalar_select %p22, %s23, %s24
    %p28 = pneg %p22
    %p29 = scmp.eq.s32.totalorder %s13, 1
    %p30 = por %p28, %p29
    %p31 = scmp.ne.s32.totalorder %s23, %s26
    %p32 = scmp.eq.s32.totalorder %s13, 0
    %p33 = por %p31, %p32
    %p34 = scmp.ne.s32.totalorder %s23, %s26
    %p35 = scmp.eq.s32.totalorder %s18, 1
    %p36 = por %p34, %p35
    %p37 = scmp.ne.s32.totalorder %s26, %s27
    %p38 = scmp.eq.s32.totalorder %s18, 0
    %p39 = por %p37, %p38
    %p40 = scmp.ne.s32.totalorder %s26, %s27
    %p41 = scmp.eq.s32.totalorder %s19, 1
    %p42 = por %p40, %p41
    %p44 = scmp.ne.s32.totalorder %s27, %s43
    %p45 = scmp.eq.s32.totalorder %s19, 0
    %p46 = por %p44, %p45
    %s48 = sadd.s32 %s47, 1
    %p51 = scmp.eq.s32.totalorder %s13, 1
    %p52 = scmp.ne.s32.totalorder %s47, %s49
    %p53 = scmp.eq.s32.totalorder %s13, 0
    %p54 = por %p52, %p53
    %p55 = scmp.ne.s32.totalorder %s47, %s49
    %p56 = scmp.eq.s32.totalorder %s18, 1
    %p57 = por %p55, %p56
    %p58 = scmp.ne.s32.totalorder %s49, %s50
    %p59 = scmp.eq.s32.totalorder %s18, 0
    %p60 = por %p58, %p59
    %p61 = scmp.ne.s32.totalorder %s49, %s50
    %p62 = scmp.eq.s32.totalorder %s19, 1
    %p63 = por %p61, %p62
    %p65 = scmp.ne.s32.totalorder %s50, %s64
    %p66 = scmp.eq.s32.totalorder %s19, 0
    %p67 = por %p65, %p66
    %s69 = sadd.s32 %s68, 1
    %p72 = scmp.eq.s32.totalorder %s13, 1
    %p73 = scmp.ne.s32.totalorder %s68, %s70
    %p74 = scmp.eq.s32.totalorder %s13, 0
    %p75 = por %p73, %p74
    %p76 = scmp.ne.s32.totalorder %s68, %s70
    %p77 = scmp.eq.s32.totalorder %s18, 1
    %p78 = por %p76, %p77
    %p79 = scmp.ne.s32.totalorder %s70, %s71
    %p80 = scmp.eq.s32.totalorder %s18, 0
    %p81 = por %p79, %p80
    %p82 = scmp.ne.s32.totalorder %s70, %s71
    %p83 = scmp.eq.s32.totalorder %s19, 1
    %p84 = por %p82, %p83
    %p86 = scmp.ne.s32.totalorder %s71, %s85
    %p87 = scmp.eq.s32.totalorder %s19, 0
    %p88 = por %p86, %p87
    %s90 = sadd.s32 %s89, 1
    %p93 = scmp.eq.s32.totalorder %s13, 1
    %p94 = scmp.ne.s32.totalorder %s89, %s91
    %p95 = scmp.eq.s32.totalorder %s13, 0
    %p96 = por %p94, %p95
    %p97 = scmp.ne.s32.totalorder %s89, %s91
    %p98 = scmp.eq.s32.totalorder %s18, 1
    %p99 = por %p97, %p98
    %p100 = scmp.ne.s32.totalorder %s91, %s92
    %p101 = scmp.eq.s32.totalorder %s18, 0
    %p102 = por %p100, %p101
    %p103 = scmp.ne.s32.totalorder %s91, %s92
    %p104 = scmp.eq.s32.totalorder %s19, 1
    %p105 = por %p103, %p104
    %p107 = scmp.ne.s32.totalorder %s92, %s106
    %p108 = scmp.eq.s32.totalorder %s19, 0
    %p109 = por %p107, %p108
    %s111 = sadd.s32 %s110, 1
    %p114 = scmp.eq.s32.totalorder %s13, 1
    %p115 = scmp.ne.s32.totalorder %s110, %s112
    %p116 = scmp.eq.s32.totalorder %s13, 0
    %p117 = por %p115, %p116
    %p118 = scmp.ne.s32.totalorder %s110, %s112
    %p119 = scmp.eq.s32.totalorder %s18, 1
    %p120 = por %p118, %p119
    %p121 = scmp.ne.s32.totalorder %s112, %s113
    %p122 = scmp.eq.s32.totalorder %s18, 0
    %p123 = por %p121, %p122
    %p124 = scmp.ne.s32.totalorder %s112, %s113
    %p125 = scmp.eq.s32.totalorder %s19, 1
    %p126 = por %p124, %p125
    %p128 = scmp.ne.s32.totalorder %s113, %s127
    %p129 = scmp.eq.s32.totalorder %s19, 0
    %p130 = por %p128, %p129
    %s132 = sadd.s32 %s131, 1
    %p135 = scmp.eq.s32.totalorder %s13, 1
    %p136 = scmp.ne.s32.totalorder %s131, %s133
    %p137 = scmp.eq.s32.totalorder %s13, 0
    %p138 = por %p136, %p137
    %p139 = scmp.ne.s32.totalorder %s131, %s133
    %p140 = scmp.eq.s32.totalorder %s18, 1
    %p141 = por %p139, %p140
    %p142 = scmp.ne.s32.totalorder %s133, %s134
    %p143 = scmp.eq.s32.totalorder %s18, 0
    %p144 = por %p142, %p143
    %p145 = scmp.ne.s32.totalorder %s133, %s134
    %p146 = scmp.eq.s32.totalorder %s19, 1
    %p147 = por %p145, %p146
    %p149 = scmp.ne.s32.totalorder %s134, %s148
    %p150 = scmp.eq.s32.totalorder %s19, 0
    %p151 = por %p149, %p150
    %s153 = sadd.s32 %s152, 1
    %p156 = scmp.eq.s32.totalorder %s13, 1
    %p157 = scmp.ne.s32.totalorder %s152, %s154
    %p158 = scmp.eq.s32.totalorder %s13, 0
    %p159 = por %p157, %p158
    %p160 = scmp.ne.s32.totalorder %s152, %s154
    %p161 = scmp.eq.s32.totalorder %s18, 1
    %p162 = por %p160, %p161
    %p163 = scmp.ne.s32.totalorder %s154, %s155
    %p164 = scmp.eq.s32.totalorder %s18, 0
    %p165 = por %p163, %p164
    %p166 = scmp.ne.s32.totalorder %s154, %s155
    %p167 = scmp.eq.s32.totalorder %s19, 1
    %p168 = por %p166, %p167
    %p170 = scmp.ne.s32.totalorder %s155, %s169
    %p171 = scmp.eq.s32.totalorder %s19, 0
    %p172 = por %p170, %p171
    %s173 = ssub.s32 %s13, %s20
    %p174 = scmp.eq.s32.totalorder %s173, 0
    %s176 = sadd.s32 %s175, 1
    %s177 = scalar_select %p174, %s175, %s176
    %p180 = pneg %p174
    %p181 = scmp.eq.s32.totalorder %s13, 1
    %p182 = por %p180, %p181
    %p183 = scmp.ne.s32.totalorder %s175, %s178
    %p184 = scmp.eq.s32.totalorder %s13, 0
    %p185 = por %p183, %p184
    %p186 = scmp.ne.s32.totalorder %s175, %s178
    %p187 = scmp.eq.s32.totalorder %s18, 1
    %p188 = por %p186, %p187
    %p189 = scmp.ne.s32.totalorder %s178, %s179
    %p190 = scmp.eq.s32.totalorder %s18, 0
    %p191 = por %p189, %p190
    %p192 = scmp.ne.s32.totalorder %s178, %s179
    %p193 = scmp.eq.s32.totalorder %s19, 1
    %p194 = por %p192, %p193
    %p196 = scmp.ne.s32.totalorder %s179, %s195
    %p197 = scmp.eq.s32.totalorder %s19, 0
    %p198 = por %p196, %p197
    %p199 = scmp.le.s32.totalorder 1, %s13
    %p200 = scmp.lt.s32.totalorder %s13, 3
    %p201 = pnand %p199, %p200
    %p202 = pneg %p201
    // Predicated region
    $region9: #{basic_block_forward.1} parent=5 // pred_check
      _
    $region10: #{basic_block_forward.1} parent=5 // pred_check_branch
      %204 = sbr.rel (%p201) target = $region12
    $region11: #{basic_block_forward.1} parent=5 // pred_region
      %s205 = ssub.s32 %s13, 1
      // Predicated region
      $region13: #{basic_block_forward.1} parent=11 // pred_check
        %p206 = pneg %p60
      $region14: #{basic_block_forward.1} parent=11 // pred_check_branch
        %208 = sbr.rel (%p206) target = $region16
      $region15: #{basic_block_forward.1} parent=11 // pred_region
        _
      $region16: #{basic_block_forward.1} parent=11 // pred_fallthru
        _
      // Predicated region
      $region17: #{basic_block_forward.1} parent=11 // pred_check
        %p209 = pneg %p81
      $region18: #{basic_block_forward.1} parent=11 // pred_check_branch
        %211 = sbr.rel (%p209) target = $region20
      $region19: #{basic_block_forward.1} parent=11 // pred_region
        _
      $region20: #{basic_block_forward.1} parent=11 // pred_fallthru
        _
      // Predicated region
      $region21: #{basic_block_forward.1} parent=11 // pred_check
        %p212 = pneg %p102
      $region22: #{basic_block_forward.1} parent=11 // pred_check_branch
        %214 = sbr.rel (%p212) target = $region24
      $region23: #{basic_block_forward.1} parent=11 // pred_region
        _
      $region24: #{basic_block_forward.1} parent=11 // pred_fallthru
        _
      // Predicated region
      $region25: #{basic_block_forward.1} parent=11 // pred_check
        %p215 = pneg %p123
      $region26: #{basic_block_forward.1} parent=11 // pred_check_branch
        %217 = sbr.rel (%p215) target = $region28
      $region27: #{basic_block_forward.1} parent=11 // pred_region
        _
      $region28: #{basic_block_forward.1} parent=11 // pred_fallthru
        _
      // Predicated region
      $region29: #{basic_block_forward.1} parent=11 // pred_check
        %p218 = pneg %p144
      $region30: #{basic_block_forward.1} parent=11 // pred_check_branch
        %220 = sbr.rel (%p218) target = $region32
      $region31: #{basic_block_forward.1} parent=11 // pred_region
        _
      $region32: #{basic_block_forward.1} parent=11 // pred_fallthru
        _
      // Predicated region
      $region33: #{basic_block_forward.1} parent=11 // pred_check
        %p221 = pneg %p165
      $region34: #{basic_block_forward.1} parent=11 // pred_check_branch
        %223 = sbr.rel (%p221) target = $region36
      $region35: #{basic_block_forward.1} parent=11 // pred_region
        _
      $region36: #{basic_block_forward.1} parent=11 // pred_fallthru
        _
    $region12: #{basic_block_forward.1} parent=5 // pred_fallthru
      _
    %p224 = scmp.lt.s32.totalorder %s13, 2
    // Predicated region
    $region37: #{basic_block_forward.1} parent=5 // pred_check
      %p225 = pneg %p224
    $region38: #{basic_block_forward.1} parent=5 // pred_check_branch
      %227 = sbr.rel (%p225) target = $region40
    $region39: #{basic_block_forward.1} parent=5 // pred_region
      // Predicated region
      $region41: #{basic_block_forward.1} parent=39 // pred_check
        %p228 = pneg %p33
      $region42: #{basic_block_forward.1} parent=39 // pred_check_branch
        %230 = sbr.rel (%p228) target = $region44
      $region43: #{basic_block_forward.1} parent=39 // pred_region
        %p231 = scmp.lt.s32.totalorder %s13, 1
        %s232 = scalar_select %p231, %s13, 1
        %s233 = smul.addr %s232, 16
        %s234 = smul.addr %s233, 4
        %s235 = scalar_lea.vmem %s0, %s234
      $region44: #{basic_block_forward.1} parent=39 // pred_fallthru
        _
    $region40: #{basic_block_forward.1} parent=5 // pred_fallthru
      _
    %p236 = scmp.le.s32.totalorder 1, %s13
    %p237 = scmp.lt.s32.totalorder %s13, 3
    %p238 = pnand %p236, %p237
    %p239 = pneg %p238
    // Predicated region
    $region45: #{basic_block_forward.1} parent=5 // pred_check
      _
    $region46: #{basic_block_forward.1} parent=5 // pred_check_branch
      %241 = sbr.rel (%p238) target = $region48
    $region47: #{basic_block_forward.1} parent=5 // pred_region
      %s242 = ssub.s32 %s13, 1
      %p243 = scmp.lt.s32.totalorder %s18, 1
      %s244 = scalar_select %p243, %s18, 1
      %s245 = smul.addr %s244, 16
      %s246 = smul.addr %s245, 4
      %s247 = scalar_lea.vmem %s0, %s246
      %p248 = pneg %p39
      %p249 = pneg %p36
      %p250 = pneg %p60
      %p251 = pneg %p57
      %p252 = pneg %p81
      %p253 = pneg %p78
      %p254 = pneg %p102
      %p255 = pneg %p99
      %p256 = pneg %p123
      %p257 = pneg %p120
      %p258 = pneg %p144
      %p259 = pneg %p141
      %p260 = pneg %p165
      %p261 = pneg %p162
      %p262 = pneg %p191
      %p263 = pneg %p188
      %p264 = scmp.lt.s32.totalorder %s18, 1
      %s265 = scalar_select %p264, %s18, 1
      %s266 = smul.addr %s265, 16
      %s267 = smul.addr %s266, 4
      %s268 = scalar_lea.vmem %s7, %s267
      %p269 = scmp.lt.s32.totalorder %s18, 1
      %s270 = scalar_select %p269, %s18, 1
      %s271 = smul.addr %s270, 16
      %s272 = smul.addr %s271, 4
      %s273 = scalar_lea.vmem %s0, %s272
      %p274 = scmp.lt.s32.totalorder %s18, 1
      %s275 = scalar_select %p274, %s18, 1
      %s276 = smul.addr %s275, 16
      %s277 = smul.addr %s276, 4
      %s278 = scalar_lea.vmem %s7, %s277
      %280 = vst [vmem:[#allocation2] sm:$0xff] 0
      %s281 = scalar_lea.vmem [#allocation2], 72
      %282 = vst [vmem:[%s281] sm:$0xff] 0
      %s283 = scalar_lea.vmem [#allocation2], 80
      %284 = vst [vmem:[%s283] sm:$0xff] 0
      %s285 = scalar_lea.vmem [#allocation2], 152
      %286 = vst [vmem:[%s285] sm:$0xff] 0
      %s287 = scalar_lea.vmem [#allocation2], 160
      %288 = vst [vmem:[%s287] sm:$0xff] 0
      %s289 = scalar_lea.vmem [#allocation2], 232
      %290 = vst [vmem:[%s289] sm:$0xff] 0
      %v291 = vld [vmem:[%s273] sm:$0xff]
      %v292 = vld [vmem:[%s273 + $0x8] sm:$0xff]
      %v293 = vld [vmem:[%s273 + $0x10] sm:$0xff]
      %v294 = vld [vmem:[%s273 + $0x18] sm:$0xff]
      %v295 = vld [vmem:[%s273 + $0x20] sm:$0xff]
      %v296 = vld [vmem:[%s273 + $0x28] sm:$0xff]
      %v297 = vld [vmem:[%s273 + $0x30] sm:$0xff]
      %v298 = vld [vmem:[%s273 + $0x38] sm:$0xff]
      %v299 = vunpack.c.l.bf16 %v291
      %v300 = vunpack.c.h.bf16 %v291
      %v301 = vunpack.c.l.bf16 %v292
      %v302 = vunpack.c.h.bf16 %v292
      %v303 = vunpack.c.l.bf16 %v293
      %v304 = vunpack.c.h.bf16 %v293
      %v305 = vunpack.c.l.bf16 %v294
      %v306 = vunpack.c.h.bf16 %v294
      %v307 = vunpack.c.l.bf16 %v295
      %v308 = vunpack.c.h.bf16 %v295
      %v309 = vunpack.c.l.bf16 %v296
      %v310 = vunpack.c.h.bf16 %v296
      %v311 = vunpack.c.l.bf16 %v297
      %v312 = vunpack.c.h.bf16 %v297
      %v313 = vunpack.c.l.bf16 %v298
      %v314 = vunpack.c.h.bf16 %v298
      %s315 = scalar_lea.vmem [#allocation2], 88
      %316 = vst [vmem:[%s315] sm:$0xff] %v291
      %317 = vst [vmem:[%s315 + $0x8] sm:$0xff] %v292
      %318 = vst [vmem:[%s315 + $0x10] sm:$0xff] %v293
      %319 = vst [vmem:[%s315 + $0x18] sm:$0xff] %v294
      %320 = vst [vmem:[%s315 + $0x20] sm:$0xff] %v295
      %321 = vst [vmem:[%s315 + $0x28] sm:$0xff] %v296
      %322 = vst [vmem:[%s315 + $0x30] sm:$0xff] %v297
      %323 = vst [vmem:[%s315 + $0x38] sm:$0xff] %v298
      %v340 = vrot.slane %v299, 7
      %v341 = vrot.slane %v300, 7
      %v342 = vrot.slane %v301, 7
      %v343 = vrot.slane %v302, 7
      %v344 = vrot.slane %v303, 7
      %v345 = vrot.slane %v304, 7
      %v346 = vrot.slane %v305, 7
      %v347 = vrot.slane %v306, 7
      %v348 = vrot.slane %v307, 7
      %v349 = vrot.slane %v308, 7
      %v350 = vrot.slane %v309, 7
      %v351 = vrot.slane %v310, 7
      %v352 = vrot.slane %v311, 7
      %v353 = vrot.slane %v312, 7
      %v354 = vrot.slane %v313, 7
      %v355 = vrot.slane %v314, 7
      %vm372 = vcmask 1040384
      %v373 = vsel %vm372, 0.0, %v340
      %v374 = vsel %vm372, 0.0, %v341
      %v375 = vsel %vm372, 0.0, %v342
      %v376 = vsel %vm372, 0.0, %v343
      %v377 = vsel %vm372, 0.0, %v344
      %v378 = vsel %vm372, 0.0, %v345
      %v379 = vsel %vm372, 0.0, %v346
      %v380 = vsel %vm372, 0.0, %v347
      %v381 = vsel %vm372, 0.0, %v348
      %v382 = vsel %vm372, 0.0, %v349
      %v383 = vsel %vm372, 0.0, %v350
      %v384 = vsel %vm372, 0.0, %v351
      %v385 = vsel %vm372, 0.0, %v352
      %v386 = vsel %vm372, 0.0, %v353
      %v387 = vsel %vm372, 0.0, %v354
      %v388 = vsel %vm372, 0.0, %v355
      %v389 = vpack.c.bf16 %v373, %v373
      %v390 = vpack.c.bf16 %v374, %v374
      %v391 = vpack.c.bf16 %v375, %v375
      %v392 = vpack.c.bf16 %v376, %v376
      %v393 = vpack.c.bf16 %v377, %v377
      %v394 = vpack.c.bf16 %v378, %v378
      %v395 = vpack.c.bf16 %v379, %v379
      %v396 = vpack.c.bf16 %v380, %v380
      %v397 = vpack.c.bf16 %v381, %v381
      %v398 = vpack.c.bf16 %v382, %v382
      %v399 = vpack.c.bf16 %v383, %v383
      %v400 = vpack.c.bf16 %v384, %v384
      %v401 = vpack.c.bf16 %v385, %v385
      %v402 = vpack.c.bf16 %v386, %v386
      %v403 = vpack.c.bf16 %v387, %v387
      %v404 = vpack.c.bf16 %v388, %v388
      %v421 = vunpack.c.l.b16 %v389
      %v422 = vunpack.c.l.b16 %v390
      %v423 = vunpack.c.l.b16 %v391
      %v424 = vunpack.c.l.b16 %v392
      %v425 = vunpack.c.l.b16 %v393
      %v426 = vunpack.c.l.b16 %v394
      %v427 = vunpack.c.l.b16 %v395
      %v428 = vunpack.c.l.b16 %v396
      %v429 = vunpack.c.l.b16 %v397
      %v430 = vunpack.c.l.b16 %v398
      %v431 = vunpack.c.l.b16 %v399
      %v432 = vunpack.c.l.b16 %v400
      %v433 = vunpack.c.l.b16 %v401
      %v434 = vunpack.c.l.b16 %v402
      %v435 = vunpack.c.l.b16 %v403
      %v436 = vunpack.c.l.b16 %v404
      %v437 = vpack.c.b16 %v422, %v421
      %v438 = vpack.c.b16 %v424, %v423
      %v439 = vpack.c.b16 %v426, %v425
      %v440 = vpack.c.b16 %v428, %v427
      %v441 = vpack.c.b16 %v430, %v429
      %v442 = vpack.c.b16 %v432, %v431
      %v443 = vpack.c.b16 %v434, %v433
      %v444 = vpack.c.b16 %v436, %v435
      %s453 = scalar_lea.vmem [#allocation2], 8
      %454 = vst [vmem:[%s453] sm:$0xff] %v437
      %455 = vst [vmem:[%s453 + $0x8] sm:$0xff] %v438
      %456 = vst [vmem:[%s453 + $0x10] sm:$0xff] %v439
      %457 = vst [vmem:[%s453 + $0x18] sm:$0xff] %v440
      %458 = vst [vmem:[%s453 + $0x20] sm:$0xff] %v441
      %459 = vst [vmem:[%s453 + $0x28] sm:$0xff] %v442
      %460 = vst [vmem:[%s453 + $0x30] sm:$0xff] %v443
      %461 = vst [vmem:[%s453 + $0x38] sm:$0xff] %v444
      %v462 = vrot.slane %v299, 1
      %v463 = vrot.slane %v300, 1
      %v464 = vrot.slane %v301, 1
      %v465 = vrot.slane %v302, 1
      %v466 = vrot.slane %v303, 1
      %v467 = vrot.slane %v304, 1
      %v468 = vrot.slane %v305, 1
      %v469 = vrot.slane %v306, 1
      %v470 = vrot.slane %v307, 1
      %v471 = vrot.slane %v308, 1
      %v472 = vrot.slane %v309, 1
      %v473 = vrot.slane %v310, 1
      %v474 = vrot.slane %v311, 1
      %v475 = vrot.slane %v312, 1
      %v476 = vrot.slane %v313, 1
      %v477 = vrot.slane %v314, 1
      %vm494 = vcmask 1046528
      %v495 = vsel %vm494, %v462, 0.0
      %v496 = vsel %vm494, %v463, 0.0
      %v497 = vsel %vm494, %v464, 0.0
      %v498 = vsel %vm494, %v465, 0.0
      %v499 = vsel %vm494, %v466, 0.0
      %v500 = vsel %vm494, %v467, 0.0
      %v501 = vsel %vm494, %v468, 0.0
      %v502 = vsel %vm494, %v469, 0.0
      %v503 = vsel %vm494, %v470, 0.0
      %v504 = vsel %vm494, %v471, 0.0
      %v505 = vsel %vm494, %v472, 0.0
      %v506 = vsel %vm494, %v473, 0.0
      %v507 = vsel %vm494, %v474, 0.0
      %v508 = vsel %vm494, %v475, 0.0
      %v509 = vsel %vm494, %v476, 0.0
      %v510 = vsel %vm494, %v477, 0.0
      %v511 = vpack.c.bf16 %v495, %v495
      %v512 = vpack.c.bf16 %v496, %v496
      %v513 = vpack.c.bf16 %v497, %v497
      %v514 = vpack.c.bf16 %v498, %v498
      %v515 = vpack.c.bf16 %v499, %v499
      %v516 = vpack.c.bf16 %v500, %v500
      %v517 = vpack.c.bf16 %v501, %v501
      %v518 = vpack.c.bf16 %v502, %v502
      %v519 = vpack.c.bf16 %v503, %v503
      %v520 = vpack.c.bf16 %v504, %v504
      %v521 = vpack.c.bf16 %v505, %v505
      %v522 = vpack.c.bf16 %v506, %v506
      %v523 = vpack.c.bf16 %v507, %v507
      %v524 = vpack.c.bf16 %v508, %v508
      %v525 = vpack.c.bf16 %v509, %v509
      %v526 = vpack.c.bf16 %v510, %v510
      %v543 = vunpack.c.l.b16 %v511
      %v544 = vunpack.c.l.b16 %v512
      %v545 = vunpack.c.l.b16 %v513
      %v546 = vunpack.c.l.b16 %v514
      %v547 = vunpack.c.l.b16 %v515
      %v548 = vunpack.c.l.b16 %v516
      %v549 = vunpack.c.l.b16 %v517
      %v550 = vunpack.c.l.b16 %v518
      %v551 = vunpack.c.l.b16 %v519
      %v552 = vunpack.c.l.b16 %v520
      %v553 = vunpack.c.l.b16 %v521
      %v554 = vunpack.c.l.b16 %v522
      %v555 = vunpack.c.l.b16 %v523
      %v556 = vunpack.c.l.b16 %v524
      %v557 = vunpack.c.l.b16 %v525
      %v558 = vunpack.c.l.b16 %v526
      %v559 = vpack.c.b16 %v544, %v543
      %v560 = vpack.c.b16 %v546, %v545
      %v561 = vpack.c.b16 %v548, %v547
      %v562 = vpack.c.b16 %v550, %v549
      %v563 = vpack.c.b16 %v552, %v551
      %v564 = vpack.c.b16 %v554, %v553
      %v565 = vpack.c.b16 %v556, %v555
      %v566 = vpack.c.b16 %v558, %v557
      %s575 = scalar_lea.vmem [#allocation2], 168
      %576 = vst [vmem:[%s575] sm:$0xff] %v559
      %577 = vst [vmem:[%s575 + $0x8] sm:$0xff] %v560
      %578 = vst [vmem:[%s575 + $0x10] sm:$0xff] %v561
      %579 = vst [vmem:[%s575 + $0x18] sm:$0xff] %v562
      %580 = vst [vmem:[%s575 + $0x20] sm:$0xff] %v563
      %581 = vst [vmem:[%s575 + $0x28] sm:$0xff] %v564
      %582 = vst [vmem:[%s575 + $0x30] sm:$0xff] %v565
      %583 = vst [vmem:[%s575 + $0x38] sm:$0xff] %v566
      %v584 = vld [vmem:[#allocation2] sm:$0xff]
      %v585 = vld [vmem:[#allocation2 + $0x8] sm:$0xff]
      %v586 = vld [vmem:[#allocation2 + $0x10] sm:$0xff]
      %v587 = vld [vmem:[#allocation2 + $0x18] sm:$0xff]
      %v588 = vld [vmem:[#allocation2 + $0x20] sm:$0xff]
      %v589 = vld [vmem:[#allocation2 + $0x28] sm:$0xff]
      %v590 = vld [vmem:[#allocation2 + $0x30] sm:$0xff]
      %v591 = vld [vmem:[#allocation2 + $0x38] sm:$0xff]
      %v592 = vld [vmem:[%s1] sm:$0xff]
      %v593 = vld [vmem:[%s1 + $0x8] sm:$0xff]
      %v594 = vld [vmem:[%s1 + $0x10] sm:$0xff]
      %v595 = vld [vmem:[%s1 + $0x18] sm:$0xff]
      %v596 = vld [vmem:[%s1 + $0x20] sm:$0xff]
      %v597 = vld [vmem:[%s1 + $0x28] sm:$0xff]
      %v598 = vld [vmem:[%s1 + $0x30] sm:$0xff]
      %v599 = vld [vmem:[%s1 + $0x38] sm:$0xff]
      %v600 = vld [vmem:[%s1 + $0x40] sm:$0xff]
      %v601 = vld [vmem:[%s1 + $0x48] sm:$0xff]
      %v602 = vld [vmem:[%s1 + $0x50] sm:$0xff]
      %v603 = vld [vmem:[%s1 + $0x58] sm:$0xff]
      %v604 = vld [vmem:[%s1 + $0x60] sm:$0xff]
      %v605 = vld [vmem:[%s1 + $0x68] sm:$0xff]
      %v606 = vld [vmem:[%s1 + $0x70] sm:$0xff]
      %v607 = vld [vmem:[%s1 + $0x78] sm:$0xff]
      %v608 = vld [vmem:[%s1 + $0x80] sm:$0xff]
      %v609 = vld [vmem:[%s1 + $0x88] sm:$0xff]
      %v610 = vld [vmem:[%s1 + $0x90] sm:$0xff]
      %v611 = vld [vmem:[%s1 + $0x98] sm:$0xff]
      %v612 = vld [vmem:[%s1 + $0xa0] sm:$0xff]
      %v613 = vld [vmem:[%s1 + $0xa8] sm:$0xff]
      %v614 = vld [vmem:[%s1 + $0xb0] sm:$0xff]
      %v615 = vld [vmem:[%s1 + $0xb8] sm:$0xff]
      %v616 = vld [vmem:[%s1 + $0xc0] sm:$0xff]
      %v617 = vld [vmem:[%s1 + $0xc8] sm:$0xff]
      %v618 = vld [vmem:[%s1 + $0xd0] sm:$0xff]
      %v619 = vld [vmem:[%s1 + $0xd8] sm:$0xff]
      %v620 = vld [vmem:[%s1 + $0xe0] sm:$0xff]
      %v621 = vld [vmem:[%s1 + $0xe8] sm:$0xff]
      %v622 = vld [vmem:[%s1 + $0xf0] sm:$0xff]
      %v623 = vld [vmem:[%s1 + $0xf8] sm:$0xff]
      %v624 = vld [vmem:[%s283] sm:$0xff]
      %v625 = vld [vmem:[%s283 + $0x8] sm:$0xff]
      %v626 = vld [vmem:[%s283 + $0x10] sm:$0xff]
      %v627 = vld [vmem:[%s283 + $0x18] sm:$0xff]
      %v628 = vld [vmem:[%s283 + $0x20] sm:$0xff]
      %v629 = vld [vmem:[%s283 + $0x28] sm:$0xff]
      %v630 = vld [vmem:[%s283 + $0x30] sm:$0xff]
      %v631 = vld [vmem:[%s283 + $0x38] sm:$0xff]
      %s632 = scalar_lea.vmem %s1, 256
      %v633 = vld [vmem:[%s632] sm:$0xff]
      %v634 = vld [vmem:[%s632 + $0x8] sm:$0xff]
      %v635 = vld [vmem:[%s632 + $0x10] sm:$0xff]
      %v636 = vld [vmem:[%s632 + $0x18] sm:$0xff]
      %v637 = vld [vmem:[%s632 + $0x20] sm:$0xff]
      %v638 = vld [vmem:[%s632 + $0x28] sm:$0xff]
      %v639 = vld [vmem:[%s632 + $0x30] sm:$0xff]
      %v640 = vld [vmem:[%s632 + $0x38] sm:$0xff]
      %v641 = vld [vmem:[%s632 + $0x40] sm:$0xff]
      %v642 = vld [vmem:[%s632 + $0x48] sm:$0xff]
      %v643 = vld [vmem:[%s632 + $0x50] sm:$0xff]
      %v644 = vld [vmem:[%s632 + $0x58] sm:$0xff]
      %v645 = vld [vmem:[%s632 + $0x60] sm:$0xff]
      %v646 = vld [vmem:[%s632 + $0x68] sm:$0xff]
      %v647 = vld [vmem:[%s632 + $0x70] sm:$0xff]
      %v648 = vld [vmem:[%s632 + $0x78] sm:$0xff]
      %v649 = vld [vmem:[%s632 + $0x80] sm:$0xff]
      %v650 = vld [vmem:[%s632 + $0x88] sm:$0xff]
      %v651 = vld [vmem:[%s632 + $0x90] sm:$0xff]
      %v652 = vld [vmem:[%s632 + $0x98] sm:$0xff]
      %v653 = vld [vmem:[%s632 + $0xa0] sm:$0xff]
      %v654 = vld [vmem:[%s632 + $0xa8] sm:$0xff]
      %v655 = vld [vmem:[%s632 + $0xb0] sm:$0xff]
      %v656 = vld [vmem:[%s632 + $0xb8] sm:$0xff]
      %v657 = vld [vmem:[%s632 + $0xc0] sm:$0xff]
      %v658 = vld [vmem:[%s632 + $0xc8] sm:$0xff]
      %v659 = vld [vmem:[%s632 + $0xd0] sm:$0xff]
      %v660 = vld [vmem:[%s632 + $0xd8] sm:$0xff]
      %v661 = vld [vmem:[%s632 + $0xe0] sm:$0xff]
      %v662 = vld [vmem:[%s632 + $0xe8] sm:$0xff]
      %v663 = vld [vmem:[%s632 + $0xf0] sm:$0xff]
      %v664 = vld [vmem:[%s632 + $0xf8] sm:$0xff]
      %v673 = vunpack.c.l.b16 %v624
      %v674 = vunpack.c.h.b16 %v624
      %v675 = vunpack.c.l.b16 %v625
      %v676 = vunpack.c.h.b16 %v625
      %v677 = vunpack.c.l.b16 %v626
      %v678 = vunpack.c.h.b16 %v626
      %v679 = vunpack.c.l.b16 %v627
      %v680 = vunpack.c.h.b16 %v627
      %v681 = vunpack.c.l.b16 %v628
      %v682 = vunpack.c.h.b16 %v628
      %v683 = vunpack.c.l.b16 %v629
      %v684 = vunpack.c.h.b16 %v629
      %v685 = vunpack.c.l.b16 %v630
      %v686 = vunpack.c.h.b16 %v630
      %v687 = vunpack.c.l.b16 %v631
      %v688 = vunpack.c.h.b16 %v631
      %v689 = vpack.c.b16 %v675, %v673
      %v690 = vpack.c.b16 %v676, %v674
      %v691 = vpack.c.b16 %v679, %v677
      %v692 = vpack.c.b16 %v680, %v678
      %v693 = vpack.c.b16 %v683, %v681
      %v694 = vpack.c.b16 %v684, %v682
      %v695 = vpack.c.b16 %v687, %v685
      %v696 = vpack.c.b16 %v688, %v686
      %v737 = vunpack.c.l.b16 %v633
      %v738 = vunpack.c.h.b16 %v633
      %v739 = vunpack.c.l.b16 %v634
      %v740 = vunpack.c.h.b16 %v634
      %v741 = vunpack.c.l.b16 %v635
      %v742 = vunpack.c.h.b16 %v635
      %v743 = vunpack.c.l.b16 %v636
      %v744 = vunpack.c.h.b16 %v636
      %v745 = vunpack.c.l.b16 %v637
      %v746 = vunpack.c.h.b16 %v637
      %v747 = vunpack.c.l.b16 %v638
      %v748 = vunpack.c.h.b16 %v638
      %v749 = vunpack.c.l.b16 %v639
      %v750 = vunpack.c.h.b16 %v639
      %v751 = vunpack.c.l.b16 %v640
      %v752 = vunpack.c.h.b16 %v640
      %v753 = vunpack.c.l.b16 %v641
      %v754 = vunpack.c.h.b16 %v641
      %v755 = vunpack.c.l.b16 %v642
      %v756 = vunpack.c.h.b16 %v642
      %v757 = vunpack.c.l.b16 %v643
      %v758 = vunpack.c.h.b16 %v643
      %v759 = vunpack.c.l.b16 %v644
      %v760 = vunpack.c.h.b16 %v644
      %v761 = vunpack.c.l.b16 %v645
      %v762 = vunpack.c.h.b16 %v645
      %v763 = vunpack.c.l.b16 %v646
      %v764 = vunpack.c.h.b16 %v646
      %v765 = vunpack.c.l.b16 %v647
      %v766 = vunpack.c.h.b16 %v647
      %v767 = vunpack.c.l.b16 %v648
      %v768 = vunpack.c.h.b16 %v648
      %v769 = vunpack.c.l.b16 %v649
      %v770 = vunpack.c.h.b16 %v649
      %v771 = vunpack.c.l.b16 %v650
      %v772 = vunpack.c.h.b16 %v650
      %v773 = vunpack.c.l.b16 %v651
      %v774 = vunpack.c.h.b16 %v651
      %v775 = vunpack.c.l.b16 %v652
      %v776 = vunpack.c.h.b16 %v652
      %v777 = vunpack.c.l.b16 %v653
      %v778 = vunpack.c.h.b16 %v653
      %v779 = vunpack.c.l.b16 %v654
      %v780 = vunpack.c.h.b16 %v654
      %v781 = vunpack.c.l.b16 %v655
      %v782 = vunpack.c.h.b16 %v655
      %v783 = vunpack.c.l.b16 %v656
      %v784 = vunpack.c.h.b16 %v656
      %v785 = vunpack.c.l.b16 %v657
      %v786 = vunpack.c.h.b16 %v657
      %v787 = vunpack.c.l.b16 %v658
      %v788 = vunpack.c.h.b16 %v658
      %v789 = vunpack.c.l.b16 %v659
      %v790 = vunpack.c.h.b16 %v659
      %v791 = vunpack.c.l.b16 %v660
      %v792 = vunpack.c.h.b16 %v660
      %v793 = vunpack.c.l.b16 %v661
      %v794 = vunpack.c.h.b16 %v661
      %v795 = vunpack.c.l.b16 %v662
      %v796 = vunpack.c.h.b16 %v662
      %v797 = vunpack.c.l.b16 %v663
      %v798 = vunpack.c.h.b16 %v663
      %v799 = vunpack.c.l.b16 %v664
      %v800 = vunpack.c.h.b16 %v664
      %v801 = vpack.c.b16 %v739, %v737
      %v802 = vpack.c.b16 %v740, %v738
      %v803 = vpack.c.b16 %v743, %v741
      %v804 = vpack.c.b16 %v744, %v742
      %v805 = vpack.c.b16 %v747, %v745
      %v806 = vpack.c.b16 %v748, %v746
      %v807 = vpack.c.b16 %v751, %v749
      %v808 = vpack.c.b16 %v752, %v750
      %v809 = vpack.c.b16 %v755, %v753
      %v810 = vpack.c.b16 %v756, %v754
      %v811 = vpack.c.b16 %v759, %v757
      %v812 = vpack.c.b16 %v760, %v758
      %v813 = vpack.c.b16 %v763, %v761
      %v814 = vpack.c.b16 %v764, %v762
      %v815 = vpack.c.b16 %v767, %v765
      %v816 = vpack.c.b16 %v768, %v766
      %v817 = vpack.c.b16 %v771, %v769
      %v818 = vpack.c.b16 %v772, %v770
      %v819 = vpack.c.b16 %v775, %v773
      %v820 = vpack.c.b16 %v776, %v774
      %v821 = vpack.c.b16 %v779, %v777
      %v822 = vpack.c.b16 %v780, %v778
      %v823 = vpack.c.b16 %v783, %v781
      %v824 = vpack.c.b16 %v784, %v782
      %v825 = vpack.c.b16 %v787, %v785
      %v826 = vpack.c.b16 %v788, %v786
      %v827 = vpack.c.b16 %v791, %v789
      %v828 = vpack.c.b16 %v792, %v790
      %v829 = vpack.c.b16 %v795, %v793
      %v830 = vpack.c.b16 %v796, %v794
      %v831 = vpack.c.b16 %v799, %v797
      %v832 = vpack.c.b16 %v800, %v798
      %865 = vmatprep.subr.bf16.mxu0 %v802
      %866 = vmatpush1.bf16.msra.mxu0 %v801
      %867 = vmatprep.subr.bf16.mxu0 %v804
      %868 = vmatpush1.bf16.msra.mxu0 %v803
      %869 = vmatprep.subr.bf16.mxu0 %v806
      %870 = vmatpush1.bf16.msra.mxu0 %v805
      %871 = vmatprep.subr.bf16.mxu0 %v808
      %872 = vmatpush1.bf16.msra.mxu0 %v807
      %873 = vmatprep.subr.bf16.mxu0 %v810
      %874 = vmatpush1.bf16.msra.mxu0 %v809
      %875 = vmatprep.subr.bf16.mxu0 %v812
      %876 = vmatpush1.bf16.msra.mxu0 %v811
      %877 = vmatprep.subr.bf16.mxu0 %v814
      %878 = vmatpush1.bf16.msra.mxu0 %v813
      %879 = vmatprep.subr.bf16.mxu0 %v816
      %880 = vmatpush1.bf16.msra.mxu0 %v815
      %881 = vmatprep.subr.bf16.mxu0 %v818
      %882 = vmatpush1.bf16.msra.mxu0 %v817
      %883 = vmatprep.subr.bf16.mxu0 %v820
      %884 = vmatpush1.bf16.msra.mxu0 %v819
      %885 = vmatprep.subr.bf16.mxu0 %v822
      %886 = vmatpush1.bf16.msra.mxu0 %v821
      %887 = vmatprep.subr.bf16.mxu0 %v824
      %888 = vmatpush1.bf16.msra.mxu0 %v823
      %889 = vmatprep.subr.bf16.mxu0 %v826
      %890 = vmatpush1.bf16.msra.mxu0 %v825
      %891 = vmatprep.subr.bf16.mxu0 %v828
      %892 = vmatpush1.bf16.msra.mxu0 %v827
      %893 = vmatprep.subr.bf16.mxu0 %v830
      %894 = vmatpush1.bf16.msra.mxu0 %v829
      %895 = vmatprep.subr.bf16.mxu0 %v832
      %896 = vmatpush1.bf16.msra.mxu0 %v831
      %897 = vmatprep.mubr.bf16.mxu0 %v690
      %898 = vmatmul.mubr.bf16.gmra.mrb[0].mxu0 %v689
      %v899 = vpop.f32.mrb[0].mxu0
      %v900 = vadd.f32 0.0, %v899
      %v901 = vpop.f32.mrb[0].mxu0
      %v902 = vadd.f32 0.0, %v901
      %v903 = vpop.f32.mrb[0].mxu0
      %v904 = vadd.f32 0.0, %v903
      %v905 = vpop.f32.mrb[0].mxu0
      %v906 = vadd.f32 0.0, %v905
      %907 = vmatprep.mubr.bf16.mxu0 %v692
      %908 = vmatmul.mubr.bf16.gmra.mrb[0].mxu0 %v691
      %v909 = vpop.f32.mrb[0].mxu0
      %v910 = vadd.f32 0.0, %v909
      %v911 = vpop.f32.mrb[0].mxu0
      %v912 = vadd.f32 0.0, %v911
      %v913 = vpop.f32.mrb[0].mxu0
      %v914 = vadd.f32 0.0, %v913
      %v915 = vpop.f32.mrb[0].mxu0
      %v916 = vadd.f32 0.0, %v915
      %917 = vmatprep.mubr.bf16.mxu0 %v694
      %918 = vmatmul.mubr.bf16.gmra.mrb[0].mxu0 %v693
      %v919 = vpop.f32.mrb[0].mxu0
      %v920 = vadd.f32 0.0, %v919
      %v921 = vpop.f32.mrb[0].mxu0
      %v922 = vadd.f32 0.0, %v921
      %v923 = vpop.f32.mrb[0].mxu0
      %v924 = vadd.f32 0.0, %v923
      %v925 = vpop.f32.mrb[0].mxu0
      %v926 = vadd.f32 0.0, %v925
      %927 = vmatprep.mubr.bf16.mxu0 %v696
      %928 = vmatmul.mubr.bf16.gmra.mrb[0].mxu0 %v695
      %v929 = vpop.f32.mrb[0].mxu0
      %v930 = vadd.f32 0.0, %v929
      %v931 = vpop.f32.mrb[0].mxu0
      %v932 = vadd.f32 0.0, %v931
      %v933 = vpop.f32.mrb[0].mxu0
      %v934 = vadd.f32 0.0, %v933
      %v935 = vpop.f32.mrb[0].mxu0
      %v936 = vadd.f32 0.0, %v935
      %937 = vdwg.mxu0
      %v946 = vunpack.c.l.b16 %v584
      %v947 = vunpack.c.h.b16 %v584
      %v948 = vunpack.c.l.b16 %v585
      %v949 = vunpack.c.h.b16 %v585
      %v950 = vunpack.c.l.b16 %v586
      %v951 = vunpack.c.h.b16 %v586
      %v952 = vunpack.c.l.b16 %v587
      %v953 = vunpack.c.h.b16 %v587
      %v954 = vunpack.c.l.b16 %v588
      %v955 = vunpack.c.h.b16 %v588
      %v956 = vunpack.c.l.b16 %v589
      %v957 = vunpack.c.h.b16 %v589
      %v958 = vunpack.c.l.b16 %v590
      %v959 = vunpack.c.h.b16 %v590
      %v960 = vunpack.c.l.b16 %v591
      %v961 = vunpack.c.h.b16 %v591
      %v962 = vpack.c.b16 %v948, %v946
      %v963 = vpack.c.b16 %v949, %v947
      %v964 = vpack.c.b16 %v952, %v950
      %v965 = vpack.c.b16 %v953, %v951
      %v966 = vpack.c.b16 %v956, %v954
      %v967 = vpack.c.b16 %v957, %v955
      %v968 = vpack.c.b16 %v960, %v958
      %v969 = vpack.c.b16 %v961, %v959
      %v1010 = vunpack.c.l.b16 %v592
      %v1011 = vunpack.c.h.b16 %v592
      %v1012 = vunpack.c.l.b16 %v593
      %v1013 = vunpack.c.h.b16 %v593
      %v1014 = vunpack.c.l.b16 %v594
      %v1015 = vunpack.c.h.b16 %v594
      %v1016 = vunpack.c.l.b16 %v595
      %v1017 = vunpack.c.h.b16 %v595
      %v1018 = vunpack.c.l.b16 %v596
      %v1019 = vunpack.c.h.b16 %v596
      %v1020 = vunpack.c.l.b16 %v597
      %v1021 = vunpack.c.h.b16 %v597
      %v1022 = vunpack.c.l.b16 %v598
      %v1023 = vunpack.c.h.b16 %v598
      %v1024 = vunpack.c.l.b16 %v599
      %v1025 = vunpack.c.h.b16 %v599
      %v1026 = vunpack.c.l.b16 %v600
      %v1027 = vunpack.c.h.b16 %v600
      %v1028 = vunpack.c.l.b16 %v601
      %v1029 = vunpack.c.h.b16 %v601
      %v1030 = vunpack.c.l.b16 %v602
      %v1031 = vunpack.c.h.b16 %v602
      %v1032 = vunpack.c.l.b16 %v603
      %v1033 = vunpack.c.h.b16 %v603
      %v1034 = vunpack.c.l.b16 %v604
      %v1035 = vunpack.c.h.b16 %v604
      %v1036 = vunpack.c.l.b16 %v605
      %v1037 = vunpack.c.h.b16 %v605
      %v1038 = vunpack.c.l.b16 %v606
      %v1039 = vunpack.c.h.b16 %v606
      %v1040 = vunpack.c.l.b16 %v607
      %v1041 = vunpack.c.h.b16 %v607
      %v1042 = vunpack.c.l.b16 %v608
      %v1043 = vunpack.c.h.b16 %v608
      %v1044 = vunpack.c.l.b16 %v609
      %v1045 = vunpack.c.h.b16 %v609
      %v1046 = vunpack.c.l.b16 %v610
      %v1047 = vunpack.c.h.b16 %v610
      %v1048 = vunpack.c.l.b16 %v611
      %v1049 = vunpack.c.h.b16 %v611
      %v1050 = vunpack.c.l.b16 %v612
      %v1051 = vunpack.c.h.b16 %v612
      %v1052 = vunpack.c.l.b16 %v613
      %v1053 = vunpack.c.h.b16 %v613
      %v1054 = vunpack.c.l.b16 %v614
      %v1055 = vunpack.c.h.b16 %v614
      %v1056 = vunpack.c.l.b16 %v615
      %v1057 = vunpack.c.h.b16 %v615
      %v1058 = vunpack.c.l.b16 %v616
      %v1059 = vunpack.c.h.b16 %v616
      %v1060 = vunpack.c.l.b16 %v617
      %v1061 = vunpack.c.h.b16 %v617
      %v1062 = vunpack.c.l.b16 %v618
      %v1063 = vunpack.c.h.b16 %v618
      %v1064 = vunpack.c.l.b16 %v619
      %v1065 = vunpack.c.h.b16 %v619
      %v1066 = vunpack.c.l.b16 %v620
      %v1067 = vunpack.c.h.b16 %v620
      %v1068 = vunpack.c.l.b16 %v621
      %v1069 = vunpack.c.h.b16 %v621
      %v1070 = vunpack.c.l.b16 %v622
      %v1071 = vunpack.c.h.b16 %v622
      %v1072 = vunpack.c.l.b16 %v623
      %v1073 = vunpack.c.h.b16 %v623
      %v1074 = vpack.c.b16 %v1012, %v1010
      %v1075 = vpack.c.b16 %v1013, %v1011
      %v1076 = vpack.c.b16 %v1016, %v1014
      %v1077 = vpack.c.b16 %v1017, %v1015
      %v1078 = vpack.c.b16 %v1020, %v1018
      %v1079 = vpack.c.b16 %v1021, %v1019
      %v1080 = vpack.c.b16 %v1024, %v1022
      %v1081 = vpack.c.b16 %v1025, %v1023
      %v1082 = vpack.c.b16 %v1028, %v1026
      %v1083 = vpack.c.b16 %v1029, %v1027
      %v1084 = vpack.c.b16 %v1032, %v1030
      %v1085 = vpack.c.b16 %v1033, %v1031
      %v1086 = vpack.c.b16 %v1036, %v1034
      %v1087 = vpack.c.b16 %v1037, %v1035
      %v1088 = vpack.c.b16 %v1040, %v1038
      %v1089 = vpack.c.b16 %v1041, %v1039
      %v1090 = vpack.c.b16 %v1044, %v1042
      %v1091 = vpack.c.b16 %v1045, %v1043
      %v1092 = vpack.c.b16 %v1048, %v1046
      %v1093 = vpack.c.b16 %v1049, %v1047
      %v1094 = vpack.c.b16 %v1052, %v1050
      %v1095 = vpack.c.b16 %v1053, %v1051
      %v1096 = vpack.c.b16 %v1056, %v1054
      %v1097 = vpack.c.b16 %v1057, %v1055
      %v1098 = vpack.c.b16 %v1060, %v1058
      %v1099 = vpack.c.b16 %v1061, %v1059
      %v1100 = vpack.c.b16 %v1064, %v1062
      %v1101 = vpack.c.b16 %v1065, %v1063
      %v1102 = vpack.c.b16 %v1068, %v1066
      %v1103 = vpack.c.b16 %v1069, %v1067
      %v1104 = vpack.c.b16 %v1072, %v1070
      %v1105 = vpack.c.b16 %v1073, %v1071
      %1138 = vmatprep.subr.bf16.mxu0 %v1075
      %1139 = vmatpush1.bf16.msra.mxu0 %v1074
      %1140 = vmatprep.subr.bf16.mxu0 %v1077
      %1141 = vmatpush1.bf16.msra.mxu0 %v1076
      %1142 = vmatprep.subr.bf16.mxu0 %v1079
      %1143 = vmatpush1.bf16.msra.mxu0 %v1078
      %1144 = vmatprep.subr.bf16.mxu0 %v1081
      %1145 = vmatpush1.bf16.msra.mxu0 %v1080
      %1146 = vmatprep.subr.bf16.mxu0 %v1083
      %1147 = vmatpush1.bf16.msra.mxu0 %v1082
      %1148 = vmatprep.subr.bf16.mxu0 %v1085
      %1149 = vmatpush1.bf16.msra.mxu0 %v1084
      %1150 = vmatprep.subr.bf16.mxu0 %v1087
      %1151 = vmatpush1.bf16.msra.mxu0 %v1086
      %1152 = vmatprep.subr.bf16.mxu0 %v1089
      %1153 = vmatpush1.bf16.msra.mxu0 %v1088
      %1154 = vmatprep.subr.bf16.mxu0 %v1091
      %1155 = vmatpush1.bf16.msra.mxu0 %v1090
      %1156 = vmatprep.subr.bf16.mxu0 %v1093
      %1157 = vmatpush1.bf16.msra.mxu0 %v1092
      %1158 = vmatprep.subr.bf16.mxu0 %v1095
      %1159 = vmatpush1.bf16.msra.mxu0 %v1094
      %1160 = vmatprep.subr.bf16.mxu0 %v1097
      %1161 = vmatpush1.bf16.msra.mxu0 %v1096
      %1162 = vmatprep.subr.bf16.mxu0 %v1099
      %1163 = vmatpush1.bf16.msra.mxu0 %v1098
      %1164 = vmatprep.subr.bf16.mxu0 %v1101
      %1165 = vmatpush1.bf16.msra.mxu0 %v1100
      %1166 = vmatprep.subr.bf16.mxu0 %v1103
      %1167 = vmatpush1.bf16.msra.mxu0 %v1102
      %1168 = vmatprep.subr.bf16.mxu0 %v1105
      %1169 = vmatpush1.bf16.msra.mxu0 %v1104
      %1170 = vmatprep.mubr.bf16.mxu0 %v963
      %1171 = vmatmul.mubr.bf16.gmra.mrb[0].mxu0 %v962
      %v1172 = vpop.f32.mrb[0].mxu0
      %v1173 = vadd.f32 %v900, %v1172
      %v1174 = vpop.f32.mrb[0].mxu0
      %v1175 = vadd.f32 %v902, %v1174
      %v1176 = vpop.f32.mrb[0].mxu0
      %v1177 = vadd.f32 %v904, %v1176
      %v1178 = vpop.f32.mrb[0].mxu0
      %v1179 = vadd.f32 %v906, %v1178
      %1180 = vmatprep.mubr.bf16.mxu0 %v965
      %1181 = vmatmul.mubr.bf16.gmra.mrb[0].mxu0 %v964
      %v1182 = vpop.f32.mrb[0].mxu0
      %v1183 = vadd.f32 %v910, %v1182
      %v1184 = vpop.f32.mrb[0].mxu0
      %v1185 = vadd.f32 %v912, %v1184
      %v1186 = vpop.f32.mrb[0].mxu0
      %v1187 = vadd.f32 %v914, %v1186
      %v1188 = vpop.f32.mrb[0].mxu0
      %v1189 = vadd.f32 %v916, %v1188
      %1190 = vmatprep.mubr.bf16.mxu0 %v967
      %1191 = vmatmul.mubr.bf16.gmra.mrb[0].mxu0 %v966
      %v1192 = vpop.f32.mrb[0].mxu0
      %v1193 = vadd.f32 %v920, %v1192
      %v1194 = vpop.f32.mrb[0].mxu0
      %v1195 = vadd.f32 %v922, %v1194
      %v1196 = vpop.f32.mrb[0].mxu0
      %v1197 = vadd.f32 %v924, %v1196
      %v1198 = vpop.f32.mrb[0].mxu0
      %v1199 = vadd.f32 %v926, %v1198
      %1200 = vmatprep.mubr.bf16.mxu0 %v969
      %1201 = vmatmul.mubr.bf16.gmra.mrb[0].mxu0 %v968
      %v1202 = vpop.f32.mrb[0].mxu0
      %v1203 = vadd.f32 %v930, %v1202
      %v1204 = vpop.f32.mrb[0].mxu0
      %v1205 = vadd.f32 %v932, %v1204
      %v1206 = vpop.f32.mrb[0].mxu0
      %v1207 = vadd.f32 %v934, %v1206
      %v1208 = vpop.f32.mrb[0].mxu0
      %v1209 = vadd.f32 %v936, %v1208
      %1210 = vdwg.mxu0
      %v1211 = vld [vmem:[%s287] sm:$0xff]
      %v1212 = vld [vmem:[%s287 + $0x8] sm:$0xff]
      %v1213 = vld [vmem:[%s287 + $0x10] sm:$0xff]
      %v1214 = vld [vmem:[%s287 + $0x18] sm:$0xff]
      %v1215 = vld [vmem:[%s287 + $0x20] sm:$0xff]
      %v1216 = vld [vmem:[%s287 + $0x28] sm:$0xff]
      %v1217 = vld [vmem:[%s287 + $0x30] sm:$0xff]
      %v1218 = vld [vmem:[%s287 + $0x38] sm:$0xff]
      %s1219 = scalar_lea.vmem %s1, 512
      %v1220 = vld [vmem:[%s1219] sm:$0xff]
      %v1221 = vld [vmem:[%s1219 + $0x8] sm:$0xff]
      %v1222 = vld [vmem:[%s1219 + $0x10] sm:$0xff]
      %v1223 = vld [vmem:[%s1219 + $0x18] sm:$0xff]
      %v1224 = vld [vmem:[%s1219 + $0x20] sm:$0xff]
      %v1225 = vld [vmem:[%s1219 + $0x28] sm:$0xff]
      %v1226 = vld [vmem:[%s1219 + $0x30] sm:$0xff]
      %v1227 = vld [vmem:[%s1219 + $0x38] sm:$0xff]
      %v1228 = vld [vmem:[%s1219 + $0x40] sm:$0xff]
      %v1229 = vld [vmem:[%s1219 + $0x48] sm:$0xff]
      %v1230 = vld [vmem:[%s1219 + $0x50] sm:$0xff]
      %v1231 = vld [vmem:[%s1219 + $0x58] sm:$0xff]
      %v1232 = vld [vmem:[%s1219 + $0x60] sm:$0xff]
      %v1233 = vld [vmem:[%s1219 + $0x68] sm:$0xff]
      %v1234 = vld [vmem:[%s1219 + $0x70] sm:$0xff]
      %v1235 = vld [vmem:[%s1219 + $0x78] sm:$0xff]
      %v1236 = vld [vmem:[%s1219 + $0x80] sm:$0xff]
      %v1237 = vld [vmem:[%s1219 + $0x88] sm:$0xff]
      %v1238 = vld [vmem:[%s1219 + $0x90] sm:$0xff]
      %v1239 = vld [vmem:[%s1219 + $0x98] sm:$0xff]
      %v1240 = vld [vmem:[%s1219 + $0xa0] sm:$0xff]
      %v1241 = vld [vmem:[%s1219 + $0xa8] sm:$0xff]
      %v1242 = vld [vmem:[%s1219 + $0xb0] sm:$0xff]
      %v1243 = vld [vmem:[%s1219 + $0xb8] sm:$0xff]
      %v1244 = vld [vmem:[%s1219 + $0xc0] sm:$0xff]
      %v1245 = vld [vmem:[%s1219 + $0xc8] sm:$0xff]
      %v1246 = vld [vmem:[%s1219 + $0xd0] sm:$0xff]
      %v1247 = vld [vmem:[%s1219 + $0xd8] sm:$0xff]
      %v1248 = vld [vmem:[%s1219 + $0xe0] sm:$0xff]
      %v1249 = vld [vmem:[%s1219 + $0xe8] sm:$0xff]
      %v1250 = vld [vmem:[%s1219 + $0xf0] sm:$0xff]
      %v1251 = vld [vmem:[%s1219 + $0xf8] sm:$0xff]
      %v1260 = vunpack.c.l.b16 %v1211
      %v1261 = vunpack.c.h.b16 %v1211
      %v1262 = vunpack.c.l.b16 %v1212
      %v1263 = vunpack.c.h.b16 %v1212
      %v1264 = vunpack.c.l.b16 %v1213
      %v1265 = vunpack.c.h.b16 %v1213
      %v1266 = vunpack.c.l.b16 %v1214
      %v1267 = vunpack.c.h.b16 %v1214
      %v1268 = vunpack.c.l.b16 %v1215
      %v1269 = vunpack.c.h.b16 %v1215
      %v1270 = vunpack.c.l.b16 %v1216
      %v1271 = vunpack.c.h.b16 %v1216
      %v1272 = vunpack.c.l.b16 %v1217
      %v1273 = vunpack.c.h.b16 %v1217
      %v1274 = vunpack.c.l.b16 %v1218
      %v1275 = vunpack.c.h.b16 %v1218
      %v1276 = vpack.c.b16 %v1262, %v1260
      %v1277 = vpack.c.b16 %v1263, %v1261
      %v1278 = vpack.c.b16 %v1266, %v1264
      %v1279 = vpack.c.b16 %v1267, %v1265
      %v1280 = vpack.c.b16 %v1270, %v1268
      %v1281 = vpack.c.b16 %v1271, %v1269
      %v1282 = vpack.c.b16 %v1274, %v1272
      %v1283 = vpack.c.b16 %v1275, %v1273
      %v1324 = vunpack.c.l.b16 %v1220
      %v1325 = vunpack.c.h.b16 %v1220
      %v1326 = vunpack.c.l.b16 %v1221
      %v1327 = vunpack.c.h.b16 %v1221
      %v1328 = vunpack.c.l.b16 %v1222
      %v1329 = vunpack.c.h.b16 %v1222
      %v1330 = vunpack.c.l.b16 %v1223
      %v1331 = vunpack.c.h.b16 %v1223
      %v1332 = vunpack.c.l.b16 %v1224
      %v1333 = vunpack.c.h.b16 %v1224
      %v1334 = vunpack.c.l.b16 %v1225
      %v1335 = vunpack.c.h.b16 %v1225
      %v1336 = vunpack.c.l.b16 %v1226
      %v1337 = vunpack.c.h.b16 %v1226
      %v1338 = vunpack.c.l.b16 %v1227
      %v1339 = vunpack.c.h.b16 %v1227
      %v1340 = vunpack.c.l.b16 %v1228
      %v1341 = vunpack.c.h.b16 %v1228
      %v1342 = vunpack.c.l.b16 %v1229
      %v1343 = vunpack.c.h.b16 %v1229
      %v1344 = vunpack.c.l.b16 %v1230
      %v1345 = vunpack.c.h.b16 %v1230
      %v1346 = vunpack.c.l.b16 %v1231
      %v1347 = vunpack.c.h.b16 %v1231
      %v1348 = vunpack.c.l.b16 %v1232
      %v1349 = vunpack.c.h.b16 %v1232
      %v1350 = vunpack.c.l.b16 %v1233
      %v1351 = vunpack.c.h.b16 %v1233
      %v1352 = vunpack.c.l.b16 %v1234
      %v1353 = vunpack.c.h.b16 %v1234
      %v1354 = vunpack.c.l.b16 %v1235
      %v1355 = vunpack.c.h.b16 %v1235
      %v1356 = vunpack.c.l.b16 %v1236
      %v1357 = vunpack.c.h.b16 %v1236
      %v1358 = vunpack.c.l.b16 %v1237
      %v1359 = vunpack.c.h.b16 %v1237
      %v1360 = vunpack.c.l.b16 %v1238
      %v1361 = vunpack.c.h.b16 %v1238
      %v1362 = vunpack.c.l.b16 %v1239
      %v1363 = vunpack.c.h.b16 %v1239
      %v1364 = vunpack.c.l.b16 %v1240
      %v1365 = vunpack.c.h.b16 %v1240
      %v1366 = vunpack.c.l.b16 %v1241
      %v1367 = vunpack.c.h.b16 %v1241
      %v1368 = vunpack.c.l.b16 %v1242
      %v1369 = vunpack.c.h.b16 %v1242
      %v1370 = vunpack.c.l.b16 %v1243
      %v1371 = vunpack.c.h.b16 %v1243
      %v1372 = vunpack.c.l.b16 %v1244
      %v1373 = vunpack.c.h.b16 %v1244
      %v1374 = vunpack.c.l.b16 %v1245
      %v1375 = vunpack.c.h.b16 %v1245
      %v1376 = vunpack.c.l.b16 %v1246
      %v1377 = vunpack.c.h.b16 %v1246
      %v1378 = vunpack.c.l.b16 %v1247
      %v1379 = vunpack.c.h.b16 %v1247
      %v1380 = vunpack.c.l.b16 %v1248
      %v1381 = vunpack.c.h.b16 %v1248
      %v1382 = vunpack.c.l.b16 %v1249
      %v1383 = vunpack.c.h.b16 %v1249
      %v1384 = vunpack.c.l.b16 %v1250
      %v1385 = vunpack.c.h.b16 %v1250
      %v1386 = vunpack.c.l.b16 %v1251
      %v1387 = vunpack.c.h.b16 %v1251
      %v1388 = vpack.c.b16 %v1326, %v1324
      %v1389 = vpack.c.b16 %v1327, %v1325
      %v1390 = vpack.c.b16 %v1330, %v1328
      %v1391 = vpack.c.b16 %v1331, %v1329
      %v1392 = vpack.c.b16 %v1334, %v1332
      %v1393 = vpack.c.b16 %v1335, %v1333
      %v1394 = vpack.c.b16 %v1338, %v1336
      %v1395 = vpack.c.b16 %v1339, %v1337
      %v1396 = vpack.c.b16 %v1342, %v1340
      %v1397 = vpack.c.b16 %v1343, %v1341
      %v1398 = vpack.c.b16 %v1346, %v1344
      %v1399 = vpack.c.b16 %v1347, %v1345
      %v1400 = vpack.c.b16 %v1350, %v1348
      %v1401 = vpack.c.b16 %v1351, %v1349
      %v1402 = vpack.c.b16 %v1354, %v1352
      %v1403 = vpack.c.b16 %v1355, %v1353
      %v1404 = vpack.c.b16 %v1358, %v1356
      %v1405 = vpack.c.b16 %v1359, %v1357
      %v1406 = vpack.c.b16 %v1362, %v1360
      %v1407 = vpack.c.b16 %v1363, %v1361
      %v1408 = vpack.c.b16 %v1366, %v1364
      %v1409 = vpack.c.b16 %v1367, %v1365
      %v1410 = vpack.c.b16 %v1370, %v1368
      %v1411 = vpack.c.b16 %v1371, %v1369
      %v1412 = vpack.c.b16 %v1374, %v1372
      %v1413 = vpack.c.b16 %v1375, %v1373
      %v1414 = vpack.c.b16 %v1378, %v1376
      %v1415 = vpack.c.b16 %v1379, %v1377
      %v1416 = vpack.c.b16 %v1382, %v1380
      %v1417 = vpack.c.b16 %v1383, %v1381
      %v1418 = vpack.c.b16 %v1386, %v1384
      %v1419 = vpack.c.b16 %v1387, %v1385
      %1452 = vmatprep.subr.bf16.mxu0 %v1389
      %1453 = vmatpush1.bf16.msra.mxu0 %v1388
      %1454 = vmatprep.subr.bf16.mxu0 %v1391
      %1455 = vmatpush1.bf16.msra.mxu0 %v1390
      %1456 = vmatprep.subr.bf16.mxu0 %v1393
      %1457 = vmatpush1.bf16.msra.mxu0 %v1392
      %1458 = vmatprep.subr.bf16.mxu0 %v1395
      %1459 = vmatpush1.bf16.msra.mxu0 %v1394
      %1460 = vmatprep.subr.bf16.mxu0 %v1397
      %1461 = vmatpush1.bf16.msra.mxu0 %v1396
      %1462 = vmatprep.subr.bf16.mxu0 %v1399
      %1463 = vmatpush1.bf16.msra.mxu0 %v1398
      %1464 = vmatprep.subr.bf16.mxu0 %v1401
      %1465 = vmatpush1.bf16.msra.mxu0 %v1400
      %1466 = vmatprep.subr.bf16.mxu0 %v1403
      %1467 = vmatpush1.bf16.msra.mxu0 %v1402
      %1468 = vmatprep.subr.bf16.mxu0 %v1405
      %1469 = vmatpush1.bf16.msra.mxu0 %v1404
      %1470 = vmatprep.subr.bf16.mxu0 %v1407
      %1471 = vmatpush1.bf16.msra.mxu0 %v1406
      %1472 = vmatprep.subr.bf16.mxu0 %v1409
      %1473 = vmatpush1.bf16.msra.mxu0 %v1408
      %1474 = vmatprep.subr.bf16.mxu0 %v1411
      %1475 = vmatpush1.bf16.msra.mxu0 %v1410
      %1476 = vmatprep.subr.bf16.mxu0 %v1413
      %1477 = vmatpush1.bf16.msra.mxu0 %v1412
      %1478 = vmatprep.subr.bf16.mxu0 %v1415
      %1479 = vmatpush1.bf16.msra.mxu0 %v1414
      %1480 = vmatprep.subr.bf16.mxu0 %v1417
      %1481 = vmatpush1.bf16.msra.mxu0 %v1416
      %1482 = vmatprep.subr.bf16.mxu0 %v1419
      %1483 = vmatpush1.bf16.msra.mxu0 %v1418
      %1484 = vmatprep.mubr.bf16.mxu0 %v1277
      %1485 = vmatmul.mubr.bf16.gmra.mrb[0].mxu0 %v1276
      %v1486 = vpop.f32.mrb[0].mxu0
      %v1487 = vadd.f32 0.0, %v1486
      %v1488 = vpop.f32.mrb[0].mxu0
      %v1489 = vadd.f32 0.0, %v1488
      %v1490 = vpop.f32.mrb[0].mxu0
      %v1491 = vadd.f32 0.0, %v1490
      %v1492 = vpop.f32.mrb[0].mxu0
      %v1493 = vadd.f32 0.0, %v1492
      %1494 = vmatprep.mubr.bf16.mxu0 %v1279
      %1495 = vmatmul.mubr.bf16.gmra.mrb[0].mxu0 %v1278
      %v1496 = vpop.f32.mrb[0].mxu0
      %v1497 = vadd.f32 0.0, %v1496
      %v1498 = vpop.f32.mrb[0].mxu0
      %v1499 = vadd.f32 0.0, %v1498
      %v1500 = vpop.f32.mrb[0].mxu0
      %v1501 = vadd.f32 0.0, %v1500
      %v1502 = vpop.f32.mrb[0].mxu0
      %v1503 = vadd.f32 0.0, %v1502
      %1504 = vmatprep.mubr.bf16.mxu0 %v1281
      %1505 = vmatmul.mubr.bf16.gmra.mrb[0].mxu0 %v1280
      %v1506 = vpop.f32.mrb[0].mxu0
      %v1507 = vadd.f32 0.0, %v1506
      %v1508 = vpop.f32.mrb[0].mxu0
      %v1509 = vadd.f32 0.0, %v1508
      %v1510 = vpop.f32.mrb[0].mxu0
      %v1511 = vadd.f32 0.0, %v1510
      %v1512 = vpop.f32.mrb[0].mxu0
      %v1513 = vadd.f32 0.0, %v1512
      %1514 = vmatprep.mubr.bf16.mxu0 %v1283
      %1515 = vmatmul.mubr.bf16.gmra.mrb[0].mxu0 %v1282
      %v1516 = vpop.f32.mrb[0].mxu0
      %v1517 = vadd.f32 0.0, %v1516
      %v1518 = vpop.f32.mrb[0].mxu0
      %v1519 = vadd.f32 0.0, %v1518
      %v1520 = vpop.f32.mrb[0].mxu0
      %v1521 = vadd.f32 0.0, %v1520
      %v1522 = vpop.f32.mrb[0].mxu0
      %v1523 = vadd.f32 0.0, %v1522
      %1524 = vdwg.mxu0
      %v1525 = vadd.f32 %v1173, %v1487
      %v1526 = vadd.f32 %v1175, %v1489
      %v1527 = vadd.f32 %v1177, %v1491
      %v1528 = vadd.f32 %v1179, %v1493
      %v1529 = vadd.f32 %v1183, %v1497
      %v1530 = vadd.f32 %v1185, %v1499
      %v1531 = vadd.f32 %v1187, %v1501
      %v1532 = vadd.f32 %v1189, %v1503
      %v1533 = vadd.f32 %v1193, %v1507
      %v1534 = vadd.f32 %v1195, %v1509
      %v1535 = vadd.f32 %v1197, %v1511
      %v1536 = vadd.f32 %v1199, %v1513
      %v1537 = vadd.f32 %v1203, %v1517
      %v1538 = vadd.f32 %v1205, %v1519
      %v1539 = vadd.f32 %v1207, %v1521
      %v1540 = vadd.f32 %v1209, %v1523
      %v1541 = vld [vmem:[%s453] sm:$0xff]
      %v1542 = vld [vmem:[%s453 + $0x8] sm:$0xff]
      %v1543 = vld [vmem:[%s453 + $0x10] sm:$0xff]
      %v1544 = vld [vmem:[%s453 + $0x18] sm:$0xff]
      %v1545 = vld [vmem:[%s453 + $0x20] sm:$0xff]
      %v1546 = vld [vmem:[%s453 + $0x28] sm:$0xff]
      %v1547 = vld [vmem:[%s453 + $0x30] sm:$0xff]
      %v1548 = vld [vmem:[%s453 + $0x38] sm:$0xff]
      %s1549 = scalar_lea.vmem %s1, 768
      %v1550 = vld [vmem:[%s1549] sm:$0xff]
      %v1551 = vld [vmem:[%s1549 + $0x8] sm:$0xff]
      %v1552 = vld [vmem:[%s1549 + $0x10] sm:$0xff]
      %v1553 = vld [vmem:[%s1549 + $0x18] sm:$0xff]
      %v1554 = vld [vmem:[%s1549 + $0x20] sm:$0xff]
      %v1555 = vld [vmem:[%s1549 + $0x28] sm:$0xff]
      %v1556 = vld [vmem:[%s1549 + $0x30] sm:$0xff]
      %v1557 = vld [vmem:[%s1549 + $0x38] sm:$0xff]
      %v1558 = vld [vmem:[%s1549 + $0x40] sm:$0xff]
      %v1559 = vld [vmem:[%s1549 + $0x48] sm:$0xff]
      %v1560 = vld [vmem:[%s1549 + $0x50] sm:$0xff]
      %v1561 = vld [vmem:[%s1549 + $0x58] sm:$0xff]
      %v1562 = vld [vmem:[%s1549 + $0x60] sm:$0xff]
      %v1563 = vld [vmem:[%s1549 + $0x68] sm:$0xff]
      %v1564 = vld [vmem:[%s1549 + $0x70] sm:$0xff]
      %v1565 = vld [vmem:[%s1549 + $0x78] sm:$0xff]
      %v1566 = vld [vmem:[%s1549 + $0x80] sm:$0xff]
      %v1567 = vld [vmem:[%s1549 + $0x88] sm:$0xff]
      %v1568 = vld [vmem:[%s1549 + $0x90] sm:$0xff]
      %v1569 = vld [vmem:[%s1549 + $0x98] sm:$0xff]
      %v1570 = vld [vmem:[%s1549 + $0xa0] sm:$0xff]
      %v1571 = vld [vmem:[%s1549 + $0xa8] sm:$0xff]
      %v1572 = vld [vmem:[%s1549 + $0xb0] sm:$0xff]
      %v1573 = vld [vmem:[%s1549 + $0xb8] sm:$0xff]
      %v1574 = vld [vmem:[%s1549 + $0xc0] sm:$0xff]
      %v1575 = vld [vmem:[%s1549 + $0xc8] sm:$0xff]
      %v1576 = vld [vmem:[%s1549 + $0xd0] sm:$0xff]
      %v1577 = vld [vmem:[%s1549 + $0xd8] sm:$0xff]
      %v1578 = vld [vmem:[%s1549 + $0xe0] sm:$0xff]
      %v1579 = vld [vmem:[%s1549 + $0xe8] sm:$0xff]
      %v1580 = vld [vmem:[%s1549 + $0xf0] sm:$0xff]
      %v1581 = vld [vmem:[%s1549 + $0xf8] sm:$0xff]
      %v1590 = vunpack.c.l.b16 %v1541
      %v1591 = vunpack.c.h.b16 %v1541
      %v1592 = vunpack.c.l.b16 %v1542
      %v1593 = vunpack.c.h.b16 %v1542
      %v1594 = vunpack.c.l.b16 %v1543
      %v1595 = vunpack.c.h.b16 %v1543
      %v1596 = vunpack.c.l.b16 %v1544
      %v1597 = vunpack.c.h.b16 %v1544
      %v1598 = vunpack.c.l.b16 %v1545
      %v1599 = vunpack.c.h.b16 %v1545
      %v1600 = vunpack.c.l.b16 %v1546
      %v1601 = vunpack.c.h.b16 %v1546
      %v1602 = vunpack.c.l.b16 %v1547
      %v1603 = vunpack.c.h.b16 %v1547
      %v1604 = vunpack.c.l.b16 %v1548
      %v1605 = vunpack.c.h.b16 %v1548
      %v1606 = vpack.c.b16 %v1592, %v1590
      %v1607 = vpack.c.b16 %v1593, %v1591
      %v1608 = vpack.c.b16 %v1596, %v1594
      %v1609 = vpack.c.b16 %v1597, %v1595
      %v1610 = vpack.c.b16 %v1600, %v1598
      %v1611 = vpack.c.b16 %v1601, %v1599
      %v1612 = vpack.c.b16 %v1604, %v1602
      %v1613 = vpack.c.b16 %v1605, %v1603
      %v1654 = vunpack.c.l.b16 %v1550
      %v1655 = vunpack.c.h.b16 %v1550
      %v1656 = vunpack.c.l.b16 %v1551
      %v1657 = vunpack.c.h.b16 %v1551
      %v1658 = vunpack.c.l.b16 %v1552
      %v1659 = vunpack.c.h.b16 %v1552
      %v1660 = vunpack.c.l.b16 %v1553
      %v1661 = vunpack.c.h.b16 %v1553
      %v1662 = vunpack.c.l.b16 %v1554
      %v1663 = vunpack.c.h.b16 %v1554
      %v1664 = vunpack.c.l.b16 %v1555
      %v1665 = vunpack.c.h.b16 %v1555
      %v1666 = vunpack.c.l.b16 %v1556
      %v1667 = vunpack.c.h.b16 %v1556
      %v1668 = vunpack.c.l.b16 %v1557
      %v1669 = vunpack.c.h.b16 %v1557
      %v1670 = vunpack.c.l.b16 %v1558
      %v1671 = vunpack.c.h.b16 %v1558
      %v1672 = vunpack.c.l.b16 %v1559
      %v1673 = vunpack.c.h.b16 %v1559
      %v1674 = vunpack.c.l.b16 %v1560
      %v1675 = vunpack.c.h.b16 %v1560
      %v1676 = vunpack.c.l.b16 %v1561
      %v1677 = vunpack.c.h.b16 %v1561
      %v1678 = vunpack.c.l.b16 %v1562
      %v1679 = vunpack.c.h.b16 %v1562
      %v1680 = vunpack.c.l.b16 %v1563
      %v1681 = vunpack.c.h.b16 %v1563
      %v1682 = vunpack.c.l.b16 %v1564
      %v1683 = vunpack.c.h.b16 %v1564
      %v1684 = vunpack.c.l.b16 %v1565
      %v1685 = vunpack.c.h.b16 %v1565
      %v1686 = vunpack.c.l.b16 %v1566
      %v1687 = vunpack.c.h.b16 %v1566
      %v1688 = vunpack.c.l.b16 %v1567
      %v1689 = vunpack.c.h.b16 %v1567
      %v1690 = vunpack.c.l.b16 %v1568
      %v1691 = vunpack.c.h.b16 %v1568
      %v1692 = vunpack.c.l.b16 %v1569
      %v1693 = vunpack.c.h.b16 %v1569
      %v1694 = vunpack.c.l.b16 %v1570
      %v1695 = vunpack.c.h.b16 %v1570
      %v1696 = vunpack.c.l.b16 %v1571
      %v1697 = vunpack.c.h.b16 %v1571
      %v1698 = vunpack.c.l.b16 %v1572
      %v1699 = vunpack.c.h.b16 %v1572
      %v1700 = vunpack.c.l.b16 %v1573
      %v1701 = vunpack.c.h.b16 %v1573
      %v1702 = vunpack.c.l.b16 %v1574
      %v1703 = vunpack.c.h.b16 %v1574
      %v1704 = vunpack.c.l.b16 %v1575
      %v1705 = vunpack.c.h.b16 %v1575
      %v1706 = vunpack.c.l.b16 %v1576
      %v1707 = vunpack.c.h.b16 %v1576
      %v1708 = vunpack.c.l.b16 %v1577
      %v1709 = vunpack.c.h.b16 %v1577
      %v1710 = vunpack.c.l.b16 %v1578
      %v1711 = vunpack.c.h.b16 %v1578
      %v1712 = vunpack.c.l.b16 %v1579
      %v1713 = vunpack.c.h.b16 %v1579
      %v1714 = vunpack.c.l.b16 %v1580
      %v1715 = vunpack.c.h.b16 %v1580
      %v1716 = vunpack.c.l.b16 %v1581
      %v1717 = vunpack.c.h.b16 %v1581
      %v1718 = vpack.c.b16 %v1656, %v1654
      %v1719 = vpack.c.b16 %v1657, %v1655
      %v1720 = vpack.c.b16 %v1660, %v1658
      %v1721 = vpack.c.b16 %v1661, %v1659
      %v1722 = vpack.c.b16 %v1664, %v1662
      %v1723 = vpack.c.b16 %v1665, %v1663
      %v1724 = vpack.c.b16 %v1668, %v1666
      %v1725 = vpack.c.b16 %v1669, %v1667
      %v1726 = vpack.c.b16 %v1672, %v1670
      %v1727 = vpack.c.b16 %v1673, %v1671
      %v1728 = vpack.c.b16 %v1676, %v1674
      %v1729 = vpack.c.b16 %v1677, %v1675
      %v1730 = vpack.c.b16 %v1680, %v1678
      %v1731 = vpack.c.b16 %v1681, %v1679
      %v1732 = vpack.c.b16 %v1684, %v1682
      %v1733 = vpack.c.b16 %v1685, %v1683
      %v1734 = vpack.c.b16 %v1688, %v1686
      %v1735 = vpack.c.b16 %v1689, %v1687
      %v1736 = vpack.c.b16 %v1692, %v1690
      %v1737 = vpack.c.b16 %v1693, %v1691
      %v1738 = vpack.c.b16 %v1696, %v1694
      %v1739 = vpack.c.b16 %v1697, %v1695
      %v1740 = vpack.c.b16 %v1700, %v1698
      %v1741 = vpack.c.b16 %v1701, %v1699
      %v1742 = vpack.c.b16 %v1704, %v1702
      %v1743 = vpack.c.b16 %v1705, %v1703
      %v1744 = vpack.c.b16 %v1708, %v1706
      %v1745 = vpack.c.b16 %v1709, %v1707
      %v1746 = vpack.c.b16 %v1712, %v1710
      %v1747 = vpack.c.b16 %v1713, %v1711
      %v1748 = vpack.c.b16 %v1716, %v1714
      %v1749 = vpack.c.b16 %v1717, %v1715
      %1782 = vmatprep.subr.bf16.mxu0 %v1719
      %1783 = vmatpush1.bf16.msra.mxu0 %v1718
      %1784 = vmatprep.subr.bf16.mxu0 %v1721
      %1785 = vmatpush1.bf16.msra.mxu0 %v1720
      %1786 = vmatprep.subr.bf16.mxu0 %v1723
      %1787 = vmatpush1.bf16.msra.mxu0 %v1722
      %1788 = vmatprep.subr.bf16.mxu0 %v1725
      %1789 = vmatpush1.bf16.msra.mxu0 %v1724
      %1790 = vmatprep.subr.bf16.mxu0 %v1727
      %1791 = vmatpush1.bf16.msra.mxu0 %v1726
      %1792 = vmatprep.subr.bf16.mxu0 %v1729
      %1793 = vmatpush1.bf16.msra.mxu0 %v1728
      %1794 = vmatprep.subr.bf16.mxu0 %v1731
      %1795 = vmatpush1.bf16.msra.mxu0 %v1730
      %1796 = vmatprep.subr.bf16.mxu0 %v1733
      %1797 = vmatpush1.bf16.msra.mxu0 %v1732
      %1798 = vmatprep.subr.bf16.mxu0 %v1735
      %1799 = vmatpush1.bf16.msra.mxu0 %v1734
      %1800 = vmatprep.subr.bf16.mxu0 %v1737
      %1801 = vmatpush1.bf16.msra.mxu0 %v1736
      %1802 = vmatprep.subr.bf16.mxu0 %v1739
      %1803 = vmatpush1.bf16.msra.mxu0 %v1738
      %1804 = vmatprep.subr.bf16.mxu0 %v1741
      %1805 = vmatpush1.bf16.msra.mxu0 %v1740
      %1806 = vmatprep.subr.bf16.mxu0 %v1743
      %1807 = vmatpush1.bf16.msra.mxu0 %v1742
      %1808 = vmatprep.subr.bf16.mxu0 %v1745
      %1809 = vmatpush1.bf16.msra.mxu0 %v1744
      %1810 = vmatprep.subr.bf16.mxu0 %v1747
      %1811 = vmatpush1.bf16.msra.mxu0 %v1746
      %1812 = vmatprep.subr.bf16.mxu0 %v1749
      %1813 = vmatpush1.bf16.msra.mxu0 %v1748
      %1814 = vmatprep.mubr.bf16.mxu0 %v1607
      %1815 = vmatmul.mubr.bf16.gmra.mrb[0].mxu0 %v1606
      %v1816 = vpop.f32.mrb[0].mxu0
      %v1817 = vadd.f32 0.0, %v1816
      %v1818 = vpop.f32.mrb[0].mxu0
      %v1819 = vadd.f32 0.0, %v1818
      %v1820 = vpop.f32.mrb[0].mxu0
      %v1821 = vadd.f32 0.0, %v1820
      %v1822 = vpop.f32.mrb[0].mxu0
      %v1823 = vadd.f32 0.0, %v1822
      %1824 = vmatprep.mubr.bf16.mxu0 %v1609
      %1825 = vmatmul.mubr.bf16.gmra.mrb[0].mxu0 %v1608
      %v1826 = vpop.f32.mrb[0].mxu0
      %v1827 = vadd.f32 0.0, %v1826
      %v1828 = vpop.f32.mrb[0].mxu0
      %v1829 = vadd.f32 0.0, %v1828
      %v1830 = vpop.f32.mrb[0].mxu0
      %v1831 = vadd.f32 0.0, %v1830
      %v1832 = vpop.f32.mrb[0].mxu0
      %v1833 = vadd.f32 0.0, %v1832
      %1834 = vmatprep.mubr.bf16.mxu0 %v1611
      %1835 = vmatmul.mubr.bf16.gmra.mrb[0].mxu0 %v1610
      %v1836 = vpop.f32.mrb[0].mxu0
      %v1837 = vadd.f32 0.0, %v1836
      %v1838 = vpop.f32.mrb[0].mxu0
      %v1839 = vadd.f32 0.0, %v1838
      %v1840 = vpop.f32.mrb[0].mxu0
      %v1841 = vadd.f32 0.0, %v1840
      %v1842 = vpop.f32.mrb[0].mxu0
      %v1843 = vadd.f32 0.0, %v1842
      %1844 = vmatprep.mubr.bf16.mxu0 %v1613
      %1845 = vmatmul.mubr.bf16.gmra.mrb[0].mxu0 %v1612
      %v1846 = vpop.f32.mrb[0].mxu0
      %v1847 = vadd.f32 0.0, %v1846
      %v1848 = vpop.f32.mrb[0].mxu0
      %v1849 = vadd.f32 0.0, %v1848
      %v1850 = vpop.f32.mrb[0].mxu0
      %v1851 = vadd.f32 0.0, %v1850
      %v1852 = vpop.f32.mrb[0].mxu0
      %v1853 = vadd.f32 0.0, %v1852
      %1854 = vdwg.mxu0
      %v1855 = vadd.f32 %v1525, %v1817
      %v1856 = vadd.f32 %v1526, %v1819
      %v1857 = vadd.f32 %v1527, %v1821
      %v1858 = vadd.f32 %v1528, %v1823
      %v1859 = vadd.f32 %v1529, %v1827
      %v1860 = vadd.f32 %v1530, %v1829
      %v1861 = vadd.f32 %v1531, %v1831
      %v1862 = vadd.f32 %v1532, %v1833
      %v1863 = vadd.f32 %v1533, %v1837
      %v1864 = vadd.f32 %v1534, %v1839
      %v1865 = vadd.f32 %v1535, %v1841
      %v1866 = vadd.f32 %v1536, %v1843
      %v1867 = vadd.f32 %v1537, %v1847
      %v1868 = vadd.f32 %v1538, %v1849
      %v1869 = vadd.f32 %v1539, %v1851
      %v1870 = vadd.f32 %v1540, %v1853
      %v1871 = vld [vmem:[%s315] sm:$0xff]
      %v1872 = vld [vmem:[%s315 + $0x8] sm:$0xff]
      %v1873 = vld [vmem:[%s315 + $0x10] sm:$0xff]
      %v1874 = vld [vmem:[%s315 + $0x18] sm:$0xff]
      %v1875 = vld [vmem:[%s315 + $0x20] sm:$0xff]
      %v1876 = vld [vmem:[%s315 + $0x28] sm:$0xff]
      %v1877 = vld [vmem:[%s315 + $0x30] sm:$0xff]
      %v1878 = vld [vmem:[%s315 + $0x38] sm:$0xff]
      %s1879 = scalar_lea.vmem %s1, 1024
      %v1880 = vld [vmem:[%s1879] sm:$0xff]
      %v1881 = vld [vmem:[%s1879 + $0x8] sm:$0xff]
      %v1882 = vld [vmem:[%s1879 + $0x10] sm:$0xff]
      %v1883 = vld [vmem:[%s1879 + $0x18] sm:$0xff]
      %v1884 = vld [vmem:[%s1879 + $0x20] sm:$0xff]
      %v1885 = vld [vmem:[%s1879 + $0x28] sm:$0xff]
      %v1886 = vld [vmem:[%s1879 + $0x30] sm:$0xff]
      %v1887 = vld [vmem:[%s1879 + $0x38] sm:$0xff]
      %v1888 = vld [vmem:[%s1879 + $0x40] sm:$0xff]
      %v1889 = vld [vmem:[%s1879 + $0x48] sm:$0xff]
      %v1890 = vld [vmem:[%s1879 + $0x50] sm:$0xff]
      %v1891 = vld [vmem:[%s1879 + $0x58] sm:$0xff]
      %v1892 = vld [vmem:[%s1879 + $0x60] sm:$0xff]
      %v1893 = vld [vmem:[%s1879 + $0x68] sm:$0xff]
      %v1894 = vld [vmem:[%s1879 + $0x70] sm:$0xff]
      %v1895 = vld [vmem:[%s1879 + $0x78] sm:$0xff]
      %v1896 = vld [vmem:[%s1879 + $0x80] sm:$0xff]
      %v1897 = vld [vmem:[%s1879 + $0x88] sm:$0xff]
      %v1898 = vld [vmem:[%s1879 + $0x90] sm:$0xff]
      %v1899 = vld [vmem:[%s1879 + $0x98] sm:$0xff]
      %v1900 = vld [vmem:[%s1879 + $0xa0] sm:$0xff]
      %v1901 = vld [vmem:[%s1879 + $0xa8] sm:$0xff]
      %v1902 = vld [vmem:[%s1879 + $0xb0] sm:$0xff]
      %v1903 = vld [vmem:[%s1879 + $0xb8] sm:$0xff]
      %v1904 = vld [vmem:[%s1879 + $0xc0] sm:$0xff]
      %v1905 = vld [vmem:[%s1879 + $0xc8] sm:$0xff]
      %v1906 = vld [vmem:[%s1879 + $0xd0] sm:$0xff]
      %v1907 = vld [vmem:[%s1879 + $0xd8] sm:$0xff]
      %v1908 = vld [vmem:[%s1879 + $0xe0] sm:$0xff]
      %v1909 = vld [vmem:[%s1879 + $0xe8] sm:$0xff]
      %v1910 = vld [vmem:[%s1879 + $0xf0] sm:$0xff]
      %v1911 = vld [vmem:[%s1879 + $0xf8] sm:$0xff]
      %v1920 = vunpack.c.l.b16 %v1871
      %v1921 = vunpack.c.h.b16 %v1871
      %v1922 = vunpack.c.l.b16 %v1872
      %v1923 = vunpack.c.h.b16 %v1872
      %v1924 = vunpack.c.l.b16 %v1873
      %v1925 = vunpack.c.h.b16 %v1873
      %v1926 = vunpack.c.l.b16 %v1874
      %v1927 = vunpack.c.h.b16 %v1874
      %v1928 = vunpack.c.l.b16 %v1875
      %v1929 = vunpack.c.h.b16 %v1875
      %v1930 = vunpack.c.l.b16 %v1876
      %v1931 = vunpack.c.h.b16 %v1876
      %v1932 = vunpack.c.l.b16 %v1877
      %v1933 = vunpack.c.h.b16 %v1877
      %v1934 = vunpack.c.l.b16 %v1878
      %v1935 = vunpack.c.h.b16 %v1878
      %v1936 = vpack.c.b16 %v1922, %v1920
      %v1937 = vpack.c.b16 %v1923, %v1921
      %v1938 = vpack.c.b16 %v1926, %v1924
      %v1939 = vpack.c.b16 %v1927, %v1925
      %v1940 = vpack.c.b16 %v1930, %v1928
      %v1941 = vpack.c.b16 %v1931, %v1929
      %v1942 = vpack.c.b16 %v1934, %v1932
      %v1943 = vpack.c.b16 %v1935, %v1933
      %v1984 = vunpack.c.l.b16 %v1880
      %v1985 = vunpack.c.h.b16 %v1880
      %v1986 = vunpack.c.l.b16 %v1881
      %v1987 = vunpack.c.h.b16 %v1881
      %v1988 = vunpack.c.l.b16 %v1882
      %v1989 = vunpack.c.h.b16 %v1882
      %v1990 = vunpack.c.l.b16 %v1883
      %v1991 = vunpack.c.h.b16 %v1883
      %v1992 = vunpack.c.l.b16 %v1884
      %v1993 = vunpack.c.h.b16 %v1884
      %v1994 = vunpack.c.l.b16 %v1885
      %v1995 = vunpack.c.h.b16 %v1885
      %v1996 = vunpack.c.l.b16 %v1886
      %v1997 = vunpack.c.h.b16 %v1886
      %v1998 = vunpack.c.l.b16 %v1887
      %v1999 = vunpack.c.h.b16 %v1887
      %v2000 = vunpack.c.l.b16 %v1888
      %v2001 = vunpack.c.h.b16 %v1888
      %v2002 = vunpack.c.l.b16 %v1889
      %v2003 = vunpack.c.h.b16 %v1889
      %v2004 = vunpack.c.l.b16 %v1890
      %v2005 = vunpack.c.h.b16 %v1890
      %v2006 = vunpack.c.l.b16 %v1891
      %v2007 = vunpack.c.h.b16 %v1891
      %v2008 = vunpack.c.l.b16 %v1892
      %v2009 = vunpack.c.h.b16 %v1892
      %v2010 = vunpack.c.l.b16 %v1893
      %v2011 = vunpack.c.h.b16 %v1893
      %v2012 = vunpack.c.l.b16 %v1894
      %v2013 = vunpack.c.h.b16 %v1894
      %v2014 = vunpack.c.l.b16 %v1895
      %v2015 = vunpack.c.h.b16 %v1895
      %v2016 = vunpack.c.l.b16 %v1896
      %v2017 = vunpack.c.h.b16 %v1896
      %v2018 = vunpack.c.l.b16 %v1897
      %v2019 = vunpack.c.h.b16 %v1897
      %v2020 = vunpack.c.l.b16 %v1898
      %v2021 = vunpack.c.h.b16 %v1898
      %v2022 = vunpack.c.l.b16 %v1899
      %v2023 = vunpack.c.h.b16 %v1899
      %v2024 = vunpack.c.l.b16 %v1900
      %v2025 = vunpack.c.h.b16 %v1900
      %v2026 = vunpack.c.l.b16 %v1901
      %v2027 = vunpack.c.h.b16 %v1901
      %v2028 = vunpack.c.l.b16 %v1902
      %v2029 = vunpack.c.h.b16 %v1902
      %v2030 = vunpack.c.l.b16 %v1903
      %v2031 = vunpack.c.h.b16 %v1903
      %v2032 = vunpack.c.l.b16 %v1904
      %v2033 = vunpack.c.h.b16 %v1904
      %v2034 = vunpack.c.l.b16 %v1905
      %v2035 = vunpack.c.h.b16 %v1905
      %v2036 = vunpack.c.l.b16 %v1906
      %v2037 = vunpack.c.h.b16 %v1906
      %v2038 = vunpack.c.l.b16 %v1907
      %v2039 = vunpack.c.h.b16 %v1907
      %v2040 = vunpack.c.l.b16 %v1908
      %v2041 = vunpack.c.h.b16 %v1908
      %v2042 = vunpack.c.l.b16 %v1909
      %v2043 = vunpack.c.h.b16 %v1909
      %v2044 = vunpack.c.l.b16 %v1910
      %v2045 = vunpack.c.h.b16 %v1910
      %v2046 = vunpack.c.l.b16 %v1911
      %v2047 = vunpack.c.h.b16 %v1911
      %v2048 = vpack.c.b16 %v1986, %v1984
      %v2049 = vpack.c.b16 %v1987, %v1985
      %v2050 = vpack.c.b16 %v1990, %v1988
      %v2051 = vpack.c.b16 %v1991, %v1989
      %v2052 = vpack.c.b16 %v1994, %v1992
      %v2053 = vpack.c.b16 %v1995, %v1993
      %v2054 = vpack.c.b16 %v1998, %v1996
      %v2055 = vpack.c.b16 %v1999, %v1997
      %v2056 = vpack.c.b16 %v2002, %v2000
      %v2057 = vpack.c.b16 %v2003, %v2001
      %v2058 = vpack.c.b16 %v2006, %v2004
      %v2059 = vpack.c.b16 %v2007, %v2005
      %v2060 = vpack.c.b16 %v2010, %v2008
      %v2061 = vpack.c.b16 %v2011, %v2009
      %v2062 = vpack.c.b16 %v2014, %v2012
      %v2063 = vpack.c.b16 %v2015, %v2013
      %v2064 = vpack.c.b16 %v2018, %v2016
      %v2065 = vpack.c.b16 %v2019, %v2017
      %v2066 = vpack.c.b16 %v2022, %v2020
      %v2067 = vpack.c.b16 %v2023, %v2021
      %v2068 = vpack.c.b16 %v2026, %v2024
      %v2069 = vpack.c.b16 %v2027, %v2025
      %v2070 = vpack.c.b16 %v2030, %v2028
      %v2071 = vpack.c.b16 %v2031, %v2029
      %v2072 = vpack.c.b16 %v2034, %v2032
      %v2073 = vpack.c.b16 %v2035, %v2033
      %v2074 = vpack.c.b16 %v2038, %v2036
      %v2075 = vpack.c.b16 %v2039, %v2037
      %v2076 = vpack.c.b16 %v2042, %v2040
      %v2077 = vpack.c.b16 %v2043, %v2041
      %v2078 = vpack.c.b16 %v2046, %v2044
      %v2079 = vpack.c.b16 %v2047, %v2045
      %2112 = vmatprep.subr.bf16.mxu0 %v2049
      %2113 = vmatpush1.bf16.msra.mxu0 %v2048
      %2114 = vmatprep.subr.bf16.mxu0 %v2051
      %2115 = vmatpush1.bf16.msra.mxu0 %v2050
      %2116 = vmatprep.subr.bf16.mxu0 %v2053
      %2117 = vmatpush1.bf16.msra.mxu0 %v2052
      %2118 = vmatprep.subr.bf16.mxu0 %v2055
      %2119 = vmatpush1.bf16.msra.mxu0 %v2054
      %2120 = vmatprep.subr.bf16.mxu0 %v2057
      %2121 = vmatpush1.bf16.msra.mxu0 %v2056
      %2122 = vmatprep.subr.bf16.mxu0 %v2059
      %2123 = vmatpush1.bf16.msra.mxu0 %v2058
      %2124 = vmatprep.subr.bf16.mxu0 %v2061
      %2125 = vmatpush1.bf16.msra.mxu0 %v2060
      %2126 = vmatprep.subr.bf16.mxu0 %v2063
      %2127 = vmatpush1.bf16.msra.mxu0 %v2062
      %2128 = vmatprep.subr.bf16.mxu0 %v2065
      %2129 = vmatpush1.bf16.msra.mxu0 %v2064
      %2130 = vmatprep.subr.bf16.mxu0 %v2067
      %2131 = vmatpush1.bf16.msra.mxu0 %v2066
      %2132 = vmatprep.subr.bf16.mxu0 %v2069
      %2133 = vmatpush1.bf16.msra.mxu0 %v2068
      %2134 = vmatprep.subr.bf16.mxu0 %v2071
      %2135 = vmatpush1.bf16.msra.mxu0 %v2070
      %2136 = vmatprep.subr.bf16.mxu0 %v2073
      %2137 = vmatpush1.bf16.msra.mxu0 %v2072
      %2138 = vmatprep.subr.bf16.mxu0 %v2075
      %2139 = vmatpush1.bf16.msra.mxu0 %v2074
      %2140 = vmatprep.subr.bf16.mxu0 %v2077
      %2141 = vmatpush1.bf16.msra.mxu0 %v2076
      %2142 = vmatprep.subr.bf16.mxu0 %v2079
      %2143 = vmatpush1.bf16.msra.mxu0 %v2078
      %2144 = vmatprep.mubr.bf16.mxu0 %v1937
      %2145 = vmatmul.mubr.bf16.gmra.mrb[0].mxu0 %v1936
      %v2146 = vpop.f32.mrb[0].mxu0
      %v2147 = vadd.f32 0.0, %v2146
      %v2148 = vpop.f32.mrb[0].mxu0
      %v2149 = vadd.f32 0.0, %v2148
      %v2150 = vpop.f32.mrb[0].mxu0
      %v2151 = vadd.f32 0.0, %v2150
      %v2152 = vpop.f32.mrb[0].mxu0
      %v2153 = vadd.f32 0.0, %v2152
      %2154 = vmatprep.mubr.bf16.mxu0 %v1939
      %2155 = vmatmul.mubr.bf16.gmra.mrb[0].mxu0 %v1938
      %v2156 = vpop.f32.mrb[0].mxu0
      %v2157 = vadd.f32 0.0, %v2156
      %v2158 = vpop.f32.mrb[0].mxu0
      %v2159 = vadd.f32 0.0, %v2158
      %v2160 = vpop.f32.mrb[0].mxu0
      %v2161 = vadd.f32 0.0, %v2160
      %v2162 = vpop.f32.mrb[0].mxu0
      %v2163 = vadd.f32 0.0, %v2162
      %2164 = vmatprep.mubr.bf16.mxu0 %v1941
      %2165 = vmatmul.mubr.bf16.gmra.mrb[0].mxu0 %v1940
      %v2166 = vpop.f32.mrb[0].mxu0
      %v2167 = vadd.f32 0.0, %v2166
      %v2168 = vpop.f32.mrb[0].mxu0
      %v2169 = vadd.f32 0.0, %v2168
      %v2170 = vpop.f32.mrb[0].mxu0
      %v2171 = vadd.f32 0.0, %v2170
      %v2172 = vpop.f32.mrb[0].mxu0
      %v2173 = vadd.f32 0.0, %v2172
      %2174 = vmatprep.mubr.bf16.mxu0 %v1943
      %2175 = vmatmul.mubr.bf16.gmra.mrb[0].mxu0 %v1942
      %v2176 = vpop.f32.mrb[0].mxu0
      %v2177 = vadd.f32 0.0, %v2176
      %v2178 = vpop.f32.mrb[0].mxu0
      %v2179 = vadd.f32 0.0, %v2178
      %v2180 = vpop.f32.mrb[0].mxu0
      %v2181 = vadd.f32 0.0, %v2180
      %v2182 = vpop.f32.mrb[0].mxu0
      %v2183 = vadd.f32 0.0, %v2182
      %2184 = vdwg.mxu0
      %v2185 = vadd.f32 %v1855, %v2147
      %v2186 = vadd.f32 %v1856, %v2149
      %v2187 = vadd.f32 %v1857, %v2151
      %v2188 = vadd.f32 %v1858, %v2153
      %v2189 = vadd.f32 %v1859, %v2157
      %v2190 = vadd.f32 %v1860, %v2159
      %v2191 = vadd.f32 %v1861, %v2161
      %v2192 = vadd.f32 %v1862, %v2163
      %v2193 = vadd.f32 %v1863, %v2167
      %v2194 = vadd.f32 %v1864, %v2169
      %v2195 = vadd.f32 %v1865, %v2171
      %v2196 = vadd.f32 %v1866, %v2173
      %v2197 = vadd.f32 %v1867, %v2177
      %v2198 = vadd.f32 %v1868, %v2179
      %v2199 = vadd.f32 %v1869, %v2181
      %v2200 = vadd.f32 %v1870, %v2183
      %v2201 = vld [vmem:[%s575] sm:$0xff]
      %v2202 = vld [vmem:[%s575 + $0x8] sm:$0xff]
      %v2203 = vld [vmem:[%s575 + $0x10] sm:$0xff]
      %v2204 = vld [vmem:[%s575 + $0x18] sm:$0xff]
      %v2205 = vld [vmem:[%s575 + $0x20] sm:$0xff]
      %v2206 = vld [vmem:[%s575 + $0x28] sm:$0xff]
      %v2207 = vld [vmem:[%s575 + $0x30] sm:$0xff]
      %v2208 = vld [vmem:[%s575 + $0x38] sm:$0xff]
      %s2209 = scalar_lea.vmem %s1, 1280
      %v2210 = vld [vmem:[%s2209] sm:$0xff]
      %v2211 = vld [vmem:[%s2209 + $0x8] sm:$0xff]
      %v2212 = vld [vmem:[%s2209 + $0x10] sm:$0xff]
      %v2213 = vld [vmem:[%s2209 + $0x18] sm:$0xff]
      %v2214 = vld [vmem:[%s2209 + $0x20] sm:$0xff]
      %v2215 = vld [vmem:[%s2209 + $0x28] sm:$0xff]
      %v2216 = vld [vmem:[%s2209 + $0x30] sm:$0xff]
      %v2217 = vld [vmem:[%s2209 + $0x38] sm:$0xff]
      %v2218 = vld [vmem:[%s2209 + $0x40] sm:$0xff]
      %v2219 = vld [vmem:[%s2209 + $0x48] sm:$0xff]
      %v2220 = vld [vmem:[%s2209 + $0x50] sm:$0xff]
      %v2221 = vld [vmem:[%s2209 + $0x58] sm:$0xff]
      %v2222 = vld [vmem:[%s2209 + $0x60] sm:$0xff]
      %v2223 = vld [vmem:[%s2209 + $0x68] sm:$0xff]
      %v2224 = vld [vmem:[%s2209 + $0x70] sm:$0xff]
      %v2225 = vld [vmem:[%s2209 + $0x78] sm:$0xff]
      %v2226 = vld [vmem:[%s2209 + $0x80] sm:$0xff]
      %v2227 = vld [vmem:[%s2209 + $0x88] sm:$0xff]
      %v2228 = vld [vmem:[%s2209 + $0x90] sm:$0xff]
      %v2229 = vld [vmem:[%s2209 + $0x98] sm:$0xff]
      %v2230 = vld [vmem:[%s2209 + $0xa0] sm:$0xff]
      %v2231 = vld [vmem:[%s2209 + $0xa8] sm:$0xff]
      %v2232 = vld [vmem:[%s2209 + $0xb0] sm:$0xff]
      %v2233 = vld [vmem:[%s2209 + $0xb8] sm:$0xff]
      %v2234 = vld [vmem:[%s2209 + $0xc0] sm:$0xff]
      %v2235 = vld [vmem:[%s2209 + $0xc8] sm:$0xff]
      %v2236 = vld [vmem:[%s2209 + $0xd0] sm:$0xff]
      %v2237 = vld [vmem:[%s2209 + $0xd8] sm:$0xff]
      %v2238 = vld [vmem:[%s2209 + $0xe0] sm:$0xff]
      %v2239 = vld [vmem:[%s2209 + $0xe8] sm:$0xff]
      %v2240 = vld [vmem:[%s2209 + $0xf0] sm:$0xff]
      %v2241 = vld [vmem:[%s2209 + $0xf8] sm:$0xff]
      %v2250 = vunpack.c.l.b16 %v2201
      %v2251 = vunpack.c.h.b16 %v2201
      %v2252 = vunpack.c.l.b16 %v2202
      %v2253 = vunpack.c.h.b16 %v2202
      %v2254 = vunpack.c.l.b16 %v2203
      %v2255 = vunpack.c.h.b16 %v2203
      %v2256 = vunpack.c.l.b16 %v2204
      %v2257 = vunpack.c.h.b16 %v2204
      %v2258 = vunpack.c.l.b16 %v2205
      %v2259 = vunpack.c.h.b16 %v2205
      %v2260 = vunpack.c.l.b16 %v2206
      %v2261 = vunpack.c.h.b16 %v2206
      %v2262 = vunpack.c.l.b16 %v2207
      %v2263 = vunpack.c.h.b16 %v2207
      %v2264 = vunpack.c.l.b16 %v2208
      %v2265 = vunpack.c.h.b16 %v2208
      %v2266 = vpack.c.b16 %v2252, %v2250
      %v2267 = vpack.c.b16 %v2253, %v2251
      %v2268 = vpack.c.b16 %v2256, %v2254
      %v2269 = vpack.c.b16 %v2257, %v2255
      %v2270 = vpack.c.b16 %v2260, %v2258
      %v2271 = vpack.c.b16 %v2261, %v2259
      %v2272 = vpack.c.b16 %v2264, %v2262
      %v2273 = vpack.c.b16 %v2265, %v2263
      %v2314 = vunpack.c.l.b16 %v2210
      %v2315 = vunpack.c.h.b16 %v2210
      %v2316 = vunpack.c.l.b16 %v2211
      %v2317 = vunpack.c.h.b16 %v2211
      %v2318 = vunpack.c.l.b16 %v2212
      %v2319 = vunpack.c.h.b16 %v2212
      %v2320 = vunpack.c.l.b16 %v2213
      %v2321 = vunpack.c.h.b16 %v2213
      %v2322 = vunpack.c.l.b16 %v2214
      %v2323 = vunpack.c.h.b16 %v2214
      %v2324 = vunpack.c.l.b16 %v2215
      %v2325 = vunpack.c.h.b16 %v2215
      %v2326 = vunpack.c.l.b16 %v2216
      %v2327 = vunpack.c.h.b16 %v2216
      %v2328 = vunpack.c.l.b16 %v2217
      %v2329 = vunpack.c.h.b16 %v2217
      %v2330 = vunpack.c.l.b16 %v2218
      %v2331 = vunpack.c.h.b16 %v2218
      %v2332 = vunpack.c.l.b16 %v2219
      %v2333 = vunpack.c.h.b16 %v2219
      %v2334 = vunpack.c.l.b16 %v2220
      %v2335 = vunpack.c.h.b16 %v2220
      %v2336 = vunpack.c.l.b16 %v2221
      %v2337 = vunpack.c.h.b16 %v2221
      %v2338 = vunpack.c.l.b16 %v2222
      %v2339 = vunpack.c.h.b16 %v2222
      %v2340 = vunpack.c.l.b16 %v2223
      %v2341 = vunpack.c.h.b16 %v2223
      %v2342 = vunpack.c.l.b16 %v2224
      %v2343 = vunpack.c.h.b16 %v2224
      %v2344 = vunpack.c.l.b16 %v2225
      %v2345 = vunpack.c.h.b16 %v2225
      %v2346 = vunpack.c.l.b16 %v2226
      %v2347 = vunpack.c.h.b16 %v2226
      %v2348 = vunpack.c.l.b16 %v2227
      %v2349 = vunpack.c.h.b16 %v2227
      %v2350 = vunpack.c.l.b16 %v2228
      %v2351 = vunpack.c.h.b16 %v2228
      %v2352 = vunpack.c.l.b16 %v2229
      %v2353 = vunpack.c.h.b16 %v2229
      %v2354 = vunpack.c.l.b16 %v2230
      %v2355 = vunpack.c.h.b16 %v2230
      %v2356 = vunpack.c.l.b16 %v2231
      %v2357 = vunpack.c.h.b16 %v2231
      %v2358 = vunpack.c.l.b16 %v2232
      %v2359 = vunpack.c.h.b16 %v2232
      %v2360 = vunpack.c.l.b16 %v2233
      %v2361 = vunpack.c.h.b16 %v2233
      %v2362 = vunpack.c.l.b16 %v2234
      %v2363 = vunpack.c.h.b16 %v2234
      %v2364 = vunpack.c.l.b16 %v2235
      %v2365 = vunpack.c.h.b16 %v2235
      %v2366 = vunpack.c.l.b16 %v2236
      %v2367 = vunpack.c.h.b16 %v2236
      %v2368 = vunpack.c.l.b16 %v2237
      %v2369 = vunpack.c.h.b16 %v2237
      %v2370 = vunpack.c.l.b16 %v2238
      %v2371 = vunpack.c.h.b16 %v2238
      %v2372 = vunpack.c.l.b16 %v2239
      %v2373 = vunpack.c.h.b16 %v2239
      %v2374 = vunpack.c.l.b16 %v2240
      %v2375 = vunpack.c.h.b16 %v2240
      %v2376 = vunpack.c.l.b16 %v2241
      %v2377 = vunpack.c.h.b16 %v2241
      %v2378 = vpack.c.b16 %v2316, %v2314
      %v2379 = vpack.c.b16 %v2317, %v2315
      %v2380 = vpack.c.b16 %v2320, %v2318
      %v2381 = vpack.c.b16 %v2321, %v2319
      %v2382 = vpack.c.b16 %v2324, %v2322
      %v2383 = vpack.c.b16 %v2325, %v2323
      %v2384 = vpack.c.b16 %v2328, %v2326
      %v2385 = vpack.c.b16 %v2329, %v2327
      %v2386 = vpack.c.b16 %v2332, %v2330
      %v2387 = vpack.c.b16 %v2333, %v2331
      %v2388 = vpack.c.b16 %v2336, %v2334
      %v2389 = vpack.c.b16 %v2337, %v2335
      %v2390 = vpack.c.b16 %v2340, %v2338
      %v2391 = vpack.c.b16 %v2341, %v2339
      %v2392 = vpack.c.b16 %v2344, %v2342
      %v2393 = vpack.c.b16 %v2345, %v2343
      %v2394 = vpack.c.b16 %v2348, %v2346
      %v2395 = vpack.c.b16 %v2349, %v2347
      %v2396 = vpack.c.b16 %v2352, %v2350
      %v2397 = vpack.c.b16 %v2353, %v2351
      %v2398 = vpack.c.b16 %v2356, %v2354
      %v2399 = vpack.c.b16 %v2357, %v2355
      %v2400 = vpack.c.b16 %v2360, %v2358
      %v2401 = vpack.c.b16 %v2361, %v2359
      %v2402 = vpack.c.b16 %v2364, %v2362
      %v2403 = vpack.c.b16 %v2365, %v2363
      %v2404 = vpack.c.b16 %v2368, %v2366
      %v2405 = vpack.c.b16 %v2369, %v2367
      %v2406 = vpack.c.b16 %v2372, %v2370
      %v2407 = vpack.c.b16 %v2373, %v2371
      %v2408 = vpack.c.b16 %v2376, %v2374
      %v2409 = vpack.c.b16 %v2377, %v2375
      %2442 = vmatprep.subr.bf16.mxu0 %v2379
      %2443 = vmatpush1.bf16.msra.mxu0 %v2378
      %2444 = vmatprep.subr.bf16.mxu0 %v2381
      %2445 = vmatpush1.bf16.msra.mxu0 %v2380
      %2446 = vmatprep.subr.bf16.mxu0 %v2383
      %2447 = vmatpush1.bf16.msra.mxu0 %v2382
      %2448 = vmatprep.subr.bf16.mxu0 %v2385
      %2449 = vmatpush1.bf16.msra.mxu0 %v2384
      %2450 = vmatprep.subr.bf16.mxu0 %v2387
      %2451 = vmatpush1.bf16.msra.mxu0 %v2386
      %2452 = vmatprep.subr.bf16.mxu0 %v2389
      %2453 = vmatpush1.bf16.msra.mxu0 %v2388
      %2454 = vmatprep.subr.bf16.mxu0 %v2391
      %2455 = vmatpush1.bf16.msra.mxu0 %v2390
      %2456 = vmatprep.subr.bf16.mxu0 %v2393
      %2457 = vmatpush1.bf16.msra.mxu0 %v2392
      %2458 = vmatprep.subr.bf16.mxu0 %v2395
      %2459 = vmatpush1.bf16.msra.mxu0 %v2394
      %2460 = vmatprep.subr.bf16.mxu0 %v2397
      %2461 = vmatpush1.bf16.msra.mxu0 %v2396
      %2462 = vmatprep.subr.bf16.mxu0 %v2399
      %2463 = vmatpush1.bf16.msra.mxu0 %v2398
      %2464 = vmatprep.subr.bf16.mxu0 %v2401
      %2465 = vmatpush1.bf16.msra.mxu0 %v2400
      %2466 = vmatprep.subr.bf16.mxu0 %v2403
      %2467 = vmatpush1.bf16.msra.mxu0 %v2402
      %2468 = vmatprep.subr.bf16.mxu0 %v2405
      %2469 = vmatpush1.bf16.msra.mxu0 %v2404
      %2470 = vmatprep.subr.bf16.mxu0 %v2407
      %2471 = vmatpush1.bf16.msra.mxu0 %v2406
      %2472 = vmatprep.subr.bf16.mxu0 %v2409
      %2473 = vmatpush1.bf16.msra.mxu0 %v2408
      %2474 = vmatprep.mubr.bf16.mxu0 %v2267
      %2475 = vmatmul.mubr.bf16.gmra.mrb[0].mxu0 %v2266
      %v2476 = vpop.f32.mrb[0].mxu0
      %v2477 = vadd.f32 0.0, %v2476
      %v2478 = vpop.f32.mrb[0].mxu0
      %v2479 = vadd.f32 0.0, %v2478
      %v2480 = vpop.f32.mrb[0].mxu0
      %v2481 = vadd.f32 0.0, %v2480
      %v2482 = vpop.f32.mrb[0].mxu0
      %v2483 = vadd.f32 0.0, %v2482
      %2484 = vmatprep.mubr.bf16.mxu0 %v2269
      %2485 = vmatmul.mubr.bf16.gmra.mrb[0].mxu0 %v2268
      %v2486 = vpop.f32.mrb[0].mxu0
      %v2487 = vadd.f32 0.0, %v2486
      %v2488 = vpop.f32.mrb[0].mxu0
      %v2489 = vadd.f32 0.0, %v2488
      %v2490 = vpop.f32.mrb[0].mxu0
      %v2491 = vadd.f32 0.0, %v2490
      %v2492 = vpop.f32.mrb[0].mxu0
      %v2493 = vadd.f32 0.0, %v2492
      %2494 = vmatprep.mubr.bf16.mxu0 %v2271
      %2495 = vmatmul.mubr.bf16.gmra.mrb[0].mxu0 %v2270
      %v2496 = vpop.f32.mrb[0].mxu0
      %v2497 = vadd.f32 0.0, %v2496
      %v2498 = vpop.f32.mrb[0].mxu0
      %v2499 = vadd.f32 0.0, %v2498
      %v2500 = vpop.f32.mrb[0].mxu0
      %v2501 = vadd.f32 0.0, %v2500
      %v2502 = vpop.f32.mrb[0].mxu0
      %v2503 = vadd.f32 0.0, %v2502
      %2504 = vmatprep.mubr.bf16.mxu0 %v2273
      %2505 = vmatmul.mubr.bf16.gmra.mrb[0].mxu0 %v2272
      %v2506 = vpop.f32.mrb[0].mxu0
      %v2507 = vadd.f32 0.0, %v2506
      %v2508 = vpop.f32.mrb[0].mxu0
      %v2509 = vadd.f32 0.0, %v2508
      %v2510 = vpop.f32.mrb[0].mxu0
      %v2511 = vadd.f32 0.0, %v2510
      %v2512 = vpop.f32.mrb[0].mxu0
      %v2513 = vadd.f32 0.0, %v2512
      %2514 = vdwg.mxu0
      %v2515 = vadd.f32 %v2185, %v2477
      %v2516 = vadd.f32 %v2186, %v2479
      %v2517 = vadd.f32 %v2187, %v2481
      %v2518 = vadd.f32 %v2188, %v2483
      %v2519 = vadd.f32 %v2189, %v2487
      %v2520 = vadd.f32 %v2190, %v2489
      %v2521 = vadd.f32 %v2191, %v2491
      %v2522 = vadd.f32 %v2192, %v2493
      %v2523 = vadd.f32 %v2193, %v2497
      %v2524 = vadd.f32 %v2194, %v2499
      %v2525 = vadd.f32 %v2195, %v2501
      %v2526 = vadd.f32 %v2196, %v2503
      %v2527 = vadd.f32 %v2197, %v2507
      %v2528 = vadd.f32 %v2198, %v2509
      %v2529 = vadd.f32 %v2199, %v2511
      %v2530 = vadd.f32 %v2200, %v2513
      %s2531 = scalar_lea.vmem [#allocation2], 16
      %v2532 = vld [vmem:[%s2531] sm:$0xff]
      %v2533 = vld [vmem:[%s2531 + $0x8] sm:$0xff]
      %v2534 = vld [vmem:[%s2531 + $0x10] sm:$0xff]
      %v2535 = vld [vmem:[%s2531 + $0x18] sm:$0xff]
      %v2536 = vld [vmem:[%s2531 + $0x20] sm:$0xff]
      %v2537 = vld [vmem:[%s2531 + $0x28] sm:$0xff]
      %v2538 = vld [vmem:[%s2531 + $0x30] sm:$0xff]
      %v2539 = vld [vmem:[%s2531 + $0x38] sm:$0xff]
      %s2540 = scalar_lea.vmem %s1, 1536
      %v2541 = vld [vmem:[%s2540] sm:$0xff]
      %v2542 = vld [vmem:[%s2540 + $0x8] sm:$0xff]
      %v2543 = vld [vmem:[%s2540 + $0x10] sm:$0xff]
      %v2544 = vld [vmem:[%s2540 + $0x18] sm:$0xff]
      %v2545 = vld [vmem:[%s2540 + $0x20] sm:$0xff]
      %v2546 = vld [vmem:[%s2540 + $0x28] sm:$0xff]
      %v2547 = vld [vmem:[%s2540 + $0x30] sm:$0xff]
      %v2548 = vld [vmem:[%s2540 + $0x38] sm:$0xff]
      %v2549 = vld [vmem:[%s2540 + $0x40] sm:$0xff]
      %v2550 = vld [vmem:[%s2540 + $0x48] sm:$0xff]
      %v2551 = vld [vmem:[%s2540 + $0x50] sm:$0xff]
      %v2552 = vld [vmem:[%s2540 + $0x58] sm:$0xff]
      %v2553 = vld [vmem:[%s2540 + $0x60] sm:$0xff]
      %v2554 = vld [vmem:[%s2540 + $0x68] sm:$0xff]
      %v2555 = vld [vmem:[%s2540 + $0x70] sm:$0xff]
      %v2556 = vld [vmem:[%s2540 + $0x78] sm:$0xff]
      %v2557 = vld [vmem:[%s2540 + $0x80] sm:$0xff]
      %v2558 = vld [vmem:[%s2540 + $0x88] sm:$0xff]
      %v2559 = vld [vmem:[%s2540 + $0x90] sm:$0xff]
      %v2560 = vld [vmem:[%s2540 + $0x98] sm:$0xff]
      %v2561 = vld [vmem:[%s2540 + $0xa0] sm:$0xff]
      %v2562 = vld [vmem:[%s2540 + $0xa8] sm:$0xff]
      %v2563 = vld [vmem:[%s2540 + $0xb0] sm:$0xff]
      %v2564 = vld [vmem:[%s2540 + $0xb8] sm:$0xff]
      %v2565 = vld [vmem:[%s2540 + $0xc0] sm:$0xff]
      %v2566 = vld [vmem:[%s2540 + $0xc8] sm:$0xff]
      %v2567 = vld [vmem:[%s2540 + $0xd0] sm:$0xff]
      %v2568 = vld [vmem:[%s2540 + $0xd8] sm:$0xff]
      %v2569 = vld [vmem:[%s2540 + $0xe0] sm:$0xff]
      %v2570 = vld [vmem:[%s2540 + $0xe8] sm:$0xff]
      %v2571 = vld [vmem:[%s2540 + $0xf0] sm:$0xff]
      %v2572 = vld [vmem:[%s2540 + $0xf8] sm:$0xff]
      %v2581 = vunpack.c.l.b16 %v2532
      %v2582 = vunpack.c.h.b16 %v2532
      %v2583 = vunpack.c.l.b16 %v2533
      %v2584 = vunpack.c.h.b16 %v2533
      %v2585 = vunpack.c.l.b16 %v2534
      %v2586 = vunpack.c.h.b16 %v2534
      %v2587 = vunpack.c.l.b16 %v2535
      %v2588 = vunpack.c.h.b16 %v2535
      %v2589 = vunpack.c.l.b16 %v2536
      %v2590 = vunpack.c.h.b16 %v2536
      %v2591 = vunpack.c.l.b16 %v2537
      %v2592 = vunpack.c.h.b16 %v2537
      %v2593 = vunpack.c.l.b16 %v2538
      %v2594 = vunpack.c.h.b16 %v2538
      %v2595 = vunpack.c.l.b16 %v2539
      %v2596 = vunpack.c.h.b16 %v2539
      %v2597 = vpack.c.b16 %v2583, %v2581
      %v2598 = vpack.c.b16 %v2584, %v2582
      %v2599 = vpack.c.b16 %v2587, %v2585
      %v2600 = vpack.c.b16 %v2588, %v2586
      %v2601 = vpack.c.b16 %v2591, %v2589
      %v2602 = vpack.c.b16 %v2592, %v2590
      %v2603 = vpack.c.b16 %v2595, %v2593
      %v2604 = vpack.c.b16 %v2596, %v2594
      %v2645 = vunpack.c.l.b16 %v2541
      %v2646 = vunpack.c.h.b16 %v2541
      %v2647 = vunpack.c.l.b16 %v2542
      %v2648 = vunpack.c.h.b16 %v2542
      %v2649 = vunpack.c.l.b16 %v2543
      %v2650 = vunpack.c.h.b16 %v2543
      %v2651 = vunpack.c.l.b16 %v2544
      %v2652 = vunpack.c.h.b16 %v2544
      %v2653 = vunpack.c.l.b16 %v2545
      %v2654 = vunpack.c.h.b16 %v2545
      %v2655 = vunpack.c.l.b16 %v2546
      %v2656 = vunpack.c.h.b16 %v2546
      %v2657 = vunpack.c.l.b16 %v2547
      %v2658 = vunpack.c.h.b16 %v2547
      %v2659 = vunpack.c.l.b16 %v2548
      %v2660 = vunpack.c.h.b16 %v2548
      %v2661 = vunpack.c.l.b16 %v2549
      %v2662 = vunpack.c.h.b16 %v2549
      %v2663 = vunpack.c.l.b16 %v2550
      %v2664 = vunpack.c.h.b16 %v2550
      %v2665 = vunpack.c.l.b16 %v2551
      %v2666 = vunpack.c.h.b16 %v2551
      %v2667 = vunpack.c.l.b16 %v2552
      %v2668 = vunpack.c.h.b16 %v2552
      %v2669 = vunpack.c.l.b16 %v2553
      %v2670 = vunpack.c.h.b16 %v2553
      %v2671 = vunpack.c.l.b16 %v2554
      %v2672 = vunpack.c.h.b16 %v2554
      %v2673 = vunpack.c.l.b16 %v2555
      %v2674 = vunpack.c.h.b16 %v2555
      %v2675 = vunpack.c.l.b16 %v2556
      %v2676 = vunpack.c.h.b16 %v2556
      %v2677 = vunpack.c.l.b16 %v2557
      %v2678 = vunpack.c.h.b16 %v2557
      %v2679 = vunpack.c.l.b16 %v2558
      %v2680 = vunpack.c.h.b16 %v2558
      %v2681 = vunpack.c.l.b16 %v2559
      %v2682 = vunpack.c.h.b16 %v2559
      %v2683 = vunpack.c.l.b16 %v2560
      %v2684 = vunpack.c.h.b16 %v2560
      %v2685 = vunpack.c.l.b16 %v2561
      %v2686 = vunpack.c.h.b16 %v2561
      %v2687 = vunpack.c.l.b16 %v2562
      %v2688 = vunpack.c.h.b16 %v2562
      %v2689 = vunpack.c.l.b16 %v2563
      %v2690 = vunpack.c.h.b16 %v2563
      %v2691 = vunpack.c.l.b16 %v2564
      %v2692 = vunpack.c.h.b16 %v2564
      %v2693 = vunpack.c.l.b16 %v2565
      %v2694 = vunpack.c.h.b16 %v2565
      %v2695 = vunpack.c.l.b16 %v2566
      %v2696 = vunpack.c.h.b16 %v2566
      %v2697 = vunpack.c.l.b16 %v2567
      %v2698 = vunpack.c.h.b16 %v2567
      %v2699 = vunpack.c.l.b16 %v2568
      %v2700 = vunpack.c.h.b16 %v2568
      %v2701 = vunpack.c.l.b16 %v2569
      %v2702 = vunpack.c.h.b16 %v2569
      %v2703 = vunpack.c.l.b16 %v2570
      %v2704 = vunpack.c.h.b16 %v2570
      %v2705 = vunpack.c.l.b16 %v2571
      %v2706 = vunpack.c.h.b16 %v2571
      %v2707 = vunpack.c.l.b16 %v2572
      %v2708 = vunpack.c.h.b16 %v2572
      %v2709 = vpack.c.b16 %v2647, %v2645
      %v2710 = vpack.c.b16 %v2648, %v2646
      %v2711 = vpack.c.b16 %v2651, %v2649
      %v2712 = vpack.c.b16 %v2652, %v2650
      %v2713 = vpack.c.b16 %v2655, %v2653
      %v2714 = vpack.c.b16 %v2656, %v2654
      %v2715 = vpack.c.b16 %v2659, %v2657
      %v2716 = vpack.c.b16 %v2660, %v2658
      %v2717 = vpack.c.b16 %v2663, %v2661
      %v2718 = vpack.c.b16 %v2664, %v2662
      %v2719 = vpack.c.b16 %v2667, %v2665
      %v2720 = vpack.c.b16 %v2668, %v2666
      %v2721 = vpack.c.b16 %v2671, %v2669
      %v2722 = vpack.c.b16 %v2672, %v2670
      %v2723 = vpack.c.b16 %v2675, %v2673
      %v2724 = vpack.c.b16 %v2676, %v2674
      %v2725 = vpack.c.b16 %v2679, %v2677
      %v2726 = vpack.c.b16 %v2680, %v2678
      %v2727 = vpack.c.b16 %v2683, %v2681
      %v2728 = vpack.c.b16 %v2684, %v2682
      %v2729 = vpack.c.b16 %v2687, %v2685
      %v2730 = vpack.c.b16 %v2688, %v2686
      %v2731 = vpack.c.b16 %v2691, %v2689
      %v2732 = vpack.c.b16 %v2692, %v2690
      %v2733 = vpack.c.b16 %v2695, %v2693
      %v2734 = vpack.c.b16 %v2696, %v2694
      %v2735 = vpack.c.b16 %v2699, %v2697
      %v2736 = vpack.c.b16 %v2700, %v2698
      %v2737 = vpack.c.b16 %v2703, %v2701
      %v2738 = vpack.c.b16 %v2704, %v2702
      %v2739 = vpack.c.b16 %v2707, %v2705
      %v2740 = vpack.c.b16 %v2708, %v2706
      %2773 = vmatprep.subr.bf16.mxu0 %v2710
      %2774 = vmatpush1.bf16.msra.mxu0 %v2709
      %2775 = vmatprep.subr.bf16.mxu0 %v2712
      %2776 = vmatpush1.bf16.msra.mxu0 %v2711
      %2777 = vmatprep.subr.bf16.mxu0 %v2714
      %2778 = vmatpush1.bf16.msra.mxu0 %v2713
      %2779 = vmatprep.subr.bf16.mxu0 %v2716
      %2780 = vmatpush1.bf16.msra.mxu0 %v2715
      %2781 = vmatprep.subr.bf16.mxu0 %v2718
      %2782 = vmatpush1.bf16.msra.mxu0 %v2717
      %2783 = vmatprep.subr.bf16.mxu0 %v2720
      %2784 = vmatpush1.bf16.msra.mxu0 %v2719
      %2785 = vmatprep.subr.bf16.mxu0 %v2722
      %2786 = vmatpush1.bf16.msra.mxu0 %v2721
      %2787 = vmatprep.subr.bf16.mxu0 %v2724
      %2788 = vmatpush1.bf16.msra.mxu0 %v2723
      %2789 = vmatprep.subr.bf16.mxu0 %v2726
      %2790 = vmatpush1.bf16.msra.mxu0 %v2725
      %2791 = vmatprep.subr.bf16.mxu0 %v2728
      %2792 = vmatpush1.bf16.msra.mxu0 %v2727
      %2793 = vmatprep.subr.bf16.mxu0 %v2730
      %2794 = vmatpush1.bf16.msra.mxu0 %v2729
      %2795 = vmatprep.subr.bf16.mxu0 %v2732
      %2796 = vmatpush1.bf16.msra.mxu0 %v2731
      %2797 = vmatprep.subr.bf16.mxu0 %v2734
      %2798 = vmatpush1.bf16.msra.mxu0 %v2733
      %2799 = vmatprep.subr.bf16.mxu0 %v2736
      %2800 = vmatpush1.bf16.msra.mxu0 %v2735
      %2801 = vmatprep.subr.bf16.mxu0 %v2738
      %2802 = vmatpush1.bf16.msra.mxu0 %v2737
      %2803 = vmatprep.subr.bf16.mxu0 %v2740
      %2804 = vmatpush1.bf16.msra.mxu0 %v2739
      %2805 = vmatprep.mubr.bf16.mxu0 %v2598
      %2806 = vmatmul.mubr.bf16.gmra.mrb[0].mxu0 %v2597
      %v2807 = vpop.f32.mrb[0].mxu0
      %v2808 = vadd.f32 0.0, %v2807
      %v2809 = vpop.f32.mrb[0].mxu0
      %v2810 = vadd.f32 0.0, %v2809
      %v2811 = vpop.f32.mrb[0].mxu0
      %v2812 = vadd.f32 0.0, %v2811
      %v2813 = vpop.f32.mrb[0].mxu0
      %v2814 = vadd.f32 0.0, %v2813
      %2815 = vmatprep.mubr.bf16.mxu0 %v2600
      %2816 = vmatmul.mubr.bf16.gmra.mrb[0].mxu0 %v2599
      %v2817 = vpop.f32.mrb[0].mxu0
      %v2818 = vadd.f32 0.0, %v2817
      %v2819 = vpop.f32.mrb[0].mxu0
      %v2820 = vadd.f32 0.0, %v2819
      %v2821 = vpop.f32.mrb[0].mxu0
      %v2822 = vadd.f32 0.0, %v2821
      %v2823 = vpop.f32.mrb[0].mxu0
      %v2824 = vadd.f32 0.0, %v2823
      %2825 = vmatprep.mubr.bf16.mxu0 %v2602
      %2826 = vmatmul.mubr.bf16.gmra.mrb[0].mxu0 %v2601
      %v2827 = vpop.f32.mrb[0].mxu0
      %v2828 = vadd.f32 0.0, %v2827
      %v2829 = vpop.f32.mrb[0].mxu0
      %v2830 = vadd.f32 0.0, %v2829
      %v2831 = vpop.f32.mrb[0].mxu0
      %v2832 = vadd.f32 0.0, %v2831
      %v2833 = vpop.f32.mrb[0].mxu0
      %v2834 = vadd.f32 0.0, %v2833
      %2835 = vmatprep.mubr.bf16.mxu0 %v2604
      %2836 = vmatmul.mubr.bf16.gmra.mrb[0].mxu0 %v2603
      %v2837 = vpop.f32.mrb[0].mxu0
      %v2838 = vadd.f32 0.0, %v2837
      %v2839 = vpop.f32.mrb[0].mxu0
      %v2840 = vadd.f32 0.0, %v2839
      %v2841 = vpop.f32.mrb[0].mxu0
      %v2842 = vadd.f32 0.0, %v2841
      %v2843 = vpop.f32.mrb[0].mxu0
      %v2844 = vadd.f32 0.0, %v2843
      %2845 = vdwg.mxu0
      %v2846 = vadd.f32 %v2515, %v2808
      %v2847 = vadd.f32 %v2516, %v2810
      %v2848 = vadd.f32 %v2517, %v2812
      %v2849 = vadd.f32 %v2518, %v2814
      %v2850 = vadd.f32 %v2519, %v2818
      %v2851 = vadd.f32 %v2520, %v2820
      %v2852 = vadd.f32 %v2521, %v2822
      %v2853 = vadd.f32 %v2522, %v2824
      %v2854 = vadd.f32 %v2523, %v2828
      %v2855 = vadd.f32 %v2524, %v2830
      %v2856 = vadd.f32 %v2525, %v2832
      %v2857 = vadd.f32 %v2526, %v2834
      %v2858 = vadd.f32 %v2527, %v2838
      %v2859 = vadd.f32 %v2528, %v2840
      %v2860 = vadd.f32 %v2529, %v2842
      %v2861 = vadd.f32 %v2530, %v2844
      %s2862 = scalar_lea.vmem [#allocation2], 96
      %v2863 = vld [vmem:[%s2862] sm:$0xff]
      %v2864 = vld [vmem:[%s2862 + $0x8] sm:$0xff]
      %v2865 = vld [vmem:[%s2862 + $0x10] sm:$0xff]
      %v2866 = vld [vmem:[%s2862 + $0x18] sm:$0xff]
      %v2867 = vld [vmem:[%s2862 + $0x20] sm:$0xff]
      %v2868 = vld [vmem:[%s2862 + $0x28] sm:$0xff]
      %v2869 = vld [vmem:[%s2862 + $0x30] sm:$0xff]
      %v2870 = vld [vmem:[%s2862 + $0x38] sm:$0xff]
      %s2871 = scalar_lea.vmem %s1, 1792
      %v2872 = vld [vmem:[%s2871] sm:$0xff]
      %v2873 = vld [vmem:[%s2871 + $0x8] sm:$0xff]
      %v2874 = vld [vmem:[%s2871 + $0x10] sm:$0xff]
      %v2875 = vld [vmem:[%s2871 + $0x18] sm:$0xff]
      %v2876 = vld [vmem:[%s2871 + $0x20] sm:$0xff]
      %v2877 = vld [vmem:[%s2871 + $0x28] sm:$0xff]
      %v2878 = vld [vmem:[%s2871 + $0x30] sm:$0xff]
      %v2879 = vld [vmem:[%s2871 + $0x38] sm:$0xff]
      %v2880 = vld [vmem:[%s2871 + $0x40] sm:$0xff]
      %v2881 = vld [vmem:[%s2871 + $0x48] sm:$0xff]
      %v2882 = vld [vmem:[%s2871 + $0x50] sm:$0xff]
      %v2883 = vld [vmem:[%s2871 + $0x58] sm:$0xff]
      %v2884 = vld [vmem:[%s2871 + $0x60] sm:$0xff]
      %v2885 = vld [vmem:[%s2871 + $0x68] sm:$0xff]
      %v2886 = vld [vmem:[%s2871 + $0x70] sm:$0xff]
      %v2887 = vld [vmem:[%s2871 + $0x78] sm:$0xff]
      %v2888 = vld [vmem:[%s2871 + $0x80] sm:$0xff]
      %v2889 = vld [vmem:[%s2871 + $0x88] sm:$0xff]
      %v2890 = vld [vmem:[%s2871 + $0x90] sm:$0xff]
      %v2891 = vld [vmem:[%s2871 + $0x98] sm:$0xff]
      %v2892 = vld [vmem:[%s2871 + $0xa0] sm:$0xff]
      %v2893 = vld [vmem:[%s2871 + $0xa8] sm:$0xff]
      %v2894 = vld [vmem:[%s2871 + $0xb0] sm:$0xff]
      %v2895 = vld [vmem:[%s2871 + $0xb8] sm:$0xff]
      %v2896 = vld [vmem:[%s2871 + $0xc0] sm:$0xff]
      %v2897 = vld [vmem:[%s2871 + $0xc8] sm:$0xff]
      %v2898 = vld [vmem:[%s2871 + $0xd0] sm:$0xff]
      %v2899 = vld [vmem:[%s2871 + $0xd8] sm:$0xff]
      %v2900 = vld [vmem:[%s2871 + $0xe0] sm:$0xff]
      %v2901 = vld [vmem:[%s2871 + $0xe8] sm:$0xff]
      %v2902 = vld [vmem:[%s2871 + $0xf0] sm:$0xff]
      %v2903 = vld [vmem:[%s2871 + $0xf8] sm:$0xff]
      %v2912 = vunpack.c.l.b16 %v2863
      %v2913 = vunpack.c.h.b16 %v2863
      %v2914 = vunpack.c.l.b16 %v2864
      %v2915 = vunpack.c.h.b16 %v2864
      %v2916 = vunpack.c.l.b16 %v2865
      %v2917 = vunpack.c.h.b16 %v2865
      %v2918 = vunpack.c.l.b16 %v2866
      %v2919 = vunpack.c.h.b16 %v2866
      %v2920 = vunpack.c.l.b16 %v2867
      %v2921 = vunpack.c.h.b16 %v2867
      %v2922 = vunpack.c.l.b16 %v2868
      %v2923 = vunpack.c.h.b16 %v2868
      %v2924 = vunpack.c.l.b16 %v2869
      %v2925 = vunpack.c.h.b16 %v2869
      %v2926 = vunpack.c.l.b16 %v2870
      %v2927 = vunpack.c.h.b16 %v2870
      %v2928 = vpack.c.b16 %v2914, %v2912
      %v2929 = vpack.c.b16 %v2915, %v2913
      %v2930 = vpack.c.b16 %v2918, %v2916
      %v2931 = vpack.c.b16 %v2919, %v2917
      %v2932 = vpack.c.b16 %v2922, %v2920
      %v2933 = vpack.c.b16 %v2923, %v2921
      %v2934 = vpack.c.b16 %v2926, %v2924
      %v2935 = vpack.c.b16 %v2927, %v2925
      %v2976 = vunpack.c.l.b16 %v2872
      %v2977 = vunpack.c.h.b16 %v2872
      %v2978 = vunpack.c.l.b16 %v2873
      %v2979 = vunpack.c.h.b16 %v2873
      %v2980 = vunpack.c.l.b16 %v2874
      %v2981 = vunpack.c.h.b16 %v2874
      %v2982 = vunpack.c.l.b16 %v2875
      %v2983 = vunpack.c.h.b16 %v2875
      %v2984 = vunpack.c.l.b16 %v2876
      %v2985 = vunpack.c.h.b16 %v2876
      %v2986 = vunpack.c.l.b16 %v2877
      %v2987 = vunpack.c.h.b16 %v2877
      %v2988 = vunpack.c.l.b16 %v2878
      %v2989 = vunpack.c.h.b16 %v2878
      %v2990 = vunpack.c.l.b16 %v2879
      %v2991 = vunpack.c.h.b16 %v2879
      %v2992 = vunpack.c.l.b16 %v2880
      %v2993 = vunpack.c.h.b16 %v2880
      %v2994 = vunpack.c.l.b16 %v2881
      %v2995 = vunpack.c.h.b16 %v2881
      %v2996 = vunpack.c.l.b16 %v2882
      %v2997 = vunpack.c.h.b16 %v2882
      %v2998 = vunpack.c.l.b16 %v2883
      %v2999 = vunpack.c.h.b16 %v2883
      %v3000 = vunpack.c.l.b16 %v2884
      %v3001 = vunpack.c.h.b16 %v2884
      %v3002 = vunpack.c.l.b16 %v2885
      %v3003 = vunpack.c.h.b16 %v2885
      %v3004 = vunpack.c.l.b16 %v2886
      %v3005 = vunpack.c.h.b16 %v2886
      %v3006 = vunpack.c.l.b16 %v2887
      %v3007 = vunpack.c.h.b16 %v2887
      %v3008 = vunpack.c.l.b16 %v2888
      %v3009 = vunpack.c.h.b16 %v2888
      %v3010 = vunpack.c.l.b16 %v2889
      %v3011 = vunpack.c.h.b16 %v2889
      %v3012 = vunpack.c.l.b16 %v2890
      %v3013 = vunpack.c.h.b16 %v2890
      %v3014 = vunpack.c.l.b16 %v2891
      %v3015 = vunpack.c.h.b16 %v2891
      %v3016 = vunpack.c.l.b16 %v2892
      %v3017 = vunpack.c.h.b16 %v2892
      %v3018 = vunpack.c.l.b16 %v2893
      %v3019 = vunpack.c.h.b16 %v2893
      %v3020 = vunpack.c.l.b16 %v2894
      %v3021 = vunpack.c.h.b16 %v2894
      %v3022 = vunpack.c.l.b16 %v2895
      %v3023 = vunpack.c.h.b16 %v2895
      %v3024 = vunpack.c.l.b16 %v2896
      %v3025 = vunpack.c.h.b16 %v2896
      %v3026 = vunpack.c.l.b16 %v2897
      %v3027 = vunpack.c.h.b16 %v2897
      %v3028 = vunpack.c.l.b16 %v2898
      %v3029 = vunpack.c.h.b16 %v2898
      %v3030 = vunpack.c.l.b16 %v2899
      %v3031 = vunpack.c.h.b16 %v2899
      %v3032 = vunpack.c.l.b16 %v2900
      %v3033 = vunpack.c.h.b16 %v2900
      %v3034 = vunpack.c.l.b16 %v2901
      %v3035 = vunpack.c.h.b16 %v2901
      %v3036 = vunpack.c.l.b16 %v2902
      %v3037 = vunpack.c.h.b16 %v2902
      %v3038 = vunpack.c.l.b16 %v2903
      %v3039 = vunpack.c.h.b16 %v2903
      %v3040 = vpack.c.b16 %v2978, %v2976
      %v3041 = vpack.c.b16 %v2979, %v2977
      %v3042 = vpack.c.b16 %v2982, %v2980
      %v3043 = vpack.c.b16 %v2983, %v2981
      %v3044 = vpack.c.b16 %v2986, %v2984
      %v3045 = vpack.c.b16 %v2987, %v2985
      %v3046 = vpack.c.b16 %v2990, %v2988
      %v3047 = vpack.c.b16 %v2991, %v2989
      %v3048 = vpack.c.b16 %v2994, %v2992
      %v3049 = vpack.c.b16 %v2995, %v2993
      %v3050 = vpack.c.b16 %v2998, %v2996
      %v3051 = vpack.c.b16 %v2999, %v2997
      %v3052 = vpack.c.b16 %v3002, %v3000
      %v3053 = vpack.c.b16 %v3003, %v3001
      %v3054 = vpack.c.b16 %v3006, %v3004
      %v3055 = vpack.c.b16 %v3007, %v3005
      %v3056 = vpack.c.b16 %v3010, %v3008
      %v3057 = vpack.c.b16 %v3011, %v3009
      %v3058 = vpack.c.b16 %v3014, %v3012
      %v3059 = vpack.c.b16 %v3015, %v3013
      %v3060 = vpack.c.b16 %v3018, %v3016
      %v3061 = vpack.c.b16 %v3019, %v3017
      %v3062 = vpack.c.b16 %v3022, %v3020
      %v3063 = vpack.c.b16 %v3023, %v3021
      %v3064 = vpack.c.b16 %v3026, %v3024
      %v3065 = vpack.c.b16 %v3027, %v3025
      %v3066 = vpack.c.b16 %v3030, %v3028
      %v3067 = vpack.c.b16 %v3031, %v3029
      %v3068 = vpack.c.b16 %v3034, %v3032
      %v3069 = vpack.c.b16 %v3035, %v3033
      %v3070 = vpack.c.b16 %v3038, %v3036
      %v3071 = vpack.c.b16 %v3039, %v3037
      %3104 = vmatprep.subr.bf16.mxu0 %v3041
      %3105 = vmatpush1.bf16.msra.mxu0 %v3040
      %3106 = vmatprep.subr.bf16.mxu0 %v3043
      %3107 = vmatpush1.bf16.msra.mxu0 %v3042
      %3108 = vmatprep.subr.bf16.mxu0 %v3045
      %3109 = vmatpush1.bf16.msra.mxu0 %v3044
      %3110 = vmatprep.subr.bf16.mxu0 %v3047
      %3111 = vmatpush1.bf16.msra.mxu0 %v3046
      %3112 = vmatprep.subr.bf16.mxu0 %v3049
      %3113 = vmatpush1.bf16.msra.mxu0 %v3048
      %3114 = vmatprep.subr.bf16.mxu0 %v3051
      %3115 = vmatpush1.bf16.msra.mxu0 %v3050
      %3116 = vmatprep.subr.bf16.mxu0 %v3053
      %3117 = vmatpush1.bf16.msra.mxu0 %v3052
      %3118 = vmatprep.subr.bf16.mxu0 %v3055
      %3119 = vmatpush1.bf16.msra.mxu0 %v3054
      %3120 = vmatprep.subr.bf16.mxu0 %v3057
      %3121 = vmatpush1.bf16.msra.mxu0 %v3056
      %3122 = vmatprep.subr.bf16.mxu0 %v3059
      %3123 = vmatpush1.bf16.msra.mxu0 %v3058
      %3124 = vmatprep.subr.bf16.mxu0 %v3061
      %3125 = vmatpush1.bf16.msra.mxu0 %v3060
      %3126 = vmatprep.subr.bf16.mxu0 %v3063
      %3127 = vmatpush1.bf16.msra.mxu0 %v3062
      %3128 = vmatprep.subr.bf16.mxu0 %v3065
      %3129 = vmatpush1.bf16.msra.mxu0 %v3064
      %3130 = vmatprep.subr.bf16.mxu0 %v3067
      %3131 = vmatpush1.bf16.msra.mxu0 %v3066
      %3132 = vmatprep.subr.bf16.mxu0 %v3069
      %3133 = vmatpush1.bf16.msra.mxu0 %v3068
      %3134 = vmatprep.subr.bf16.mxu0 %v3071
      %3135 = vmatpush1.bf16.msra.mxu0 %v3070
      %3136 = vmatprep.mubr.bf16.mxu0 %v2929
      %3137 = vmatmul.mubr.bf16.gmra.mrb[0].mxu0 %v2928
      %v3138 = vpop.f32.mrb[0].mxu0
      %v3139 = vadd.f32 0.0, %v3138
      %v3140 = vpop.f32.mrb[0].mxu0
      %v3141 = vadd.f32 0.0, %v3140
      %v3142 = vpop.f32.mrb[0].mxu0
      %v3143 = vadd.f32 0.0, %v3142
      %v3144 = vpop.f32.mrb[0].mxu0
      %v3145 = vadd.f32 0.0, %v3144
      %3146 = vmatprep.mubr.bf16.mxu0 %v2931
      %3147 = vmatmul.mubr.bf16.gmra.mrb[0].mxu0 %v2930
      %v3148 = vpop.f32.mrb[0].mxu0
      %v3149 = vadd.f32 0.0, %v3148
      %v3150 = vpop.f32.mrb[0].mxu0
      %v3151 = vadd.f32 0.0, %v3150
      %v3152 = vpop.f32.mrb[0].mxu0
      %v3153 = vadd.f32 0.0, %v3152
      %v3154 = vpop.f32.mrb[0].mxu0
      %v3155 = vadd.f32 0.0, %v3154
      %3156 = vmatprep.mubr.bf16.mxu0 %v2933
      %3157 = vmatmul.mubr.bf16.gmra.mrb[0].mxu0 %v2932
      %v3158 = vpop.f32.mrb[0].mxu0
      %v3159 = vadd.f32 0.0, %v3158
      %v3160 = vpop.f32.mrb[0].mxu0
      %v3161 = vadd.f32 0.0, %v3160
      %v3162 = vpop.f32.mrb[0].mxu0
      %v3163 = vadd.f32 0.0, %v3162
      %v3164 = vpop.f32.mrb[0].mxu0
      %v3165 = vadd.f32 0.0, %v3164
      %3166 = vmatprep.mubr.bf16.mxu0 %v2935
      %3167 = vmatmul.mubr.bf16.gmra.mrb[0].mxu0 %v2934
      %v3168 = vpop.f32.mrb[0].mxu0
      %v3169 = vadd.f32 0.0, %v3168
      %v3170 = vpop.f32.mrb[0].mxu0
      %v3171 = vadd.f32 0.0, %v3170
      %v3172 = vpop.f32.mrb[0].mxu0
      %v3173 = vadd.f32 0.0, %v3172
      %v3174 = vpop.f32.mrb[0].mxu0
      %v3175 = vadd.f32 0.0, %v3174
      %3176 = vdwg.mxu0
      %v3177 = vadd.f32 %v2846, %v3139
      %v3178 = vadd.f32 %v2847, %v3141
      %v3179 = vadd.f32 %v2848, %v3143
      %v3180 = vadd.f32 %v2849, %v3145
      %v3181 = vadd.f32 %v2850, %v3149
      %v3182 = vadd.f32 %v2851, %v3151
      %v3183 = vadd.f32 %v2852, %v3153
      %v3184 = vadd.f32 %v2853, %v3155
      %v3185 = vadd.f32 %v2854, %v3159
      %v3186 = vadd.f32 %v2855, %v3161
      %v3187 = vadd.f32 %v2856, %v3163
      %v3188 = vadd.f32 %v2857, %v3165
      %v3189 = vadd.f32 %v2858, %v3169
      %v3190 = vadd.f32 %v2859, %v3171
      %v3191 = vadd.f32 %v2860, %v3173
      %v3192 = vadd.f32 %v2861, %v3175
      %s3193 = scalar_lea.vmem [#allocation2], 176
      %v3194 = vld [vmem:[%s3193] sm:$0xff]
      %v3195 = vld [vmem:[%s3193 + $0x8] sm:$0xff]
      %v3196 = vld [vmem:[%s3193 + $0x10] sm:$0xff]
      %v3197 = vld [vmem:[%s3193 + $0x18] sm:$0xff]
      %v3198 = vld [vmem:[%s3193 + $0x20] sm:$0xff]
      %v3199 = vld [vmem:[%s3193 + $0x28] sm:$0xff]
      %v3200 = vld [vmem:[%s3193 + $0x30] sm:$0xff]
      %v3201 = vld [vmem:[%s3193 + $0x38] sm:$0xff]
      %s3202 = scalar_lea.vmem %s1, 2048
      %v3203 = vld [vmem:[%s3202] sm:$0xff]
      %v3204 = vld [vmem:[%s3202 + $0x8] sm:$0xff]
      %v3205 = vld [vmem:[%s3202 + $0x10] sm:$0xff]
      %v3206 = vld [vmem:[%s3202 + $0x18] sm:$0xff]
      %v3207 = vld [vmem:[%s3202 + $0x20] sm:$0xff]
      %v3208 = vld [vmem:[%s3202 + $0x28] sm:$0xff]
      %v3209 = vld [vmem:[%s3202 + $0x30] sm:$0xff]
      %v3210 = vld [vmem:[%s3202 + $0x38] sm:$0xff]
      %v3211 = vld [vmem:[%s3202 + $0x40] sm:$0xff]
      %v3212 = vld [vmem:[%s3202 + $0x48] sm:$0xff]
      %v3213 = vld [vmem:[%s3202 + $0x50] sm:$0xff]
      %v3214 = vld [vmem:[%s3202 + $0x58] sm:$0xff]
      %v3215 = vld [vmem:[%s3202 + $0x60] sm:$0xff]
      %v3216 = vld [vmem:[%s3202 + $0x68] sm:$0xff]
      %v3217 = vld [vmem:[%s3202 + $0x70] sm:$0xff]
      %v3218 = vld [vmem:[%s3202 + $0x78] sm:$0xff]
      %v3219 = vld [vmem:[%s3202 + $0x80] sm:$0xff]
      %v3220 = vld [vmem:[%s3202 + $0x88] sm:$0xff]
      %v3221 = vld [vmem:[%s3202 + $0x90] sm:$0xff]
      %v3222 = vld [vmem:[%s3202 + $0x98] sm:$0xff]
      %v3223 = vld [vmem:[%s3202 + $0xa0] sm:$0xff]
      %v3224 = vld [vmem:[%s3202 + $0xa8] sm:$0xff]
      %v3225 = vld [vmem:[%s3202 + $0xb0] sm:$0xff]
      %v3226 = vld [vmem:[%s3202 + $0xb8] sm:$0xff]
      %v3227 = vld [vmem:[%s3202 + $0xc0] sm:$0xff]
      %v3228 = vld [vmem:[%s3202 + $0xc8] sm:$0xff]
      %v3229 = vld [vmem:[%s3202 + $0xd0] sm:$0xff]
      %v3230 = vld [vmem:[%s3202 + $0xd8] sm:$0xff]
      %v3231 = vld [vmem:[%s3202 + $0xe0] sm:$0xff]
      %v3232 = vld [vmem:[%s3202 + $0xe8] sm:$0xff]
      %v3233 = vld [vmem:[%s3202 + $0xf0] sm:$0xff]
      %v3234 = vld [vmem:[%s3202 + $0xf8] sm:$0xff]
      %v3243 = vunpack.c.l.b16 %v3194
      %v3244 = vunpack.c.h.b16 %v3194
      %v3245 = vunpack.c.l.b16 %v3195
      %v3246 = vunpack.c.h.b16 %v3195
      %v3247 = vunpack.c.l.b16 %v3196
      %v3248 = vunpack.c.h.b16 %v3196
      %v3249 = vunpack.c.l.b16 %v3197
      %v3250 = vunpack.c.h.b16 %v3197
      %v3251 = vunpack.c.l.b16 %v3198
      %v3252 = vunpack.c.h.b16 %v3198
      %v3253 = vunpack.c.l.b16 %v3199
      %v3254 = vunpack.c.h.b16 %v3199
      %v3255 = vunpack.c.l.b16 %v3200
      %v3256 = vunpack.c.h.b16 %v3200
      %v3257 = vunpack.c.l.b16 %v3201
      %v3258 = vunpack.c.h.b16 %v3201
      %v3259 = vpack.c.b16 %v3245, %v3243
      %v3260 = vpack.c.b16 %v3246, %v3244
      %v3261 = vpack.c.b16 %v3249, %v3247
      %v3262 = vpack.c.b16 %v3250, %v3248
      %v3263 = vpack.c.b16 %v3253, %v3251
      %v3264 = vpack.c.b16 %v3254, %v3252
      %v3265 = vpack.c.b16 %v3257, %v3255
      %v3266 = vpack.c.b16 %v3258, %v3256
      %v3307 = vunpack.c.l.b16 %v3203
      %v3308 = vunpack.c.h.b16 %v3203
      %v3309 = vunpack.c.l.b16 %v3204
      %v3310 = vunpack.c.h.b16 %v3204
      %v3311 = vunpack.c.l.b16 %v3205
      %v3312 = vunpack.c.h.b16 %v3205
      %v3313 = vunpack.c.l.b16 %v3206
      %v3314 = vunpack.c.h.b16 %v3206
      %v3315 = vunpack.c.l.b16 %v3207
      %v3316 = vunpack.c.h.b16 %v3207
      %v3317 = vunpack.c.l.b16 %v3208
      %v3318 = vunpack.c.h.b16 %v3208
      %v3319 = vunpack.c.l.b16 %v3209
      %v3320 = vunpack.c.h.b16 %v3209
      %v3321 = vunpack.c.l.b16 %v3210
      %v3322 = vunpack.c.h.b16 %v3210
      %v3323 = vunpack.c.l.b16 %v3211
      %v3324 = vunpack.c.h.b16 %v3211
      %v3325 = vunpack.c.l.b16 %v3212
      %v3326 = vunpack.c.h.b16 %v3212
      %v3327 = vunpack.c.l.b16 %v3213
      %v3328 = vunpack.c.h.b16 %v3213
      %v3329 = vunpack.c.l.b16 %v3214
      %v3330 = vunpack.c.h.b16 %v3214
      %v3331 = vunpack.c.l.b16 %v3215
      %v3332 = vunpack.c.h.b16 %v3215
      %v3333 = vunpack.c.l.b16 %v3216
      %v3334 = vunpack.c.h.b16 %v3216
      %v3335 = vunpack.c.l.b16 %v3217
      %v3336 = vunpack.c.h.b16 %v3217
      %v3337 = vunpack.c.l.b16 %v3218
      %v3338 = vunpack.c.h.b16 %v3218
      %v3339 = vunpack.c.l.b16 %v3219
      %v3340 = vunpack.c.h.b16 %v3219
      %v3341 = vunpack.c.l.b16 %v3220
      %v3342 = vunpack.c.h.b16 %v3220
      %v3343 = vunpack.c.l.b16 %v3221
      %v3344 = vunpack.c.h.b16 %v3221
      %v3345 = vunpack.c.l.b16 %v3222
      %v3346 = vunpack.c.h.b16 %v3222
      %v3347 = vunpack.c.l.b16 %v3223
      %v3348 = vunpack.c.h.b16 %v3223
      %v3349 = vunpack.c.l.b16 %v3224
      %v3350 = vunpack.c.h.b16 %v3224
      %v3351 = vunpack.c.l.b16 %v3225
      %v3352 = vunpack.c.h.b16 %v3225
      %v3353 = vunpack.c.l.b16 %v3226
      %v3354 = vunpack.c.h.b16 %v3226
      %v3355 = vunpack.c.l.b16 %v3227
      %v3356 = vunpack.c.h.b16 %v3227
      %v3357 = vunpack.c.l.b16 %v3228
      %v3358 = vunpack.c.h.b16 %v3228
      %v3359 = vunpack.c.l.b16 %v3229
      %v3360 = vunpack.c.h.b16 %v3229
      %v3361 = vunpack.c.l.b16 %v3230
      %v3362 = vunpack.c.h.b16 %v3230
      %v3363 = vunpack.c.l.b16 %v3231
      %v3364 = vunpack.c.h.b16 %v3231
      %v3365 = vunpack.c.l.b16 %v3232
      %v3366 = vunpack.c.h.b16 %v3232
      %v3367 = vunpack.c.l.b16 %v3233
      %v3368 = vunpack.c.h.b16 %v3233
      %v3369 = vunpack.c.l.b16 %v3234
      %v3370 = vunpack.c.h.b16 %v3234
      %v3371 = vpack.c.b16 %v3309, %v3307
      %v3372 = vpack.c.b16 %v3310, %v3308
      %v3373 = vpack.c.b16 %v3313, %v3311
      %v3374 = vpack.c.b16 %v3314, %v3312
      %v3375 = vpack.c.b16 %v3317, %v3315
      %v3376 = vpack.c.b16 %v3318, %v3316
      %v3377 = vpack.c.b16 %v3321, %v3319
      %v3378 = vpack.c.b16 %v3322, %v3320
      %v3379 = vpack.c.b16 %v3325, %v3323
      %v3380 = vpack.c.b16 %v3326, %v3324
      %v3381 = vpack.c.b16 %v3329, %v3327
      %v3382 = vpack.c.b16 %v3330, %v3328
      %v3383 = vpack.c.b16 %v3333, %v3331
      %v3384 = vpack.c.b16 %v3334, %v3332
      %v3385 = vpack.c.b16 %v3337, %v3335
      %v3386 = vpack.c.b16 %v3338, %v3336
      %v3387 = vpack.c.b16 %v3341, %v3339
      %v3388 = vpack.c.b16 %v3342, %v3340
      %v3389 = vpack.c.b16 %v3345, %v3343
      %v3390 = vpack.c.b16 %v3346, %v3344
      %v3391 = vpack.c.b16 %v3349, %v3347
      %v3392 = vpack.c.b16 %v3350, %v3348
      %v3393 = vpack.c.b16 %v3353, %v3351
      %v3394 = vpack.c.b16 %v3354, %v3352
      %v3395 = vpack.c.b16 %v3357, %v3355
      %v3396 = vpack.c.b16 %v3358, %v3356
      %v3397 = vpack.c.b16 %v3361, %v3359
      %v3398 = vpack.c.b16 %v3362, %v3360
      %v3399 = vpack.c.b16 %v3365, %v3363
      %v3400 = vpack.c.b16 %v3366, %v3364
      %v3401 = vpack.c.b16 %v3369, %v3367
      %v3402 = vpack.c.b16 %v3370, %v3368
      %3435 = vmatprep.subr.bf16.mxu0 %v3372
      %3436 = vmatpush1.bf16.msra.mxu0 %v3371
      %3437 = vmatprep.subr.bf16.mxu0 %v3374
      %3438 = vmatpush1.bf16.msra.mxu0 %v3373
      %3439 = vmatprep.subr.bf16.mxu0 %v3376
      %3440 = vmatpush1.bf16.msra.mxu0 %v3375
      %3441 = vmatprep.subr.bf16.mxu0 %v3378
      %3442 = vmatpush1.bf16.msra.mxu0 %v3377
      %3443 = vmatprep.subr.bf16.mxu0 %v3380
      %3444 = vmatpush1.bf16.msra.mxu0 %v3379
      %3445 = vmatprep.subr.bf16.mxu0 %v3382
      %3446 = vmatpush1.bf16.msra.mxu0 %v3381
      %3447 = vmatprep.subr.bf16.mxu0 %v3384
      %3448 = vmatpush1.bf16.msra.mxu0 %v3383
      %3449 = vmatprep.subr.bf16.mxu0 %v3386
      %3450 = vmatpush1.bf16.msra.mxu0 %v3385
      %3451 = vmatprep.subr.bf16.mxu0 %v3388
      %3452 = vmatpush1.bf16.msra.mxu0 %v3387
      %3453 = vmatprep.subr.bf16.mxu0 %v3390
      %3454 = vmatpush1.bf16.msra.mxu0 %v3389
      %3455 = vmatprep.subr.bf16.mxu0 %v3392
      %3456 = vmatpush1.bf16.msra.mxu0 %v3391
      %3457 = vmatprep.subr.bf16.mxu0 %v3394
      %3458 = vmatpush1.bf16.msra.mxu0 %v3393
      %3459 = vmatprep.subr.bf16.mxu0 %v3396
      %3460 = vmatpush1.bf16.msra.mxu0 %v3395
      %3461 = vmatprep.subr.bf16.mxu0 %v3398
      %3462 = vmatpush1.bf16.msra.mxu0 %v3397
      %3463 = vmatprep.subr.bf16.mxu0 %v3400
      %3464 = vmatpush1.bf16.msra.mxu0 %v3399
      %3465 = vmatprep.subr.bf16.mxu0 %v3402
      %3466 = vmatpush1.bf16.msra.mxu0 %v3401
      %3467 = vmatprep.mubr.bf16.mxu0 %v3260
      %3468 = vmatmul.mubr.bf16.gmra.mrb[0].mxu0 %v3259
      %v3469 = vpop.f32.mrb[0].mxu0
      %v3470 = vadd.f32 0.0, %v3469
      %v3471 = vpop.f32.mrb[0].mxu0
      %v3472 = vadd.f32 0.0, %v3471
      %v3473 = vpop.f32.mrb[0].mxu0
      %v3474 = vadd.f32 0.0, %v3473
      %v3475 = vpop.f32.mrb[0].mxu0
      %v3476 = vadd.f32 0.0, %v3475
      %3477 = vmatprep.mubr.bf16.mxu0 %v3262
      %3478 = vmatmul.mubr.bf16.gmra.mrb[0].mxu0 %v3261
      %v3479 = vpop.f32.mrb[0].mxu0
      %v3480 = vadd.f32 0.0, %v3479
      %v3481 = vpop.f32.mrb[0].mxu0
      %v3482 = vadd.f32 0.0, %v3481
      %v3483 = vpop.f32.mrb[0].mxu0
      %v3484 = vadd.f32 0.0, %v3483
      %v3485 = vpop.f32.mrb[0].mxu0
      %v3486 = vadd.f32 0.0, %v3485
      %3487 = vmatprep.mubr.bf16.mxu0 %v3264
      %3488 = vmatmul.mubr.bf16.gmra.mrb[0].mxu0 %v3263
      %v3489 = vpop.f32.mrb[0].mxu0
      %v3490 = vadd.f32 0.0, %v3489
      %v3491 = vpop.f32.mrb[0].mxu0
      %v3492 = vadd.f32 0.0, %v3491
      %v3493 = vpop.f32.mrb[0].mxu0
      %v3494 = vadd.f32 0.0, %v3493
      %v3495 = vpop.f32.mrb[0].mxu0
      %v3496 = vadd.f32 0.0, %v3495
      %3497 = vmatprep.mubr.bf16.mxu0 %v3266
      %3498 = vmatmul.mubr.bf16.gmra.mrb[0].mxu0 %v3265
      %v3499 = vpop.f32.mrb[0].mxu0
      %v3500 = vadd.f32 0.0, %v3499
      %v3501 = vpop.f32.mrb[0].mxu0
      %v3502 = vadd.f32 0.0, %v3501
      %v3503 = vpop.f32.mrb[0].mxu0
      %v3504 = vadd.f32 0.0, %v3503
      %v3505 = vpop.f32.mrb[0].mxu0
      %v3506 = vadd.f32 0.0, %v3505
      %3507 = vdwg.mxu0
      %v3508 = vadd.f32 %v3177, %v3470
      %v3509 = vadd.f32 %v3178, %v3472
      %v3510 = vadd.f32 %v3179, %v3474
      %v3511 = vadd.f32 %v3180, %v3476
      %v3512 = vadd.f32 %v3181, %v3480
      %v3513 = vadd.f32 %v3182, %v3482
      %v3514 = vadd.f32 %v3183, %v3484
      %v3515 = vadd.f32 %v3184, %v3486
      %v3516 = vadd.f32 %v3185, %v3490
      %v3517 = vadd.f32 %v3186, %v3492
      %v3518 = vadd.f32 %v3187, %v3494
      %v3519 = vadd.f32 %v3188, %v3496
      %v3520 = vadd.f32 %v3189, %v3500
      %v3521 = vadd.f32 %v3190, %v3502
      %v3522 = vadd.f32 %v3191, %v3504
      %v3523 = vadd.f32 %v3192, %v3506
      %v3524 = vld [vmem:[%s2] sm:$0x3]
      %v3526 = vlaneseq
      %v3527 = vshrl.u32 %v3526, 7
      %v3528 = vsub.s32 0, %v3527
      %v3529 = vrot.slane %v3524, %v3528
      %v3530 = vlaneseq
      %v3531 = vshrl.u32 %v3530, 7
      %v3532 = vsub.s32 1, %v3531
      %v3533 = vrot.slane %v3524, %v3532
      %v3536 = vmul.f32 %v3508, %v3529
      %v3537 = vmul.f32 %v3509, %v3533
      %v3538 = vmul.f32 %v3510, %v3529
      %v3539 = vmul.f32 %v3511, %v3533
      %v3540 = vmul.f32 %v3512, %v3529
      %v3541 = vmul.f32 %v3513, %v3533
      %v3542 = vmul.f32 %v3514, %v3529
      %v3543 = vmul.f32 %v3515, %v3533
      %v3544 = vmul.f32 %v3516, %v3529
      %v3545 = vmul.f32 %v3517, %v3533
      %v3546 = vmul.f32 %v3518, %v3529
      %v3547 = vmul.f32 %v3519, %v3533
      %v3548 = vmul.f32 %v3520, %v3529
      %v3549 = vmul.f32 %v3521, %v3533
      %v3550 = vmul.f32 %v3522, %v3529
      %v3551 = vmul.f32 %v3523, %v3533
      %v3552 = vld [vmem:[%s3] sm:$0x3]
      %v3554 = vlaneseq
      %v3555 = vshrl.u32 %v3554, 7
      %v3556 = vsub.s32 0, %v3555
      %v3557 = vrot.slane %v3552, %v3556
      %v3558 = vlaneseq
      %v3559 = vshrl.u32 %v3558, 7
      %v3560 = vsub.s32 1, %v3559
      %v3561 = vrot.slane %v3552, %v3560
      %v3564 = vadd.f32 %v3536, %v3557
      %v3565 = vadd.f32 %v3537, %v3561
      %v3566 = vadd.f32 %v3538, %v3557
      %v3567 = vadd.f32 %v3539, %v3561
      %v3568 = vadd.f32 %v3540, %v3557
      %v3569 = vadd.f32 %v3541, %v3561
      %v3570 = vadd.f32 %v3542, %v3557
      %v3571 = vadd.f32 %v3543, %v3561
      %v3572 = vadd.f32 %v3544, %v3557
      %v3573 = vadd.f32 %v3545, %v3561
      %v3574 = vadd.f32 %v3546, %v3557
      %v3575 = vadd.f32 %v3547, %v3561
      %v3576 = vadd.f32 %v3548, %v3557
      %v3577 = vadd.f32 %v3549, %v3561
      %v3578 = vadd.f32 %v3550, %v3557
      %v3579 = vadd.f32 %v3551, %v3561
      %v3580 = vmax.f32 %v3564, 0.0
      %v3581 = vmax.f32 %v3565, 0.0
      %v3582 = vmax.f32 %v3566, 0.0
      %v3583 = vmax.f32 %v3567, 0.0
      %v3584 = vmax.f32 %v3568, 0.0
      %v3585 = vmax.f32 %v3569, 0.0
      %v3586 = vmax.f32 %v3570, 0.0
      %v3587 = vmax.f32 %v3571, 0.0
      %v3588 = vmax.f32 %v3572, 0.0
      %v3589 = vmax.f32 %v3573, 0.0
      %v3590 = vmax.f32 %v3574, 0.0
      %v3591 = vmax.f32 %v3575, 0.0
      %v3592 = vmax.f32 %v3576, 0.0
      %v3593 = vmax.f32 %v3577, 0.0
      %v3594 = vmax.f32 %v3578, 0.0
      %v3595 = vmax.f32 %v3579, 0.0
      %v3596 = vpack.c.bf16 %v3580, %v3580
      %v3597 = vpack.c.bf16 %v3581, %v3581
      %v3598 = vpack.c.bf16 %v3582, %v3582
      %v3599 = vpack.c.bf16 %v3583, %v3583
      %v3600 = vpack.c.bf16 %v3584, %v3584
      %v3601 = vpack.c.bf16 %v3585, %v3585
      %v3602 = vpack.c.bf16 %v3586, %v3586
      %v3603 = vpack.c.bf16 %v3587, %v3587
      %v3604 = vpack.c.bf16 %v3588, %v3588
      %v3605 = vpack.c.bf16 %v3589, %v3589
      %v3606 = vpack.c.bf16 %v3590, %v3590
      %v3607 = vpack.c.bf16 %v3591, %v3591
      %v3608 = vpack.c.bf16 %v3592, %v3592
      %v3609 = vpack.c.bf16 %v3593, %v3593
      %v3610 = vpack.c.bf16 %v3594, %v3594
      %v3611 = vpack.c.bf16 %v3595, %v3595
      %v3628 = vunpack.c.l.b16 %v3596
      %v3629 = vunpack.c.l.b16 %v3597
      %v3630 = vunpack.c.l.b16 %v3598
      %v3631 = vunpack.c.l.b16 %v3599
      %v3632 = vunpack.c.l.b16 %v3600
      %v3633 = vunpack.c.l.b16 %v3601
      %v3634 = vunpack.c.l.b16 %v3602
      %v3635 = vunpack.c.l.b16 %v3603
      %v3636 = vunpack.c.l.b16 %v3604
      %v3637 = vunpack.c.l.b16 %v3605
      %v3638 = vunpack.c.l.b16 %v3606
      %v3639 = vunpack.c.l.b16 %v3607
      %v3640 = vunpack.c.l.b16 %v3608
      %v3641 = vunpack.c.l.b16 %v3609
      %v3642 = vunpack.c.l.b16 %v3610
      %v3643 = vunpack.c.l.b16 %v3611
      %v3644 = vpack.c.b16 %v3629, %v3628
      %v3645 = vpack.c.b16 %v3631, %v3630
      %v3646 = vpack.c.b16 %v3633, %v3632
      %v3647 = vpack.c.b16 %v3635, %v3634
      %v3648 = vpack.c.b16 %v3637, %v3636
      %v3649 = vpack.c.b16 %v3639, %v3638
      %v3650 = vpack.c.b16 %v3641, %v3640
      %v3651 = vpack.c.b16 %v3643, %v3642
      %3660 = vst [vmem:[%s315] sm:$0xff] %v3644
      %3661 = vst [vmem:[%s315 + $0x8] sm:$0xff] %v3645
      %3662 = vst [vmem:[%s315 + $0x10] sm:$0xff] %v3646
      %3663 = vst [vmem:[%s315 + $0x18] sm:$0xff] %v3647
      %3664 = vst [vmem:[%s315 + $0x20] sm:$0xff] %v3648
      %3665 = vst [vmem:[%s315 + $0x28] sm:$0xff] %v3649
      %3666 = vst [vmem:[%s315 + $0x30] sm:$0xff] %v3650
      %3667 = vst [vmem:[%s315 + $0x38] sm:$0xff] %v3651
      %v3684 = vrot.slane %v3580, 7
      %v3685 = vrot.slane %v3581, 7
      %v3686 = vrot.slane %v3582, 7
      %v3687 = vrot.slane %v3583, 7
      %v3688 = vrot.slane %v3584, 7
      %v3689 = vrot.slane %v3585, 7
      %v3690 = vrot.slane %v3586, 7
      %v3691 = vrot.slane %v3587, 7
      %v3692 = vrot.slane %v3588, 7
      %v3693 = vrot.slane %v3589, 7
      %v3694 = vrot.slane %v3590, 7
      %v3695 = vrot.slane %v3591, 7
      %v3696 = vrot.slane %v3592, 7
      %v3697 = vrot.slane %v3593, 7
      %v3698 = vrot.slane %v3594, 7
      %v3699 = vrot.slane %v3595, 7
      %v3716 = vsel %vm372, 0.0, %v3684
      %v3717 = vsel %vm372, 0.0, %v3685
      %v3718 = vsel %vm372, 0.0, %v3686
      %v3719 = vsel %vm372, 0.0, %v3687
      %v3720 = vsel %vm372, 0.0, %v3688
      %v3721 = vsel %vm372, 0.0, %v3689
      %v3722 = vsel %vm372, 0.0, %v3690
      %v3723 = vsel %vm372, 0.0, %v3691
      %v3724 = vsel %vm372, 0.0, %v3692
      %v3725 = vsel %vm372, 0.0, %v3693
      %v3726 = vsel %vm372, 0.0, %v3694
      %v3727 = vsel %vm372, 0.0, %v3695
      %v3728 = vsel %vm372, 0.0, %v3696
      %v3729 = vsel %vm372, 0.0, %v3697
      %v3730 = vsel %vm372, 0.0, %v3698
      %v3731 = vsel %vm372, 0.0, %v3699
      %v3732 = vpack.c.bf16 %v3716, %v3716
      %v3733 = vpack.c.bf16 %v3717, %v3717
      %v3734 = vpack.c.bf16 %v3718, %v3718
      %v3735 = vpack.c.bf16 %v3719, %v3719
      %v3736 = vpack.c.bf16 %v3720, %v3720
      %v3737 = vpack.c.bf16 %v3721, %v3721
      %v3738 = vpack.c.bf16 %v3722, %v3722
      %v3739 = vpack.c.bf16 %v3723, %v3723
      %v3740 = vpack.c.bf16 %v3724, %v3724
      %v3741 = vpack.c.bf16 %v3725, %v3725
      %v3742 = vpack.c.bf16 %v3726, %v3726
      %v3743 = vpack.c.bf16 %v3727, %v3727
      %v3744 = vpack.c.bf16 %v3728, %v3728
      %v3745 = vpack.c.bf16 %v3729, %v3729
      %v3746 = vpack.c.bf16 %v3730, %v3730
      %v3747 = vpack.c.bf16 %v3731, %v3731
      %v3764 = vunpack.c.l.b16 %v3732
      %v3765 = vunpack.c.l.b16 %v3733
      %v3766 = vunpack.c.l.b16 %v3734
      %v3767 = vunpack.c.l.b16 %v3735
      %v3768 = vunpack.c.l.b16 %v3736
      %v3769 = vunpack.c.l.b16 %v3737
      %v3770 = vunpack.c.l.b16 %v3738
      %v3771 = vunpack.c.l.b16 %v3739
      %v3772 = vunpack.c.l.b16 %v3740
      %v3773 = vunpack.c.l.b16 %v3741
      %v3774 = vunpack.c.l.b16 %v3742
      %v3775 = vunpack.c.l.b16 %v3743
      %v3776 = vunpack.c.l.b16 %v3744
      %v3777 = vunpack.c.l.b16 %v3745
      %v3778 = vunpack.c.l.b16 %v3746
      %v3779 = vunpack.c.l.b16 %v3747
      %v3780 = vpack.c.b16 %v3765, %v3764
      %v3781 = vpack.c.b16 %v3767, %v3766
      %v3782 = vpack.c.b16 %v3769, %v3768
      %v3783 = vpack.c.b16 %v3771, %v3770
      %v3784 = vpack.c.b16 %v3773, %v3772
      %v3785 = vpack.c.b16 %v3775, %v3774
      %v3786 = vpack.c.b16 %v3777, %v3776
      %v3787 = vpack.c.b16 %v3779, %v3778
      %3796 = vst [vmem:[%s453] sm:$0xff] %v3780
      %3797 = vst [vmem:[%s453 + $0x8] sm:$0xff] %v3781
      %3798 = vst [vmem:[%s453 + $0x10] sm:$0xff] %v3782
      %3799 = vst [vmem:[%s453 + $0x18] sm:$0xff] %v3783
      %3800 = vst [vmem:[%s453 + $0x20] sm:$0xff] %v3784
      %3801 = vst [vmem:[%s453 + $0x28] sm:$0xff] %v3785
      %3802 = vst [vmem:[%s453 + $0x30] sm:$0xff] %v3786
      %3803 = vst [vmem:[%s453 + $0x38] sm:$0xff] %v3787
      %v3804 = vrot.slane %v3580, 1
      %v3805 = vrot.slane %v3581, 1
      %v3806 = vrot.slane %v3582, 1
      %v3807 = vrot.slane %v3583, 1
      %v3808 = vrot.slane %v3584, 1
      %v3809 = vrot.slane %v3585, 1
      %v3810 = vrot.slane %v3586, 1
      %v3811 = vrot.slane %v3587, 1
      %v3812 = vrot.slane %v3588, 1
      %v3813 = vrot.slane %v3589, 1
      %v3814 = vrot.slane %v3590, 1
      %v3815 = vrot.slane %v3591, 1
      %v3816 = vrot.slane %v3592, 1
      %v3817 = vrot.slane %v3593, 1
      %v3818 = vrot.slane %v3594, 1
      %v3819 = vrot.slane %v3595, 1
      %v3836 = vsel %vm494, %v3804, 0.0
      %v3837 = vsel %vm494, %v3805, 0.0
      %v3838 = vsel %vm494, %v3806, 0.0
      %v3839 = vsel %vm494, %v3807, 0.0
      %v3840 = vsel %vm494, %v3808, 0.0
      %v3841 = vsel %vm494, %v3809, 0.0
      %v3842 = vsel %vm494, %v3810, 0.0
      %v3843 = vsel %vm494, %v3811, 0.0
      %v3844 = vsel %vm494, %v3812, 0.0
      %v3845 = vsel %vm494, %v3813, 0.0
      %v3846 = vsel %vm494, %v3814, 0.0
      %v3847 = vsel %vm494, %v3815, 0.0
      %v3848 = vsel %vm494, %v3816, 0.0
      %v3849 = vsel %vm494, %v3817, 0.0
      %v3850 = vsel %vm494, %v3818, 0.0
      %v3851 = vsel %vm494, %v3819, 0.0
      %v3852 = vpack.c.bf16 %v3836, %v3836
      %v3853 = vpack.c.bf16 %v3837, %v3837
      %v3854 = vpack.c.bf16 %v3838, %v3838
      %v3855 = vpack.c.bf16 %v3839, %v3839
      %v3856 = vpack.c.bf16 %v3840, %v3840
      %v3857 = vpack.c.bf16 %v3841, %v3841
      %v3858 = vpack.c.bf16 %v3842, %v3842
      %v3859 = vpack.c.bf16 %v3843, %v3843
      %v3860 = vpack.c.bf16 %v3844, %v3844
      %v3861 = vpack.c.bf16 %v3845, %v3845
      %v3862 = vpack.c.bf16 %v3846, %v3846
      %v3863 = vpack.c.bf16 %v3847, %v3847
      %v3864 = vpack.c.bf16 %v3848, %v3848
      %v3865 = vpack.c.bf16 %v3849, %v3849
      %v3866 = vpack.c.bf16 %v3850, %v3850
      %v3867 = vpack.c.bf16 %v3851, %v3851
      %v3884 = vunpack.c.l.b16 %v3852
      %v3885 = vunpack.c.l.b16 %v3853
      %v3886 = vunpack.c.l.b16 %v3854
      %v3887 = vunpack.c.l.b16 %v3855
      %v3888 = vunpack.c.l.b16 %v3856
      %v3889 = vunpack.c.l.b16 %v3857
      %v3890 = vunpack.c.l.b16 %v3858
      %v3891 = vunpack.c.l.b16 %v3859
      %v3892 = vunpack.c.l.b16 %v3860
      %v3893 = vunpack.c.l.b16 %v3861
      %v3894 = vunpack.c.l.b16 %v3862
      %v3895 = vunpack.c.l.b16 %v3863
      %v3896 = vunpack.c.l.b16 %v3864
      %v3897 = vunpack.c.l.b16 %v3865
      %v3898 = vunpack.c.l.b16 %v3866
      %v3899 = vunpack.c.l.b16 %v3867
      %v3900 = vpack.c.b16 %v3885, %v3884
      %v3901 = vpack.c.b16 %v3887, %v3886
      %v3902 = vpack.c.b16 %v3889, %v3888
      %v3903 = vpack.c.b16 %v3891, %v3890
      %v3904 = vpack.c.b16 %v3893, %v3892
      %v3905 = vpack.c.b16 %v3895, %v3894
      %v3906 = vpack.c.b16 %v3897, %v3896
      %v3907 = vpack.c.b16 %v3899, %v3898
      %3916 = vst [vmem:[%s575] sm:$0xff] %v3900
      %3917 = vst [vmem:[%s575 + $0x8] sm:$0xff] %v3901
      %3918 = vst [vmem:[%s575 + $0x10] sm:$0xff] %v3902
      %3919 = vst [vmem:[%s575 + $0x18] sm:$0xff] %v3903
      %3920 = vst [vmem:[%s575 + $0x20] sm:$0xff] %v3904
      %3921 = vst [vmem:[%s575 + $0x28] sm:$0xff] %v3905
      %3922 = vst [vmem:[%s575 + $0x30] sm:$0xff] %v3906
      %3923 = vst [vmem:[%s575 + $0x38] sm:$0xff] %v3907
      %v3924 = vld [vmem:[#allocation2] sm:$0xff]
      %v3925 = vld [vmem:[#allocation2 + $0x8] sm:$0xff]
      %v3926 = vld [vmem:[#allocation2 + $0x10] sm:$0xff]
      %v3927 = vld [vmem:[#allocation2 + $0x18] sm:$0xff]
      %v3928 = vld [vmem:[#allocation2 + $0x20] sm:$0xff]
      %v3929 = vld [vmem:[#allocation2 + $0x28] sm:$0xff]
      %v3930 = vld [vmem:[#allocation2 + $0x30] sm:$0xff]
      %v3931 = vld [vmem:[#allocation2 + $0x38] sm:$0xff]
      %v3932 = vld [vmem:[%s4] sm:$0xff]
      %v3933 = vld [vmem:[%s4 + $0x8] sm:$0xff]
      %v3934 = vld [vmem:[%s4 + $0x10] sm:$0xff]
      %v3935 = vld [vmem:[%s4 + $0x18] sm:$0xff]
      %v3936 = vld [vmem:[%s4 + $0x20] sm:$0xff]
      %v3937 = vld [vmem:[%s4 + $0x28] sm:$0xff]
      %v3938 = vld [vmem:[%s4 + $0x30] sm:$0xff]
      %v3939 = vld [vmem:[%s4 + $0x38] sm:$0xff]
      %v3940 = vld [vmem:[%s4 + $0x40] sm:$0xff]
      %v3941 = vld [vmem:[%s4 + $0x48] sm:$0xff]
      %v3942 = vld [vmem:[%s4 + $0x50] sm:$0xff]
      %v3943 = vld [vmem:[%s4 + $0x58] sm:$0xff]
      %v3944 = vld [vmem:[%s4 + $0x60] sm:$0xff]
      %v3945 = vld [vmem:[%s4 + $0x68] sm:$0xff]
      %v3946 = vld [vmem:[%s4 + $0x70] sm:$0xff]
      %v3947 = vld [vmem:[%s4 + $0x78] sm:$0xff]
      %v3948 = vld [vmem:[%s4 + $0x80] sm:$0xff]
      %v3949 = vld [vmem:[%s4 + $0x88] sm:$0xff]
      %v3950 = vld [vmem:[%s4 + $0x90] sm:$0xff]
      %v3951 = vld [vmem:[%s4 + $0x98] sm:$0xff]
      %v3952 = vld [vmem:[%s4 + $0xa0] sm:$0xff]
      %v3953 = vld [vmem:[%s4 + $0xa8] sm:$0xff]
      %v3954 = vld [vmem:[%s4 + $0xb0] sm:$0xff]
      %v3955 = vld [vmem:[%s4 + $0xb8] sm:$0xff]
      %v3956 = vld [vmem:[%s4 + $0xc0] sm:$0xff]
      %v3957 = vld [vmem:[%s4 + $0xc8] sm:$0xff]
      %v3958 = vld [vmem:[%s4 + $0xd0] sm:$0xff]
      %v3959 = vld [vmem:[%s4 + $0xd8] sm:$0xff]
      %v3960 = vld [vmem:[%s4 + $0xe0] sm:$0xff]
      %v3961 = vld [vmem:[%s4 + $0xe8] sm:$0xff]
      %v3962 = vld [vmem:[%s4 + $0xf0] sm:$0xff]
      %v3963 = vld [vmem:[%s4 + $0xf8] sm:$0xff]
      %v3964 = vld [vmem:[%s283] sm:$0xff]
      %v3965 = vld [vmem:[%s283 + $0x8] sm:$0xff]
      %v3966 = vld [vmem:[%s283 + $0x10] sm:$0xff]
      %v3967 = vld [vmem:[%s283 + $0x18] sm:$0xff]
      %v3968 = vld [vmem:[%s283 + $0x20] sm:$0xff]
      %v3969 = vld [vmem:[%s283 + $0x28] sm:$0xff]
      %v3970 = vld [vmem:[%s283 + $0x30] sm:$0xff]
      %v3971 = vld [vmem:[%s283 + $0x38] sm:$0xff]
      %s3972 = scalar_lea.vmem %s4, 256
      %v3973 = vld [vmem:[%s3972] sm:$0xff]
      %v3974 = vld [vmem:[%s3972 + $0x8] sm:$0xff]
      %v3975 = vld [vmem:[%s3972 + $0x10] sm:$0xff]
      %v3976 = vld [vmem:[%s3972 + $0x18] sm:$0xff]
      %v3977 = vld [vmem:[%s3972 + $0x20] sm:$0xff]
      %v3978 = vld [vmem:[%s3972 + $0x28] sm:$0xff]
      %v3979 = vld [vmem:[%s3972 + $0x30] sm:$0xff]
      %v3980 = vld [vmem:[%s3972 + $0x38] sm:$0xff]
      %v3981 = vld [vmem:[%s3972 + $0x40] sm:$0xff]
      %v3982 = vld [vmem:[%s3972 + $0x48] sm:$0xff]
      %v3983 = vld [vmem:[%s3972 + $0x50] sm:$0xff]
      %v3984 = vld [vmem:[%s3972 + $0x58] sm:$0xff]
      %v3985 = vld [vmem:[%s3972 + $0x60] sm:$0xff]
      %v3986 = vld [vmem:[%s3972 + $0x68] sm:$0xff]
      %v3987 = vld [vmem:[%s3972 + $0x70] sm:$0xff]
      %v3988 = vld [vmem:[%s3972 + $0x78] sm:$0xff]
      %v3989 = vld [vmem:[%s3972 + $0x80] sm:$0xff]
      %v3990 = vld [vmem:[%s3972 + $0x88] sm:$0xff]
      %v3991 = vld [vmem:[%s3972 + $0x90] sm:$0xff]
      %v3992 = vld [vmem:[%s3972 + $0x98] sm:$0xff]
      %v3993 = vld [vmem:[%s3972 + $0xa0] sm:$0xff]
      %v3994 = vld [vmem:[%s3972 + $0xa8] sm:$0xff]
      %v3995 = vld [vmem:[%s3972 + $0xb0] sm:$0xff]
      %v3996 = vld [vmem:[%s3972 + $0xb8] sm:$0xff]
      %v3997 = vld [vmem:[%s3972 + $0xc0] sm:$0xff]
      %v3998 = vld [vmem:[%s3972 + $0xc8] sm:$0xff]
      %v3999 = vld [vmem:[%s3972 + $0xd0] sm:$0xff]
      %v4000 = vld [vmem:[%s3972 + $0xd8] sm:$0xff]
      %v4001 = vld [vmem:[%s3972 + $0xe0] sm:$0xff]
      %v4002 = vld [vmem:[%s3972 + $0xe8] sm:$0xff]
      %v4003 = vld [vmem:[%s3972 + $0xf0] sm:$0xff]
      %v4004 = vld [vmem:[%s3972 + $0xf8] sm:$0xff]
      %v4013 = vunpack.c.l.b16 %v3964
      %v4014 = vunpack.c.h.b16 %v3964
      %v4015 = vunpack.c.l.b16 %v3965
      %v4016 = vunpack.c.h.b16 %v3965
      %v4017 = vunpack.c.l.b16 %v3966
      %v4018 = vunpack.c.h.b16 %v3966
      %v4019 = vunpack.c.l.b16 %v3967
      %v4020 = vunpack.c.h.b16 %v3967
      %v4021 = vunpack.c.l.b16 %v3968
      %v4022 = vunpack.c.h.b16 %v3968
      %v4023 = vunpack.c.l.b16 %v3969
      %v4024 = vunpack.c.h.b16 %v3969
      %v4025 = vunpack.c.l.b16 %v3970
      %v4026 = vunpack.c.h.b16 %v3970
      %v4027 = vunpack.c.l.b16 %v3971
      %v4028 = vunpack.c.h.b16 %v3971
      %v4029 = vpack.c.b16 %v4015, %v4013
      %v4030 = vpack.c.b16 %v4016, %v4014
      %v4031 = vpack.c.b16 %v4019, %v4017
      %v4032 = vpack.c.b16 %v4020, %v4018
      %v4033 = vpack.c.b16 %v4023, %v4021
      %v4034 = vpack.c.b16 %v4024, %v4022
      %v4035 = vpack.c.b16 %v4027, %v4025
      %v4036 = vpack.c.b16 %v4028, %v4026
      %v4077 = vunpack.c.l.b16 %v3973
      %v4078 = vunpack.c.h.b16 %v3973
      %v4079 = vunpack.c.l.b16 %v3974
      %v4080 = vunpack.c.h.b16 %v3974
      %v4081 = vunpack.c.l.b16 %v3975
      %v4082 = vunpack.c.h.b16 %v3975
      %v4083 = vunpack.c.l.b16 %v3976
      %v4084 = vunpack.c.h.b16 %v3976
      %v4085 = vunpack.c.l.b16 %v3977
      %v4086 = vunpack.c.h.b16 %v3977
      %v4087 = vunpack.c.l.b16 %v3978
      %v4088 = vunpack.c.h.b16 %v3978
      %v4089 = vunpack.c.l.b16 %v3979
      %v4090 = vunpack.c.h.b16 %v3979
      %v4091 = vunpack.c.l.b16 %v3980
      %v4092 = vunpack.c.h.b16 %v3980
      %v4093 = vunpack.c.l.b16 %v3981
      %v4094 = vunpack.c.h.b16 %v3981
      %v4095 = vunpack.c.l.b16 %v3982
      %v4096 = vunpack.c.h.b16 %v3982
      %v4097 = vunpack.c.l.b16 %v3983
      %v4098 = vunpack.c.h.b16 %v3983
      %v4099 = vunpack.c.l.b16 %v3984
      %v4100 = vunpack.c.h.b16 %v3984
      %v4101 = vunpack.c.l.b16 %v3985
      %v4102 = vunpack.c.h.b16 %v3985
      %v4103 = vunpack.c.l.b16 %v3986
      %v4104 = vunpack.c.h.b16 %v3986
      %v4105 = vunpack.c.l.b16 %v3987
      %v4106 = vunpack.c.h.b16 %v3987
      %v4107 = vunpack.c.l.b16 %v3988
      %v4108 = vunpack.c.h.b16 %v3988
      %v4109 = vunpack.c.l.b16 %v3989
      %v4110 = vunpack.c.h.b16 %v3989
      %v4111 = vunpack.c.l.b16 %v3990
      %v4112 = vunpack.c.h.b16 %v3990
      %v4113 = vunpack.c.l.b16 %v3991
      %v4114 = vunpack.c.h.b16 %v3991
      %v4115 = vunpack.c.l.b16 %v3992
      %v4116 = vunpack.c.h.b16 %v3992
      %v4117 = vunpack.c.l.b16 %v3993
      %v4118 = vunpack.c.h.b16 %v3993
      %v4119 = vunpack.c.l.b16 %v3994
      %v4120 = vunpack.c.h.b16 %v3994
      %v4121 = vunpack.c.l.b16 %v3995
      %v4122 = vunpack.c.h.b16 %v3995
      %v4123 = vunpack.c.l.b16 %v3996
      %v4124 = vunpack.c.h.b16 %v3996
      %v4125 = vunpack.c.l.b16 %v3997
      %v4126 = vunpack.c.h.b16 %v3997
      %v4127 = vunpack.c.l.b16 %v3998
      %v4128 = vunpack.c.h.b16 %v3998
      %v4129 = vunpack.c.l.b16 %v3999
      %v4130 = vunpack.c.h.b16 %v3999
      %v4131 = vunpack.c.l.b16 %v4000
      %v4132 = vunpack.c.h.b16 %v4000
      %v4133 = vunpack.c.l.b16 %v4001
      %v4134 = vunpack.c.h.b16 %v4001
      %v4135 = vunpack.c.l.b16 %v4002
      %v4136 = vunpack.c.h.b16 %v4002
      %v4137 = vunpack.c.l.b16 %v4003
      %v4138 = vunpack.c.h.b16 %v4003
      %v4139 = vunpack.c.l.b16 %v4004
      %v4140 = vunpack.c.h.b16 %v4004
      %v4141 = vpack.c.b16 %v4079, %v4077
      %v4142 = vpack.c.b16 %v4080, %v4078
      %v4143 = vpack.c.b16 %v4083, %v4081
      %v4144 = vpack.c.b16 %v4084, %v4082
      %v4145 = vpack.c.b16 %v4087, %v4085
      %v4146 = vpack.c.b16 %v4088, %v4086
      %v4147 = vpack.c.b16 %v4091, %v4089
      %v4148 = vpack.c.b16 %v4092, %v4090
      %v4149 = vpack.c.b16 %v4095, %v4093
      %v4150 = vpack.c.b16 %v4096, %v4094
      %v4151 = vpack.c.b16 %v4099, %v4097
      %v4152 = vpack.c.b16 %v4100, %v4098
      %v4153 = vpack.c.b16 %v4103, %v4101
      %v4154 = vpack.c.b16 %v4104, %v4102
      %v4155 = vpack.c.b16 %v4107, %v4105
      %v4156 = vpack.c.b16 %v4108, %v4106
      %v4157 = vpack.c.b16 %v4111, %v4109
      %v4158 = vpack.c.b16 %v4112, %v4110
      %v4159 = vpack.c.b16 %v4115, %v4113
      %v4160 = vpack.c.b16 %v4116, %v4114
      %v4161 = vpack.c.b16 %v4119, %v4117
      %v4162 = vpack.c.b16 %v4120, %v4118
      %v4163 = vpack.c.b16 %v4123, %v4121
      %v4164 = vpack.c.b16 %v4124, %v4122
      %v4165 = vpack.c.b16 %v4127, %v4125
      %v4166 = vpack.c.b16 %v4128, %v4126
      %v4167 = vpack.c.b16 %v4131, %v4129
      %v4168 = vpack.c.b16 %v4132, %v4130
      %v4169 = vpack.c.b16 %v4135, %v4133
      %v4170 = vpack.c.b16 %v4136, %v4134
      %v4171 = vpack.c.b16 %v4139, %v4137
      %v4172 = vpack.c.b16 %v4140, %v4138
      %4205 = vmatprep.subr.bf16.mxu0 %v4142
      %4206 = vmatpush1.bf16.msra.mxu0 %v4141
      %4207 = vmatprep.subr.bf16.mxu0 %v4144
      %4208 = vmatpush1.bf16.msra.mxu0 %v4143
      %4209 = vmatprep.subr.bf16.mxu0 %v4146
      %4210 = vmatpush1.bf16.msra.mxu0 %v4145
      %4211 = vmatprep.subr.bf16.mxu0 %v4148
      %4212 = vmatpush1.bf16.msra.mxu0 %v4147
      %4213 = vmatprep.subr.bf16.mxu0 %v4150
      %4214 = vmatpush1.bf16.msra.mxu0 %v4149
      %4215 = vmatprep.subr.bf16.mxu0 %v4152
      %4216 = vmatpush1.bf16.msra.mxu0 %v4151
      %4217 = vmatprep.subr.bf16.mxu0 %v4154
      %4218 = vmatpush1.bf16.msra.mxu0 %v4153
      %4219 = vmatprep.subr.bf16.mxu0 %v4156
      %4220 = vmatpush1.bf16.msra.mxu0 %v4155
      %4221 = vmatprep.subr.bf16.mxu0 %v4158
      %4222 = vmatpush1.bf16.msra.mxu0 %v4157
      %4223 = vmatprep.subr.bf16.mxu0 %v4160
      %4224 = vmatpush1.bf16.msra.mxu0 %v4159
      %4225 = vmatprep.subr.bf16.mxu0 %v4162
      %4226 = vmatpush1.bf16.msra.mxu0 %v4161
      %4227 = vmatprep.subr.bf16.mxu0 %v4164
      %4228 = vmatpush1.bf16.msra.mxu0 %v4163
      %4229 = vmatprep.subr.bf16.mxu0 %v4166
      %4230 = vmatpush1.bf16.msra.mxu0 %v4165
      %4231 = vmatprep.subr.bf16.mxu0 %v4168
      %4232 = vmatpush1.bf16.msra.mxu0 %v4167
      %4233 = vmatprep.subr.bf16.mxu0 %v4170
      %4234 = vmatpush1.bf16.msra.mxu0 %v4169
      %4235 = vmatprep.subr.bf16.mxu0 %v4172
      %4236 = vmatpush1.bf16.msra.mxu0 %v4171
      %4237 = vmatprep.mubr.bf16.mxu0 %v4030
      %4238 = vmatmul.mubr.bf16.gmra.mrb[0].mxu0 %v4029
      %v4239 = vpop.f32.mrb[0].mxu0
      %v4240 = vadd.f32 0.0, %v4239
      %v4241 = vpop.f32.mrb[0].mxu0
      %v4242 = vadd.f32 0.0, %v4241
      %v4243 = vpop.f32.mrb[0].mxu0
      %v4244 = vadd.f32 0.0, %v4243
      %v4245 = vpop.f32.mrb[0].mxu0
      %v4246 = vadd.f32 0.0, %v4245
      %4247 = vmatprep.mubr.bf16.mxu0 %v4032
      %4248 = vmatmul.mubr.bf16.gmra.mrb[0].mxu0 %v4031
      %v4249 = vpop.f32.mrb[0].mxu0
      %v4250 = vadd.f32 0.0, %v4249
      %v4251 = vpop.f32.mrb[0].mxu0
      %v4252 = vadd.f32 0.0, %v4251
      %v4253 = vpop.f32.mrb[0].mxu0
      %v4254 = vadd.f32 0.0, %v4253
      %v4255 = vpop.f32.mrb[0].mxu0
      %v4256 = vadd.f32 0.0, %v4255
      %4257 = vmatprep.mubr.bf16.mxu0 %v4034
      %4258 = vmatmul.mubr.bf16.gmra.mrb[0].mxu0 %v4033
      %v4259 = vpop.f32.mrb[0].mxu0
      %v4260 = vadd.f32 0.0, %v4259
      %v4261 = vpop.f32.mrb[0].mxu0
      %v4262 = vadd.f32 0.0, %v4261
      %v4263 = vpop.f32.mrb[0].mxu0
      %v4264 = vadd.f32 0.0, %v4263
      %v4265 = vpop.f32.mrb[0].mxu0
      %v4266 = vadd.f32 0.0, %v4265
      %4267 = vmatprep.mubr.bf16.mxu0 %v4036
      %4268 = vmatmul.mubr.bf16.gmra.mrb[0].mxu0 %v4035
      %v4269 = vpop.f32.mrb[0].mxu0
      %v4270 = vadd.f32 0.0, %v4269
      %v4271 = vpop.f32.mrb[0].mxu0
      %v4272 = vadd.f32 0.0, %v4271
      %v4273 = vpop.f32.mrb[0].mxu0
      %v4274 = vadd.f32 0.0, %v4273
      %v4275 = vpop.f32.mrb[0].mxu0
      %v4276 = vadd.f32 0.0, %v4275
      %4277 = vdwg.mxu0
      %v4286 = vunpack.c.l.b16 %v3924
      %v4287 = vunpack.c.h.b16 %v3924
      %v4288 = vunpack.c.l.b16 %v3925
      %v4289 = vunpack.c.h.b16 %v3925
      %v4290 = vunpack.c.l.b16 %v3926
      %v4291 = vunpack.c.h.b16 %v3926
      %v4292 = vunpack.c.l.b16 %v3927
      %v4293 = vunpack.c.h.b16 %v3927
      %v4294 = vunpack.c.l.b16 %v3928
      %v4295 = vunpack.c.h.b16 %v3928
      %v4296 = vunpack.c.l.b16 %v3929
      %v4297 = vunpack.c.h.b16 %v3929
      %v4298 = vunpack.c.l.b16 %v3930
      %v4299 = vunpack.c.h.b16 %v3930
      %v4300 = vunpack.c.l.b16 %v3931
      %v4301 = vunpack.c.h.b16 %v3931
      %v4302 = vpack.c.b16 %v4288, %v4286
      %v4303 = vpack.c.b16 %v4289, %v4287
      %v4304 = vpack.c.b16 %v4292, %v4290
      %v4305 = vpack.c.b16 %v4293, %v4291
      %v4306 = vpack.c.b16 %v4296, %v4294
      %v4307 = vpack.c.b16 %v4297, %v4295
      %v4308 = vpack.c.b16 %v4300, %v4298
      %v4309 = vpack.c.b16 %v4301, %v4299
      %v4350 = vunpack.c.l.b16 %v3932
      %v4351 = vunpack.c.h.b16 %v3932
      %v4352 = vunpack.c.l.b16 %v3933
      %v4353 = vunpack.c.h.b16 %v3933
      %v4354 = vunpack.c.l.b16 %v3934
      %v4355 = vunpack.c.h.b16 %v3934
      %v4356 = vunpack.c.l.b16 %v3935
      %v4357 = vunpack.c.h.b16 %v3935
      %v4358 = vunpack.c.l.b16 %v3936
      %v4359 = vunpack.c.h.b16 %v3936
      %v4360 = vunpack.c.l.b16 %v3937
      %v4361 = vunpack.c.h.b16 %v3937
      %v4362 = vunpack.c.l.b16 %v3938
      %v4363 = vunpack.c.h.b16 %v3938
      %v4364 = vunpack.c.l.b16 %v3939
      %v4365 = vunpack.c.h.b16 %v3939
      %v4366 = vunpack.c.l.b16 %v3940
      %v4367 = vunpack.c.h.b16 %v3940
      %v4368 = vunpack.c.l.b16 %v3941
      %v4369 = vunpack.c.h.b16 %v3941
      %v4370 = vunpack.c.l.b16 %v3942
      %v4371 = vunpack.c.h.b16 %v3942
      %v4372 = vunpack.c.l.b16 %v3943
      %v4373 = vunpack.c.h.b16 %v3943
      %v4374 = vunpack.c.l.b16 %v3944
      %v4375 = vunpack.c.h.b16 %v3944
      %v4376 = vunpack.c.l.b16 %v3945
      %v4377 = vunpack.c.h.b16 %v3945
      %v4378 = vunpack.c.l.b16 %v3946
      %v4379 = vunpack.c.h.b16 %v3946
      %v4380 = vunpack.c.l.b16 %v3947
      %v4381 = vunpack.c.h.b16 %v3947
      %v4382 = vunpack.c.l.b16 %v3948
      %v4383 = vunpack.c.h.b16 %v3948
      %v4384 = vunpack.c.l.b16 %v3949
      %v4385 = vunpack.c.h.b16 %v3949
      %v4386 = vunpack.c.l.b16 %v3950
      %v4387 = vunpack.c.h.b16 %v3950
      %v4388 = vunpack.c.l.b16 %v3951
      %v4389 = vunpack.c.h.b16 %v3951
      %v4390 = vunpack.c.l.b16 %v3952
      %v4391 = vunpack.c.h.b16 %v3952
      %v4392 = vunpack.c.l.b16 %v3953
      %v4393 = vunpack.c.h.b16 %v3953
      %v4394 = vunpack.c.l.b16 %v3954
      %v4395 = vunpack.c.h.b16 %v3954
      %v4396 = vunpack.c.l.b16 %v3955
      %v4397 = vunpack.c.h.b16 %v3955
      %v4398 = vunpack.c.l.b16 %v3956
      %v4399 = vunpack.c.h.b16 %v3956
      %v4400 = vunpack.c.l.b16 %v3957
      %v4401 = vunpack.c.h.b16 %v3957
      %v4402 = vunpack.c.l.b16 %v3958
      %v4403 = vunpack.c.h.b16 %v3958
      %v4404 = vunpack.c.l.b16 %v3959
      %v4405 = vunpack.c.h.b16 %v3959
      %v4406 = vunpack.c.l.b16 %v3960
      %v4407 = vunpack.c.h.b16 %v3960
      %v4408 = vunpack.c.l.b16 %v3961
      %v4409 = vunpack.c.h.b16 %v3961
      %v4410 = vunpack.c.l.b16 %v3962
      %v4411 = vunpack.c.h.b16 %v3962
      %v4412 = vunpack.c.l.b16 %v3963
      %v4413 = vunpack.c.h.b16 %v3963
      %v4414 = vpack.c.b16 %v4352, %v4350
      %v4415 = vpack.c.b16 %v4353, %v4351
      %v4416 = vpack.c.b16 %v4356, %v4354
      %v4417 = vpack.c.b16 %v4357, %v4355
      %v4418 = vpack.c.b16 %v4360, %v4358
      %v4419 = vpack.c.b16 %v4361, %v4359
      %v4420 = vpack.c.b16 %v4364, %v4362
      %v4421 = vpack.c.b16 %v4365, %v4363
      %v4422 = vpack.c.b16 %v4368, %v4366
      %v4423 = vpack.c.b16 %v4369, %v4367
      %v4424 = vpack.c.b16 %v4372, %v4370
      %v4425 = vpack.c.b16 %v4373, %v4371
      %v4426 = vpack.c.b16 %v4376, %v4374
      %v4427 = vpack.c.b16 %v4377, %v4375
      %v4428 = vpack.c.b16 %v4380, %v4378
      %v4429 = vpack.c.b16 %v4381, %v4379
      %v4430 = vpack.c.b16 %v4384, %v4382
      %v4431 = vpack.c.b16 %v4385, %v4383
      %v4432 = vpack.c.b16 %v4388, %v4386
      %v4433 = vpack.c.b16 %v4389, %v4387
      %v4434 = vpack.c.b16 %v4392, %v4390
      %v4435 = vpack.c.b16 %v4393, %v4391
      %v4436 = vpack.c.b16 %v4396, %v4394
      %v4437 = vpack.c.b16 %v4397, %v4395
      %v4438 = vpack.c.b16 %v4400, %v4398
      %v4439 = vpack.c.b16 %v4401, %v4399
      %v4440 = vpack.c.b16 %v4404, %v4402
      %v4441 = vpack.c.b16 %v4405, %v4403
      %v4442 = vpack.c.b16 %v4408, %v4406
      %v4443 = vpack.c.b16 %v4409, %v4407
      %v4444 = vpack.c.b16 %v4412, %v4410
      %v4445 = vpack.c.b16 %v4413, %v4411
      %4478 = vmatprep.subr.bf16.mxu0 %v4415
      %4479 = vmatpush1.bf16.msra.mxu0 %v4414
      %4480 = vmatprep.subr.bf16.mxu0 %v4417
      %4481 = vmatpush1.bf16.msra.mxu0 %v4416
      %4482 = vmatprep.subr.bf16.mxu0 %v4419
      %4483 = vmatpush1.bf16.msra.mxu0 %v4418
      %4484 = vmatprep.subr.bf16.mxu0 %v4421
      %4485 = vmatpush1.bf16.msra.mxu0 %v4420
      %4486 = vmatprep.subr.bf16.mxu0 %v4423
      %4487 = vmatpush1.bf16.msra.mxu0 %v4422
      %4488 = vmatprep.subr.bf16.mxu0 %v4425
      %4489 = vmatpush1.bf16.msra.mxu0 %v4424
      %4490 = vmatprep.subr.bf16.mxu0 %v4427
      %4491 = vmatpush1.bf16.msra.mxu0 %v4426
      %4492 = vmatprep.subr.bf16.mxu0 %v4429
      %4493 = vmatpush1.bf16.msra.mxu0 %v4428
      %4494 = vmatprep.subr.bf16.mxu0 %v4431
      %4495 = vmatpush1.bf16.msra.mxu0 %v4430
      %4496 = vmatprep.subr.bf16.mxu0 %v4433
      %4497 = vmatpush1.bf16.msra.mxu0 %v4432
      %4498 = vmatprep.subr.bf16.mxu0 %v4435
      %4499 = vmatpush1.bf16.msra.mxu0 %v4434
      %4500 = vmatprep.subr.bf16.mxu0 %v4437
      %4501 = vmatpush1.bf16.msra.mxu0 %v4436
      %4502 = vmatprep.subr.bf16.mxu0 %v4439
      %4503 = vmatpush1.bf16.msra.mxu0 %v4438
      %4504 = vmatprep.subr.bf16.mxu0 %v4441
      %4505 = vmatpush1.bf16.msra.mxu0 %v4440
      %4506 = vmatprep.subr.bf16.mxu0 %v4443
      %4507 = vmatpush1.bf16.msra.mxu0 %v4442
      %4508 = vmatprep.subr.bf16.mxu0 %v4445
      %4509 = vmatpush1.bf16.msra.mxu0 %v4444
      %4510 = vmatprep.mubr.bf16.mxu0 %v4303
      %4511 = vmatmul.mubr.bf16.gmra.mrb[0].mxu0 %v4302
      %v4512 = vpop.f32.mrb[0].mxu0
      %v4513 = vadd.f32 %v4240, %v4512
      %v4514 = vpop.f32.mrb[0].mxu0
      %v4515 = vadd.f32 %v4242, %v4514
      %v4516 = vpop.f32.mrb[0].mxu0
      %v4517 = vadd.f32 %v4244, %v4516
      %v4518 = vpop.f32.mrb[0].mxu0
      %v4519 = vadd.f32 %v4246, %v4518
      %4520 = vmatprep.mubr.bf16.mxu0 %v4305
      %4521 = vmatmul.mubr.bf16.gmra.mrb[0].mxu0 %v4304
      %v4522 = vpop.f32.mrb[0].mxu0
      %v4523 = vadd.f32 %v4250, %v4522
      %v4524 = vpop.f32.mrb[0].mxu0
      %v4525 = vadd.f32 %v4252, %v4524
      %v4526 = vpop.f32.mrb[0].mxu0
      %v4527 = vadd.f32 %v4254, %v4526
      %v4528 = vpop.f32.mrb[0].mxu0
      %v4529 = vadd.f32 %v4256, %v4528
      %4530 = vmatprep.mubr.bf16.mxu0 %v4307
      %4531 = vmatmul.mubr.bf16.gmra.mrb[0].mxu0 %v4306
      %v4532 = vpop.f32.mrb[0].mxu0
      %v4533 = vadd.f32 %v4260, %v4532
      %v4534 = vpop.f32.mrb[0].mxu0
      %v4535 = vadd.f32 %v4262, %v4534
      %v4536 = vpop.f32.mrb[0].mxu0
      %v4537 = vadd.f32 %v4264, %v4536
      %v4538 = vpop.f32.mrb[0].mxu0
      %v4539 = vadd.f32 %v4266, %v4538
      %4540 = vmatprep.mubr.bf16.mxu0 %v4309
      %4541 = vmatmul.mubr.bf16.gmra.mrb[0].mxu0 %v4308
      %v4542 = vpop.f32.mrb[0].mxu0
      %v4543 = vadd.f32 %v4270, %v4542
      %v4544 = vpop.f32.mrb[0].mxu0
      %v4545 = vadd.f32 %v4272, %v4544
      %v4546 = vpop.f32.mrb[0].mxu0
      %v4547 = vadd.f32 %v4274, %v4546
      %v4548 = vpop.f32.mrb[0].mxu0
      %v4549 = vadd.f32 %v4276, %v4548
      %4550 = vdwg.mxu0
      %v4551 = vld [vmem:[%s287] sm:$0xff]
      %v4552 = vld [vmem:[%s287 + $0x8] sm:$0xff]
      %v4553 = vld [vmem:[%s287 + $0x10] sm:$0xff]
      %v4554 = vld [vmem:[%s287 + $0x18] sm:$0xff]
      %v4555 = vld [vmem:[%s287 + $0x20] sm:$0xff]
      %v4556 = vld [vmem:[%s287 + $0x28] sm:$0xff]
      %v4557 = vld [vmem:[%s287 + $0x30] sm:$0xff]
      %v4558 = vld [vmem:[%s287 + $0x38] sm:$0xff]
      %s4559 = scalar_lea.vmem %s4, 512
      %v4560 = vld [vmem:[%s4559] sm:$0xff]
      %v4561 = vld [vmem:[%s4559 + $0x8] sm:$0xff]
      %v4562 = vld [vmem:[%s4559 + $0x10] sm:$0xff]
      %v4563 = vld [vmem:[%s4559 + $0x18] sm:$0xff]
      %v4564 = vld [vmem:[%s4559 + $0x20] sm:$0xff]
      %v4565 = vld [vmem:[%s4559 + $0x28] sm:$0xff]
      %v4566 = vld [vmem:[%s4559 + $0x30] sm:$0xff]
      %v4567 = vld [vmem:[%s4559 + $0x38] sm:$0xff]
      %v4568 = vld [vmem:[%s4559 + $0x40] sm:$0xff]
      %v4569 = vld [vmem:[%s4559 + $0x48] sm:$0xff]
      %v4570 = vld [vmem:[%s4559 + $0x50] sm:$0xff]
      %v4571 = vld [vmem:[%s4559 + $0x58] sm:$0xff]
      %v4572 = vld [vmem:[%s4559 + $0x60] sm:$0xff]
      %v4573 = vld [vmem:[%s4559 + $0x68] sm:$0xff]
      %v4574 = vld [vmem:[%s4559 + $0x70] sm:$0xff]
      %v4575 = vld [vmem:[%s4559 + $0x78] sm:$0xff]
      %v4576 = vld [vmem:[%s4559 + $0x80] sm:$0xff]
      %v4577 = vld [vmem:[%s4559 + $0x88] sm:$0xff]
      %v4578 = vld [vmem:[%s4559 + $0x90] sm:$0xff]
      %v4579 = vld [vmem:[%s4559 + $0x98] sm:$0xff]
      %v4580 = vld [vmem:[%s4559 + $0xa0] sm:$0xff]
      %v4581 = vld [vmem:[%s4559 + $0xa8] sm:$0xff]
      %v4582 = vld [vmem:[%s4559 + $0xb0] sm:$0xff]
      %v4583 = vld [vmem:[%s4559 + $0xb8] sm:$0xff]
      %v4584 = vld [vmem:[%s4559 + $0xc0] sm:$0xff]
      %v4585 = vld [vmem:[%s4559 + $0xc8] sm:$0xff]
      %v4586 = vld [vmem:[%s4559 + $0xd0] sm:$0xff]
      %v4587 = vld [vmem:[%s4559 + $0xd8] sm:$0xff]
      %v4588 = vld [vmem:[%s4559 + $0xe0] sm:$0xff]
      %v4589 = vld [vmem:[%s4559 + $0xe8] sm:$0xff]
      %v4590 = vld [vmem:[%s4559 + $0xf0] sm:$0xff]
      %v4591 = vld [vmem:[%s4559 + $0xf8] sm:$0xff]
      %v4600 = vunpack.c.l.b16 %v4551
      %v4601 = vunpack.c.h.b16 %v4551
      %v4602 = vunpack.c.l.b16 %v4552
      %v4603 = vunpack.c.h.b16 %v4552
      %v4604 = vunpack.c.l.b16 %v4553
      %v4605 = vunpack.c.h.b16 %v4553
      %v4606 = vunpack.c.l.b16 %v4554
      %v4607 = vunpack.c.h.b16 %v4554
      %v4608 = vunpack.c.l.b16 %v4555
      %v4609 = vunpack.c.h.b16 %v4555
      %v4610 = vunpack.c.l.b16 %v4556
      %v4611 = vunpack.c.h.b16 %v4556
      %v4612 = vunpack.c.l.b16 %v4557
      %v4613 = vunpack.c.h.b16 %v4557
      %v4614 = vunpack.c.l.b16 %v4558
      %v4615 = vunpack.c.h.b16 %v4558
      %v4616 = vpack.c.b16 %v4602, %v4600
      %v4617 = vpack.c.b16 %v4603, %v4601
      %v4618 = vpack.c.b16 %v4606, %v4604
      %v4619 = vpack.c.b16 %v4607, %v4605
      %v4620 = vpack.c.b16 %v4610, %v4608
      %v4621 = vpack.c.b16 %v4611, %v4609
      %v4622 = vpack.c.b16 %v4614, %v4612
      %v4623 = vpack.c.b16 %v4615, %v4613
      %v4664 = vunpack.c.l.b16 %v4560
      %v4665 = vunpack.c.h.b16 %v4560
      %v4666 = vunpack.c.l.b16 %v4561
      %v4667 = vunpack.c.h.b16 %v4561
      %v4668 = vunpack.c.l.b16 %v4562
      %v4669 = vunpack.c.h.b16 %v4562
      %v4670 = vunpack.c.l.b16 %v4563
      %v4671 = vunpack.c.h.b16 %v4563
      %v4672 = vunpack.c.l.b16 %v4564
      %v4673 = vunpack.c.h.b16 %v4564
      %v4674 = vunpack.c.l.b16 %v4565
      %v4675 = vunpack.c.h.b16 %v4565
      %v4676 = vunpack.c.l.b16 %v4566
      %v4677 = vunpack.c.h.b16 %v4566
      %v4678 = vunpack.c.l.b16 %v4567
      %v4679 = vunpack.c.h.b16 %v4567
      %v4680 = vunpack.c.l.b16 %v4568
      %v4681 = vunpack.c.h.b16 %v4568
      %v4682 = vunpack.c.l.b16 %v4569
      %v4683 = vunpack.c.h.b16 %v4569
      %v4684 = vunpack.c.l.b16 %v4570
      %v4685 = vunpack.c.h.b16 %v4570
      %v4686 = vunpack.c.l.b16 %v4571
      %v4687 = vunpack.c.h.b16 %v4571
      %v4688 = vunpack.c.l.b16 %v4572
      %v4689 = vunpack.c.h.b16 %v4572
      %v4690 = vunpack.c.l.b16 %v4573
      %v4691 = vunpack.c.h.b16 %v4573
      %v4692 = vunpack.c.l.b16 %v4574
      %v4693 = vunpack.c.h.b16 %v4574
      %v4694 = vunpack.c.l.b16 %v4575
      %v4695 = vunpack.c.h.b16 %v4575
      %v4696 = vunpack.c.l.b16 %v4576
      %v4697 = vunpack.c.h.b16 %v4576
      %v4698 = vunpack.c.l.b16 %v4577
      %v4699 = vunpack.c.h.b16 %v4577
      %v4700 = vunpack.c.l.b16 %v4578
      %v4701 = vunpack.c.h.b16 %v4578
      %v4702 = vunpack.c.l.b16 %v4579
      %v4703 = vunpack.c.h.b16 %v4579
      %v4704 = vunpack.c.l.b16 %v4580
      %v4705 = vunpack.c.h.b16 %v4580
      %v4706 = vunpack.c.l.b16 %v4581
      %v4707 = vunpack.c.h.b16 %v4581
      %v4708 = vunpack.c.l.b16 %v4582
      %v4709 = vunpack.c.h.b16 %v4582
      %v4710 = vunpack.c.l.b16 %v4583
      %v4711 = vunpack.c.h.b16 %v4583
      %v4712 = vunpack.c.l.b16 %v4584
      %v4713 = vunpack.c.h.b16 %v4584
      %v4714 = vunpack.c.l.b16 %v4585
      %v4715 = vunpack.c.h.b16 %v4585
      %v4716 = vunpack.c.l.b16 %v4586
      %v4717 = vunpack.c.h.b16 %v4586
      %v4718 = vunpack.c.l.b16 %v4587
      %v4719 = vunpack.c.h.b16 %v4587
      %v4720 = vunpack.c.l.b16 %v4588
      %v4721 = vunpack.c.h.b16 %v4588
      %v4722 = vunpack.c.l.b16 %v4589
      %v4723 = vunpack.c.h.b16 %v4589
      %v4724 = vunpack.c.l.b16 %v4590
      %v4725 = vunpack.c.h.b16 %v4590
      %v4726 = vunpack.c.l.b16 %v4591
      %v4727 = vunpack.c.h.b16 %v4591
      %v4728 = vpack.c.b16 %v4666, %v4664
      %v4729 = vpack.c.b16 %v4667, %v4665
      %v4730 = vpack.c.b16 %v4670, %v4668
      %v4731 = vpack.c.b16 %v4671, %v4669
      %v4732 = vpack.c.b16 %v4674, %v4672
      %v4733 = vpack.c.b16 %v4675, %v4673
      %v4734 = vpack.c.b16 %v4678, %v4676
      %v4735 = vpack.c.b16 %v4679, %v4677
      %v4736 = vpack.c.b16 %v4682, %v4680
      %v4737 = vpack.c.b16 %v4683, %v4681
      %v4738 = vpack.c.b16 %v4686, %v4684
      %v4739 = vpack.c.b16 %v4687, %v4685
      %v4740 = vpack.c.b16 %v4690, %v4688
      %v4741 = vpack.c.b16 %v4691, %v4689
      %v4742 = vpack.c.b16 %v4694, %v4692
      %v4743 = vpack.c.b16 %v4695, %v4693
      %v4744 = vpack.c.b16 %v4698, %v4696
      %v4745 = vpack.c.b16 %v4699, %v4697
      %v4746 = vpack.c.b16 %v4702, %v4700
      %v4747 = vpack.c.b16 %v4703, %v4701
      %v4748 = vpack.c.b16 %v4706, %v4704
      %v4749 = vpack.c.b16 %v4707, %v4705
      %v4750 = vpack.c.b16 %v4710, %v4708
      %v4751 = vpack.c.b16 %v4711, %v4709
      %v4752 = vpack.c.b16 %v4714, %v4712
      %v4753 = vpack.c.b16 %v4715, %v4713
      %v4754 = vpack.c.b16 %v4718, %v4716
      %v4755 = vpack.c.b16 %v4719, %v4717
      %v4756 = vpack.c.b16 %v4722, %v4720
      %v4757 = vpack.c.b16 %v4723, %v4721
      %v4758 = vpack.c.b16 %v4726, %v4724
      %v4759 = vpack.c.b16 %v4727, %v4725
      %4792 = vmatprep.subr.bf16.mxu0 %v4729
      %4793 = vmatpush1.bf16.msra.mxu0 %v4728
      %4794 = vmatprep.subr.bf16.mxu0 %v4731
      %4795 = vmatpush1.bf16.msra.mxu0 %v4730
      %4796 = vmatprep.subr.bf16.mxu0 %v4733
      %4797 = vmatpush1.bf16.msra.mxu0 %v4732
      %4798 = vmatprep.subr.bf16.mxu0 %v4735
      %4799 = vmatpush1.bf16.msra.mxu0 %v4734
      %4800 = vmatprep.subr.bf16.mxu0 %v4737
      %4801 = vmatpush1.bf16.msra.mxu0 %v4736
      %4802 = vmatprep.subr.bf16.mxu0 %v4739
      %4803 = vmatpush1.bf16.msra.mxu0 %v4738
      %4804 = vmatprep.subr.bf16.mxu0 %v4741
      %4805 = vmatpush1.bf16.msra.mxu0 %v4740
      %4806 = vmatprep.subr.bf16.mxu0 %v4743
      %4807 = vmatpush1.bf16.msra.mxu0 %v4742
      %4808 = vmatprep.subr.bf16.mxu0 %v4745
      %4809 = vmatpush1.bf16.msra.mxu0 %v4744
      %4810 = vmatprep.subr.bf16.mxu0 %v4747
      %4811 = vmatpush1.bf16.msra.mxu0 %v4746
      %4812 = vmatprep.subr.bf16.mxu0 %v4749
      %4813 = vmatpush1.bf16.msra.mxu0 %v4748
      %4814 = vmatprep.subr.bf16.mxu0 %v4751
      %4815 = vmatpush1.bf16.msra.mxu0 %v4750
      %4816 = vmatprep.subr.bf16.mxu0 %v4753
      %4817 = vmatpush1.bf16.msra.mxu0 %v4752
      %4818 = vmatprep.subr.bf16.mxu0 %v4755
      %4819 = vmatpush1.bf16.msra.mxu0 %v4754
      %4820 = vmatprep.subr.bf16.mxu0 %v4757
      %4821 = vmatpush1.bf16.msra.mxu0 %v4756
      %4822 = vmatprep.subr.bf16.mxu0 %v4759
      %4823 = vmatpush1.bf16.msra.mxu0 %v4758
      %4824 = vmatprep.mubr.bf16.mxu0 %v4617
      %4825 = vmatmul.mubr.bf16.gmra.mrb[0].mxu0 %v4616
      %v4826 = vpop.f32.mrb[0].mxu0
      %v4827 = vadd.f32 0.0, %v4826
      %v4828 = vpop.f32.mrb[0].mxu0
      %v4829 = vadd.f32 0.0, %v4828
      %v4830 = vpop.f32.mrb[0].mxu0
      %v4831 = vadd.f32 0.0, %v4830
      %v4832 = vpop.f32.mrb[0].mxu0
      %v4833 = vadd.f32 0.0, %v4832
      %4834 = vmatprep.mubr.bf16.mxu0 %v4619
      %4835 = vmatmul.mubr.bf16.gmra.mrb[0].mxu0 %v4618
      %v4836 = vpop.f32.mrb[0].mxu0
      %v4837 = vadd.f32 0.0, %v4836
      %v4838 = vpop.f32.mrb[0].mxu0
      %v4839 = vadd.f32 0.0, %v4838
      %v4840 = vpop.f32.mrb[0].mxu0
      %v4841 = vadd.f32 0.0, %v4840
      %v4842 = vpop.f32.mrb[0].mxu0
      %v4843 = vadd.f32 0.0, %v4842
      %4844 = vmatprep.mubr.bf16.mxu0 %v4621
      %4845 = vmatmul.mubr.bf16.gmra.mrb[0].mxu0 %v4620
      %v4846 = vpop.f32.mrb[0].mxu0
      %v4847 = vadd.f32 0.0, %v4846
      %v4848 = vpop.f32.mrb[0].mxu0
      %v4849 = vadd.f32 0.0, %v4848
      %v4850 = vpop.f32.mrb[0].mxu0
      %v4851 = vadd.f32 0.0, %v4850
      %v4852 = vpop.f32.mrb[0].mxu0
      %v4853 = vadd.f32 0.0, %v4852
      %4854 = vmatprep.mubr.bf16.mxu0 %v4623
      %4855 = vmatmul.mubr.bf16.gmra.mrb[0].mxu0 %v4622
      %v4856 = vpop.f32.mrb[0].mxu0
      %v4857 = vadd.f32 0.0, %v4856
      %v4858 = vpop.f32.mrb[0].mxu0
      %v4859 = vadd.f32 0.0, %v4858
      %v4860 = vpop.f32.mrb[0].mxu0
      %v4861 = vadd.f32 0.0, %v4860
      %v4862 = vpop.f32.mrb[0].mxu0
      %v4863 = vadd.f32 0.0, %v4862
      %4864 = vdwg.mxu0
      %v4865 = vadd.f32 %v4513, %v4827
      %v4866 = vadd.f32 %v4515, %v4829
      %v4867 = vadd.f32 %v4517, %v4831
      %v4868 = vadd.f32 %v4519, %v4833
      %v4869 = vadd.f32 %v4523, %v4837
      %v4870 = vadd.f32 %v4525, %v4839
      %v4871 = vadd.f32 %v4527, %v4841
      %v4872 = vadd.f32 %v4529, %v4843
      %v4873 = vadd.f32 %v4533, %v4847
      %v4874 = vadd.f32 %v4535, %v4849
      %v4875 = vadd.f32 %v4537, %v4851
      %v4876 = vadd.f32 %v4539, %v4853
      %v4877 = vadd.f32 %v4543, %v4857
      %v4878 = vadd.f32 %v4545, %v4859
      %v4879 = vadd.f32 %v4547, %v4861
      %v4880 = vadd.f32 %v4549, %v4863
      %v4881 = vld [vmem:[%s453] sm:$0xff]
      %v4882 = vld [vmem:[%s453 + $0x8] sm:$0xff]
      %v4883 = vld [vmem:[%s453 + $0x10] sm:$0xff]
      %v4884 = vld [vmem:[%s453 + $0x18] sm:$0xff]
      %v4885 = vld [vmem:[%s453 + $0x20] sm:$0xff]
      %v4886 = vld [vmem:[%s453 + $0x28] sm:$0xff]
      %v4887 = vld [vmem:[%s453 + $0x30] sm:$0xff]
      %v4888 = vld [vmem:[%s453 + $0x38] sm:$0xff]
      %s4889 = scalar_lea.vmem %s4, 768
      %v4890 = vld [vmem:[%s4889] sm:$0xff]
      %v4891 = vld [vmem:[%s4889 + $0x8] sm:$0xff]
      %v4892 = vld [vmem:[%s4889 + $0x10] sm:$0xff]
      %v4893 = vld [vmem:[%s4889 + $0x18] sm:$0xff]
      %v4894 = vld [vmem:[%s4889 + $0x20] sm:$0xff]
      %v4895 = vld [vmem:[%s4889 + $0x28] sm:$0xff]
      %v4896 = vld [vmem:[%s4889 + $0x30] sm:$0xff]
      %v4897 = vld [vmem:[%s4889 + $0x38] sm:$0xff]
      %v4898 = vld [vmem:[%s4889 + $0x40] sm:$0xff]
      %v4899 = vld [vmem:[%s4889 + $0x48] sm:$0xff]
      %v4900 = vld [vmem:[%s4889 + $0x50] sm:$0xff]
      %v4901 = vld [vmem:[%s4889 + $0x58] sm:$0xff]
      %v4902 = vld [vmem:[%s4889 + $0x60] sm:$0xff]
      %v4903 = vld [vmem:[%s4889 + $0x68] sm:$0xff]
      %v4904 = vld [vmem:[%s4889 + $0x70] sm:$0xff]
      %v4905 = vld [vmem:[%s4889 + $0x78] sm:$0xff]
      %v4906 = vld [vmem:[%s4889 + $0x80] sm:$0xff]
      %v4907 = vld [vmem:[%s4889 + $0x88] sm:$0xff]
      %v4908 = vld [vmem:[%s4889 + $0x90] sm:$0xff]
      %v4909 = vld [vmem:[%s4889 + $0x98] sm:$0xff]
      %v4910 = vld [vmem:[%s4889 + $0xa0] sm:$0xff]
      %v4911 = vld [vmem:[%s4889 + $0xa8] sm:$0xff]
      %v4912 = vld [vmem:[%s4889 + $0xb0] sm:$0xff]
      %v4913 = vld [vmem:[%s4889 + $0xb8] sm:$0xff]
      %v4914 = vld [vmem:[%s4889 + $0xc0] sm:$0xff]
      %v4915 = vld [vmem:[%s4889 + $0xc8] sm:$0xff]
      %v4916 = vld [vmem:[%s4889 + $0xd0] sm:$0xff]
      %v4917 = vld [vmem:[%s4889 + $0xd8] sm:$0xff]
      %v4918 = vld [vmem:[%s4889 + $0xe0] sm:$0xff]
      %v4919 = vld [vmem:[%s4889 + $0xe8] sm:$0xff]
      %v4920 = vld [vmem:[%s4889 + $0xf0] sm:$0xff]
      %v4921 = vld [vmem:[%s4889 + $0xf8] sm:$0xff]
      %v4930 = vunpack.c.l.b16 %v4881
      %v4931 = vunpack.c.h.b16 %v4881
      %v4932 = vunpack.c.l.b16 %v4882
      %v4933 = vunpack.c.h.b16 %v4882
      %v4934 = vunpack.c.l.b16 %v4883
      %v4935 = vunpack.c.h.b16 %v4883
      %v4936 = vunpack.c.l.b16 %v4884
      %v4937 = vunpack.c.h.b16 %v4884
      %v4938 = vunpack.c.l.b16 %v4885
      %v4939 = vunpack.c.h.b16 %v4885
      %v4940 = vunpack.c.l.b16 %v4886
      %v4941 = vunpack.c.h.b16 %v4886
      %v4942 = vunpack.c.l.b16 %v4887
      %v4943 = vunpack.c.h.b16 %v4887
      %v4944 = vunpack.c.l.b16 %v4888
      %v4945 = vunpack.c.h.b16 %v4888
      %v4946 = vpack.c.b16 %v4932, %v4930
      %v4947 = vpack.c.b16 %v4933, %v4931
      %v4948 = vpack.c.b16 %v4936, %v4934
      %v4949 = vpack.c.b16 %v4937, %v4935
      %v4950 = vpack.c.b16 %v4940, %v4938
      %v4951 = vpack.c.b16 %v4941, %v4939
      %v4952 = vpack.c.b16 %v4944, %v4942
      %v4953 = vpack.c.b16 %v4945, %v4943
      %v4994 = vunpack.c.l.b16 %v4890
      %v4995 = vunpack.c.h.b16 %v4890
      %v4996 = vunpack.c.l.b16 %v4891
      %v4997 = vunpack.c.h.b16 %v4891
      %v4998 = vunpack.c.l.b16 %v4892
      %v4999 = vunpack.c.h.b16 %v4892
      %v5000 = vunpack.c.l.b16 %v4893
      %v5001 = vunpack.c.h.b16 %v4893
      %v5002 = vunpack.c.l.b16 %v4894
      %v5003 = vunpack.c.h.b16 %v4894
      %v5004 = vunpack.c.l.b16 %v4895
      %v5005 = vunpack.c.h.b16 %v4895
      %v5006 = vunpack.c.l.b16 %v4896
      %v5007 = vunpack.c.h.b16 %v4896
      %v5008 = vunpack.c.l.b16 %v4897
      %v5009 = vunpack.c.h.b16 %v4897
      %v5010 = vunpack.c.l.b16 %v4898
      %v5011 = vunpack.c.h.b16 %v4898
      %v5012 = vunpack.c.l.b16 %v4899
      %v5013 = vunpack.c.h.b16 %v4899
      %v5014 = vunpack.c.l.b16 %v4900
      %v5015 = vunpack.c.h.b16 %v4900
      %v5016 = vunpack.c.l.b16 %v4901
      %v5017 = vunpack.c.h.b16 %v4901
      %v5018 = vunpack.c.l.b16 %v4902
      %v5019 = vunpack.c.h.b16 %v4902
      %v5020 = vunpack.c.l.b16 %v4903
      %v5021 = vunpack.c.h.b16 %v4903
      %v5022 = vunpack.c.l.b16 %v4904
      %v5023 = vunpack.c.h.b16 %v4904
      %v5024 = vunpack.c.l.b16 %v4905
      %v5025 = vunpack.c.h.b16 %v4905
      %v5026 = vunpack.c.l.b16 %v4906
      %v5027 = vunpack.c.h.b16 %v4906
      %v5028 = vunpack.c.l.b16 %v4907
      %v5029 = vunpack.c.h.b16 %v4907
      %v5030 = vunpack.c.l.b16 %v4908
      %v5031 = vunpack.c.h.b16 %v4908
      %v5032 = vunpack.c.l.b16 %v4909
      %v5033 = vunpack.c.h.b16 %v4909
      %v5034 = vunpack.c.l.b16 %v4910
      %v5035 = vunpack.c.h.b16 %v4910
      %v5036 = vunpack.c.l.b16 %v4911
      %v5037 = vunpack.c.h.b16 %v4911
      %v5038 = vunpack.c.l.b16 %v4912
      %v5039 = vunpack.c.h.b16 %v4912
      %v5040 = vunpack.c.l.b16 %v4913
      %v5041 = vunpack.c.h.b16 %v4913
      %v5042 = vunpack.c.l.b16 %v4914
      %v5043 = vunpack.c.h.b16 %v4914
      %v5044 = vunpack.c.l.b16 %v4915
      %v5045 = vunpack.c.h.b16 %v4915
      %v5046 = vunpack.c.l.b16 %v4916
      %v5047 = vunpack.c.h.b16 %v4916
      %v5048 = vunpack.c.l.b16 %v4917
      %v5049 = vunpack.c.h.b16 %v4917
      %v5050 = vunpack.c.l.b16 %v4918
      %v5051 = vunpack.c.h.b16 %v4918
      %v5052 = vunpack.c.l.b16 %v4919
      %v5053 = vunpack.c.h.b16 %v4919
      %v5054 = vunpack.c.l.b16 %v4920
      %v5055 = vunpack.c.h.b16 %v4920
      %v5056 = vunpack.c.l.b16 %v4921
      %v5057 = vunpack.c.h.b16 %v4921
      %v5058 = vpack.c.b16 %v4996, %v4994
      %v5059 = vpack.c.b16 %v4997, %v4995
      %v5060 = vpack.c.b16 %v5000, %v4998
      %v5061 = vpack.c.b16 %v5001, %v4999
      %v5062 = vpack.c.b16 %v5004, %v5002
      %v5063 = vpack.c.b16 %v5005, %v5003
      %v5064 = vpack.c.b16 %v5008, %v5006
      %v5065 = vpack.c.b16 %v5009, %v5007
      %v5066 = vpack.c.b16 %v5012, %v5010
      %v5067 = vpack.c.b16 %v5013, %v5011
      %v5068 = vpack.c.b16 %v5016, %v5014
      %v5069 = vpack.c.b16 %v5017, %v5015
      %v5070 = vpack.c.b16 %v5020, %v5018
      %v5071 = vpack.c.b16 %v5021, %v5019
      %v5072 = vpack.c.b16 %v5024, %v5022
      %v5073 = vpack.c.b16 %v5025, %v5023
      %v5074 = vpack.c.b16 %v5028, %v5026
      %v5075 = vpack.c.b16 %v5029, %v5027
      %v5076 = vpack.c.b16 %v5032, %v5030
      %v5077 = vpack.c.b16 %v5033, %v5031
      %v5078 = vpack.c.b16 %v5036, %v5034
      %v5079 = vpack.c.b16 %v5037, %v5035
      %v5080 = vpack.c.b16 %v5040, %v5038
      %v5081 = vpack.c.b16 %v5041, %v5039
      %v5082 = vpack.c.b16 %v5044, %v5042
      %v5083 = vpack.c.b16 %v5045, %v5043
      %v5084 = vpack.c.b16 %v5048, %v5046
      %v5085 = vpack.c.b16 %v5049, %v5047
      %v5086 = vpack.c.b16 %v5052, %v5050
      %v5087 = vpack.c.b16 %v5053, %v5051
      %v5088 = vpack.c.b16 %v5056, %v5054
      %v5089 = vpack.c.b16 %v5057, %v5055
      %5122 = vmatprep.subr.bf16.mxu0 %v5059
      %5123 = vmatpush1.bf16.msra.mxu0 %v5058
      %5124 = vmatprep.subr.bf16.mxu0 %v5061
      %5125 = vmatpush1.bf16.msra.mxu0 %v5060
      %5126 = vmatprep.subr.bf16.mxu0 %v5063
      %5127 = vmatpush1.bf16.msra.mxu0 %v5062
      %5128 = vmatprep.subr.bf16.mxu0 %v5065
      %5129 = vmatpush1.bf16.msra.mxu0 %v5064
      %5130 = vmatprep.subr.bf16.mxu0 %v5067
      %5131 = vmatpush1.bf16.msra.mxu0 %v5066
      %5132 = vmatprep.subr.bf16.mxu0 %v5069
      %5133 = vmatpush1.bf16.msra.mxu0 %v5068
      %5134 = vmatprep.subr.bf16.mxu0 %v5071
      %5135 = vmatpush1.bf16.msra.mxu0 %v5070
      %5136 = vmatprep.subr.bf16.mxu0 %v5073
      %5137 = vmatpush1.bf16.msra.mxu0 %v5072
      %5138 = vmatprep.subr.bf16.mxu0 %v5075
      %5139 = vmatpush1.bf16.msra.mxu0 %v5074
      %5140 = vmatprep.subr.bf16.mxu0 %v5077
      %5141 = vmatpush1.bf16.msra.mxu0 %v5076
      %5142 = vmatprep.subr.bf16.mxu0 %v5079
      %5143 = vmatpush1.bf16.msra.mxu0 %v5078
      %5144 = vmatprep.subr.bf16.mxu0 %v5081
      %5145 = vmatpush1.bf16.msra.mxu0 %v5080
      %5146 = vmatprep.subr.bf16.mxu0 %v5083
      %5147 = vmatpush1.bf16.msra.mxu0 %v5082
      %5148 = vmatprep.subr.bf16.mxu0 %v5085
      %5149 = vmatpush1.bf16.msra.mxu0 %v5084
      %5150 = vmatprep.subr.bf16.mxu0 %v5087
      %5151 = vmatpush1.bf16.msra.mxu0 %v5086
      %5152 = vmatprep.subr.bf16.mxu0 %v5089
      %5153 = vmatpush1.bf16.msra.mxu0 %v5088
      %5154 = vmatprep.mubr.bf16.mxu0 %v4947
      %5155 = vmatmul.mubr.bf16.gmra.mrb[0].mxu0 %v4946
      %v5156 = vpop.f32.mrb[0].mxu0
      %v5157 = vadd.f32 0.0, %v5156
      %v5158 = vpop.f32.mrb[0].mxu0
      %v5159 = vadd.f32 0.0, %v5158
      %v5160 = vpop.f32.mrb[0].mxu0
      %v5161 = vadd.f32 0.0, %v5160
      %v5162 = vpop.f32.mrb[0].mxu0
      %v5163 = vadd.f32 0.0, %v5162
      %5164 = vmatprep.mubr.bf16.mxu0 %v4949
      %5165 = vmatmul.mubr.bf16.gmra.mrb[0].mxu0 %v4948
      %v5166 = vpop.f32.mrb[0].mxu0
      %v5167 = vadd.f32 0.0, %v5166
      %v5168 = vpop.f32.mrb[0].mxu0
      %v5169 = vadd.f32 0.0, %v5168
      %v5170 = vpop.f32.mrb[0].mxu0
      %v5171 = vadd.f32 0.0, %v5170
      %v5172 = vpop.f32.mrb[0].mxu0
      %v5173 = vadd.f32 0.0, %v5172
      %5174 = vmatprep.mubr.bf16.mxu0 %v4951
      %5175 = vmatmul.mubr.bf16.gmra.mrb[0].mxu0 %v4950
      %v5176 = vpop.f32.mrb[0].mxu0
      %v5177 = vadd.f32 0.0, %v5176
      %v5178 = vpop.f32.mrb[0].mxu0
      %v5179 = vadd.f32 0.0, %v5178
      %v5180 = vpop.f32.mrb[0].mxu0
      %v5181 = vadd.f32 0.0, %v5180
      %v5182 = vpop.f32.mrb[0].mxu0
      %v5183 = vadd.f32 0.0, %v5182
      %5184 = vmatprep.mubr.bf16.mxu0 %v4953
      %5185 = vmatmul.mubr.bf16.gmra.mrb[0].mxu0 %v4952
      %v5186 = vpop.f32.mrb[0].mxu0
      %v5187 = vadd.f32 0.0, %v5186
      %v5188 = vpop.f32.mrb[0].mxu0
      %v5189 = vadd.f32 0.0, %v5188
      %v5190 = vpop.f32.mrb[0].mxu0
      %v5191 = vadd.f32 0.0, %v5190
      %v5192 = vpop.f32.mrb[0].mxu0
      %v5193 = vadd.f32 0.0, %v5192
      %5194 = vdwg.mxu0
      %v5195 = vadd.f32 %v4865, %v5157
      %v5196 = vadd.f32 %v4866, %v5159
      %v5197 = vadd.f32 %v4867, %v5161
      %v5198 = vadd.f32 %v4868, %v5163
      %v5199 = vadd.f32 %v4869, %v5167
      %v5200 = vadd.f32 %v4870, %v5169
      %v5201 = vadd.f32 %v4871, %v5171
      %v5202 = vadd.f32 %v4872, %v5173
      %v5203 = vadd.f32 %v4873, %v5177
      %v5204 = vadd.f32 %v4874, %v5179
      %v5205 = vadd.f32 %v4875, %v5181
      %v5206 = vadd.f32 %v4876, %v5183
      %v5207 = vadd.f32 %v4877, %v5187
      %v5208 = vadd.f32 %v4878, %v5189
      %v5209 = vadd.f32 %v4879, %v5191
      %v5210 = vadd.f32 %v4880, %v5193
      %v5211 = vld [vmem:[%s315] sm:$0xff]
      %v5212 = vld [vmem:[%s315 + $0x8] sm:$0xff]
      %v5213 = vld [vmem:[%s315 + $0x10] sm:$0xff]
      %v5214 = vld [vmem:[%s315 + $0x18] sm:$0xff]
      %v5215 = vld [vmem:[%s315 + $0x20] sm:$0xff]
      %v5216 = vld [vmem:[%s315 + $0x28] sm:$0xff]
      %v5217 = vld [vmem:[%s315 + $0x30] sm:$0xff]
      %v5218 = vld [vmem:[%s315 + $0x38] sm:$0xff]
      %s5219 = scalar_lea.vmem %s4, 1024
      %v5220 = vld [vmem:[%s5219] sm:$0xff]
      %v5221 = vld [vmem:[%s5219 + $0x8] sm:$0xff]
      %v5222 = vld [vmem:[%s5219 + $0x10] sm:$0xff]
      %v5223 = vld [vmem:[%s5219 + $0x18] sm:$0xff]
      %v5224 = vld [vmem:[%s5219 + $0x20] sm:$0xff]
      %v5225 = vld [vmem:[%s5219 + $0x28] sm:$0xff]
      %v5226 = vld [vmem:[%s5219 + $0x30] sm:$0xff]
      %v5227 = vld [vmem:[%s5219 + $0x38] sm:$0xff]
      %v5228 = vld [vmem:[%s5219 + $0x40] sm:$0xff]
      %v5229 = vld [vmem:[%s5219 + $0x48] sm:$0xff]
      %v5230 = vld [vmem:[%s5219 + $0x50] sm:$0xff]
      %v5231 = vld [vmem:[%s5219 + $0x58] sm:$0xff]
      %v5232 = vld [vmem:[%s5219 + $0x60] sm:$0xff]
      %v5233 = vld [vmem:[%s5219 + $0x68] sm:$0xff]
      %v5234 = vld [vmem:[%s5219 + $0x70] sm:$0xff]
      %v5235 = vld [vmem:[%s5219 + $0x78] sm:$0xff]
      %v5236 = vld [vmem:[%s5219 + $0x80] sm:$0xff]
      %v5237 = vld [vmem:[%s5219 + $0x88] sm:$0xff]
      %v5238 = vld [vmem:[%s5219 + $0x90] sm:$0xff]
      %v5239 = vld [vmem:[%s5219 + $0x98] sm:$0xff]
      %v5240 = vld [vmem:[%s5219 + $0xa0] sm:$0xff]
      %v5241 = vld [vmem:[%s5219 + $0xa8] sm:$0xff]
      %v5242 = vld [vmem:[%s5219 + $0xb0] sm:$0xff]
      %v5243 = vld [vmem:[%s5219 + $0xb8] sm:$0xff]
      %v5244 = vld [vmem:[%s5219 + $0xc0] sm:$0xff]
      %v5245 = vld [vmem:[%s5219 + $0xc8] sm:$0xff]
      %v5246 = vld [vmem:[%s5219 + $0xd0] sm:$0xff]
      %v5247 = vld [vmem:[%s5219 + $0xd8] sm:$0xff]
      %v5248 = vld [vmem:[%s5219 + $0xe0] sm:$0xff]
      %v5249 = vld [vmem:[%s5219 + $0xe8] sm:$0xff]
      %v5250 = vld [vmem:[%s5219 + $0xf0] sm:$0xff]
      %v5251 = vld [vmem:[%s5219 + $0xf8] sm:$0xff]
      %v5260 = vunpack.c.l.b16 %v5211
      %v5261 = vunpack.c.h.b16 %v5211
      %v5262 = vunpack.c.l.b16 %v5212
      %v5263 = vunpack.c.h.b16 %v5212
      %v5264 = vunpack.c.l.b16 %v5213
      %v5265 = vunpack.c.h.b16 %v5213
      %v5266 = vunpack.c.l.b16 %v5214
      %v5267 = vunpack.c.h.b16 %v5214
      %v5268 = vunpack.c.l.b16 %v5215
      %v5269 = vunpack.c.h.b16 %v5215
      %v5270 = vunpack.c.l.b16 %v5216
      %v5271 = vunpack.c.h.b16 %v5216
      %v5272 = vunpack.c.l.b16 %v5217
      %v5273 = vunpack.c.h.b16 %v5217
      %v5274 = vunpack.c.l.b16 %v5218
      %v5275 = vunpack.c.h.b16 %v5218
      %v5276 = vpack.c.b16 %v5262, %v5260
      %v5277 = vpack.c.b16 %v5263, %v5261
      %v5278 = vpack.c.b16 %v5266, %v5264
      %v5279 = vpack.c.b16 %v5267, %v5265
      %v5280 = vpack.c.b16 %v5270, %v5268
      %v5281 = vpack.c.b16 %v5271, %v5269
      %v5282 = vpack.c.b16 %v5274, %v5272
      %v5283 = vpack.c.b16 %v5275, %v5273
      %v5324 = vunpack.c.l.b16 %v5220
      %v5325 = vunpack.c.h.b16 %v5220
      %v5326 = vunpack.c.l.b16 %v5221
      %v5327 = vunpack.c.h.b16 %v5221
      %v5328 = vunpack.c.l.b16 %v5222
      %v5329 = vunpack.c.h.b16 %v5222
      %v5330 = vunpack.c.l.b16 %v5223
      %v5331 = vunpack.c.h.b16 %v5223
      %v5332 = vunpack.c.l.b16 %v5224
      %v5333 = vunpack.c.h.b16 %v5224
      %v5334 = vunpack.c.l.b16 %v5225
      %v5335 = vunpack.c.h.b16 %v5225
      %v5336 = vunpack.c.l.b16 %v5226
      %v5337 = vunpack.c.h.b16 %v5226
      %v5338 = vunpack.c.l.b16 %v5227
      %v5339 = vunpack.c.h.b16 %v5227
      %v5340 = vunpack.c.l.b16 %v5228
      %v5341 = vunpack.c.h.b16 %v5228
      %v5342 = vunpack.c.l.b16 %v5229
      %v5343 = vunpack.c.h.b16 %v5229
      %v5344 = vunpack.c.l.b16 %v5230
      %v5345 = vunpack.c.h.b16 %v5230
      %v5346 = vunpack.c.l.b16 %v5231
      %v5347 = vunpack.c.h.b16 %v5231
      %v5348 = vunpack.c.l.b16 %v5232
      %v5349 = vunpack.c.h.b16 %v5232
      %v5350 = vunpack.c.l.b16 %v5233
      %v5351 = vunpack.c.h.b16 %v5233
      %v5352 = vunpack.c.l.b16 %v5234
      %v5353 = vunpack.c.h.b16 %v5234
      %v5354 = vunpack.c.l.b16 %v5235
      %v5355 = vunpack.c.h.b16 %v5235
      %v5356 = vunpack.c.l.b16 %v5236
      %v5357 = vunpack.c.h.b16 %v5236
      %v5358 = vunpack.c.l.b16 %v5237
      %v5359 = vunpack.c.h.b16 %v5237
      %v5360 = vunpack.c.l.b16 %v5238
      %v5361 = vunpack.c.h.b16 %v5238
      %v5362 = vunpack.c.l.b16 %v5239
      %v5363 = vunpack.c.h.b16 %v5239
      %v5364 = vunpack.c.l.b16 %v5240
      %v5365 = vunpack.c.h.b16 %v5240
      %v5366 = vunpack.c.l.b16 %v5241
      %v5367 = vunpack.c.h.b16 %v5241
      %v5368 = vunpack.c.l.b16 %v5242
      %v5369 = vunpack.c.h.b16 %v5242
      %v5370 = vunpack.c.l.b16 %v5243
      %v5371 = vunpack.c.h.b16 %v5243
      %v5372 = vunpack.c.l.b16 %v5244
      %v5373 = vunpack.c.h.b16 %v5244
      %v5374 = vunpack.c.l.b16 %v5245
      %v5375 = vunpack.c.h.b16 %v5245
      %v5376 = vunpack.c.l.b16 %v5246
      %v5377 = vunpack.c.h.b16 %v5246
      %v5378 = vunpack.c.l.b16 %v5247
      %v5379 = vunpack.c.h.b16 %v5247
      %v5380 = vunpack.c.l.b16 %v5248
      %v5381 = vunpack.c.h.b16 %v5248
      %v5382 = vunpack.c.l.b16 %v5249
      %v5383 = vunpack.c.h.b16 %v5249
      %v5384 = vunpack.c.l.b16 %v5250
      %v5385 = vunpack.c.h.b16 %v5250
      %v5386 = vunpack.c.l.b16 %v5251
      %v5387 = vunpack.c.h.b16 %v5251
      %v5388 = vpack.c.b16 %v5326, %v5324
      %v5389 = vpack.c.b16 %v5327, %v5325
      %v5390 = vpack.c.b16 %v5330, %v5328
      %v5391 = vpack.c.b16 %v5331, %v5329
      %v5392 = vpack.c.b16 %v5334, %v5332
      %v5393 = vpack.c.b16 %v5335, %v5333
      %v5394 = vpack.c.b16 %v5338, %v5336
      %v5395 = vpack.c.b16 %v5339, %v5337
      %v5396 = vpack.c.b16 %v5342, %v5340
      %v5397 = vpack.c.b16 %v5343, %v5341
      %v5398 = vpack.c.b16 %v5346, %v5344
      %v5399 = vpack.c.b16 %v5347, %v5345
      %v5400 = vpack.c.b16 %v5350, %v5348
      %v5401 = vpack.c.b16 %v5351, %v5349
      %v5402 = vpack.c.b16 %v5354, %v5352
      %v5403 = vpack.c.b16 %v5355, %v5353
      %v5404 = vpack.c.b16 %v5358, %v5356
      %v5405 = vpack.c.b16 %v5359, %v5357
      %v5406 = vpack.c.b16 %v5362, %v5360
      %v5407 = vpack.c.b16 %v5363, %v5361
      %v5408 = vpack.c.b16 %v5366, %v5364
      %v5409 = vpack.c.b16 %v5367, %v5365
      %v5410 = vpack.c.b16 %v5370, %v5368
      %v5411 = vpack.c.b16 %v5371, %v5369
      %v5412 = vpack.c.b16 %v5374, %v5372
      %v5413 = vpack.c.b16 %v5375, %v5373
      %v5414 = vpack.c.b16 %v5378, %v5376
      %v5415 = vpack.c.b16 %v5379, %v5377
      %v5416 = vpack.c.b16 %v5382, %v5380
      %v5417 = vpack.c.b16 %v5383, %v5381
      %v5418 = vpack.c.b16 %v5386, %v5384
      %v5419 = vpack.c.b16 %v5387, %v5385
      %5452 = vmatprep.subr.bf16.mxu0 %v5389
      %5453 = vmatpush1.bf16.msra.mxu0 %v5388
      %5454 = vmatprep.subr.bf16.mxu0 %v5391
      %5455 = vmatpush1.bf16.msra.mxu0 %v5390
      %5456 = vmatprep.subr.bf16.mxu0 %v5393
      %5457 = vmatpush1.bf16.msra.mxu0 %v5392
      %5458 = vmatprep.subr.bf16.mxu0 %v5395
      %5459 = vmatpush1.bf16.msra.mxu0 %v5394
      %5460 = vmatprep.subr.bf16.mxu0 %v5397
      %5461 = vmatpush1.bf16.msra.mxu0 %v5396
      %5462 = vmatprep.subr.bf16.mxu0 %v5399
      %5463 = vmatpush1.bf16.msra.mxu0 %v5398
      %5464 = vmatprep.subr.bf16.mxu0 %v5401
      %5465 = vmatpush1.bf16.msra.mxu0 %v5400
      %5466 = vmatprep.subr.bf16.mxu0 %v5403
      %5467 = vmatpush1.bf16.msra.mxu0 %v5402
      %5468 = vmatprep.subr.bf16.mxu0 %v5405
      %5469 = vmatpush1.bf16.msra.mxu0 %v5404
      %5470 = vmatprep.subr.bf16.mxu0 %v5407
      %5471 = vmatpush1.bf16.msra.mxu0 %v5406
      %5472 = vmatprep.subr.bf16.mxu0 %v5409
      %5473 = vmatpush1.bf16.msra.mxu0 %v5408
      %5474 = vmatprep.subr.bf16.mxu0 %v5411
      %5475 = vmatpush1.bf16.msra.mxu0 %v5410
      %5476 = vmatprep.subr.bf16.mxu0 %v5413
      %5477 = vmatpush1.bf16.msra.mxu0 %v5412
      %5478 = vmatprep.subr.bf16.mxu0 %v5415
      %5479 = vmatpush1.bf16.msra.mxu0 %v5414
      %5480 = vmatprep.subr.bf16.mxu0 %v5417
      %5481 = vmatpush1.bf16.msra.mxu0 %v5416
      %5482 = vmatprep.subr.bf16.mxu0 %v5419
      %5483 = vmatpush1.bf16.msra.mxu0 %v5418
      %5484 = vmatprep.mubr.bf16.mxu0 %v5277
      %5485 = vmatmul.mubr.bf16.gmra.mrb[0].mxu0 %v5276
      %v5486 = vpop.f32.mrb[0].mxu0
      %v5487 = vadd.f32 0.0, %v5486
      %v5488 = vpop.f32.mrb[0].mxu0
      %v5489 = vadd.f32 0.0, %v5488
      %v5490 = vpop.f32.mrb[0].mxu0
      %v5491 = vadd.f32 0.0, %v5490
      %v5492 = vpop.f32.mrb[0].mxu0
      %v5493 = vadd.f32 0.0, %v5492
      %5494 = vmatprep.mubr.bf16.mxu0 %v5279
      %5495 = vmatmul.mubr.bf16.gmra.mrb[0].mxu0 %v5278
      %v5496 = vpop.f32.mrb[0].mxu0
      %v5497 = vadd.f32 0.0, %v5496
      %v5498 = vpop.f32.mrb[0].mxu0
      %v5499 = vadd.f32 0.0, %v5498
      %v5500 = vpop.f32.mrb[0].mxu0
      %v5501 = vadd.f32 0.0, %v5500
      %v5502 = vpop.f32.mrb[0].mxu0
      %v5503 = vadd.f32 0.0, %v5502
      %5504 = vmatprep.mubr.bf16.mxu0 %v5281
      %5505 = vmatmul.mubr.bf16.gmra.mrb[0].mxu0 %v5280
      %v5506 = vpop.f32.mrb[0].mxu0
      %v5507 = vadd.f32 0.0, %v5506
      %v5508 = vpop.f32.mrb[0].mxu0
      %v5509 = vadd.f32 0.0, %v5508
      %v5510 = vpop.f32.mrb[0].mxu0
      %v5511 = vadd.f32 0.0, %v5510
      %v5512 = vpop.f32.mrb[0].mxu0
      %v5513 = vadd.f32 0.0, %v5512
      %5514 = vmatprep.mubr.bf16.mxu0 %v5283
      %5515 = vmatmul.mubr.bf16.gmra.mrb[0].mxu0 %v5282
      %v5516 = vpop.f32.mrb[0].mxu0
      %v5517 = vadd.f32 0.0, %v5516
      %v5518 = vpop.f32.mrb[0].mxu0
      %v5519 = vadd.f32 0.0, %v5518
      %v5520 = vpop.f32.mrb[0].mxu0
      %v5521 = vadd.f32 0.0, %v5520
      %v5522 = vpop.f32.mrb[0].mxu0
      %v5523 = vadd.f32 0.0, %v5522
      %5524 = vdwg.mxu0
      %v5525 = vadd.f32 %v5195, %v5487
      %v5526 = vadd.f32 %v5196, %v5489
      %v5527 = vadd.f32 %v5197, %v5491
      %v5528 = vadd.f32 %v5198, %v5493
      %v5529 = vadd.f32 %v5199, %v5497
      %v5530 = vadd.f32 %v5200, %v5499
      %v5531 = vadd.f32 %v5201, %v5501
      %v5532 = vadd.f32 %v5202, %v5503
      %v5533 = vadd.f32 %v5203, %v5507
      %v5534 = vadd.f32 %v5204, %v5509
      %v5535 = vadd.f32 %v5205, %v5511
      %v5536 = vadd.f32 %v5206, %v5513
      %v5537 = vadd.f32 %v5207, %v5517
      %v5538 = vadd.f32 %v5208, %v5519
      %v5539 = vadd.f32 %v5209, %v5521
      %v5540 = vadd.f32 %v5210, %v5523
      %v5541 = vld [vmem:[%s575] sm:$0xff]
      %v5542 = vld [vmem:[%s575 + $0x8] sm:$0xff]
      %v5543 = vld [vmem:[%s575 + $0x10] sm:$0xff]
      %v5544 = vld [vmem:[%s575 + $0x18] sm:$0xff]
      %v5545 = vld [vmem:[%s575 + $0x20] sm:$0xff]
      %v5546 = vld [vmem:[%s575 + $0x28] sm:$0xff]
      %v5547 = vld [vmem:[%s575 + $0x30] sm:$0xff]
      %v5548 = vld [vmem:[%s575 + $0x38] sm:$0xff]
      %s5549 = scalar_lea.vmem %s4, 1280
      %v5550 = vld [vmem:[%s5549] sm:$0xff]
      %v5551 = vld [vmem:[%s5549 + $0x8] sm:$0xff]
      %v5552 = vld [vmem:[%s5549 + $0x10] sm:$0xff]
      %v5553 = vld [vmem:[%s5549 + $0x18] sm:$0xff]
      %v5554 = vld [vmem:[%s5549 + $0x20] sm:$0xff]
      %v5555 = vld [vmem:[%s5549 + $0x28] sm:$0xff]
      %v5556 = vld [vmem:[%s5549 + $0x30] sm:$0xff]
      %v5557 = vld [vmem:[%s5549 + $0x38] sm:$0xff]
      %v5558 = vld [vmem:[%s5549 + $0x40] sm:$0xff]
      %v5559 = vld [vmem:[%s5549 + $0x48] sm:$0xff]
      %v5560 = vld [vmem:[%s5549 + $0x50] sm:$0xff]
      %v5561 = vld [vmem:[%s5549 + $0x58] sm:$0xff]
      %v5562 = vld [vmem:[%s5549 + $0x60] sm:$0xff]
      %v5563 = vld [vmem:[%s5549 + $0x68] sm:$0xff]
      %v5564 = vld [vmem:[%s5549 + $0x70] sm:$0xff]
      %v5565 = vld [vmem:[%s5549 + $0x78] sm:$0xff]
      %v5566 = vld [vmem:[%s5549 + $0x80] sm:$0xff]
      %v5567 = vld [vmem:[%s5549 + $0x88] sm:$0xff]
      %v5568 = vld [vmem:[%s5549 + $0x90] sm:$0xff]
      %v5569 = vld [vmem:[%s5549 + $0x98] sm:$0xff]
      %v5570 = vld [vmem:[%s5549 + $0xa0] sm:$0xff]
      %v5571 = vld [vmem:[%s5549 + $0xa8] sm:$0xff]
      %v5572 = vld [vmem:[%s5549 + $0xb0] sm:$0xff]
      %v5573 = vld [vmem:[%s5549 + $0xb8] sm:$0xff]
      %v5574 = vld [vmem:[%s5549 + $0xc0] sm:$0xff]
      %v5575 = vld [vmem:[%s5549 + $0xc8] sm:$0xff]
      %v5576 = vld [vmem:[%s5549 + $0xd0] sm:$0xff]
      %v5577 = vld [vmem:[%s5549 + $0xd8] sm:$0xff]
      %v5578 = vld [vmem:[%s5549 + $0xe0] sm:$0xff]
      %v5579 = vld [vmem:[%s5549 + $0xe8] sm:$0xff]
      %v5580 = vld [vmem:[%s5549 + $0xf0] sm:$0xff]
      %v5581 = vld [vmem:[%s5549 + $0xf8] sm:$0xff]
      %v5590 = vunpack.c.l.b16 %v5541
      %v5591 = vunpack.c.h.b16 %v5541
      %v5592 = vunpack.c.l.b16 %v5542
      %v5593 = vunpack.c.h.b16 %v5542
      %v5594 = vunpack.c.l.b16 %v5543
      %v5595 = vunpack.c.h.b16 %v5543
      %v5596 = vunpack.c.l.b16 %v5544
      %v5597 = vunpack.c.h.b16 %v5544
      %v5598 = vunpack.c.l.b16 %v5545
      %v5599 = vunpack.c.h.b16 %v5545
      %v5600 = vunpack.c.l.b16 %v5546
      %v5601 = vunpack.c.h.b16 %v5546
      %v5602 = vunpack.c.l.b16 %v5547
      %v5603 = vunpack.c.h.b16 %v5547
      %v5604 = vunpack.c.l.b16 %v5548
      %v5605 = vunpack.c.h.b16 %v5548
      %v5606 = vpack.c.b16 %v5592, %v5590
      %v5607 = vpack.c.b16 %v5593, %v5591
      %v5608 = vpack.c.b16 %v5596, %v5594
      %v5609 = vpack.c.b16 %v5597, %v5595
      %v5610 = vpack.c.b16 %v5600, %v5598
      %v5611 = vpack.c.b16 %v5601, %v5599
      %v5612 = vpack.c.b16 %v5604, %v5602
      %v5613 = vpack.c.b16 %v5605, %v5603
      %v5654 = vunpack.c.l.b16 %v5550
      %v5655 = vunpack.c.h.b16 %v5550
      %v5656 = vunpack.c.l.b16 %v5551
      %v5657 = vunpack.c.h.b16 %v5551
      %v5658 = vunpack.c.l.b16 %v5552
      %v5659 = vunpack.c.h.b16 %v5552
      %v5660 = vunpack.c.l.b16 %v5553
      %v5661 = vunpack.c.h.b16 %v5553
      %v5662 = vunpack.c.l.b16 %v5554
      %v5663 = vunpack.c.h.b16 %v5554
      %v5664 = vunpack.c.l.b16 %v5555
      %v5665 = vunpack.c.h.b16 %v5555
      %v5666 = vunpack.c.l.b16 %v5556
      %v5667 = vunpack.c.h.b16 %v5556
      %v5668 = vunpack.c.l.b16 %v5557
      %v5669 = vunpack.c.h.b16 %v5557
      %v5670 = vunpack.c.l.b16 %v5558
      %v5671 = vunpack.c.h.b16 %v5558
      %v5672 = vunpack.c.l.b16 %v5559
      %v5673 = vunpack.c.h.b16 %v5559
      %v5674 = vunpack.c.l.b16 %v5560
      %v5675 = vunpack.c.h.b16 %v5560
      %v5676 = vunpack.c.l.b16 %v5561
      %v5677 = vunpack.c.h.b16 %v5561
      %v5678 = vunpack.c.l.b16 %v5562
      %v5679 = vunpack.c.h.b16 %v5562
      %v5680 = vunpack.c.l.b16 %v5563
      %v5681 = vunpack.c.h.b16 %v5563
      %v5682 = vunpack.c.l.b16 %v5564
      %v5683 = vunpack.c.h.b16 %v5564
      %v5684 = vunpack.c.l.b16 %v5565
      %v5685 = vunpack.c.h.b16 %v5565
      %v5686 = vunpack.c.l.b16 %v5566
      %v5687 = vunpack.c.h.b16 %v5566
      %v5688 = vunpack.c.l.b16 %v5567
      %v5689 = vunpack.c.h.b16 %v5567
      %v5690 = vunpack.c.l.b16 %v5568
      %v5691 = vunpack.c.h.b16 %v5568
      %v5692 = vunpack.c.l.b16 %v5569
      %v5693 = vunpack.c.h.b16 %v5569
      %v5694 = vunpack.c.l.b16 %v5570
      %v5695 = vunpack.c.h.b16 %v5570
      %v5696 = vunpack.c.l.b16 %v5571
      %v5697 = vunpack.c.h.b16 %v5571
      %v5698 = vunpack.c.l.b16 %v5572
      %v5699 = vunpack.c.h.b16 %v5572
      %v5700 = vunpack.c.l.b16 %v5573
      %v5701 = vunpack.c.h.b16 %v5573
      %v5702 = vunpack.c.l.b16 %v5574
      %v5703 = vunpack.c.h.b16 %v5574
      %v5704 = vunpack.c.l.b16 %v5575
      %v5705 = vunpack.c.h.b16 %v5575
      %v5706 = vunpack.c.l.b16 %v5576
      %v5707 = vunpack.c.h.b16 %v5576
      %v5708 = vunpack.c.l.b16 %v5577
      %v5709 = vunpack.c.h.b16 %v5577
      %v5710 = vunpack.c.l.b16 %v5578
      %v5711 = vunpack.c.h.b16 %v5578
      %v5712 = vunpack.c.l.b16 %v5579
      %v5713 = vunpack.c.h.b16 %v5579
      %v5714 = vunpack.c.l.b16 %v5580
      %v5715 = vunpack.c.h.b16 %v5580
      %v5716 = vunpack.c.l.b16 %v5581
      %v5717 = vunpack.c.h.b16 %v5581
      %v5718 = vpack.c.b16 %v5656, %v5654
      %v5719 = vpack.c.b16 %v5657, %v5655
      %v5720 = vpack.c.b16 %v5660, %v5658
      %v5721 = vpack.c.b16 %v5661, %v5659
      %v5722 = vpack.c.b16 %v5664, %v5662
      %v5723 = vpack.c.b16 %v5665, %v5663
      %v5724 = vpack.c.b16 %v5668, %v5666
      %v5725 = vpack.c.b16 %v5669, %v5667
      %v5726 = vpack.c.b16 %v5672, %v5670
      %v5727 = vpack.c.b16 %v5673, %v5671
      %v5728 = vpack.c.b16 %v5676, %v5674
      %v5729 = vpack.c.b16 %v5677, %v5675
      %v5730 = vpack.c.b16 %v5680, %v5678
      %v5731 = vpack.c.b16 %v5681, %v5679
      %v5732 = vpack.c.b16 %v5684, %v5682
      %v5733 = vpack.c.b16 %v5685, %v5683
      %v5734 = vpack.c.b16 %v5688, %v5686
      %v5735 = vpack.c.b16 %v5689, %v5687
      %v5736 = vpack.c.b16 %v5692, %v5690
      %v5737 = vpack.c.b16 %v5693, %v5691
      %v5738 = vpack.c.b16 %v5696, %v5694
      %v5739 = vpack.c.b16 %v5697, %v5695
      %v5740 = vpack.c.b16 %v5700, %v5698
      %v5741 = vpack.c.b16 %v5701, %v5699
      %v5742 = vpack.c.b16 %v5704, %v5702
      %v5743 = vpack.c.b16 %v5705, %v5703
      %v5744 = vpack.c.b16 %v5708, %v5706
      %v5745 = vpack.c.b16 %v5709, %v5707
      %v5746 = vpack.c.b16 %v5712, %v5710
      %v5747 = vpack.c.b16 %v5713, %v5711
      %v5748 = vpack.c.b16 %v5716, %v5714
      %v5749 = vpack.c.b16 %v5717, %v5715
      %5782 = vmatprep.subr.bf16.mxu0 %v5719
      %5783 = vmatpush1.bf16.msra.mxu0 %v5718
      %5784 = vmatprep.subr.bf16.mxu0 %v5721
      %5785 = vmatpush1.bf16.msra.mxu0 %v5720
      %5786 = vmatprep.subr.bf16.mxu0 %v5723
      %5787 = vmatpush1.bf16.msra.mxu0 %v5722
      %5788 = vmatprep.subr.bf16.mxu0 %v5725
      %5789 = vmatpush1.bf16.msra.mxu0 %v5724
      %5790 = vmatprep.subr.bf16.mxu0 %v5727
      %5791 = vmatpush1.bf16.msra.mxu0 %v5726
      %5792 = vmatprep.subr.bf16.mxu0 %v5729
      %5793 = vmatpush1.bf16.msra.mxu0 %v5728
      %5794 = vmatprep.subr.bf16.mxu0 %v5731
      %5795 = vmatpush1.bf16.msra.mxu0 %v5730
      %5796 = vmatprep.subr.bf16.mxu0 %v5733
      %5797 = vmatpush1.bf16.msra.mxu0 %v5732
      %5798 = vmatprep.subr.bf16.mxu0 %v5735
      %5799 = vmatpush1.bf16.msra.mxu0 %v5734
      %5800 = vmatprep.subr.bf16.mxu0 %v5737
      %5801 = vmatpush1.bf16.msra.mxu0 %v5736
      %5802 = vmatprep.subr.bf16.mxu0 %v5739
      %5803 = vmatpush1.bf16.msra.mxu0 %v5738
      %5804 = vmatprep.subr.bf16.mxu0 %v5741
      %5805 = vmatpush1.bf16.msra.mxu0 %v5740
      %5806 = vmatprep.subr.bf16.mxu0 %v5743
      %5807 = vmatpush1.bf16.msra.mxu0 %v5742
      %5808 = vmatprep.subr.bf16.mxu0 %v5745
      %5809 = vmatpush1.bf16.msra.mxu0 %v5744
      %5810 = vmatprep.subr.bf16.mxu0 %v5747
      %5811 = vmatpush1.bf16.msra.mxu0 %v5746
      %5812 = vmatprep.subr.bf16.mxu0 %v5749
      %5813 = vmatpush1.bf16.msra.mxu0 %v5748
      %5814 = vmatprep.mubr.bf16.mxu0 %v5607
      %5815 = vmatmul.mubr.bf16.gmra.mrb[0].mxu0 %v5606
      %v5816 = vpop.f32.mrb[0].mxu0
      %v5817 = vadd.f32 0.0, %v5816
      %v5818 = vpop.f32.mrb[0].mxu0
      %v5819 = vadd.f32 0.0, %v5818
      %v5820 = vpop.f32.mrb[0].mxu0
      %v5821 = vadd.f32 0.0, %v5820
      %v5822 = vpop.f32.mrb[0].mxu0
      %v5823 = vadd.f32 0.0, %v5822
      %5824 = vmatprep.mubr.bf16.mxu0 %v5609
      %5825 = vmatmul.mubr.bf16.gmra.mrb[0].mxu0 %v5608
      %v5826 = vpop.f32.mrb[0].mxu0
      %v5827 = vadd.f32 0.0, %v5826
      %v5828 = vpop.f32.mrb[0].mxu0
      %v5829 = vadd.f32 0.0, %v5828
      %v5830 = vpop.f32.mrb[0].mxu0
      %v5831 = vadd.f32 0.0, %v5830
      %v5832 = vpop.f32.mrb[0].mxu0
      %v5833 = vadd.f32 0.0, %v5832
      %5834 = vmatprep.mubr.bf16.mxu0 %v5611
      %5835 = vmatmul.mubr.bf16.gmra.mrb[0].mxu0 %v5610
      %v5836 = vpop.f32.mrb[0].mxu0
      %v5837 = vadd.f32 0.0, %v5836
      %v5838 = vpop.f32.mrb[0].mxu0
      %v5839 = vadd.f32 0.0, %v5838
      %v5840 = vpop.f32.mrb[0].mxu0
      %v5841 = vadd.f32 0.0, %v5840
      %v5842 = vpop.f32.mrb[0].mxu0
      %v5843 = vadd.f32 0.0, %v5842
      %5844 = vmatprep.mubr.bf16.mxu0 %v5613
      %5845 = vmatmul.mubr.bf16.gmra.mrb[0].mxu0 %v5612
      %v5846 = vpop.f32.mrb[0].mxu0
      %v5847 = vadd.f32 0.0, %v5846
      %v5848 = vpop.f32.mrb[0].mxu0
      %v5849 = vadd.f32 0.0, %v5848
      %v5850 = vpop.f32.mrb[0].mxu0
      %v5851 = vadd.f32 0.0, %v5850
      %v5852 = vpop.f32.mrb[0].mxu0
      %v5853 = vadd.f32 0.0, %v5852
      %5854 = vdwg.mxu0
      %v5855 = vadd.f32 %v5525, %v5817
      %v5856 = vadd.f32 %v5526, %v5819
      %v5857 = vadd.f32 %v5527, %v5821
      %v5858 = vadd.f32 %v5528, %v5823
      %v5859 = vadd.f32 %v5529, %v5827
      %v5860 = vadd.f32 %v5530, %v5829
      %v5861 = vadd.f32 %v5531, %v5831
      %v5862 = vadd.f32 %v5532, %v5833
      %v5863 = vadd.f32 %v5533, %v5837
      %v5864 = vadd.f32 %v5534, %v5839
      %v5865 = vadd.f32 %v5535, %v5841
      %v5866 = vadd.f32 %v5536, %v5843
      %v5867 = vadd.f32 %v5537, %v5847
      %v5868 = vadd.f32 %v5538, %v5849
      %v5869 = vadd.f32 %v5539, %v5851
      %v5870 = vadd.f32 %v5540, %v5853
      %v5871 = vld [vmem:[%s2531] sm:$0xff]
      %v5872 = vld [vmem:[%s2531 + $0x8] sm:$0xff]
      %v5873 = vld [vmem:[%s2531 + $0x10] sm:$0xff]
      %v5874 = vld [vmem:[%s2531 + $0x18] sm:$0xff]
      %v5875 = vld [vmem:[%s2531 + $0x20] sm:$0xff]
      %v5876 = vld [vmem:[%s2531 + $0x28] sm:$0xff]
      %v5877 = vld [vmem:[%s2531 + $0x30] sm:$0xff]
      %v5878 = vld [vmem:[%s2531 + $0x38] sm:$0xff]
      %s5879 = scalar_lea.vmem %s4, 1536
      %v5880 = vld [vmem:[%s5879] sm:$0xff]
      %v5881 = vld [vmem:[%s5879 + $0x8] sm:$0xff]
      %v5882 = vld [vmem:[%s5879 + $0x10] sm:$0xff]
      %v5883 = vld [vmem:[%s5879 + $0x18] sm:$0xff]
      %v5884 = vld [vmem:[%s5879 + $0x20] sm:$0xff]
      %v5885 = vld [vmem:[%s5879 + $0x28] sm:$0xff]
      %v5886 = vld [vmem:[%s5879 + $0x30] sm:$0xff]
      %v5887 = vld [vmem:[%s5879 + $0x38] sm:$0xff]
      %v5888 = vld [vmem:[%s5879 + $0x40] sm:$0xff]
      %v5889 = vld [vmem:[%s5879 + $0x48] sm:$0xff]
      %v5890 = vld [vmem:[%s5879 + $0x50] sm:$0xff]
      %v5891 = vld [vmem:[%s5879 + $0x58] sm:$0xff]
      %v5892 = vld [vmem:[%s5879 + $0x60] sm:$0xff]
      %v5893 = vld [vmem:[%s5879 + $0x68] sm:$0xff]
      %v5894 = vld [vmem:[%s5879 + $0x70] sm:$0xff]
      %v5895 = vld [vmem:[%s5879 + $0x78] sm:$0xff]
      %v5896 = vld [vmem:[%s5879 + $0x80] sm:$0xff]
      %v5897 = vld [vmem:[%s5879 + $0x88] sm:$0xff]
      %v5898 = vld [vmem:[%s5879 + $0x90] sm:$0xff]
      %v5899 = vld [vmem:[%s5879 + $0x98] sm:$0xff]
      %v5900 = vld [vmem:[%s5879 + $0xa0] sm:$0xff]
      %v5901 = vld [vmem:[%s5879 + $0xa8] sm:$0xff]
      %v5902 = vld [vmem:[%s5879 + $0xb0] sm:$0xff]
      %v5903 = vld [vmem:[%s5879 + $0xb8] sm:$0xff]
      %v5904 = vld [vmem:[%s5879 + $0xc0] sm:$0xff]
      %v5905 = vld [vmem:[%s5879 + $0xc8] sm:$0xff]
      %v5906 = vld [vmem:[%s5879 + $0xd0] sm:$0xff]
      %v5907 = vld [vmem:[%s5879 + $0xd8] sm:$0xff]
      %v5908 = vld [vmem:[%s5879 + $0xe0] sm:$0xff]
      %v5909 = vld [vmem:[%s5879 + $0xe8] sm:$0xff]
      %v5910 = vld [vmem:[%s5879 + $0xf0] sm:$0xff]
      %v5911 = vld [vmem:[%s5879 + $0xf8] sm:$0xff]
      %v5920 = vunpack.c.l.b16 %v5871
      %v5921 = vunpack.c.h.b16 %v5871
      %v5922 = vunpack.c.l.b16 %v5872
      %v5923 = vunpack.c.h.b16 %v5872
      %v5924 = vunpack.c.l.b16 %v5873
      %v5925 = vunpack.c.h.b16 %v5873
      %v5926 = vunpack.c.l.b16 %v5874
      %v5927 = vunpack.c.h.b16 %v5874
      %v5928 = vunpack.c.l.b16 %v5875
      %v5929 = vunpack.c.h.b16 %v5875
      %v5930 = vunpack.c.l.b16 %v5876
      %v5931 = vunpack.c.h.b16 %v5876
      %v5932 = vunpack.c.l.b16 %v5877
      %v5933 = vunpack.c.h.b16 %v5877
      %v5934 = vunpack.c.l.b16 %v5878
      %v5935 = vunpack.c.h.b16 %v5878
      %v5936 = vpack.c.b16 %v5922, %v5920
      %v5937 = vpack.c.b16 %v5923, %v5921
      %v5938 = vpack.c.b16 %v5926, %v5924
      %v5939 = vpack.c.b16 %v5927, %v5925
      %v5940 = vpack.c.b16 %v5930, %v5928
      %v5941 = vpack.c.b16 %v5931, %v5929
      %v5942 = vpack.c.b16 %v5934, %v5932
      %v5943 = vpack.c.b16 %v5935, %v5933
      %v5984 = vunpack.c.l.b16 %v5880
      %v5985 = vunpack.c.h.b16 %v5880
      %v5986 = vunpack.c.l.b16 %v5881
      %v5987 = vunpack.c.h.b16 %v5881
      %v5988 = vunpack.c.l.b16 %v5882
      %v5989 = vunpack.c.h.b16 %v5882
      %v5990 = vunpack.c.l.b16 %v5883
      %v5991 = vunpack.c.h.b16 %v5883
      %v5992 = vunpack.c.l.b16 %v5884
      %v5993 = vunpack.c.h.b16 %v5884
      %v5994 = vunpack.c.l.b16 %v5885
      %v5995 = vunpack.c.h.b16 %v5885
      %v5996 = vunpack.c.l.b16 %v5886
      %v5997 = vunpack.c.h.b16 %v5886
      %v5998 = vunpack.c.l.b16 %v5887
      %v5999 = vunpack.c.h.b16 %v5887
      %v6000 = vunpack.c.l.b16 %v5888
      %v6001 = vunpack.c.h.b16 %v5888
      %v6002 = vunpack.c.l.b16 %v5889
      %v6003 = vunpack.c.h.b16 %v5889
      %v6004 = vunpack.c.l.b16 %v5890
      %v6005 = vunpack.c.h.b16 %v5890
      %v6006 = vunpack.c.l.b16 %v5891
      %v6007 = vunpack.c.h.b16 %v5891
      %v6008 = vunpack.c.l.b16 %v5892
      %v6009 = vunpack.c.h.b16 %v5892
      %v6010 = vunpack.c.l.b16 %v5893
      %v6011 = vunpack.c.h.b16 %v5893
      %v6012 = vunpack.c.l.b16 %v5894
      %v6013 = vunpack.c.h.b16 %v5894
      %v6014 = vunpack.c.l.b16 %v5895
      %v6015 = vunpack.c.h.b16 %v5895
      %v6016 = vunpack.c.l.b16 %v5896
      %v6017 = vunpack.c.h.b16 %v5896
      %v6018 = vunpack.c.l.b16 %v5897
      %v6019 = vunpack.c.h.b16 %v5897
      %v6020 = vunpack.c.l.b16 %v5898
      %v6021 = vunpack.c.h.b16 %v5898
      %v6022 = vunpack.c.l.b16 %v5899
      %v6023 = vunpack.c.h.b16 %v5899
      %v6024 = vunpack.c.l.b16 %v5900
      %v6025 = vunpack.c.h.b16 %v5900
      %v6026 = vunpack.c.l.b16 %v5901
      %v6027 = vunpack.c.h.b16 %v5901
      %v6028 = vunpack.c.l.b16 %v5902
      %v6029 = vunpack.c.h.b16 %v5902
      %v6030 = vunpack.c.l.b16 %v5903
      %v6031 = vunpack.c.h.b16 %v5903
      %v6032 = vunpack.c.l.b16 %v5904
      %v6033 = vunpack.c.h.b16 %v5904
      %v6034 = vunpack.c.l.b16 %v5905
      %v6035 = vunpack.c.h.b16 %v5905
      %v6036 = vunpack.c.l.b16 %v5906
      %v6037 = vunpack.c.h.b16 %v5906
      %v6038 = vunpack.c.l.b16 %v5907
      %v6039 = vunpack.c.h.b16 %v5907
      %v6040 = vunpack.c.l.b16 %v5908
      %v6041 = vunpack.c.h.b16 %v5908
      %v6042 = vunpack.c.l.b16 %v5909
      %v6043 = vunpack.c.h.b16 %v5909
      %v6044 = vunpack.c.l.b16 %v5910
      %v6045 = vunpack.c.h.b16 %v5910
      %v6046 = vunpack.c.l.b16 %v5911
      %v6047 = vunpack.c.h.b16 %v5911
      %v6048 = vpack.c.b16 %v5986, %v5984
      %v6049 = vpack.c.b16 %v5987, %v5985
      %v6050 = vpack.c.b16 %v5990, %v5988
      %v6051 = vpack.c.b16 %v5991, %v5989
      %v6052 = vpack.c.b16 %v5994, %v5992
      %v6053 = vpack.c.b16 %v5995, %v5993
      %v6054 = vpack.c.b16 %v5998, %v5996
      %v6055 = vpack.c.b16 %v5999, %v5997
      %v6056 = vpack.c.b16 %v6002, %v6000
      %v6057 = vpack.c.b16 %v6003, %v6001
      %v6058 = vpack.c.b16 %v6006, %v6004
      %v6059 = vpack.c.b16 %v6007, %v6005
      %v6060 = vpack.c.b16 %v6010, %v6008
      %v6061 = vpack.c.b16 %v6011, %v6009
      %v6062 = vpack.c.b16 %v6014, %v6012
      %v6063 = vpack.c.b16 %v6015, %v6013
      %v6064 = vpack.c.b16 %v6018, %v6016
      %v6065 = vpack.c.b16 %v6019, %v6017
      %v6066 = vpack.c.b16 %v6022, %v6020
      %v6067 = vpack.c.b16 %v6023, %v6021
      %v6068 = vpack.c.b16 %v6026, %v6024
      %v6069 = vpack.c.b16 %v6027, %v6025
      %v6070 = vpack.c.b16 %v6030, %v6028
      %v6071 = vpack.c.b16 %v6031, %v6029
      %v6072 = vpack.c.b16 %v6034, %v6032
      %v6073 = vpack.c.b16 %v6035, %v6033
      %v6074 = vpack.c.b16 %v6038, %v6036
      %v6075 = vpack.c.b16 %v6039, %v6037
      %v6076 = vpack.c.b16 %v6042, %v6040
      %v6077 = vpack.c.b16 %v6043, %v6041
      %v6078 = vpack.c.b16 %v6046, %v6044
      %v6079 = vpack.c.b16 %v6047, %v6045
      %6112 = vmatprep.subr.bf16.mxu0 %v6049
      %6113 = vmatpush1.bf16.msra.mxu0 %v6048
      %6114 = vmatprep.subr.bf16.mxu0 %v6051
      %6115 = vmatpush1.bf16.msra.mxu0 %v6050
      %6116 = vmatprep.subr.bf16.mxu0 %v6053
      %6117 = vmatpush1.bf16.msra.mxu0 %v6052
      %6118 = vmatprep.subr.bf16.mxu0 %v6055
      %6119 = vmatpush1.bf16.msra.mxu0 %v6054
      %6120 = vmatprep.subr.bf16.mxu0 %v6057
      %6121 = vmatpush1.bf16.msra.mxu0 %v6056
      %6122 = vmatprep.subr.bf16.mxu0 %v6059
      %6123 = vmatpush1.bf16.msra.mxu0 %v6058
      %6124 = vmatprep.subr.bf16.mxu0 %v6061
      %6125 = vmatpush1.bf16.msra.mxu0 %v6060
      %6126 = vmatprep.subr.bf16.mxu0 %v6063
      %6127 = vmatpush1.bf16.msra.mxu0 %v6062
      %6128 = vmatprep.subr.bf16.mxu0 %v6065
      %6129 = vmatpush1.bf16.msra.mxu0 %v6064
      %6130 = vmatprep.subr.bf16.mxu0 %v6067
      %6131 = vmatpush1.bf16.msra.mxu0 %v6066
      %6132 = vmatprep.subr.bf16.mxu0 %v6069
      %6133 = vmatpush1.bf16.msra.mxu0 %v6068
      %6134 = vmatprep.subr.bf16.mxu0 %v6071
      %6135 = vmatpush1.bf16.msra.mxu0 %v6070
      %6136 = vmatprep.subr.bf16.mxu0 %v6073
      %6137 = vmatpush1.bf16.msra.mxu0 %v6072
      %6138 = vmatprep.subr.bf16.mxu0 %v6075
      %6139 = vmatpush1.bf16.msra.mxu0 %v6074
      %6140 = vmatprep.subr.bf16.mxu0 %v6077
      %6141 = vmatpush1.bf16.msra.mxu0 %v6076
      %6142 = vmatprep.subr.bf16.mxu0 %v6079
      %6143 = vmatpush1.bf16.msra.mxu0 %v6078
      %6144 = vmatprep.mubr.bf16.mxu0 %v5937
      %6145 = vmatmul.mubr.bf16.gmra.mrb[0].mxu0 %v5936
      %v6146 = vpop.f32.mrb[0].mxu0
      %v6147 = vadd.f32 0.0, %v6146
      %v6148 = vpop.f32.mrb[0].mxu0
      %v6149 = vadd.f32 0.0, %v6148
      %v6150 = vpop.f32.mrb[0].mxu0
      %v6151 = vadd.f32 0.0, %v6150
      %v6152 = vpop.f32.mrb[0].mxu0
      %v6153 = vadd.f32 0.0, %v6152
      %6154 = vmatprep.mubr.bf16.mxu0 %v5939
      %6155 = vmatmul.mubr.bf16.gmra.mrb[0].mxu0 %v5938
      %v6156 = vpop.f32.mrb[0].mxu0
      %v6157 = vadd.f32 0.0, %v6156
      %v6158 = vpop.f32.mrb[0].mxu0
      %v6159 = vadd.f32 0.0, %v6158
      %v6160 = vpop.f32.mrb[0].mxu0
      %v6161 = vadd.f32 0.0, %v6160
      %v6162 = vpop.f32.mrb[0].mxu0
      %v6163 = vadd.f32 0.0, %v6162
      %6164 = vmatprep.mubr.bf16.mxu0 %v5941
      %6165 = vmatmul.mubr.bf16.gmra.mrb[0].mxu0 %v5940
      %v6166 = vpop.f32.mrb[0].mxu0
      %v6167 = vadd.f32 0.0, %v6166
      %v6168 = vpop.f32.mrb[0].mxu0
      %v6169 = vadd.f32 0.0, %v6168
      %v6170 = vpop.f32.mrb[0].mxu0
      %v6171 = vadd.f32 0.0, %v6170
      %v6172 = vpop.f32.mrb[0].mxu0
      %v6173 = vadd.f32 0.0, %v6172
      %6174 = vmatprep.mubr.bf16.mxu0 %v5943
      %6175 = vmatmul.mubr.bf16.gmra.mrb[0].mxu0 %v5942
      %v6176 = vpop.f32.mrb[0].mxu0
      %v6177 = vadd.f32 0.0, %v6176
      %v6178 = vpop.f32.mrb[0].mxu0
      %v6179 = vadd.f32 0.0, %v6178
      %v6180 = vpop.f32.mrb[0].mxu0
      %v6181 = vadd.f32 0.0, %v6180
      %v6182 = vpop.f32.mrb[0].mxu0
      %v6183 = vadd.f32 0.0, %v6182
      %6184 = vdwg.mxu0
      %v6185 = vadd.f32 %v5855, %v6147
      %v6186 = vadd.f32 %v5856, %v6149
      %v6187 = vadd.f32 %v5857, %v6151
      %v6188 = vadd.f32 %v5858, %v6153
      %v6189 = vadd.f32 %v5859, %v6157
      %v6190 = vadd.f32 %v5860, %v6159
      %v6191 = vadd.f32 %v5861, %v6161
      %v6192 = vadd.f32 %v5862, %v6163
      %v6193 = vadd.f32 %v5863, %v6167
      %v6194 = vadd.f32 %v5864, %v6169
      %v6195 = vadd.f32 %v5865, %v6171
      %v6196 = vadd.f32 %v5866, %v6173
      %v6197 = vadd.f32 %v5867, %v6177
      %v6198 = vadd.f32 %v5868, %v6179
      %v6199 = vadd.f32 %v5869, %v6181
      %v6200 = vadd.f32 %v5870, %v6183
      %v6201 = vld [vmem:[%s2862] sm:$0xff]
      %v6202 = vld [vmem:[%s2862 + $0x8] sm:$0xff]
      %v6203 = vld [vmem:[%s2862 + $0x10] sm:$0xff]
      %v6204 = vld [vmem:[%s2862 + $0x18] sm:$0xff]
      %v6205 = vld [vmem:[%s2862 + $0x20] sm:$0xff]
      %v6206 = vld [vmem:[%s2862 + $0x28] sm:$0xff]
      %v6207 = vld [vmem:[%s2862 + $0x30] sm:$0xff]
      %v6208 = vld [vmem:[%s2862 + $0x38] sm:$0xff]
      %s6209 = scalar_lea.vmem %s4, 1792
      %v6210 = vld [vmem:[%s6209] sm:$0xff]
      %v6211 = vld [vmem:[%s6209 + $0x8] sm:$0xff]
      %v6212 = vld [vmem:[%s6209 + $0x10] sm:$0xff]
      %v6213 = vld [vmem:[%s6209 + $0x18] sm:$0xff]
      %v6214 = vld [vmem:[%s6209 + $0x20] sm:$0xff]
      %v6215 = vld [vmem:[%s6209 + $0x28] sm:$0xff]
      %v6216 = vld [vmem:[%s6209 + $0x30] sm:$0xff]
      %v6217 = vld [vmem:[%s6209 + $0x38] sm:$0xff]
      %v6218 = vld [vmem:[%s6209 + $0x40] sm:$0xff]
      %v6219 = vld [vmem:[%s6209 + $0x48] sm:$0xff]
      %v6220 = vld [vmem:[%s6209 + $0x50] sm:$0xff]
      %v6221 = vld [vmem:[%s6209 + $0x58] sm:$0xff]
      %v6222 = vld [vmem:[%s6209 + $0x60] sm:$0xff]
      %v6223 = vld [vmem:[%s6209 + $0x68] sm:$0xff]
      %v6224 = vld [vmem:[%s6209 + $0x70] sm:$0xff]
      %v6225 = vld [vmem:[%s6209 + $0x78] sm:$0xff]
      %v6226 = vld [vmem:[%s6209 + $0x80] sm:$0xff]
      %v6227 = vld [vmem:[%s6209 + $0x88] sm:$0xff]
      %v6228 = vld [vmem:[%s6209 + $0x90] sm:$0xff]
      %v6229 = vld [vmem:[%s6209 + $0x98] sm:$0xff]
      %v6230 = vld [vmem:[%s6209 + $0xa0] sm:$0xff]
      %v6231 = vld [vmem:[%s6209 + $0xa8] sm:$0xff]
      %v6232 = vld [vmem:[%s6209 + $0xb0] sm:$0xff]
      %v6233 = vld [vmem:[%s6209 + $0xb8] sm:$0xff]
      %v6234 = vld [vmem:[%s6209 + $0xc0] sm:$0xff]
      %v6235 = vld [vmem:[%s6209 + $0xc8] sm:$0xff]
      %v6236 = vld [vmem:[%s6209 + $0xd0] sm:$0xff]
      %v6237 = vld [vmem:[%s6209 + $0xd8] sm:$0xff]
      %v6238 = vld [vmem:[%s6209 + $0xe0] sm:$0xff]
      %v6239 = vld [vmem:[%s6209 + $0xe8] sm:$0xff]
      %v6240 = vld [vmem:[%s6209 + $0xf0] sm:$0xff]
      %v6241 = vld [vmem:[%s6209 + $0xf8] sm:$0xff]
      %v6250 = vunpack.c.l.b16 %v6201
      %v6251 = vunpack.c.h.b16 %v6201
      %v6252 = vunpack.c.l.b16 %v6202
      %v6253 = vunpack.c.h.b16 %v6202
      %v6254 = vunpack.c.l.b16 %v6203
      %v6255 = vunpack.c.h.b16 %v6203
      %v6256 = vunpack.c.l.b16 %v6204
      %v6257 = vunpack.c.h.b16 %v6204
      %v6258 = vunpack.c.l.b16 %v6205
      %v6259 = vunpack.c.h.b16 %v6205
      %v6260 = vunpack.c.l.b16 %v6206
      %v6261 = vunpack.c.h.b16 %v6206
      %v6262 = vunpack.c.l.b16 %v6207
      %v6263 = vunpack.c.h.b16 %v6207
      %v6264 = vunpack.c.l.b16 %v6208
      %v6265 = vunpack.c.h.b16 %v6208
      %v6266 = vpack.c.b16 %v6252, %v6250
      %v6267 = vpack.c.b16 %v6253, %v6251
      %v6268 = vpack.c.b16 %v6256, %v6254
      %v6269 = vpack.c.b16 %v6257, %v6255
      %v6270 = vpack.c.b16 %v6260, %v6258
      %v6271 = vpack.c.b16 %v6261, %v6259
      %v6272 = vpack.c.b16 %v6264, %v6262
      %v6273 = vpack.c.b16 %v6265, %v6263
      %v6314 = vunpack.c.l.b16 %v6210
      %v6315 = vunpack.c.h.b16 %v6210
      %v6316 = vunpack.c.l.b16 %v6211
      %v6317 = vunpack.c.h.b16 %v6211
      %v6318 = vunpack.c.l.b16 %v6212
      %v6319 = vunpack.c.h.b16 %v6212
      %v6320 = vunpack.c.l.b16 %v6213
      %v6321 = vunpack.c.h.b16 %v6213
      %v6322 = vunpack.c.l.b16 %v6214
      %v6323 = vunpack.c.h.b16 %v6214
      %v6324 = vunpack.c.l.b16 %v6215
      %v6325 = vunpack.c.h.b16 %v6215
      %v6326 = vunpack.c.l.b16 %v6216
      %v6327 = vunpack.c.h.b16 %v6216
      %v6328 = vunpack.c.l.b16 %v6217
      %v6329 = vunpack.c.h.b16 %v6217
      %v6330 = vunpack.c.l.b16 %v6218
      %v6331 = vunpack.c.h.b16 %v6218
      %v6332 = vunpack.c.l.b16 %v6219
      %v6333 = vunpack.c.h.b16 %v6219
      %v6334 = vunpack.c.l.b16 %v6220
      %v6335 = vunpack.c.h.b16 %v6220
      %v6336 = vunpack.c.l.b16 %v6221
      %v6337 = vunpack.c.h.b16 %v6221
      %v6338 = vunpack.c.l.b16 %v6222
      %v6339 = vunpack.c.h.b16 %v6222
      %v6340 = vunpack.c.l.b16 %v6223
      %v6341 = vunpack.c.h.b16 %v6223
      %v6342 = vunpack.c.l.b16 %v6224
      %v6343 = vunpack.c.h.b16 %v6224
      %v6344 = vunpack.c.l.b16 %v6225
      %v6345 = vunpack.c.h.b16 %v6225
      %v6346 = vunpack.c.l.b16 %v6226
      %v6347 = vunpack.c.h.b16 %v6226
      %v6348 = vunpack.c.l.b16 %v6227
      %v6349 = vunpack.c.h.b16 %v6227
      %v6350 = vunpack.c.l.b16 %v6228
      %v6351 = vunpack.c.h.b16 %v6228
      %v6352 = vunpack.c.l.b16 %v6229
      %v6353 = vunpack.c.h.b16 %v6229
      %v6354 = vunpack.c.l.b16 %v6230
      %v6355 = vunpack.c.h.b16 %v6230
      %v6356 = vunpack.c.l.b16 %v6231
      %v6357 = vunpack.c.h.b16 %v6231
      %v6358 = vunpack.c.l.b16 %v6232
      %v6359 = vunpack.c.h.b16 %v6232
      %v6360 = vunpack.c.l.b16 %v6233
      %v6361 = vunpack.c.h.b16 %v6233
      %v6362 = vunpack.c.l.b16 %v6234
      %v6363 = vunpack.c.h.b16 %v6234
      %v6364 = vunpack.c.l.b16 %v6235
      %v6365 = vunpack.c.h.b16 %v6235
      %v6366 = vunpack.c.l.b16 %v6236
      %v6367 = vunpack.c.h.b16 %v6236
      %v6368 = vunpack.c.l.b16 %v6237
      %v6369 = vunpack.c.h.b16 %v6237
      %v6370 = vunpack.c.l.b16 %v6238
      %v6371 = vunpack.c.h.b16 %v6238
      %v6372 = vunpack.c.l.b16 %v6239
      %v6373 = vunpack.c.h.b16 %v6239
      %v6374 = vunpack.c.l.b16 %v6240
      %v6375 = vunpack.c.h.b16 %v6240
      %v6376 = vunpack.c.l.b16 %v6241
      %v6377 = vunpack.c.h.b16 %v6241
      %v6378 = vpack.c.b16 %v6316, %v6314
      %v6379 = vpack.c.b16 %v6317, %v6315
      %v6380 = vpack.c.b16 %v6320, %v6318
      %v6381 = vpack.c.b16 %v6321, %v6319
      %v6382 = vpack.c.b16 %v6324, %v6322
      %v6383 = vpack.c.b16 %v6325, %v6323
      %v6384 = vpack.c.b16 %v6328, %v6326
      %v6385 = vpack.c.b16 %v6329, %v6327
      %v6386 = vpack.c.b16 %v6332, %v6330
      %v6387 = vpack.c.b16 %v6333, %v6331
      %v6388 = vpack.c.b16 %v6336, %v6334
      %v6389 = vpack.c.b16 %v6337, %v6335
      %v6390 = vpack.c.b16 %v6340, %v6338
      %v6391 = vpack.c.b16 %v6341, %v6339
      %v6392 = vpack.c.b16 %v6344, %v6342
      %v6393 = vpack.c.b16 %v6345, %v6343
      %v6394 = vpack.c.b16 %v6348, %v6346
      %v6395 = vpack.c.b16 %v6349, %v6347
      %v6396 = vpack.c.b16 %v6352, %v6350
      %v6397 = vpack.c.b16 %v6353, %v6351
      %v6398 = vpack.c.b16 %v6356, %v6354
      %v6399 = vpack.c.b16 %v6357, %v6355
      %v6400 = vpack.c.b16 %v6360, %v6358
      %v6401 = vpack.c.b16 %v6361, %v6359
      %v6402 = vpack.c.b16 %v6364, %v6362
      %v6403 = vpack.c.b16 %v6365, %v6363
      %v6404 = vpack.c.b16 %v6368, %v6366
      %v6405 = vpack.c.b16 %v6369, %v6367
      %v6406 = vpack.c.b16 %v6372, %v6370
      %v6407 = vpack.c.b16 %v6373, %v6371
      %v6408 = vpack.c.b16 %v6376, %v6374
      %v6409 = vpack.c.b16 %v6377, %v6375
      %6442 = vmatprep.subr.bf16.mxu0 %v6379
      %6443 = vmatpush1.bf16.msra.mxu0 %v6378
      %6444 = vmatprep.subr.bf16.mxu0 %v6381
      %6445 = vmatpush1.bf16.msra.mxu0 %v6380
      %6446 = vmatprep.subr.bf16.mxu0 %v6383
      %6447 = vmatpush1.bf16.msra.mxu0 %v6382
      %6448 = vmatprep.subr.bf16.mxu0 %v6385
      %6449 = vmatpush1.bf16.msra.mxu0 %v6384
      %6450 = vmatprep.subr.bf16.mxu0 %v6387
      %6451 = vmatpush1.bf16.msra.mxu0 %v6386
      %6452 = vmatprep.subr.bf16.mxu0 %v6389
      %6453 = vmatpush1.bf16.msra.mxu0 %v6388
      %6454 = vmatprep.subr.bf16.mxu0 %v6391
      %6455 = vmatpush1.bf16.msra.mxu0 %v6390
      %6456 = vmatprep.subr.bf16.mxu0 %v6393
      %6457 = vmatpush1.bf16.msra.mxu0 %v6392
      %6458 = vmatprep.subr.bf16.mxu0 %v6395
      %6459 = vmatpush1.bf16.msra.mxu0 %v6394
      %6460 = vmatprep.subr.bf16.mxu0 %v6397
      %6461 = vmatpush1.bf16.msra.mxu0 %v6396
      %6462 = vmatprep.subr.bf16.mxu0 %v6399
      %6463 = vmatpush1.bf16.msra.mxu0 %v6398
      %6464 = vmatprep.subr.bf16.mxu0 %v6401
      %6465 = vmatpush1.bf16.msra.mxu0 %v6400
      %6466 = vmatprep.subr.bf16.mxu0 %v6403
      %6467 = vmatpush1.bf16.msra.mxu0 %v6402
      %6468 = vmatprep.subr.bf16.mxu0 %v6405
      %6469 = vmatpush1.bf16.msra.mxu0 %v6404
      %6470 = vmatprep.subr.bf16.mxu0 %v6407
      %6471 = vmatpush1.bf16.msra.mxu0 %v6406
      %6472 = vmatprep.subr.bf16.mxu0 %v6409
      %6473 = vmatpush1.bf16.msra.mxu0 %v6408
      %6474 = vmatprep.mubr.bf16.mxu0 %v6267
      %6475 = vmatmul.mubr.bf16.gmra.mrb[0].mxu0 %v6266
      %v6476 = vpop.f32.mrb[0].mxu0
      %v6477 = vadd.f32 0.0, %v6476
      %v6478 = vpop.f32.mrb[0].mxu0
      %v6479 = vadd.f32 0.0, %v6478
      %v6480 = vpop.f32.mrb[0].mxu0
      %v6481 = vadd.f32 0.0, %v6480
      %v6482 = vpop.f32.mrb[0].mxu0
      %v6483 = vadd.f32 0.0, %v6482
      %6484 = vmatprep.mubr.bf16.mxu0 %v6269
      %6485 = vmatmul.mubr.bf16.gmra.mrb[0].mxu0 %v6268
      %v6486 = vpop.f32.mrb[0].mxu0
      %v6487 = vadd.f32 0.0, %v6486
      %v6488 = vpop.f32.mrb[0].mxu0
      %v6489 = vadd.f32 0.0, %v6488
      %v6490 = vpop.f32.mrb[0].mxu0
      %v6491 = vadd.f32 0.0, %v6490
      %v6492 = vpop.f32.mrb[0].mxu0
      %v6493 = vadd.f32 0.0, %v6492
      %6494 = vmatprep.mubr.bf16.mxu0 %v6271
      %6495 = vmatmul.mubr.bf16.gmra.mrb[0].mxu0 %v6270
      %v6496 = vpop.f32.mrb[0].mxu0
      %v6497 = vadd.f32 0.0, %v6496
      %v6498 = vpop.f32.mrb[0].mxu0
      %v6499 = vadd.f32 0.0, %v6498
      %v6500 = vpop.f32.mrb[0].mxu0
      %v6501 = vadd.f32 0.0, %v6500
      %v6502 = vpop.f32.mrb[0].mxu0
      %v6503 = vadd.f32 0.0, %v6502
      %6504 = vmatprep.mubr.bf16.mxu0 %v6273
      %6505 = vmatmul.mubr.bf16.gmra.mrb[0].mxu0 %v6272
      %v6506 = vpop.f32.mrb[0].mxu0
      %v6507 = vadd.f32 0.0, %v6506
      %v6508 = vpop.f32.mrb[0].mxu0
      %v6509 = vadd.f32 0.0, %v6508
      %v6510 = vpop.f32.mrb[0].mxu0
      %v6511 = vadd.f32 0.0, %v6510
      %v6512 = vpop.f32.mrb[0].mxu0
      %v6513 = vadd.f32 0.0, %v6512
      %6514 = vdwg.mxu0
      %v6515 = vadd.f32 %v6185, %v6477
      %v6516 = vadd.f32 %v6186, %v6479
      %v6517 = vadd.f32 %v6187, %v6481
      %v6518 = vadd.f32 %v6188, %v6483
      %v6519 = vadd.f32 %v6189, %v6487
      %v6520 = vadd.f32 %v6190, %v6489
      %v6521 = vadd.f32 %v6191, %v6491
      %v6522 = vadd.f32 %v6192, %v6493
      %v6523 = vadd.f32 %v6193, %v6497
      %v6524 = vadd.f32 %v6194, %v6499
      %v6525 = vadd.f32 %v6195, %v6501
      %v6526 = vadd.f32 %v6196, %v6503
      %v6527 = vadd.f32 %v6197, %v6507
      %v6528 = vadd.f32 %v6198, %v6509
      %v6529 = vadd.f32 %v6199, %v6511
      %v6530 = vadd.f32 %v6200, %v6513
      %v6531 = vld [vmem:[%s3193] sm:$0xff]
      %v6532 = vld [vmem:[%s3193 + $0x8] sm:$0xff]
      %v6533 = vld [vmem:[%s3193 + $0x10] sm:$0xff]
      %v6534 = vld [vmem:[%s3193 + $0x18] sm:$0xff]
      %v6535 = vld [vmem:[%s3193 + $0x20] sm:$0xff]
      %v6536 = vld [vmem:[%s3193 + $0x28] sm:$0xff]
      %v6537 = vld [vmem:[%s3193 + $0x30] sm:$0xff]
      %v6538 = vld [vmem:[%s3193 + $0x38] sm:$0xff]
      %s6539 = scalar_lea.vmem %s4, 2048
      %v6540 = vld [vmem:[%s6539] sm:$0xff]
      %v6541 = vld [vmem:[%s6539 + $0x8] sm:$0xff]
      %v6542 = vld [vmem:[%s6539 + $0x10] sm:$0xff]
      %v6543 = vld [vmem:[%s6539 + $0x18] sm:$0xff]
      %v6544 = vld [vmem:[%s6539 + $0x20] sm:$0xff]
      %v6545 = vld [vmem:[%s6539 + $0x28] sm:$0xff]
      %v6546 = vld [vmem:[%s6539 + $0x30] sm:$0xff]
      %v6547 = vld [vmem:[%s6539 + $0x38] sm:$0xff]
      %v6548 = vld [vmem:[%s6539 + $0x40] sm:$0xff]
      %v6549 = vld [vmem:[%s6539 + $0x48] sm:$0xff]
      %v6550 = vld [vmem:[%s6539 + $0x50] sm:$0xff]
      %v6551 = vld [vmem:[%s6539 + $0x58] sm:$0xff]
      %v6552 = vld [vmem:[%s6539 + $0x60] sm:$0xff]
      %v6553 = vld [vmem:[%s6539 + $0x68] sm:$0xff]
      %v6554 = vld [vmem:[%s6539 + $0x70] sm:$0xff]
      %v6555 = vld [vmem:[%s6539 + $0x78] sm:$0xff]
      %v6556 = vld [vmem:[%s6539 + $0x80] sm:$0xff]
      %v6557 = vld [vmem:[%s6539 + $0x88] sm:$0xff]
      %v6558 = vld [vmem:[%s6539 + $0x90] sm:$0xff]
      %v6559 = vld [vmem:[%s6539 + $0x98] sm:$0xff]
      %v6560 = vld [vmem:[%s6539 + $0xa0] sm:$0xff]
      %v6561 = vld [vmem:[%s6539 + $0xa8] sm:$0xff]
      %v6562 = vld [vmem:[%s6539 + $0xb0] sm:$0xff]
      %v6563 = vld [vmem:[%s6539 + $0xb8] sm:$0xff]
      %v6564 = vld [vmem:[%s6539 + $0xc0] sm:$0xff]
      %v6565 = vld [vmem:[%s6539 + $0xc8] sm:$0xff]
      %v6566 = vld [vmem:[%s6539 + $0xd0] sm:$0xff]
      %v6567 = vld [vmem:[%s6539 + $0xd8] sm:$0xff]
      %v6568 = vld [vmem:[%s6539 + $0xe0] sm:$0xff]
      %v6569 = vld [vmem:[%s6539 + $0xe8] sm:$0xff]
      %v6570 = vld [vmem:[%s6539 + $0xf0] sm:$0xff]
      %v6571 = vld [vmem:[%s6539 + $0xf8] sm:$0xff]
      %v6580 = vunpack.c.l.b16 %v6531
      %v6581 = vunpack.c.h.b16 %v6531
      %v6582 = vunpack.c.l.b16 %v6532
      %v6583 = vunpack.c.h.b16 %v6532
      %v6584 = vunpack.c.l.b16 %v6533
      %v6585 = vunpack.c.h.b16 %v6533
      %v6586 = vunpack.c.l.b16 %v6534
      %v6587 = vunpack.c.h.b16 %v6534
      %v6588 = vunpack.c.l.b16 %v6535
      %v6589 = vunpack.c.h.b16 %v6535
      %v6590 = vunpack.c.l.b16 %v6536
      %v6591 = vunpack.c.h.b16 %v6536
      %v6592 = vunpack.c.l.b16 %v6537
      %v6593 = vunpack.c.h.b16 %v6537
      %v6594 = vunpack.c.l.b16 %v6538
      %v6595 = vunpack.c.h.b16 %v6538
      %v6596 = vpack.c.b16 %v6582, %v6580
      %v6597 = vpack.c.b16 %v6583, %v6581
      %v6598 = vpack.c.b16 %v6586, %v6584
      %v6599 = vpack.c.b16 %v6587, %v6585
      %v6600 = vpack.c.b16 %v6590, %v6588
      %v6601 = vpack.c.b16 %v6591, %v6589
      %v6602 = vpack.c.b16 %v6594, %v6592
      %v6603 = vpack.c.b16 %v6595, %v6593
      %v6644 = vunpack.c.l.b16 %v6540
      %v6645 = vunpack.c.h.b16 %v6540
      %v6646 = vunpack.c.l.b16 %v6541
      %v6647 = vunpack.c.h.b16 %v6541
      %v6648 = vunpack.c.l.b16 %v6542
      %v6649 = vunpack.c.h.b16 %v6542
      %v6650 = vunpack.c.l.b16 %v6543
      %v6651 = vunpack.c.h.b16 %v6543
      %v6652 = vunpack.c.l.b16 %v6544
      %v6653 = vunpack.c.h.b16 %v6544
      %v6654 = vunpack.c.l.b16 %v6545
      %v6655 = vunpack.c.h.b16 %v6545
      %v6656 = vunpack.c.l.b16 %v6546
      %v6657 = vunpack.c.h.b16 %v6546
      %v6658 = vunpack.c.l.b16 %v6547
      %v6659 = vunpack.c.h.b16 %v6547
      %v6660 = vunpack.c.l.b16 %v6548
      %v6661 = vunpack.c.h.b16 %v6548
      %v6662 = vunpack.c.l.b16 %v6549
      %v6663 = vunpack.c.h.b16 %v6549
      %v6664 = vunpack.c.l.b16 %v6550
      %v6665 = vunpack.c.h.b16 %v6550
      %v6666 = vunpack.c.l.b16 %v6551
      %v6667 = vunpack.c.h.b16 %v6551
      %v6668 = vunpack.c.l.b16 %v6552
      %v6669 = vunpack.c.h.b16 %v6552
      %v6670 = vunpack.c.l.b16 %v6553
      %v6671 = vunpack.c.h.b16 %v6553
      %v6672 = vunpack.c.l.b16 %v6554
      %v6673 = vunpack.c.h.b16 %v6554
      %v6674 = vunpack.c.l.b16 %v6555
      %v6675 = vunpack.c.h.b16 %v6555
      %v6676 = vunpack.c.l.b16 %v6556
      %v6677 = vunpack.c.h.b16 %v6556
      %v6678 = vunpack.c.l.b16 %v6557
      %v6679 = vunpack.c.h.b16 %v6557
      %v6680 = vunpack.c.l.b16 %v6558
      %v6681 = vunpack.c.h.b16 %v6558
      %v6682 = vunpack.c.l.b16 %v6559
      %v6683 = vunpack.c.h.b16 %v6559
      %v6684 = vunpack.c.l.b16 %v6560
      %v6685 = vunpack.c.h.b16 %v6560
      %v6686 = vunpack.c.l.b16 %v6561
      %v6687 = vunpack.c.h.b16 %v6561
      %v6688 = vunpack.c.l.b16 %v6562
      %v6689 = vunpack.c.h.b16 %v6562
      %v6690 = vunpack.c.l.b16 %v6563
      %v6691 = vunpack.c.h.b16 %v6563
      %v6692 = vunpack.c.l.b16 %v6564
      %v6693 = vunpack.c.h.b16 %v6564
      %v6694 = vunpack.c.l.b16 %v6565
      %v6695 = vunpack.c.h.b16 %v6565
      %v6696 = vunpack.c.l.b16 %v6566
      %v6697 = vunpack.c.h.b16 %v6566
      %v6698 = vunpack.c.l.b16 %v6567
      %v6699 = vunpack.c.h.b16 %v6567
      %v6700 = vunpack.c.l.b16 %v6568
      %v6701 = vunpack.c.h.b16 %v6568
      %v6702 = vunpack.c.l.b16 %v6569
      %v6703 = vunpack.c.h.b16 %v6569
      %v6704 = vunpack.c.l.b16 %v6570
      %v6705 = vunpack.c.h.b16 %v6570
      %v6706 = vunpack.c.l.b16 %v6571
      %v6707 = vunpack.c.h.b16 %v6571
      %v6708 = vpack.c.b16 %v6646, %v6644
      %v6709 = vpack.c.b16 %v6647, %v6645
      %v6710 = vpack.c.b16 %v6650, %v6648
      %v6711 = vpack.c.b16 %v6651, %v6649
      %v6712 = vpack.c.b16 %v6654, %v6652
      %v6713 = vpack.c.b16 %v6655, %v6653
      %v6714 = vpack.c.b16 %v6658, %v6656
      %v6715 = vpack.c.b16 %v6659, %v6657
      %v6716 = vpack.c.b16 %v6662, %v6660
      %v6717 = vpack.c.b16 %v6663, %v6661
      %v6718 = vpack.c.b16 %v6666, %v6664
      %v6719 = vpack.c.b16 %v6667, %v6665
      %v6720 = vpack.c.b16 %v6670, %v6668
      %v6721 = vpack.c.b16 %v6671, %v6669
      %v6722 = vpack.c.b16 %v6674, %v6672
      %v6723 = vpack.c.b16 %v6675, %v6673
      %v6724 = vpack.c.b16 %v6678, %v6676
      %v6725 = vpack.c.b16 %v6679, %v6677
      %v6726 = vpack.c.b16 %v6682, %v6680
      %v6727 = vpack.c.b16 %v6683, %v6681
      %v6728 = vpack.c.b16 %v6686, %v6684
      %v6729 = vpack.c.b16 %v6687, %v6685
      %v6730 = vpack.c.b16 %v6690, %v6688
      %v6731 = vpack.c.b16 %v6691, %v6689
      %v6732 = vpack.c.b16 %v6694, %v6692
      %v6733 = vpack.c.b16 %v6695, %v6693
      %v6734 = vpack.c.b16 %v6698, %v6696
      %v6735 = vpack.c.b16 %v6699, %v6697
      %v6736 = vpack.c.b16 %v6702, %v6700
      %v6737 = vpack.c.b16 %v6703, %v6701
      %v6738 = vpack.c.b16 %v6706, %v6704
      %v6739 = vpack.c.b16 %v6707, %v6705
      %6772 = vmatprep.subr.bf16.mxu0 %v6709
      %6773 = vmatpush1.bf16.msra.mxu0 %v6708
      %6774 = vmatprep.subr.bf16.mxu0 %v6711
      %6775 = vmatpush1.bf16.msra.mxu0 %v6710
      %6776 = vmatprep.subr.bf16.mxu0 %v6713
      %6777 = vmatpush1.bf16.msra.mxu0 %v6712
      %6778 = vmatprep.subr.bf16.mxu0 %v6715
      %6779 = vmatpush1.bf16.msra.mxu0 %v6714
      %6780 = vmatprep.subr.bf16.mxu0 %v6717
      %6781 = vmatpush1.bf16.msra.mxu0 %v6716
      %6782 = vmatprep.subr.bf16.mxu0 %v6719
      %6783 = vmatpush1.bf16.msra.mxu0 %v6718
      %6784 = vmatprep.subr.bf16.mxu0 %v6721
      %6785 = vmatpush1.bf16.msra.mxu0 %v6720
      %6786 = vmatprep.subr.bf16.mxu0 %v6723
      %6787 = vmatpush1.bf16.msra.mxu0 %v6722
      %6788 = vmatprep.subr.bf16.mxu0 %v6725
      %6789 = vmatpush1.bf16.msra.mxu0 %v6724
      %6790 = vmatprep.subr.bf16.mxu0 %v6727
      %6791 = vmatpush1.bf16.msra.mxu0 %v6726
      %6792 = vmatprep.subr.bf16.mxu0 %v6729
      %6793 = vmatpush1.bf16.msra.mxu0 %v6728
      %6794 = vmatprep.subr.bf16.mxu0 %v6731
      %6795 = vmatpush1.bf16.msra.mxu0 %v6730
      %6796 = vmatprep.subr.bf16.mxu0 %v6733
      %6797 = vmatpush1.bf16.msra.mxu0 %v6732
      %6798 = vmatprep.subr.bf16.mxu0 %v6735
      %6799 = vmatpush1.bf16.msra.mxu0 %v6734
      %6800 = vmatprep.subr.bf16.mxu0 %v6737
      %6801 = vmatpush1.bf16.msra.mxu0 %v6736
      %6802 = vmatprep.subr.bf16.mxu0 %v6739
      %6803 = vmatpush1.bf16.msra.mxu0 %v6738
      %6804 = vmatprep.mubr.bf16.mxu0 %v6597
      %6805 = vmatmul.mubr.bf16.gmra.mrb[0].mxu0 %v6596
      %v6806 = vpop.f32.mrb[0].mxu0
      %v6807 = vadd.f32 0.0, %v6806
      %v6808 = vpop.f32.mrb[0].mxu0
      %v6809 = vadd.f32 0.0, %v6808
      %v6810 = vpop.f32.mrb[0].mxu0
      %v6811 = vadd.f32 0.0, %v6810
      %v6812 = vpop.f32.mrb[0].mxu0
      %v6813 = vadd.f32 0.0, %v6812
      %6814 = vmatprep.mubr.bf16.mxu0 %v6599
      %6815 = vmatmul.mubr.bf16.gmra.mrb[0].mxu0 %v6598
      %v6816 = vpop.f32.mrb[0].mxu0
      %v6817 = vadd.f32 0.0, %v6816
      %v6818 = vpop.f32.mrb[0].mxu0
      %v6819 = vadd.f32 0.0, %v6818
      %v6820 = vpop.f32.mrb[0].mxu0
      %v6821 = vadd.f32 0.0, %v6820
      %v6822 = vpop.f32.mrb[0].mxu0
      %v6823 = vadd.f32 0.0, %v6822
      %6824 = vmatprep.mubr.bf16.mxu0 %v6601
      %6825 = vmatmul.mubr.bf16.gmra.mrb[0].mxu0 %v6600
      %v6826 = vpop.f32.mrb[0].mxu0
      %v6827 = vadd.f32 0.0, %v6826
      %v6828 = vpop.f32.mrb[0].mxu0
      %v6829 = vadd.f32 0.0, %v6828
      %v6830 = vpop.f32.mrb[0].mxu0
      %v6831 = vadd.f32 0.0, %v6830
      %v6832 = vpop.f32.mrb[0].mxu0
      %v6833 = vadd.f32 0.0, %v6832
      %6834 = vmatprep.mubr.bf16.mxu0 %v6603
      %6835 = vmatmul.mubr.bf16.gmra.mrb[0].mxu0 %v6602
      %v6836 = vpop.f32.mrb[0].mxu0
      %v6837 = vadd.f32 0.0, %v6836
      %v6838 = vpop.f32.mrb[0].mxu0
      %v6839 = vadd.f32 0.0, %v6838
      %v6840 = vpop.f32.mrb[0].mxu0
      %v6841 = vadd.f32 0.0, %v6840
      %v6842 = vpop.f32.mrb[0].mxu0
      %v6843 = vadd.f32 0.0, %v6842
      %6844 = vdwg.mxu0
      %v6845 = vadd.f32 %v6515, %v6807
      %v6846 = vadd.f32 %v6516, %v6809
      %v6847 = vadd.f32 %v6517, %v6811
      %v6848 = vadd.f32 %v6518, %v6813
      %v6849 = vadd.f32 %v6519, %v6817
      %v6850 = vadd.f32 %v6520, %v6819
      %v6851 = vadd.f32 %v6521, %v6821
      %v6852 = vadd.f32 %v6522, %v6823
      %v6853 = vadd.f32 %v6523, %v6827
      %v6854 = vadd.f32 %v6524, %v6829
      %v6855 = vadd.f32 %v6525, %v6831
      %v6856 = vadd.f32 %v6526, %v6833
      %v6857 = vadd.f32 %v6527, %v6837
      %v6858 = vadd.f32 %v6528, %v6839
      %v6859 = vadd.f32 %v6529, %v6841
      %v6860 = vadd.f32 %v6530, %v6843
      %v6861 = vld [vmem:[%s5] sm:$0x3]
      %v6863 = vlaneseq
      %v6864 = vshrl.u32 %v6863, 7
      %v6865 = vsub.s32 0, %v6864
      %v6866 = vrot.slane %v6861, %v6865
      %v6867 = vlaneseq
      %v6868 = vshrl.u32 %v6867, 7
      %v6869 = vsub.s32 1, %v6868
      %v6870 = vrot.slane %v6861, %v6869
      %v6873 = vmul.f32 %v6845, %v6866
      %v6874 = vmul.f32 %v6846, %v6870
      %v6875 = vmul.f32 %v6847, %v6866
      %v6876 = vmul.f32 %v6848, %v6870
      %v6877 = vmul.f32 %v6849, %v6866
      %v6878 = vmul.f32 %v6850, %v6870
      %v6879 = vmul.f32 %v6851, %v6866
      %v6880 = vmul.f32 %v6852, %v6870
      %v6881 = vmul.f32 %v6853, %v6866
      %v6882 = vmul.f32 %v6854, %v6870
      %v6883 = vmul.f32 %v6855, %v6866
      %v6884 = vmul.f32 %v6856, %v6870
      %v6885 = vmul.f32 %v6857, %v6866
      %v6886 = vmul.f32 %v6858, %v6870
      %v6887 = vmul.f32 %v6859, %v6866
      %v6888 = vmul.f32 %v6860, %v6870
      %v6889 = vld [vmem:[%s6] sm:$0x3]
      %v6891 = vlaneseq
      %v6892 = vshrl.u32 %v6891, 7
      %v6893 = vsub.s32 0, %v6892
      %v6894 = vrot.slane %v6889, %v6893
      %v6895 = vlaneseq
      %v6896 = vshrl.u32 %v6895, 7
      %v6897 = vsub.s32 1, %v6896
      %v6898 = vrot.slane %v6889, %v6897
      %v6901 = vadd.f32 %v6873, %v6894
      %v6902 = vadd.f32 %v6874, %v6898
      %v6903 = vadd.f32 %v6875, %v6894
      %v6904 = vadd.f32 %v6876, %v6898
      %v6905 = vadd.f32 %v6877, %v6894
      %v6906 = vadd.f32 %v6878, %v6898
      %v6907 = vadd.f32 %v6879, %v6894
      %v6908 = vadd.f32 %v6880, %v6898
      %v6909 = vadd.f32 %v6881, %v6894
      %v6910 = vadd.f32 %v6882, %v6898
      %v6911 = vadd.f32 %v6883, %v6894
      %v6912 = vadd.f32 %v6884, %v6898
      %v6913 = vadd.f32 %v6885, %v6894
      %v6914 = vadd.f32 %v6886, %v6898
      %v6915 = vadd.f32 %v6887, %v6894
      %v6916 = vadd.f32 %v6888, %v6898
      %v6917 = vld [vmem:[%s273] sm:$0xff]
      %v6918 = vld [vmem:[%s273 + $0x8] sm:$0xff]
      %v6919 = vld [vmem:[%s273 + $0x10] sm:$0xff]
      %v6920 = vld [vmem:[%s273 + $0x18] sm:$0xff]
      %v6921 = vld [vmem:[%s273 + $0x20] sm:$0xff]
      %v6922 = vld [vmem:[%s273 + $0x28] sm:$0xff]
      %v6923 = vld [vmem:[%s273 + $0x30] sm:$0xff]
      %v6924 = vld [vmem:[%s273 + $0x38] sm:$0xff]
      %v6925 = vunpack.c.l.bf16 %v6917
      %v6926 = vunpack.c.h.bf16 %v6917
      %v6927 = vunpack.c.l.bf16 %v6918
      %v6928 = vunpack.c.h.bf16 %v6918
      %v6929 = vunpack.c.l.bf16 %v6919
      %v6930 = vunpack.c.h.bf16 %v6919
      %v6931 = vunpack.c.l.bf16 %v6920
      %v6932 = vunpack.c.h.bf16 %v6920
      %v6933 = vunpack.c.l.bf16 %v6921
      %v6934 = vunpack.c.h.bf16 %v6921
      %v6935 = vunpack.c.l.bf16 %v6922
      %v6936 = vunpack.c.h.bf16 %v6922
      %v6937 = vunpack.c.l.bf16 %v6923
      %v6938 = vunpack.c.h.bf16 %v6923
      %v6939 = vunpack.c.l.bf16 %v6924
      %v6940 = vunpack.c.h.bf16 %v6924
      %v6941 = vadd.f32 %v6901, %v6925
      %v6942 = vadd.f32 %v6902, %v6926
      %v6943 = vadd.f32 %v6903, %v6927
      %v6944 = vadd.f32 %v6904, %v6928
      %v6945 = vadd.f32 %v6905, %v6929
      %v6946 = vadd.f32 %v6906, %v6930
      %v6947 = vadd.f32 %v6907, %v6931
      %v6948 = vadd.f32 %v6908, %v6932
      %v6949 = vadd.f32 %v6909, %v6933
      %v6950 = vadd.f32 %v6910, %v6934
      %v6951 = vadd.f32 %v6911, %v6935
      %v6952 = vadd.f32 %v6912, %v6936
      %v6953 = vadd.f32 %v6913, %v6937
      %v6954 = vadd.f32 %v6914, %v6938
      %v6955 = vadd.f32 %v6915, %v6939
      %v6956 = vadd.f32 %v6916, %v6940
      %v6957 = vmax.f32 %v6941, 0.0
      %v6958 = vmax.f32 %v6942, 0.0
      %v6959 = vmax.f32 %v6943, 0.0
      %v6960 = vmax.f32 %v6944, 0.0
      %v6961 = vmax.f32 %v6945, 0.0
      %v6962 = vmax.f32 %v6946, 0.0
      %v6963 = vmax.f32 %v6947, 0.0
      %v6964 = vmax.f32 %v6948, 0.0
      %v6965 = vmax.f32 %v6949, 0.0
      %v6966 = vmax.f32 %v6950, 0.0
      %v6967 = vmax.f32 %v6951, 0.0
      %v6968 = vmax.f32 %v6952, 0.0
      %v6969 = vmax.f32 %v6953, 0.0
      %v6970 = vmax.f32 %v6954, 0.0
      %v6971 = vmax.f32 %v6955, 0.0
      %v6972 = vmax.f32 %v6956, 0.0
      %v6973 = vpack.c.bf16 %v6957, %v6957
      %v6974 = vpack.c.bf16 %v6958, %v6958
      %v6975 = vpack.c.bf16 %v6959, %v6959
      %v6976 = vpack.c.bf16 %v6960, %v6960
      %v6977 = vpack.c.bf16 %v6961, %v6961
      %v6978 = vpack.c.bf16 %v6962, %v6962
      %v6979 = vpack.c.bf16 %v6963, %v6963
      %v6980 = vpack.c.bf16 %v6964, %v6964
      %v6981 = vpack.c.bf16 %v6965, %v6965
      %v6982 = vpack.c.bf16 %v6966, %v6966
      %v6983 = vpack.c.bf16 %v6967, %v6967
      %v6984 = vpack.c.bf16 %v6968, %v6968
      %v6985 = vpack.c.bf16 %v6969, %v6969
      %v6986 = vpack.c.bf16 %v6970, %v6970
      %v6987 = vpack.c.bf16 %v6971, %v6971
      %v6988 = vpack.c.bf16 %v6972, %v6972
      %v7005 = vunpack.c.l.b16 %v6973
      %v7006 = vunpack.c.l.b16 %v6974
      %v7007 = vunpack.c.l.b16 %v6975
      %v7008 = vunpack.c.l.b16 %v6976
      %v7009 = vunpack.c.l.b16 %v6977
      %v7010 = vunpack.c.l.b16 %v6978
      %v7011 = vunpack.c.l.b16 %v6979
      %v7012 = vunpack.c.l.b16 %v6980
      %v7013 = vunpack.c.l.b16 %v6981
      %v7014 = vunpack.c.l.b16 %v6982
      %v7015 = vunpack.c.l.b16 %v6983
      %v7016 = vunpack.c.l.b16 %v6984
      %v7017 = vunpack.c.l.b16 %v6985
      %v7018 = vunpack.c.l.b16 %v6986
      %v7019 = vunpack.c.l.b16 %v6987
      %v7020 = vunpack.c.l.b16 %v6988
      %v7021 = vpack.c.b16 %v7006, %v7005
      %v7022 = vpack.c.b16 %v7008, %v7007
      %v7023 = vpack.c.b16 %v7010, %v7009
      %v7024 = vpack.c.b16 %v7012, %v7011
      %v7025 = vpack.c.b16 %v7014, %v7013
      %v7026 = vpack.c.b16 %v7016, %v7015
      %v7027 = vpack.c.b16 %v7018, %v7017
      %v7028 = vpack.c.b16 %v7020, %v7019
      %7037 = vst [vmem:[%s278] sm:$0xff] %v7021
      %7038 = vst [vmem:[%s278 + $0x8] sm:$0xff] %v7022
      %7039 = vst [vmem:[%s278 + $0x10] sm:$0xff] %v7023
      %7040 = vst [vmem:[%s278 + $0x18] sm:$0xff] %v7024
      %7041 = vst [vmem:[%s278 + $0x20] sm:$0xff] %v7025
      %7042 = vst [vmem:[%s278 + $0x28] sm:$0xff] %v7026
      %7043 = vst [vmem:[%s278 + $0x30] sm:$0xff] %v7027
      %7044 = vst [vmem:[%s278 + $0x38] sm:$0xff] %v7028
      %p7045 = scmp.lt.s32.totalorder %s18, 1
      %s7046 = scalar_select %p7045, %s18, 1
      %s7047 = smul.addr %s7046, 16
      %s7048 = smul.addr %s7047, 4
      %s7049 = scalar_lea.vmem %s7, %s7048
      // Predicated region
      $region49: #{basic_block_forward.1} parent=47 // pred_check
        %p7050 = pneg %p188
      $region50: #{basic_block_forward.1} parent=47 // pred_check_branch
        %7052 = sbr.rel (%p7050) target = $region52
      $region51: #{basic_block_forward.1} parent=47 // pred_region
        _
      $region52: #{basic_block_forward.1} parent=47 // pred_fallthru
        _
    $region48: #{basic_block_forward.1} parent=5 // pred_fallthru
      _
    %p7053 = scmp.le.s32.totalorder 2, %s13
    // Predicated region
    $region53: #{basic_block_forward.1} parent=5 // pred_check
      %p7054 = pneg %p7053
    $region54: #{basic_block_forward.1} parent=5 // pred_check_branch
      %7056 = sbr.rel (%p7054) target = $region56
    $region55: #{basic_block_forward.1} parent=5 // pred_region
      %s7057 = ssub.s32 %s13, 2
      // Predicated region
      $region57: #{basic_block_forward.1} parent=55 // pred_check
        %p7058 = pneg %p194
      $region58: #{basic_block_forward.1} parent=55 // pred_check_branch
        %7060 = sbr.rel (%p7058) target = $region60
      $region59: #{basic_block_forward.1} parent=55 // pred_region
        %p7061 = scmp.lt.s32.totalorder %s19, 1
        %s7062 = scalar_select %p7061, %s19, 1
        %s7063 = smul.addr %s7062, 16
        %s7064 = smul.addr %s7063, 4
        %s7065 = scalar_lea.vmem %s7, %s7064
      $region60: #{basic_block_forward.1} parent=55 // pred_fallthru
        _
    $region56: #{basic_block_forward.1} parent=5 // pred_fallthru
      _
  $region6: #{basic_block_forward.1} parent=0 // loop_footer
    %s17 = sadd.s32 1, %s13
  $region7: #{basic_block_forward.1} parent=0 // loop_footer_branch
    %12 = sbr.rel target = $region3
  $region8: #{basic_block_forward.1} parent=0 // loop_exit
    _

</llo_original>
